<compile_context>
chip_gen: v7x
topology: tpu7x:2x2x1
jax: 0.10.0
libtpu: 0.0.40
codegen_flags: <defaults>
</compile_context>

<pallas_src>
import jax
import jax.numpy as jnp
import numpy as np
from jax import lax
from jax.experimental import pallas as pl
from jax.experimental.pallas import tpu as pltpu

VOCAB_SIZE = 1000        # synthetic stand-in for len(vocab) + 1
EMBED_DIM = 50           # config.embedding_dim
HIDDEN = 100             # config.hidden_size
HIDDEN_PAD = 128         # lane-aligned hidden
GATES_PAD = 4 * HIDDEN_PAD
NUM_LAYERS = 2           # config.num_layers
N_CLASSES = 2            # config.n_classes
DEC_DIM = 64             # decoder output width
OUT_PAD = 128            # padded logits lane width


# ---------------------------------------------------------------------------
# Pallas kernels
# ---------------------------------------------------------------------------
def _lstm_cell(gates, c_prev):
    """PyTorch gate order i,f,g,o in 128-lane chunks; padded lanes stay 0."""
    Hp = HIDDEN_PAD
    i = jax.nn.sigmoid(gates[:, 0 * Hp:1 * Hp])
    f = jax.nn.sigmoid(gates[:, 1 * Hp:2 * Hp])
    g = jnp.tanh(gates[:, 2 * Hp:3 * Hp])
    o = jax.nn.sigmoid(gates[:, 3 * Hp:4 * Hp])
    c = f * c_prev + i * g
    h = o * jnp.tanh(c)
    return h, c


def _bilstm_chunk(pre_f_ref, pre_b_ref, whh_f_ref, whh_b_ref,
                  hf_sc, cf_sc, hb_sc, cb_sc,
                  hseq_f_ref=None, hseq_b_ref=None):
    """Run Tb recurrent steps of both directions; return final (h_f, h_b)."""
    Tb = pre_f_ref.shape[0]

    @pl.when(pl.program_id(0) == 0)
    def _():
        hf_sc[...] = jnp.zeros_like(hf_sc)
        cf_sc[...] = jnp.zeros_like(cf_sc)
        hb_sc[...] = jnp.zeros_like(hb_sc)
        cb_sc[...] = jnp.zeros_like(cb_sc)

    whh_f = whh_f_ref[...]                 # (Hp, 4Hp), loaded once per chunk
    whh_b = whh_b_ref[...]

    def step(s, carry):
        h_f, c_f, h_b, c_b = carry
        # Only the recurrent matmul sits on the serial chain; x-projection and
        # biases were precomputed outside the kernel.
        g_f = pre_f_ref[s] + jnp.dot(h_f, whh_f, preferred_element_type=jnp.float32)
        g_b = pre_b_ref[Tb - 1 - s] + jnp.dot(h_b, whh_b,
                                              preferred_element_type=jnp.float32)
        h_f, c_f = _lstm_cell(g_f, c_f)
        h_b, c_b = _lstm_cell(g_b, c_b)
        if hseq_f_ref is not None:
            hseq_f_ref[s] = h_f
            hseq_b_ref[Tb - 1 - s] = h_b
        return h_f, c_f, h_b, c_b

    carry = (hf_sc[...], cf_sc[...], hb_sc[...], cb_sc[...])
    h_f, c_f, h_b, c_b = lax.fori_loop(0, Tb, step, carry, unroll=True)
    hf_sc[...] = h_f
    cf_sc[...] = c_f
    hb_sc[...] = h_b
    cb_sc[...] = c_b
    return h_f, h_b


def _bilstm_seq_kernel(pre_f_ref, pre_b_ref, whh_f_ref, whh_b_ref,
                       hseq_f_ref, hseq_b_ref,
                       hf_sc, cf_sc, hb_sc, cb_sc):
    """Layer-0 kernel: emits the full (T,Bp,Hp) hidden sequence per direction."""
    _bilstm_chunk(pre_f_ref, pre_b_ref, whh_f_ref, whh_b_ref,
                  hf_sc, cf_sc, hb_sc, cb_sc,
                  hseq_f_ref=hseq_f_ref, hseq_b_ref=hseq_b_ref)


def _bilstm_head_kernel(pre_f_ref, pre_b_ref, whh_f_ref, whh_b_ref,
                        dec_w_ref, dec_b_ref, fc1_w_ref, fc1_b_ref,
                        logits_ref,
                        hf_sc, cf_sc, hb_sc, cb_sc):
    """Layer-1 kernel: no sequence writeback; MLP head fused into the epilogue."""
    h_f, h_b = _bilstm_chunk(pre_f_ref, pre_b_ref, whh_f_ref, whh_b_ref,
                             hf_sc, cf_sc, hb_sc, cb_sc)

    @pl.when(pl.program_id(0) == pl.num_programs(0) - 1)
    def _():
        feats = jnp.concatenate([h_f, h_b], axis=-1)            # (Bp, 2*Hp)
        hid = jnp.dot(feats, dec_w_ref[...],
                      preferred_element_type=jnp.float32) + dec_b_ref[...]
        logits_ref[...] = (jnp.dot(hid, fc1_w_ref[...],
                                   preferred_element_type=jnp.float32)
                           + fc1_b_ref[...]).astype(logits_ref.dtype)


# ---------------------------------------------------------------------------
# Pallas-call wrappers
# ---------------------------------------------------------------------------
def _pick_time_chunk(T):
    for tb in (32, 16, 8, 4, 2, 1):
        if T % tb == 0:
            return tb
    return 1


def _bilstm_seq(pre_f, pre_b, whh_f, whh_b, Tb):
    T, Bp, G = pre_f.shape
    Hp = whh_f.shape[0]
    nT = T // Tb
    grid_spec = pltpu.PrefetchScalarGridSpec(
        num_scalar_prefetch=0,
        grid=(nT,),
        in_specs=[
            pl.BlockSpec((Tb, Bp, G), lambda tb: (tb, 0, 0)),
            pl.BlockSpec((Tb, Bp, G), lambda tb, nT=nT: (nT - 1 - tb, 0, 0)),
            pl.BlockSpec((Hp, G), lambda tb: (0, 0)),
            pl.BlockSpec((Hp, G), lambda tb: (0, 0)),
        ],
        out_specs=[
            pl.BlockSpec((Tb, Bp, Hp), lambda tb: (tb, 0, 0)),
            pl.BlockSpec((Tb, Bp, Hp), lambda tb, nT=nT: (nT - 1 - tb, 0, 0)),
        ],
        scratch_shapes=[
            pltpu.VMEM((Bp, Hp), jnp.float32),
            pltpu.VMEM((Bp, Hp), jnp.float32),
            pltpu.VMEM((Bp, Hp), jnp.float32),
            pltpu.VMEM((Bp, Hp), jnp.float32),
        ],
    )
    return pl.pallas_call(
        _bilstm_seq_kernel,
        out_shape=(jax.ShapeDtypeStruct((T, Bp, Hp), jnp.float32),
                   jax.ShapeDtypeStruct((T, Bp, Hp), jnp.float32)),
        grid_spec=grid_spec,
        compiler_params=pltpu.CompilerParams(
            dimension_semantics=("arbitrary",)),   # time chunks are sequential
    )(pre_f, pre_b, whh_f, whh_b)


def _bilstm_head(pre_f, pre_b, whh_f, whh_b, dec_w, dec_b, fc1_w, fc1_b, Tb):
    T, Bp, G = pre_f.shape
    Hp = whh_f.shape[0]
    nT = T // Tb
    grid_spec = pltpu.PrefetchScalarGridSpec(
        num_scalar_prefetch=0,
        grid=(nT,),
        in_specs=[
            pl.BlockSpec((Tb, Bp, G), lambda tb: (tb, 0, 0)),
            pl.BlockSpec((Tb, Bp, G), lambda tb, nT=nT: (nT - 1 - tb, 0, 0)),
            pl.BlockSpec((Hp, G), lambda tb: (0, 0)),
            pl.BlockSpec((Hp, G), lambda tb: (0, 0)),
            pl.BlockSpec((2 * Hp, DEC_DIM), lambda tb: (0, 0)),
            pl.BlockSpec((1, DEC_DIM), lambda tb: (0, 0)),
            pl.BlockSpec((DEC_DIM, OUT_PAD), lambda tb: (0, 0)),
            pl.BlockSpec((1, OUT_PAD), lambda tb: (0, 0)),
        ],
        out_specs=pl.BlockSpec((Bp, OUT_PAD), lambda tb: (0, 0)),
        scratch_shapes=[
            pltpu.VMEM((Bp, Hp), jnp.float32),
            pltpu.VMEM((Bp, Hp), jnp.float32),
            pltpu.VMEM((Bp, Hp), jnp.float32),
            pltpu.VMEM((Bp, Hp), jnp.float32),
        ],
    )
    return pl.pallas_call(
        _bilstm_head_kernel,
        out_shape=jax.ShapeDtypeStruct((Bp, OUT_PAD), jnp.float32),
        grid_spec=grid_spec,
        compiler_params=pltpu.CompilerParams(
            dimension_semantics=("arbitrary",)),
    )(pre_f, pre_b, whh_f, whh_b, dec_w, dec_b, fc1_w, fc1_b)


# ---------------------------------------------------------------------------
# Weight padding / layout prep (torch layout -> lane-aligned Pallas layout)
# ---------------------------------------------------------------------------
def _pad_gate_cols(w):
    """(rows, 4*HIDDEN) -> (rows, GATES_PAD); each 100-wide gate into a 128 chunk."""
    rows = w.shape[0]
    out = jnp.zeros((rows, GATES_PAD), jnp.float32)
    for k in range(4):
        out = out.at[:, k * HIDDEN_PAD:k * HIDDEN_PAD + HIDDEN].set(
            w[:, k * HIDDEN:(k + 1) * HIDDEN])
    return out


def _pad_dir_rows(w):
    """(2*HIDDEN, cols) -> (2*HIDDEN_PAD, cols); fwd rows -> [0:100], bwd -> [128:228]."""
    out = jnp.zeros((2 * HIDDEN_PAD, w.shape[1]), jnp.float32)
    out = out.at[:HIDDEN, :].set(w[:HIDDEN])
    out = out.at[HIDDEN_PAD:HIDDEN_PAD + HIDDEN, :].set(w[HIDDEN:])
    return out


def _pad_rows(w, rows_pad):
    out = jnp.zeros((rows_pad, w.shape[1]), jnp.float32)
    return out.at[:w.shape[0], :].set(w)


def prepare_pallas_params(params):
    pp = {}
    for layer in (0, 1):
        for tag, d in (("f", "fwd"), ("b", "bwd")):
            w_ih, w_hh, b_ih, b_hh = params[f"l{layer}_{d}"]
            wih_t = _pad_gate_cols(jnp.transpose(w_ih))             # (Din, 4Hp)
            if layer == 1:
                wih_t = _pad_dir_rows(wih_t)                        # (2Hp, 4Hp)
            pp[f"wih{layer}_{tag}"] = wih_t
            pp[f"whh{layer}_{tag}"] = _pad_rows(
                _pad_gate_cols(jnp.transpose(w_hh)), HIDDEN_PAD)    # (Hp, 4Hp)
            pp[f"b{layer}_{tag}"] = _pad_gate_cols(
                (b_ih + b_hh).reshape(1, -1))[0]                    # (4Hp,)
    pp["dec_w"] = _pad_dir_rows(jnp.transpose(params["dec_w"]))     # (2Hp, 64)
    pp["dec_b"] = params["dec_b"].reshape(1, DEC_DIM)
    fc1 = jnp.zeros((DEC_DIM, OUT_PAD), jnp.float32)
    pp["fc1_w"] = fc1.at[:, :N_CLASSES].set(jnp.transpose(params["fc1_w"]))
    fc1b = jnp.zeros((1, OUT_PAD), jnp.float32)
    pp["fc1_b"] = fc1b.at[:, :N_CLASSES].set(params["fc1_b"])
    return pp


# ---------------------------------------------------------------------------
# Forward pass
# ---------------------------------------------------------------------------
@jax.jit
def rnn_lstm_forward(token_ids, params):
    pp = prepare_pallas_params(params)
    B, T = token_ids.shape
    Bp = ((B + 7) // 8) * 8
    Tb = _pick_time_chunk(T)

    # TODO(synk): embedding gather has no clean rectangular BlockSpec; done with jnp.take glue.
    emb = jnp.take(params["embedding"], token_ids.astype(jnp.int32), axis=0)  # (B,T,E)
    x = jnp.transpose(emb, (1, 0, 2))                                         # (T,B,E)
    x = jnp.pad(x, ((0, 0), (0, Bp - B), (0, 0)))                             # (T,Bp,E)

    # Layer 0: hoisted input projection (bias folded), then fused bi-dir kernel.
    pre0_f = jnp.einsum("tbd,dg->tbg", x, pp["wih0_f"]) + pp["b0_f"]
    pre0_b = jnp.einsum("tbd,dg->tbg", x, pp["wih0_b"]) + pp["b0_b"]
    hseq_f, hseq_b = _bilstm_seq(pre0_f, pre0_b, pp["whh0_f"], pp["whh0_b"], Tb)

    # Layer 1: projection consumes the padded (T,Bp,2Hp) sequence directly
    # (padded rows of wih1_* are zero); kernel emits only the fused head output.
    x1 = jnp.concatenate([hseq_f, hseq_b], axis=-1)                           # (T,Bp,2Hp)
    pre1_f = jnp.einsum("tbd,dg->tbg", x1, pp["wih1_f"]) + pp["b1_f"]
    pre1_b = jnp.einsum("tbd,dg->tbg", x1, pp["wih1_b"]) + pp["b1_b"]
    logits_pad = _bilstm_head(pre1_f, pre1_b, pp["whh1_f"], pp["whh1_b"],
                              pp["dec_w"], pp["dec_b"], pp["fc1_w"], pp["fc1_b"],
                              Tb)
    return logits_pad[:B, :N_CLASSES]


# ---------------------------------------------------------------------------
# Deterministic synthetic parameters (torch layout)
# ---------------------------------------------------------------------------
def init_params(key):
    ks = jax.random.split(key, 24)

    def rn(k, shape, scale=0.1):
        return (scale * jax.random.normal(k, shape)).astype(jnp.float32)

    params = {"embedding": rn(ks[0], (VOCAB_SIZE, EMBED_DIM))}
    idx = 1
    for layer, din in [(0, EMBED_DIM), (1, 2 * HIDDEN)]:
        for d in ("fwd", "bwd"):
            params[f"l{layer}_{d}"] = (
                rn(ks[idx + 0], (4 * HIDDEN, din)),     # weight_ih
                rn(ks[idx + 1], (4 * HIDDEN, HIDDEN)),  # weight_hh
                rn(ks[idx + 2], (4 * HIDDEN,)),         # bias_ih
                rn(ks[idx + 3], (4 * HIDDEN,)),         # bias_hh
            )
            idx += 4
    params["dec_w"] = rn(ks[idx + 0], (DEC_DIM, 2 * HIDDEN))
    params["dec_b"] = rn(ks[idx + 1], (DEC_DIM,))
    params["fc1_w"] = rn(ks[idx + 2], (N_CLASSES, DEC_DIM))
    params["fc1_b"] = rn(ks[idx + 3], (N_CLASSES,))
    return params


# ---------------------------------------------------------------------------
# Pure-JAX reference (mirrors torch semantics) for a correctness sanity check
# ---------------------------------------------------------------------------
def _lstm_dir_ref(x, w_ih, w_hh, b_ih, b_hh):
    H = w_hh.shape[1]
    B = x.shape[1]

    def step(carry, x_t):
        h, c = carry
        gates = x_t @ w_ih.T + h @ w_hh.T + b_ih + b_hh
        i = jax.nn.sigmoid(gates[:, :H])
        f = jax.nn.sigmoid(gates[:, H:2 * H])
        g = jnp.tanh(gates[:, 2 * H:3 * H])
        o = jax.nn.sigmoid(gates[:, 3 * H:])
        c = f * c + i * g
        h = o * jnp.tanh(c)
        return (h, c), h

    init = (jnp.zeros((B, H), jnp.float32), jnp.zeros((B, H), jnp.float32))
    _, hs = jax.lax.scan(step, init, x)
    return hs


def rnn_lstm_ref(token_ids, params):
    emb = jnp.take(params["embedding"], token_ids.astype(jnp.int32), axis=0)
    x = jnp.transpose(emb, (1, 0, 2))
    for layer in (0, 1):
        h_f = _lstm_dir_ref(x, *params[f"l{layer}_fwd"])
        h_b_rev = _lstm_dir_ref(x[::-1], *params[f"l{layer}_bwd"])
        x = jnp.concatenate([h_f, h_b_rev[::-1]], axis=-1)
    feats = jnp.concatenate([h_f[-1], h_b_rev[-1]], axis=-1)
    h = feats @ params["dec_w"].T + params["dec_b"]
    return h @ params["fc1_w"].T + params["fc1_b"]


if __name__ == "__main__":
    key = jax.random.PRNGKey(0)
    pkey, ikey = jax.random.split(key)
    params = init_params(pkey)

    batch, seq = 2, 8
    token_ids = jax.random.randint(ikey, (batch, seq), 0, VOCAB_SIZE, dtype=jnp.int32)

    out = rnn_lstm_forward(token_ids, params)
    out = jax.block_until_ready(out)

    ref = rnn_lstm_ref(token_ids, params)
    assert out.shape == (batch, N_CLASSES), out.shape
    np.testing.assert_allclose(np.asarray(out), np.asarray(ref), atol=5e-4, rtol=5e-3)

    print("KERNEL_OK")
</pallas_src>

<mosaic_0001>
module attributes {stable_mosaic.version = 11 : i64} {
  func.func @_bilstm_seq_kernel(%arg0: i32, %arg1: memref<8x8x512xf32, #tpu.memory_space<vmem>>, %arg2: memref<8x8x512xf32, #tpu.memory_space<vmem>>, %arg3: memref<128x512xf32, #tpu.memory_space<vmem>>, %arg4: memref<128x512xf32, #tpu.memory_space<vmem>>, %arg5: memref<8x8x128xf32, #tpu.memory_space<vmem>>, %arg6: memref<8x8x128xf32, #tpu.memory_space<vmem>>, %arg7: memref<8x128xf32, #tpu.memory_space<vmem>>, %arg8: memref<8x128xf32, #tpu.memory_space<vmem>>, %arg9: memref<8x128xf32, #tpu.memory_space<vmem>>, %arg10: memref<8x128xf32, #tpu.memory_space<vmem>>) attributes {dimension_semantics = [#tpu.dimension_semantics<arbitrary>], iteration_bounds = array<i64: 1>, scalar_prefetch = 0 : i64, scratch_operands = 4 : i64, tpu.core_type = #tpu.core_type<tc>, window_params = [{transform_indices = @transform_0, window_bounds = array<i64: 8, 8, 512>}, {transform_indices = @transform_1, window_bounds = array<i64: 8, 8, 512>}, {pipeline_mode = #tpu.pipeline_mode<synchronous>, transform_indices = @transform_2, window_bounds = array<i64: 128, 512>}, {pipeline_mode = #tpu.pipeline_mode<synchronous>, transform_indices = @transform_3, window_bounds = array<i64: 128, 512>}, {transform_indices = @transform_4, window_bounds = array<i64: 8, 8, 128>}, {transform_indices = @transform_5, window_bounds = array<i64: 8, 8, 128>}]} {
    %c0_i32 = arith.constant 0 : i32
    %0 = arith.cmpi eq, %arg0, %c0_i32 : i32
    %1 = arith.extui %0 : i1 to i32
    %c0_i32_0 = arith.constant 0 : i32
    %2 = arith.cmpi ne, %1, %c0_i32_0 : i32
    scf.if %2 {
      %cst_164 = arith.constant 0.000000e+00 : f32
      %573 = vector.broadcast %cst_164 : f32 to vector<8x128xf32>
      %c0_165 = arith.constant 0 : index
      %c0_166 = arith.constant 0 : index
      %574 = vector.load %arg7[%c0_165, %c0_166] : memref<8x128xf32, #tpu.memory_space<vmem>>, vector<8x128xf32>
      tpu.vector_store %arg7[%c0_165, %c0_166], %573 {strides = array<i32>} : memref<8x128xf32, #tpu.memory_space<vmem>>, vector<8x128xf32>,
      %cst_167 = arith.constant 0.000000e+00 : f32
      %575 = vector.broadcast %cst_167 : f32 to vector<8x128xf32>
      %c0_168 = arith.constant 0 : index
      %c0_169 = arith.constant 0 : index
      %576 = vector.load %arg8[%c0_168, %c0_169] : memref<8x128xf32, #tpu.memory_space<vmem>>, vector<8x128xf32>
      tpu.vector_store %arg8[%c0_168, %c0_169], %575 {strides = array<i32>} : memref<8x128xf32, #tpu.memory_space<vmem>>, vector<8x128xf32>,
      %cst_170 = arith.constant 0.000000e+00 : f32
      %577 = vector.broadcast %cst_170 : f32 to vector<8x128xf32>
      %c0_171 = arith.constant 0 : index
      %c0_172 = arith.constant 0 : index
      %578 = vector.load %arg9[%c0_171, %c0_172] : memref<8x128xf32, #tpu.memory_space<vmem>>, vector<8x128xf32>
      tpu.vector_store %arg9[%c0_171, %c0_172], %577 {strides = array<i32>} : memref<8x128xf32, #tpu.memory_space<vmem>>, vector<8x128xf32>,
      %cst_173 = arith.constant 0.000000e+00 : f32
      %579 = vector.broadcast %cst_173 : f32 to vector<8x128xf32>
      %c0_174 = arith.constant 0 : index
      %c0_175 = arith.constant 0 : index
      %580 = vector.load %arg10[%c0_174, %c0_175] : memref<8x128xf32, #tpu.memory_space<vmem>>, vector<8x128xf32>
      tpu.vector_store %arg10[%c0_174, %c0_175], %579 {strides = array<i32>} : memref<8x128xf32, #tpu.memory_space<vmem>>, vector<8x128xf32>,
    } else {
    }
    %c0 = arith.constant 0 : index
    %c0_1 = arith.constant 0 : index
    %3 = vector.load %arg3[%c0, %c0_1] : memref<128x512xf32, #tpu.memory_space<vmem>>, vector<128x512xf32>
    %c0_2 = arith.constant 0 : index
    %c0_3 = arith.constant 0 : index
    %4 = vector.load %arg4[%c0_2, %c0_3] : memref<128x512xf32, #tpu.memory_space<vmem>>, vector<128x512xf32>
    %c0_4 = arith.constant 0 : index
    %c0_5 = arith.constant 0 : index
    %5 = vector.load %arg7[%c0_4, %c0_5] : memref<8x128xf32, #tpu.memory_space<vmem>>, vector<8x128xf32>
    %c0_6 = arith.constant 0 : index
    %c0_7 = arith.constant 0 : index
    %6 = vector.load %arg8[%c0_6, %c0_7] : memref<8x128xf32, #tpu.memory_space<vmem>>, vector<8x128xf32>
    %c0_8 = arith.constant 0 : index
    %c0_9 = arith.constant 0 : index
    %7 = vector.load %arg9[%c0_8, %c0_9] : memref<8x128xf32, #tpu.memory_space<vmem>>, vector<8x128xf32>
    %c0_10 = arith.constant 0 : index
    %c0_11 = arith.constant 0 : index
    %8 = vector.load %arg10[%c0_10, %c0_11] : memref<8x128xf32, #tpu.memory_space<vmem>>, vector<8x128xf32>
    %c0_i32_12 = arith.constant 0 : i32
    %9 = arith.index_cast %c0_i32_12 : i32 to index
    %c0_13 = arith.constant 0 : index
    %c0_14 = arith.constant 0 : index
    %10 = vector.load %arg1[%9, %c0_13, %c0_14] : memref<8x8x512xf32, #tpu.memory_space<vmem>>, vector<1x8x512xf32>
    %11 = vector.shape_cast %10 : vector<1x8x512xf32> to vector<8x512xf32>
    %cst = arith.constant dense<0.000000e+00> : vector<8x512xf32>
    %12 = tpu.matmul %5, %3, %cst {dimension_numbers = #tpu.dot_dimension_numbers<[1], [0], [0], [1], [0, 0, 1, 1], [], []>} : vector<8x128xf32>, vector<128x512xf32>, vector<8x512xf32> -> vector<8x512xf32>
    %13 = arith.addf %11, %12 : vector<8x512xf32>
    %c7_i32 = arith.constant 7 : i32
    %14 = arith.subi %c7_i32, %c0_i32_12 : i32
    %15 = arith.index_cast %14 : i32 to index
    %c0_15 = arith.constant 0 : index
    %c0_16 = arith.constant 0 : index
    %16 = vector.load %arg2[%15, %c0_15, %c0_16] : memref<8x8x512xf32, #tpu.memory_space<vmem>>, vector<1x8x512xf32>
    %17 = vector.shape_cast %16 : vector<1x8x512xf32> to vector<8x512xf32>
    %cst_17 = arith.constant dense<0.000000e+00> : vector<8x512xf32>
    %18 = tpu.matmul %7, %4, %cst_17 {dimension_numbers = #tpu.dot_dimension_numbers<[1], [0], [0], [1], [0, 0, 1, 1], [], []>} : vector<8x128xf32>, vector<128x512xf32>, vector<8x512xf32> -> vector<8x512xf32>
    %19 = arith.addf %17, %18 : vector<8x512xf32>
    %20 = vector.extract_strided_slice %13 {offsets = [0, 0], sizes = [8, 128], strides = [1, 1]} : vector<8x512xf32> to vector<8x128xf32>
    %21 = arith.negf %20 : vector<8x128xf32>
    %22 = math.exp %21 : vector<8x128xf32>
    %cst_18 = arith.constant 1.000000e+00 : f32
    %23 = vector.broadcast %cst_18 : f32 to vector<8x128xf32>
    %24 = arith.addf %23, %22 : vector<8x128xf32>
    %25 = arith.divf %23, %24 : vector<8x128xf32>
    %26 = vector.extract_strided_slice %13 {offsets = [0, 128], sizes = [8, 128], strides = [1, 1]} : vector<8x512xf32> to vector<8x128xf32>
    %27 = arith.negf %26 : vector<8x128xf32>
    %28 = math.exp %27 : vector<8x128xf32>
    %cst_19 = arith.constant 1.000000e+00 : f32
    %29 = vector.broadcast %cst_19 : f32 to vector<8x128xf32>
    %30 = arith.addf %29, %28 : vector<8x128xf32>
    %31 = arith.divf %29, %30 : vector<8x128xf32>
    %32 = vector.extract_strided_slice %13 {offsets = [0, 256], sizes = [8, 128], strides = [1, 1]} : vector<8x512xf32> to vector<8x128xf32>
    %33 = math.tanh %32 : vector<8x128xf32>
    %34 = vector.extract_strided_slice %13 {offsets = [0, 384], sizes = [8, 128], strides = [1, 1]} : vector<8x512xf32> to vector<8x128xf32>
    %35 = arith.negf %34 : vector<8x128xf32>
    %36 = math.exp %35 : vector<8x128xf32>
    %cst_20 = arith.constant 1.000000e+00 : f32
    %37 = vector.broadcast %cst_20 : f32 to vector<8x128xf32>
    %38 = arith.addf %37, %36 : vector<8x128xf32>
    %39 = arith.divf %37, %38 : vector<8x128xf32>
    %40 = arith.mulf %31, %6 : vector<8x128xf32>
    %41 = arith.mulf %25, %33 : vector<8x128xf32>
    %42 = arith.addf %40, %41 : vector<8x128xf32>
    %43 = math.tanh %42 : vector<8x128xf32>
    %44 = arith.mulf %39, %43 : vector<8x128xf32>
    %45 = vector.extract_strided_slice %19 {offsets = [0, 0], sizes = [8, 128], strides = [1, 1]} : vector<8x512xf32> to vector<8x128xf32>
    %46 = arith.negf %45 : vector<8x128xf32>
    %47 = math.exp %46 : vector<8x128xf32>
    %cst_21 = arith.constant 1.000000e+00 : f32
    %48 = vector.broadcast %cst_21 : f32 to vector<8x128xf32>
    %49 = arith.addf %48, %47 : vector<8x128xf32>
    %50 = arith.divf %48, %49 : vector<8x128xf32>
    %51 = vector.extract_strided_slice %19 {offsets = [0, 128], sizes = [8, 128], strides = [1, 1]} : vector<8x512xf32> to vector<8x128xf32>
    %52 = arith.negf %51 : vector<8x128xf32>
    %53 = math.exp %52 : vector<8x128xf32>
    %cst_22 = arith.constant 1.000000e+00 : f32
    %54 = vector.broadcast %cst_22 : f32 to vector<8x128xf32>
    %55 = arith.addf %54, %53 : vector<8x128xf32>
    %56 = arith.divf %54, %55 : vector<8x128xf32>
    %57 = vector.extract_strided_slice %19 {offsets = [0, 256], sizes = [8, 128], strides = [1, 1]} : vector<8x512xf32> to vector<8x128xf32>
    %58 = math.tanh %57 : vector<8x128xf32>
    %59 = vector.extract_strided_slice %19 {offsets = [0, 384], sizes = [8, 128], strides = [1, 1]} : vector<8x512xf32> to vector<8x128xf32>
    %60 = arith.negf %59 : vector<8x128xf32>
    %61 = math.exp %60 : vector<8x128xf32>
    %cst_23 = arith.constant 1.000000e+00 : f32
    %62 = vector.broadcast %cst_23 : f32 to vector<8x128xf32>
    %63 = arith.addf %62, %61 : vector<8x128xf32>
    %64 = arith.divf %62, %63 : vector<8x128xf32>
    %65 = arith.mulf %56, %8 : vector<8x128xf32>
    %66 = arith.mulf %50, %58 : vector<8x128xf32>
    %67 = arith.addf %65, %66 : vector<8x128xf32>
    %68 = math.tanh %67 : vector<8x128xf32>
    %69 = arith.mulf %64, %68 : vector<8x128xf32>
    %70 = arith.index_cast %c0_i32_12 : i32 to index
    %c0_24 = arith.constant 0 : index
    %c0_25 = arith.constant 0 : index
    %71 = vector.load %arg5[%70, %c0_24, %c0_25] : memref<8x8x128xf32, #tpu.memory_space<vmem>>, vector<1x8x128xf32>
    %72 = vector.shape_cast %71 : vector<1x8x128xf32> to vector<8x128xf32>
    %73 = vector.shape_cast %44 : vector<8x128xf32> to vector<1x8x128xf32>
    tpu.vector_store %arg5[%70, %c0_24, %c0_25], %73 {strides = array<i32>} : memref<8x8x128xf32, #tpu.memory_space<vmem>>, vector<1x8x128xf32>,
    %c7_i32_26 = arith.constant 7 : i32
    %74 = arith.subi %c7_i32_26, %c0_i32_12 : i32
    %75 = arith.index_cast %74 : i32 to index
    %c0_27 = arith.constant 0 : index
    %c0_28 = arith.constant 0 : index
    %76 = vector.load %arg6[%75, %c0_27, %c0_28] : memref<8x8x128xf32, #tpu.memory_space<vmem>>, vector<1x8x128xf32>
    %77 = vector.shape_cast %76 : vector<1x8x128xf32> to vector<8x128xf32>
    %78 = vector.shape_cast %69 : vector<8x128xf32> to vector<1x8x128xf32>
    tpu.vector_store %arg6[%75, %c0_27, %c0_28], %78 {strides = array<i32>} : memref<8x8x128xf32, #tpu.memory_space<vmem>>, vector<1x8x128xf32>,
    %c1_i32 = arith.constant 1 : i32
    %79 = arith.index_cast %c1_i32 : i32 to index
    %c0_29 = arith.constant 0 : index
    %c0_30 = arith.constant 0 : index
    %80 = vector.load %arg1[%79, %c0_29, %c0_30] : memref<8x8x512xf32, #tpu.memory_space<vmem>>, vector<1x8x512xf32>
    %81 = vector.shape_cast %80 : vector<1x8x512xf32> to vector<8x512xf32>
    %cst_31 = arith.constant dense<0.000000e+00> : vector<8x512xf32>
    %82 = tpu.matmul %44, %3, %cst_31 {dimension_numbers = #tpu.dot_dimension_numbers<[1], [0], [0], [1], [0, 0, 1, 1], [], []>} : vector<8x128xf32>, vector<128x512xf32>, vector<8x512xf32> -> vector<8x512xf32>
    %83 = arith.addf %81, %82 : vector<8x512xf32>
    %c7_i32_32 = arith.constant 7 : i32
    %84 = arith.subi %c7_i32_32, %c1_i32 : i32
    %85 = arith.index_cast %84 : i32 to index
    %c0_33 = arith.constant 0 : index
    %c0_34 = arith.constant 0 : index
    %86 = vector.load %arg2[%85, %c0_33, %c0_34] : memref<8x8x512xf32, #tpu.memory_space<vmem>>, vector<1x8x512xf32>
    %87 = vector.shape_cast %86 : vector<1x8x512xf32> to vector<8x512xf32>
    %cst_35 = arith.constant dense<0.000000e+00> : vector<8x512xf32>
    %88 = tpu.matmul %69, %4, %cst_35 {dimension_numbers = #tpu.dot_dimension_numbers<[1], [0], [0], [1], [0, 0, 1, 1], [], []>} : vector<8x128xf32>, vector<128x512xf32>, vector<8x512xf32> -> vector<8x512xf32>
    %89 = arith.addf %87, %88 : vector<8x512xf32>
    %90 = vector.extract_strided_slice %83 {offsets = [0, 0], sizes = [8, 128], strides = [1, 1]} : vector<8x512xf32> to vector<8x128xf32>
    %91 = arith.negf %90 : vector<8x128xf32>
    %92 = math.exp %91 : vector<8x128xf32>
    %cst_36 = arith.constant 1.000000e+00 : f32
    %93 = vector.broadcast %cst_36 : f32 to vector<8x128xf32>
    %94 = arith.addf %93, %92 : vector<8x128xf32>
    %95 = arith.divf %93, %94 : vector<8x128xf32>
    %96 = vector.extract_strided_slice %83 {offsets = [0, 128], sizes = [8, 128], strides = [1, 1]} : vector<8x512xf32> to vector<8x128xf32>
    %97 = arith.negf %96 : vector<8x128xf32>
    %98 = math.exp %97 : vector<8x128xf32>
    %cst_37 = arith.constant 1.000000e+00 : f32
    %99 = vector.broadcast %cst_37 : f32 to vector<8x128xf32>
    %100 = arith.addf %99, %98 : vector<8x128xf32>
    %101 = arith.divf %99, %100 : vector<8x128xf32>
    %102 = vector.extract_strided_slice %83 {offsets = [0, 256], sizes = [8, 128], strides = [1, 1]} : vector<8x512xf32> to vector<8x128xf32>
    %103 = math.tanh %102 : vector<8x128xf32>
    %104 = vector.extract_strided_slice %83 {offsets = [0, 384], sizes = [8, 128], strides = [1, 1]} : vector<8x512xf32> to vector<8x128xf32>
    %105 = arith.negf %104 : vector<8x128xf32>
    %106 = math.exp %105 : vector<8x128xf32>
    %cst_38 = arith.constant 1.000000e+00 : f32
    %107 = vector.broadcast %cst_38 : f32 to vector<8x128xf32>
    %108 = arith.addf %107, %106 : vector<8x128xf32>
    %109 = arith.divf %107, %108 : vector<8x128xf32>
    %110 = arith.mulf %101, %42 : vector<8x128xf32>
    %111 = arith.mulf %95, %103 : vector<8x128xf32>
    %112 = arith.addf %110, %111 : vector<8x128xf32>
    %113 = math.tanh %112 : vector<8x128xf32>
    %114 = arith.mulf %109, %113 : vector<8x128xf32>
    %115 = vector.extract_strided_slice %89 {offsets = [0, 0], sizes = [8, 128], strides = [1, 1]} : vector<8x512xf32> to vector<8x128xf32>
    %116 = arith.negf %115 : vector<8x128xf32>
    %117 = math.exp %116 : vector<8x128xf32>
    %cst_39 = arith.constant 1.000000e+00 : f32
    %118 = vector.broadcast %cst_39 : f32 to vector<8x128xf32>
    %119 = arith.addf %118, %117 : vector<8x128xf32>
    %120 = arith.divf %118, %119 : vector<8x128xf32>
    %121 = vector.extract_strided_slice %89 {offsets = [0, 128], sizes = [8, 128], strides = [1, 1]} : vector<8x512xf32> to vector<8x128xf32>
    %122 = arith.negf %121 : vector<8x128xf32>
    %123 = math.exp %122 : vector<8x128xf32>
    %cst_40 = arith.constant 1.000000e+00 : f32
    %124 = vector.broadcast %cst_40 : f32 to vector<8x128xf32>
    %125 = arith.addf %124, %123 : vector<8x128xf32>
    %126 = arith.divf %124, %125 : vector<8x128xf32>
    %127 = vector.extract_strided_slice %89 {offsets = [0, 256], sizes = [8, 128], strides = [1, 1]} : vector<8x512xf32> to vector<8x128xf32>
    %128 = math.tanh %127 : vector<8x128xf32>
    %129 = vector.extract_strided_slice %89 {offsets = [0, 384], sizes = [8, 128], strides = [1, 1]} : vector<8x512xf32> to vector<8x128xf32>
    %130 = arith.negf %129 : vector<8x128xf32>
    %131 = math.exp %130 : vector<8x128xf32>
    %cst_41 = arith.constant 1.000000e+00 : f32
    %132 = vector.broadcast %cst_41 : f32 to vector<8x128xf32>
    %133 = arith.addf %132, %131 : vector<8x128xf32>
    %134 = arith.divf %132, %133 : vector<8x128xf32>
    %135 = arith.mulf %126, %67 : vector<8x128xf32>
    %136 = arith.mulf %120, %128 : vector<8x128xf32>
    %137 = arith.addf %135, %136 : vector<8x128xf32>
    %138 = math.tanh %137 : vector<8x128xf32>
    %139 = arith.mulf %134, %138 : vector<8x128xf32>
    %140 = arith.index_cast %c1_i32 : i32 to index
    %c0_42 = arith.constant 0 : index
    %c0_43 = arith.constant 0 : index
    %141 = vector.load %arg5[%140, %c0_42, %c0_43] : memref<8x8x128xf32, #tpu.memory_space<vmem>>, vector<1x8x128xf32>
    %142 = vector.shape_cast %141 : vector<1x8x128xf32> to vector<8x128xf32>
    %143 = vector.shape_cast %114 : vector<8x128xf32> to vector<1x8x128xf32>
    tpu.vector_store %arg5[%140, %c0_42, %c0_43], %143 {strides = array<i32>} : memref<8x8x128xf32, #tpu.memory_space<vmem>>, vector<1x8x128xf32>,
    %c7_i32_44 = arith.constant 7 : i32
    %144 = arith.subi %c7_i32_44, %c1_i32 : i32
    %145 = arith.index_cast %144 : i32 to index
    %c0_45 = arith.constant 0 : index
    %c0_46 = arith.constant 0 : index
    %146 = vector.load %arg6[%145, %c0_45, %c0_46] : memref<8x8x128xf32, #tpu.memory_space<vmem>>, vector<1x8x128xf32>
    %147 = vector.shape_cast %146 : vector<1x8x128xf32> to vector<8x128xf32>
    %148 = vector.shape_cast %139 : vector<8x128xf32> to vector<1x8x128xf32>
    tpu.vector_store %arg6[%145, %c0_45, %c0_46], %148 {strides = array<i32>} : memref<8x8x128xf32, #tpu.memory_space<vmem>>, vector<1x8x128xf32>,
    %c2_i32 = arith.constant 2 : i32
    %149 = arith.index_cast %c2_i32 : i32 to index
    %c0_47 = arith.constant 0 : index
    %c0_48 = arith.constant 0 : index
    %150 = vector.load %arg1[%149, %c0_47, %c0_48] : memref<8x8x512xf32, #tpu.memory_space<vmem>>, vector<1x8x512xf32>
    %151 = vector.shape_cast %150 : vector<1x8x512xf32> to vector<8x512xf32>
    %cst_49 = arith.constant dense<0.000000e+00> : vector<8x512xf32>
    %152 = tpu.matmul %114, %3, %cst_49 {dimension_numbers = #tpu.dot_dimension_numbers<[1], [0], [0], [1], [0, 0, 1, 1], [], []>} : vector<8x128xf32>, vector<128x512xf32>, vector<8x512xf32> -> vector<8x512xf32>
    %153 = arith.addf %151, %152 : vector<8x512xf32>
    %c7_i32_50 = arith.constant 7 : i32
    %154 = arith.subi %c7_i32_50, %c2_i32 : i32
    %155 = arith.index_cast %154 : i32 to index
    %c0_51 = arith.constant 0 : index
    %c0_52 = arith.constant 0 : index
    %156 = vector.load %arg2[%155, %c0_51, %c0_52] : memref<8x8x512xf32, #tpu.memory_space<vmem>>, vector<1x8x512xf32>
    %157 = vector.shape_cast %156 : vector<1x8x512xf32> to vector<8x512xf32>
    %cst_53 = arith.constant dense<0.000000e+00> : vector<8x512xf32>
    %158 = tpu.matmul %139, %4, %cst_53 {dimension_numbers = #tpu.dot_dimension_numbers<[1], [0], [0], [1], [0, 0, 1, 1], [], []>} : vector<8x128xf32>, vector<128x512xf32>, vector<8x512xf32> -> vector<8x512xf32>
    %159 = arith.addf %157, %158 : vector<8x512xf32>
    %160 = vector.extract_strided_slice %153 {offsets = [0, 0], sizes = [8, 128], strides = [1, 1]} : vector<8x512xf32> to vector<8x128xf32>
    %161 = arith.negf %160 : vector<8x128xf32>
    %162 = math.exp %161 : vector<8x128xf32>
    %cst_54 = arith.constant 1.000000e+00 : f32
    %163 = vector.broadcast %cst_54 : f32 to vector<8x128xf32>
    %164 = arith.addf %163, %162 : vector<8x128xf32>
    %165 = arith.divf %163, %164 : vector<8x128xf32>
    %166 = vector.extract_strided_slice %153 {offsets = [0, 128], sizes = [8, 128], strides = [1, 1]} : vector<8x512xf32> to vector<8x128xf32>
    %167 = arith.negf %166 : vector<8x128xf32>
    %168 = math.exp %167 : vector<8x128xf32>
    %cst_55 = arith.constant 1.000000e+00 : f32
    %169 = vector.broadcast %cst_55 : f32 to vector<8x128xf32>
    %170 = arith.addf %169, %168 : vector<8x128xf32>
    %171 = arith.divf %169, %170 : vector<8x128xf32>
    %172 = vector.extract_strided_slice %153 {offsets = [0, 256], sizes = [8, 128], strides = [1, 1]} : vector<8x512xf32> to vector<8x128xf32>
    %173 = math.tanh %172 : vector<8x128xf32>
    %174 = vector.extract_strided_slice %153 {offsets = [0, 384], sizes = [8, 128], strides = [1, 1]} : vector<8x512xf32> to vector<8x128xf32>
    %175 = arith.negf %174 : vector<8x128xf32>
    %176 = math.exp %175 : vector<8x128xf32>
    %cst_56 = arith.constant 1.000000e+00 : f32
    %177 = vector.broadcast %cst_56 : f32 to vector<8x128xf32>
    %178 = arith.addf %177, %176 : vector<8x128xf32>
    %179 = arith.divf %177, %178 : vector<8x128xf32>
    %180 = arith.mulf %171, %112 : vector<8x128xf32>
    %181 = arith.mulf %165, %173 : vector<8x128xf32>
    %182 = arith.addf %180, %181 : vector<8x128xf32>
    %183 = math.tanh %182 : vector<8x128xf32>
    %184 = arith.mulf %179, %183 : vector<8x128xf32>
    %185 = vector.extract_strided_slice %159 {offsets = [0, 0], sizes = [8, 128], strides = [1, 1]} : vector<8x512xf32> to vector<8x128xf32>
    %186 = arith.negf %185 : vector<8x128xf32>
    %187 = math.exp %186 : vector<8x128xf32>
    %cst_57 = arith.constant 1.000000e+00 : f32
    %188 = vector.broadcast %cst_57 : f32 to vector<8x128xf32>
    %189 = arith.addf %188, %187 : vector<8x128xf32>
    %190 = arith.divf %188, %189 : vector<8x128xf32>
    %191 = vector.extract_strided_slice %159 {offsets = [0, 128], sizes = [8, 128], strides = [1, 1]} : vector<8x512xf32> to vector<8x128xf32>
    %192 = arith.negf %191 : vector<8x128xf32>
    %193 = math.exp %192 : vector<8x128xf32>
    %cst_58 = arith.constant 1.000000e+00 : f32
    %194 = vector.broadcast %cst_58 : f32 to vector<8x128xf32>
    %195 = arith.addf %194, %193 : vector<8x128xf32>
    %196 = arith.divf %194, %195 : vector<8x128xf32>
    %197 = vector.extract_strided_slice %159 {offsets = [0, 256], sizes = [8, 128], strides = [1, 1]} : vector<8x512xf32> to vector<8x128xf32>
    %198 = math.tanh %197 : vector<8x128xf32>
    %199 = vector.extract_strided_slice %159 {offsets = [0, 384], sizes = [8, 128], strides = [1, 1]} : vector<8x512xf32> to vector<8x128xf32>
    %200 = arith.negf %199 : vector<8x128xf32>
    %201 = math.exp %200 : vector<8x128xf32>
    %cst_59 = arith.constant 1.000000e+00 : f32
    %202 = vector.broadcast %cst_59 : f32 to vector<8x128xf32>
    %203 = arith.addf %202, %201 : vector<8x128xf32>
    %204 = arith.divf %202, %203 : vector<8x128xf32>
    %205 = arith.mulf %196, %137 : vector<8x128xf32>
    %206 = arith.mulf %190, %198 : vector<8x128xf32>
    %207 = arith.addf %205, %206 : vector<8x128xf32>
    %208 = math.tanh %207 : vector<8x128xf32>
    %209 = arith.mulf %204, %208 : vector<8x128xf32>
    %210 = arith.index_cast %c2_i32 : i32 to index
    %c0_60 = arith.constant 0 : index
    %c0_61 = arith.constant 0 : index
    %211 = vector.load %arg5[%210, %c0_60, %c0_61] : memref<8x8x128xf32, #tpu.memory_space<vmem>>, vector<1x8x128xf32>
    %212 = vector.shape_cast %211 : vector<1x8x128xf32> to vector<8x128xf32>
    %213 = vector.shape_cast %184 : vector<8x128xf32> to vector<1x8x128xf32>
    tpu.vector_store %arg5[%210, %c0_60, %c0_61], %213 {strides = array<i32>} : memref<8x8x128xf32, #tpu.memory_space<vmem>>, vector<1x8x128xf32>,
    %c7_i32_62 = arith.constant 7 : i32
    %214 = arith.subi %c7_i32_62, %c2_i32 : i32
    %215 = arith.index_cast %214 : i32 to index
    %c0_63 = arith.constant 0 : index
    %c0_64 = arith.constant 0 : index
    %216 = vector.load %arg6[%215, %c0_63, %c0_64] : memref<8x8x128xf32, #tpu.memory_space<vmem>>, vector<1x8x128xf32>
    %217 = vector.shape_cast %216 : vector<1x8x128xf32> to vector<8x128xf32>
    %218 = vector.shape_cast %209 : vector<8x128xf32> to vector<1x8x128xf32>
    tpu.vector_store %arg6[%215, %c0_63, %c0_64], %218 {strides = array<i32>} : memref<8x8x128xf32, #tpu.memory_space<vmem>>, vector<1x8x128xf32>,
    %c3_i32 = arith.constant 3 : i32
    %219 = arith.index_cast %c3_i32 : i32 to index
    %c0_65 = arith.constant 0 : index
    %c0_66 = arith.constant 0 : index
    %220 = vector.load %arg1[%219, %c0_65, %c0_66] : memref<8x8x512xf32, #tpu.memory_space<vmem>>, vector<1x8x512xf32>
    %221 = vector.shape_cast %220 : vector<1x8x512xf32> to vector<8x512xf32>
    %cst_67 = arith.constant dense<0.000000e+00> : vector<8x512xf32>
    %222 = tpu.matmul %184, %3, %cst_67 {dimension_numbers = #tpu.dot_dimension_numbers<[1], [0], [0], [1], [0, 0, 1, 1], [], []>} : vector<8x128xf32>, vector<128x512xf32>, vector<8x512xf32> -> vector<8x512xf32>
    %223 = arith.addf %221, %222 : vector<8x512xf32>
    %c7_i32_68 = arith.constant 7 : i32
    %224 = arith.subi %c7_i32_68, %c3_i32 : i32
    %225 = arith.index_cast %224 : i32 to index
    %c0_69 = arith.constant 0 : index
    %c0_70 = arith.constant 0 : index
    %226 = vector.load %arg2[%225, %c0_69, %c0_70] : memref<8x8x512xf32, #tpu.memory_space<vmem>>, vector<1x8x512xf32>
    %227 = vector.shape_cast %226 : vector<1x8x512xf32> to vector<8x512xf32>
    %cst_71 = arith.constant dense<0.000000e+00> : vector<8x512xf32>
    %228 = tpu.matmul %209, %4, %cst_71 {dimension_numbers = #tpu.dot_dimension_numbers<[1], [0], [0], [1], [0, 0, 1, 1], [], []>} : vector<8x128xf32>, vector<128x512xf32>, vector<8x512xf32> -> vector<8x512xf32>
    %229 = arith.addf %227, %228 : vector<8x512xf32>
    %230 = vector.extract_strided_slice %223 {offsets = [0, 0], sizes = [8, 128], strides = [1, 1]} : vector<8x512xf32> to vector<8x128xf32>
    %231 = arith.negf %230 : vector<8x128xf32>
    %232 = math.exp %231 : vector<8x128xf32>
    %cst_72 = arith.constant 1.000000e+00 : f32
    %233 = vector.broadcast %cst_72 : f32 to vector<8x128xf32>
    %234 = arith.addf %233, %232 : vector<8x128xf32>
    %235 = arith.divf %233, %234 : vector<8x128xf32>
    %236 = vector.extract_strided_slice %223 {offsets = [0, 128], sizes = [8, 128], strides = [1, 1]} : vector<8x512xf32> to vector<8x128xf32>
    %237 = arith.negf %236 : vector<8x128xf32>
    %238 = math.exp %237 : vector<8x128xf32>
    %cst_73 = arith.constant 1.000000e+00 : f32
    %239 = vector.broadcast %cst_73 : f32 to vector<8x128xf32>
    %240 = arith.addf %239, %238 : vector<8x128xf32>
    %241 = arith.divf %239, %240 : vector<8x128xf32>
    %242 = vector.extract_strided_slice %223 {offsets = [0, 256], sizes = [8, 128], strides = [1, 1]} : vector<8x512xf32> to vector<8x128xf32>
    %243 = math.tanh %242 : vector<8x128xf32>
    %244 = vector.extract_strided_slice %223 {offsets = [0, 384], sizes = [8, 128], strides = [1, 1]} : vector<8x512xf32> to vector<8x128xf32>
    %245 = arith.negf %244 : vector<8x128xf32>
    %246 = math.exp %245 : vector<8x128xf32>
    %cst_74 = arith.constant 1.000000e+00 : f32
    %247 = vector.broadcast %cst_74 : f32 to vector<8x128xf32>
    %248 = arith.addf %247, %246 : vector<8x128xf32>
    %249 = arith.divf %247, %248 : vector<8x128xf32>
    %250 = arith.mulf %241, %182 : vector<8x128xf32>
    %251 = arith.mulf %235, %243 : vector<8x128xf32>
    %252 = arith.addf %250, %251 : vector<8x128xf32>
    %253 = math.tanh %252 : vector<8x128xf32>
    %254 = arith.mulf %249, %253 : vector<8x128xf32>
    %255 = vector.extract_strided_slice %229 {offsets = [0, 0], sizes = [8, 128], strides = [1, 1]} : vector<8x512xf32> to vector<8x128xf32>
    %256 = arith.negf %255 : vector<8x128xf32>
    %257 = math.exp %256 : vector<8x128xf32>
    %cst_75 = arith.constant 1.000000e+00 : f32
    %258 = vector.broadcast %cst_75 : f32 to vector<8x128xf32>
    %259 = arith.addf %258, %257 : vector<8x128xf32>
    %260 = arith.divf %258, %259 : vector<8x128xf32>
    %261 = vector.extract_strided_slice %229 {offsets = [0, 128], sizes = [8, 128], strides = [1, 1]} : vector<8x512xf32> to vector<8x128xf32>
    %262 = arith.negf %261 : vector<8x128xf32>
    %263 = math.exp %262 : vector<8x128xf32>
    %cst_76 = arith.constant 1.000000e+00 : f32
    %264 = vector.broadcast %cst_76 : f32 to vector<8x128xf32>
    %265 = arith.addf %264, %263 : vector<8x128xf32>
    %266 = arith.divf %264, %265 : vector<8x128xf32>
    %267 = vector.extract_strided_slice %229 {offsets = [0, 256], sizes = [8, 128], strides = [1, 1]} : vector<8x512xf32> to vector<8x128xf32>
    %268 = math.tanh %267 : vector<8x128xf32>
    %269 = vector.extract_strided_slice %229 {offsets = [0, 384], sizes = [8, 128], strides = [1, 1]} : vector<8x512xf32> to vector<8x128xf32>
    %270 = arith.negf %269 : vector<8x128xf32>
    %271 = math.exp %270 : vector<8x128xf32>
    %cst_77 = arith.constant 1.000000e+00 : f32
    %272 = vector.broadcast %cst_77 : f32 to vector<8x128xf32>
    %273 = arith.addf %272, %271 : vector<8x128xf32>
    %274 = arith.divf %272, %273 : vector<8x128xf32>
    %275 = arith.mulf %266, %207 : vector<8x128xf32>
    %276 = arith.mulf %260, %268 : vector<8x128xf32>
    %277 = arith.addf %275, %276 : vector<8x128xf32>
    %278 = math.tanh %277 : vector<8x128xf32>
    %279 = arith.mulf %274, %278 : vector<8x128xf32>
    %280 = arith.index_cast %c3_i32 : i32 to index
    %c0_78 = arith.constant 0 : index
    %c0_79 = arith.constant 0 : index
    %281 = vector.load %arg5[%280, %c0_78, %c0_79] : memref<8x8x128xf32, #tpu.memory_space<vmem>>, vector<1x8x128xf32>
    %282 = vector.shape_cast %281 : vector<1x8x128xf32> to vector<8x128xf32>
    %283 = vector.shape_cast %254 : vector<8x128xf32> to vector<1x8x128xf32>
    tpu.vector_store %arg5[%280, %c0_78, %c0_79], %283 {strides = array<i32>} : memref<8x8x128xf32, #tpu.memory_space<vmem>>, vector<1x8x128xf32>,
    %c7_i32_80 = arith.constant 7 : i32
    %284 = arith.subi %c7_i32_80, %c3_i32 : i32
    %285 = arith.index_cast %284 : i32 to index
    %c0_81 = arith.constant 0 : index
    %c0_82 = arith.constant 0 : index
    %286 = vector.load %arg6[%285, %c0_81, %c0_82] : memref<8x8x128xf32, #tpu.memory_space<vmem>>, vector<1x8x128xf32>
    %287 = vector.shape_cast %286 : vector<1x8x128xf32> to vector<8x128xf32>
    %288 = vector.shape_cast %279 : vector<8x128xf32> to vector<1x8x128xf32>
    tpu.vector_store %arg6[%285, %c0_81, %c0_82], %288 {strides = array<i32>} : memref<8x8x128xf32, #tpu.memory_space<vmem>>, vector<1x8x128xf32>,
    %c4_i32 = arith.constant 4 : i32
    %289 = arith.index_cast %c4_i32 : i32 to index
    %c0_83 = arith.constant 0 : index
    %c0_84 = arith.constant 0 : index
    %290 = vector.load %arg1[%289, %c0_83, %c0_84] : memref<8x8x512xf32, #tpu.memory_space<vmem>>, vector<1x8x512xf32>
    %291 = vector.shape_cast %290 : vector<1x8x512xf32> to vector<8x512xf32>
    %cst_85 = arith.constant dense<0.000000e+00> : vector<8x512xf32>
    %292 = tpu.matmul %254, %3, %cst_85 {dimension_numbers = #tpu.dot_dimension_numbers<[1], [0], [0], [1], [0, 0, 1, 1], [], []>} : vector<8x128xf32>, vector<128x512xf32>, vector<8x512xf32> -> vector<8x512xf32>
    %293 = arith.addf %291, %292 : vector<8x512xf32>
    %c7_i32_86 = arith.constant 7 : i32
    %294 = arith.subi %c7_i32_86, %c4_i32 : i32
    %295 = arith.index_cast %294 : i32 to index
    %c0_87 = arith.constant 0 : index
    %c0_88 = arith.constant 0 : index
    %296 = vector.load %arg2[%295, %c0_87, %c0_88] : memref<8x8x512xf32, #tpu.memory_space<vmem>>, vector<1x8x512xf32>
    %297 = vector.shape_cast %296 : vector<1x8x512xf32> to vector<8x512xf32>
    %cst_89 = arith.constant dense<0.000000e+00> : vector<8x512xf32>
    %298 = tpu.matmul %279, %4, %cst_89 {dimension_numbers = #tpu.dot_dimension_numbers<[1], [0], [0], [1], [0, 0, 1, 1], [], []>} : vector<8x128xf32>, vector<128x512xf32>, vector<8x512xf32> -> vector<8x512xf32>
    %299 = arith.addf %297, %298 : vector<8x512xf32>
    %300 = vector.extract_strided_slice %293 {offsets = [0, 0], sizes = [8, 128], strides = [1, 1]} : vector<8x512xf32> to vector<8x128xf32>
    %301 = arith.negf %300 : vector<8x128xf32>
    %302 = math.exp %301 : vector<8x128xf32>
    %cst_90 = arith.constant 1.000000e+00 : f32
    %303 = vector.broadcast %cst_90 : f32 to vector<8x128xf32>
    %304 = arith.addf %303, %302 : vector<8x128xf32>
    %305 = arith.divf %303, %304 : vector<8x128xf32>
    %306 = vector.extract_strided_slice %293 {offsets = [0, 128], sizes = [8, 128], strides = [1, 1]} : vector<8x512xf32> to vector<8x128xf32>
    %307 = arith.negf %306 : vector<8x128xf32>
    %308 = math.exp %307 : vector<8x128xf32>
    %cst_91 = arith.constant 1.000000e+00 : f32
    %309 = vector.broadcast %cst_91 : f32 to vector<8x128xf32>
    %310 = arith.addf %309, %308 : vector<8x128xf32>
    %311 = arith.divf %309, %310 : vector<8x128xf32>
    %312 = vector.extract_strided_slice %293 {offsets = [0, 256], sizes = [8, 128], strides = [1, 1]} : vector<8x512xf32> to vector<8x128xf32>
    %313 = math.tanh %312 : vector<8x128xf32>
    %314 = vector.extract_strided_slice %293 {offsets = [0, 384], sizes = [8, 128], strides = [1, 1]} : vector<8x512xf32> to vector<8x128xf32>
    %315 = arith.negf %314 : vector<8x128xf32>
    %316 = math.exp %315 : vector<8x128xf32>
    %cst_92 = arith.constant 1.000000e+00 : f32
    %317 = vector.broadcast %cst_92 : f32 to vector<8x128xf32>
    %318 = arith.addf %317, %316 : vector<8x128xf32>
    %319 = arith.divf %317, %318 : vector<8x128xf32>
    %320 = arith.mulf %311, %252 : vector<8x128xf32>
    %321 = arith.mulf %305, %313 : vector<8x128xf32>
    %322 = arith.addf %320, %321 : vector<8x128xf32>
    %323 = math.tanh %322 : vector<8x128xf32>
    %324 = arith.mulf %319, %323 : vector<8x128xf32>
    %325 = vector.extract_strided_slice %299 {offsets = [0, 0], sizes = [8, 128], strides = [1, 1]} : vector<8x512xf32> to vector<8x128xf32>
    %326 = arith.negf %325 : vector<8x128xf32>
    %327 = math.exp %326 : vector<8x128xf32>
    %cst_93 = arith.constant 1.000000e+00 : f32
    %328 = vector.broadcast %cst_93 : f32 to vector<8x128xf32>
    %329 = arith.addf %328, %327 : vector<8x128xf32>
    %330 = arith.divf %328, %329 : vector<8x128xf32>
    %331 = vector.extract_strided_slice %299 {offsets = [0, 128], sizes = [8, 128], strides = [1, 1]} : vector<8x512xf32> to vector<8x128xf32>
    %332 = arith.negf %331 : vector<8x128xf32>
    %333 = math.exp %332 : vector<8x128xf32>
    %cst_94 = arith.constant 1.000000e+00 : f32
    %334 = vector.broadcast %cst_94 : f32 to vector<8x128xf32>
    %335 = arith.addf %334, %333 : vector<8x128xf32>
    %336 = arith.divf %334, %335 : vector<8x128xf32>
    %337 = vector.extract_strided_slice %299 {offsets = [0, 256], sizes = [8, 128], strides = [1, 1]} : vector<8x512xf32> to vector<8x128xf32>
    %338 = math.tanh %337 : vector<8x128xf32>
    %339 = vector.extract_strided_slice %299 {offsets = [0, 384], sizes = [8, 128], strides = [1, 1]} : vector<8x512xf32> to vector<8x128xf32>
    %340 = arith.negf %339 : vector<8x128xf32>
    %341 = math.exp %340 : vector<8x128xf32>
    %cst_95 = arith.constant 1.000000e+00 : f32
    %342 = vector.broadcast %cst_95 : f32 to vector<8x128xf32>
    %343 = arith.addf %342, %341 : vector<8x128xf32>
    %344 = arith.divf %342, %343 : vector<8x128xf32>
    %345 = arith.mulf %336, %277 : vector<8x128xf32>
    %346 = arith.mulf %330, %338 : vector<8x128xf32>
    %347 = arith.addf %345, %346 : vector<8x128xf32>
    %348 = math.tanh %347 : vector<8x128xf32>
    %349 = arith.mulf %344, %348 : vector<8x128xf32>
    %350 = arith.index_cast %c4_i32 : i32 to index
    %c0_96 = arith.constant 0 : index
    %c0_97 = arith.constant 0 : index
    %351 = vector.load %arg5[%350, %c0_96, %c0_97] : memref<8x8x128xf32, #tpu.memory_space<vmem>>, vector<1x8x128xf32>
    %352 = vector.shape_cast %351 : vector<1x8x128xf32> to vector<8x128xf32>
    %353 = vector.shape_cast %324 : vector<8x128xf32> to vector<1x8x128xf32>
    tpu.vector_store %arg5[%350, %c0_96, %c0_97], %353 {strides = array<i32>} : memref<8x8x128xf32, #tpu.memory_space<vmem>>, vector<1x8x128xf32>,
    %c7_i32_98 = arith.constant 7 : i32
    %354 = arith.subi %c7_i32_98, %c4_i32 : i32
    %355 = arith.index_cast %354 : i32 to index
    %c0_99 = arith.constant 0 : index
    %c0_100 = arith.constant 0 : index
    %356 = vector.load %arg6[%355, %c0_99, %c0_100] : memref<8x8x128xf32, #tpu.memory_space<vmem>>, vector<1x8x128xf32>
    %357 = vector.shape_cast %356 : vector<1x8x128xf32> to vector<8x128xf32>
    %358 = vector.shape_cast %349 : vector<8x128xf32> to vector<1x8x128xf32>
    tpu.vector_store %arg6[%355, %c0_99, %c0_100], %358 {strides = array<i32>} : memref<8x8x128xf32, #tpu.memory_space<vmem>>, vector<1x8x128xf32>,
    %c5_i32 = arith.constant 5 : i32
    %359 = arith.index_cast %c5_i32 : i32 to index
    %c0_101 = arith.constant 0 : index
    %c0_102 = arith.constant 0 : index
    %360 = vector.load %arg1[%359, %c0_101, %c0_102] : memref<8x8x512xf32, #tpu.memory_space<vmem>>, vector<1x8x512xf32>
    %361 = vector.shape_cast %360 : vector<1x8x512xf32> to vector<8x512xf32>
    %cst_103 = arith.constant dense<0.000000e+00> : vector<8x512xf32>
    %362 = tpu.matmul %324, %3, %cst_103 {dimension_numbers = #tpu.dot_dimension_numbers<[1], [0], [0], [1], [0, 0, 1, 1], [], []>} : vector<8x128xf32>, vector<128x512xf32>, vector<8x512xf32> -> vector<8x512xf32>
    %363 = arith.addf %361, %362 : vector<8x512xf32>
    %c7_i32_104 = arith.constant 7 : i32
    %364 = arith.subi %c7_i32_104, %c5_i32 : i32
    %365 = arith.index_cast %364 : i32 to index
    %c0_105 = arith.constant 0 : index
    %c0_106 = arith.constant 0 : index
    %366 = vector.load %arg2[%365, %c0_105, %c0_106] : memref<8x8x512xf32, #tpu.memory_space<vmem>>, vector<1x8x512xf32>
    %367 = vector.shape_cast %366 : vector<1x8x512xf32> to vector<8x512xf32>
    %cst_107 = arith.constant dense<0.000000e+00> : vector<8x512xf32>
    %368 = tpu.matmul %349, %4, %cst_107 {dimension_numbers = #tpu.dot_dimension_numbers<[1], [0], [0], [1], [0, 0, 1, 1], [], []>} : vector<8x128xf32>, vector<128x512xf32>, vector<8x512xf32> -> vector<8x512xf32>
    %369 = arith.addf %367, %368 : vector<8x512xf32>
    %370 = vector.extract_strided_slice %363 {offsets = [0, 0], sizes = [8, 128], strides = [1, 1]} : vector<8x512xf32> to vector<8x128xf32>
    %371 = arith.negf %370 : vector<8x128xf32>
    %372 = math.exp %371 : vector<8x128xf32>
    %cst_108 = arith.constant 1.000000e+00 : f32
    %373 = vector.broadcast %cst_108 : f32 to vector<8x128xf32>
    %374 = arith.addf %373, %372 : vector<8x128xf32>
    %375 = arith.divf %373, %374 : vector<8x128xf32>
    %376 = vector.extract_strided_slice %363 {offsets = [0, 128], sizes = [8, 128], strides = [1, 1]} : vector<8x512xf32> to vector<8x128xf32>
    %377 = arith.negf %376 : vector<8x128xf32>
    %378 = math.exp %377 : vector<8x128xf32>
    %cst_109 = arith.constant 1.000000e+00 : f32
    %379 = vector.broadcast %cst_109 : f32 to vector<8x128xf32>
    %380 = arith.addf %379, %378 : vector<8x128xf32>
    %381 = arith.divf %379, %380 : vector<8x128xf32>
    %382 = vector.extract_strided_slice %363 {offsets = [0, 256], sizes = [8, 128], strides = [1, 1]} : vector<8x512xf32> to vector<8x128xf32>
    %383 = math.tanh %382 : vector<8x128xf32>
    %384 = vector.extract_strided_slice %363 {offsets = [0, 384], sizes = [8, 128], strides = [1, 1]} : vector<8x512xf32> to vector<8x128xf32>
    %385 = arith.negf %384 : vector<8x128xf32>
    %386 = math.exp %385 : vector<8x128xf32>
    %cst_110 = arith.constant 1.000000e+00 : f32
    %387 = vector.broadcast %cst_110 : f32 to vector<8x128xf32>
    %388 = arith.addf %387, %386 : vector<8x128xf32>
    %389 = arith.divf %387, %388 : vector<8x128xf32>
    %390 = arith.mulf %381, %322 : vector<8x128xf32>
    %391 = arith.mulf %375, %383 : vector<8x128xf32>
    %392 = arith.addf %390, %391 : vector<8x128xf32>
    %393 = math.tanh %392 : vector<8x128xf32>
    %394 = arith.mulf %389, %393 : vector<8x128xf32>
    %395 = vector.extract_strided_slice %369 {offsets = [0, 0], sizes = [8, 128], strides = [1, 1]} : vector<8x512xf32> to vector<8x128xf32>
    %396 = arith.negf %395 : vector<8x128xf32>
    %397 = math.exp %396 : vector<8x128xf32>
    %cst_111 = arith.constant 1.000000e+00 : f32
    %398 = vector.broadcast %cst_111 : f32 to vector<8x128xf32>
    %399 = arith.addf %398, %397 : vector<8x128xf32>
    %400 = arith.divf %398, %399 : vector<8x128xf32>
    %401 = vector.extract_strided_slice %369 {offsets = [0, 128], sizes = [8, 128], strides = [1, 1]} : vector<8x512xf32> to vector<8x128xf32>
    %402 = arith.negf %401 : vector<8x128xf32>
    %403 = math.exp %402 : vector<8x128xf32>
    %cst_112 = arith.constant 1.000000e+00 : f32
    %404 = vector.broadcast %cst_112 : f32 to vector<8x128xf32>
    %405 = arith.addf %404, %403 : vector<8x128xf32>
    %406 = arith.divf %404, %405 : vector<8x128xf32>
    %407 = vector.extract_strided_slice %369 {offsets = [0, 256], sizes = [8, 128], strides = [1, 1]} : vector<8x512xf32> to vector<8x128xf32>
    %408 = math.tanh %407 : vector<8x128xf32>
    %409 = vector.extract_strided_slice %369 {offsets = [0, 384], sizes = [8, 128], strides = [1, 1]} : vector<8x512xf32> to vector<8x128xf32>
    %410 = arith.negf %409 : vector<8x128xf32>
    %411 = math.exp %410 : vector<8x128xf32>
    %cst_113 = arith.constant 1.000000e+00 : f32
    %412 = vector.broadcast %cst_113 : f32 to vector<8x128xf32>
    %413 = arith.addf %412, %411 : vector<8x128xf32>
    %414 = arith.divf %412, %413 : vector<8x128xf32>
    %415 = arith.mulf %406, %347 : vector<8x128xf32>
    %416 = arith.mulf %400, %408 : vector<8x128xf32>
    %417 = arith.addf %415, %416 : vector<8x128xf32>
    %418 = math.tanh %417 : vector<8x128xf32>
    %419 = arith.mulf %414, %418 : vector<8x128xf32>
    %420 = arith.index_cast %c5_i32 : i32 to index
    %c0_114 = arith.constant 0 : index
    %c0_115 = arith.constant 0 : index
    %421 = vector.load %arg5[%420, %c0_114, %c0_115] : memref<8x8x128xf32, #tpu.memory_space<vmem>>, vector<1x8x128xf32>
    %422 = vector.shape_cast %421 : vector<1x8x128xf32> to vector<8x128xf32>
    %423 = vector.shape_cast %394 : vector<8x128xf32> to vector<1x8x128xf32>
    tpu.vector_store %arg5[%420, %c0_114, %c0_115], %423 {strides = array<i32>} : memref<8x8x128xf32, #tpu.memory_space<vmem>>, vector<1x8x128xf32>,
    %c7_i32_116 = arith.constant 7 : i32
    %424 = arith.subi %c7_i32_116, %c5_i32 : i32
    %425 = arith.index_cast %424 : i32 to index
    %c0_117 = arith.constant 0 : index
    %c0_118 = arith.constant 0 : index
    %426 = vector.load %arg6[%425, %c0_117, %c0_118] : memref<8x8x128xf32, #tpu.memory_space<vmem>>, vector<1x8x128xf32>
    %427 = vector.shape_cast %426 : vector<1x8x128xf32> to vector<8x128xf32>
    %428 = vector.shape_cast %419 : vector<8x128xf32> to vector<1x8x128xf32>
    tpu.vector_store %arg6[%425, %c0_117, %c0_118], %428 {strides = array<i32>} : memref<8x8x128xf32, #tpu.memory_space<vmem>>, vector<1x8x128xf32>,
    %c6_i32 = arith.constant 6 : i32
    %429 = arith.index_cast %c6_i32 : i32 to index
    %c0_119 = arith.constant 0 : index
    %c0_120 = arith.constant 0 : index
    %430 = vector.load %arg1[%429, %c0_119, %c0_120] : memref<8x8x512xf32, #tpu.memory_space<vmem>>, vector<1x8x512xf32>
    %431 = vector.shape_cast %430 : vector<1x8x512xf32> to vector<8x512xf32>
    %cst_121 = arith.constant dense<0.000000e+00> : vector<8x512xf32>
    %432 = tpu.matmul %394, %3, %cst_121 {dimension_numbers = #tpu.dot_dimension_numbers<[1], [0], [0], [1], [0, 0, 1, 1], [], []>} : vector<8x128xf32>, vector<128x512xf32>, vector<8x512xf32> -> vector<8x512xf32>
    %433 = arith.addf %431, %432 : vector<8x512xf32>
    %c7_i32_122 = arith.constant 7 : i32
    %434 = arith.subi %c7_i32_122, %c6_i32 : i32
    %435 = arith.index_cast %434 : i32 to index
    %c0_123 = arith.constant 0 : index
    %c0_124 = arith.constant 0 : index
    %436 = vector.load %arg2[%435, %c0_123, %c0_124] : memref<8x8x512xf32, #tpu.memory_space<vmem>>, vector<1x8x512xf32>
    %437 = vector.shape_cast %436 : vector<1x8x512xf32> to vector<8x512xf32>
    %cst_125 = arith.constant dense<0.000000e+00> : vector<8x512xf32>
    %438 = tpu.matmul %419, %4, %cst_125 {dimension_numbers = #tpu.dot_dimension_numbers<[1], [0], [0], [1], [0, 0, 1, 1], [], []>} : vector<8x128xf32>, vector<128x512xf32>, vector<8x512xf32> -> vector<8x512xf32>
    %439 = arith.addf %437, %438 : vector<8x512xf32>
    %440 = vector.extract_strided_slice %433 {offsets = [0, 0], sizes = [8, 128], strides = [1, 1]} : vector<8x512xf32> to vector<8x128xf32>
    %441 = arith.negf %440 : vector<8x128xf32>
    %442 = math.exp %441 : vector<8x128xf32>
    %cst_126 = arith.constant 1.000000e+00 : f32
    %443 = vector.broadcast %cst_126 : f32 to vector<8x128xf32>
    %444 = arith.addf %443, %442 : vector<8x128xf32>
    %445 = arith.divf %443, %444 : vector<8x128xf32>
    %446 = vector.extract_strided_slice %433 {offsets = [0, 128], sizes = [8, 128], strides = [1, 1]} : vector<8x512xf32> to vector<8x128xf32>
    %447 = arith.negf %446 : vector<8x128xf32>
    %448 = math.exp %447 : vector<8x128xf32>
    %cst_127 = arith.constant 1.000000e+00 : f32
    %449 = vector.broadcast %cst_127 : f32 to vector<8x128xf32>
    %450 = arith.addf %449, %448 : vector<8x128xf32>
    %451 = arith.divf %449, %450 : vector<8x128xf32>
    %452 = vector.extract_strided_slice %433 {offsets = [0, 256], sizes = [8, 128], strides = [1, 1]} : vector<8x512xf32> to vector<8x128xf32>
    %453 = math.tanh %452 : vector<8x128xf32>
    %454 = vector.extract_strided_slice %433 {offsets = [0, 384], sizes = [8, 128], strides = [1, 1]} : vector<8x512xf32> to vector<8x128xf32>
    %455 = arith.negf %454 : vector<8x128xf32>
    %456 = math.exp %455 : vector<8x128xf32>
    %cst_128 = arith.constant 1.000000e+00 : f32
    %457 = vector.broadcast %cst_128 : f32 to vector<8x128xf32>
    %458 = arith.addf %457, %456 : vector<8x128xf32>
    %459 = arith.divf %457, %458 : vector<8x128xf32>
    %460 = arith.mulf %451, %392 : vector<8x128xf32>
    %461 = arith.mulf %445, %453 : vector<8x128xf32>
    %462 = arith.addf %460, %461 : vector<8x128xf32>
    %463 = math.tanh %462 : vector<8x128xf32>
    %464 = arith.mulf %459, %463 : vector<8x128xf32>
    %465 = vector.extract_strided_slice %439 {offsets = [0, 0], sizes = [8, 128], strides = [1, 1]} : vector<8x512xf32> to vector<8x128xf32>
    %466 = arith.negf %465 : vector<8x128xf32>
    %467 = math.exp %466 : vector<8x128xf32>
    %cst_129 = arith.constant 1.000000e+00 : f32
    %468 = vector.broadcast %cst_129 : f32 to vector<8x128xf32>
    %469 = arith.addf %468, %467 : vector<8x128xf32>
    %470 = arith.divf %468, %469 : vector<8x128xf32>
    %471 = vector.extract_strided_slice %439 {offsets = [0, 128], sizes = [8, 128], strides = [1, 1]} : vector<8x512xf32> to vector<8x128xf32>
    %472 = arith.negf %471 : vector<8x128xf32>
    %473 = math.exp %472 : vector<8x128xf32>
    %cst_130 = arith.constant 1.000000e+00 : f32
    %474 = vector.broadcast %cst_130 : f32 to vector<8x128xf32>
    %475 = arith.addf %474, %473 : vector<8x128xf32>
    %476 = arith.divf %474, %475 : vector<8x128xf32>
    %477 = vector.extract_strided_slice %439 {offsets = [0, 256], sizes = [8, 128], strides = [1, 1]} : vector<8x512xf32> to vector<8x128xf32>
    %478 = math.tanh %477 : vector<8x128xf32>
    %479 = vector.extract_strided_slice %439 {offsets = [0, 384], sizes = [8, 128], strides = [1, 1]} : vector<8x512xf32> to vector<8x128xf32>
    %480 = arith.negf %479 : vector<8x128xf32>
    %481 = math.exp %480 : vector<8x128xf32>
    %cst_131 = arith.constant 1.000000e+00 : f32
    %482 = vector.broadcast %cst_131 : f32 to vector<8x128xf32>
    %483 = arith.addf %482, %481 : vector<8x128xf32>
    %484 = arith.divf %482, %483 : vector<8x128xf32>
    %485 = arith.mulf %476, %417 : vector<8x128xf32>
    %486 = arith.mulf %470, %478 : vector<8x128xf32>
    %487 = arith.addf %485, %486 : vector<8x128xf32>
    %488 = math.tanh %487 : vector<8x128xf32>
    %489 = arith.mulf %484, %488 : vector<8x128xf32>
    %490 = arith.index_cast %c6_i32 : i32 to index
    %c0_132 = arith.constant 0 : index
    %c0_133 = arith.constant 0 : index
    %491 = vector.load %arg5[%490, %c0_132, %c0_133] : memref<8x8x128xf32, #tpu.memory_space<vmem>>, vector<1x8x128xf32>
    %492 = vector.shape_cast %491 : vector<1x8x128xf32> to vector<8x128xf32>
    %493 = vector.shape_cast %464 : vector<8x128xf32> to vector<1x8x128xf32>
    tpu.vector_store %arg5[%490, %c0_132, %c0_133], %493 {strides = array<i32>} : memref<8x8x128xf32, #tpu.memory_space<vmem>>, vector<1x8x128xf32>,
    %c7_i32_134 = arith.constant 7 : i32
    %494 = arith.subi %c7_i32_134, %c6_i32 : i32
    %495 = arith.index_cast %494 : i32 to index
    %c0_135 = arith.constant 0 : index
    %c0_136 = arith.constant 0 : index
    %496 = vector.load %arg6[%495, %c0_135, %c0_136] : memref<8x8x128xf32, #tpu.memory_space<vmem>>, vector<1x8x128xf32>
    %497 = vector.shape_cast %496 : vector<1x8x128xf32> to vector<8x128xf32>
    %498 = vector.shape_cast %489 : vector<8x128xf32> to vector<1x8x128xf32>
    tpu.vector_store %arg6[%495, %c0_135, %c0_136], %498 {strides = array<i32>} : memref<8x8x128xf32, #tpu.memory_space<vmem>>, vector<1x8x128xf32>,
    %c7_i32_137 = arith.constant 7 : i32
    %499 = arith.index_cast %c7_i32_137 : i32 to index
    %c0_138 = arith.constant 0 : index
    %c0_139 = arith.constant 0 : index
    %500 = vector.load %arg1[%499, %c0_138, %c0_139] : memref<8x8x512xf32, #tpu.memory_space<vmem>>, vector<1x8x512xf32>
    %501 = vector.shape_cast %500 : vector<1x8x512xf32> to vector<8x512xf32>
    %cst_140 = arith.constant dense<0.000000e+00> : vector<8x512xf32>
    %502 = tpu.matmul %464, %3, %cst_140 {dimension_numbers = #tpu.dot_dimension_numbers<[1], [0], [0], [1], [0, 0, 1, 1], [], []>} : vector<8x128xf32>, vector<128x512xf32>, vector<8x512xf32> -> vector<8x512xf32>
    %503 = arith.addf %501, %502 : vector<8x512xf32>
    %c7_i32_141 = arith.constant 7 : i32
    %504 = arith.subi %c7_i32_141, %c7_i32_137 : i32
    %505 = arith.index_cast %504 : i32 to index
    %c0_142 = arith.constant 0 : index
    %c0_143 = arith.constant 0 : index
    %506 = vector.load %arg2[%505, %c0_142, %c0_143] : memref<8x8x512xf32, #tpu.memory_space<vmem>>, vector<1x8x512xf32>
    %507 = vector.shape_cast %506 : vector<1x8x512xf32> to vector<8x512xf32>
    %cst_144 = arith.constant dense<0.000000e+00> : vector<8x512xf32>
    %508 = tpu.matmul %489, %4, %cst_144 {dimension_numbers = #tpu.dot_dimension_numbers<[1], [0], [0], [1], [0, 0, 1, 1], [], []>} : vector<8x128xf32>, vector<128x512xf32>, vector<8x512xf32> -> vector<8x512xf32>
    %509 = arith.addf %507, %508 : vector<8x512xf32>
    %510 = vector.extract_strided_slice %503 {offsets = [0, 0], sizes = [8, 128], strides = [1, 1]} : vector<8x512xf32> to vector<8x128xf32>
    %511 = arith.negf %510 : vector<8x128xf32>
    %512 = math.exp %511 : vector<8x128xf32>
    %cst_145 = arith.constant 1.000000e+00 : f32
    %513 = vector.broadcast %cst_145 : f32 to vector<8x128xf32>
    %514 = arith.addf %513, %512 : vector<8x128xf32>
    %515 = arith.divf %513, %514 : vector<8x128xf32>
    %516 = vector.extract_strided_slice %503 {offsets = [0, 128], sizes = [8, 128], strides = [1, 1]} : vector<8x512xf32> to vector<8x128xf32>
    %517 = arith.negf %516 : vector<8x128xf32>
    %518 = math.exp %517 : vector<8x128xf32>
    %cst_146 = arith.constant 1.000000e+00 : f32
    %519 = vector.broadcast %cst_146 : f32 to vector<8x128xf32>
    %520 = arith.addf %519, %518 : vector<8x128xf32>
    %521 = arith.divf %519, %520 : vector<8x128xf32>
    %522 = vector.extract_strided_slice %503 {offsets = [0, 256], sizes = [8, 128], strides = [1, 1]} : vector<8x512xf32> to vector<8x128xf32>
    %523 = math.tanh %522 : vector<8x128xf32>
    %524 = vector.extract_strided_slice %503 {offsets = [0, 384], sizes = [8, 128], strides = [1, 1]} : vector<8x512xf32> to vector<8x128xf32>
    %525 = arith.negf %524 : vector<8x128xf32>
    %526 = math.exp %525 : vector<8x128xf32>
    %cst_147 = arith.constant 1.000000e+00 : f32
    %527 = vector.broadcast %cst_147 : f32 to vector<8x128xf32>
    %528 = arith.addf %527, %526 : vector<8x128xf32>
    %529 = arith.divf %527, %528 : vector<8x128xf32>
    %530 = arith.mulf %521, %462 : vector<8x128xf32>
    %531 = arith.mulf %515, %523 : vector<8x128xf32>
    %532 = arith.addf %530, %531 : vector<8x128xf32>
    %533 = math.tanh %532 : vector<8x128xf32>
    %534 = arith.mulf %529, %533 : vector<8x128xf32>
    %535 = vector.extract_strided_slice %509 {offsets = [0, 0], sizes = [8, 128], strides = [1, 1]} : vector<8x512xf32> to vector<8x128xf32>
    %536 = arith.negf %535 : vector<8x128xf32>
    %537 = math.exp %536 : vector<8x128xf32>
    %cst_148 = arith.constant 1.000000e+00 : f32
    %538 = vector.broadcast %cst_148 : f32 to vector<8x128xf32>
    %539 = arith.addf %538, %537 : vector<8x128xf32>
    %540 = arith.divf %538, %539 : vector<8x128xf32>
    %541 = vector.extract_strided_slice %509 {offsets = [0, 128], sizes = [8, 128], strides = [1, 1]} : vector<8x512xf32> to vector<8x128xf32>
    %542 = arith.negf %541 : vector<8x128xf32>
    %543 = math.exp %542 : vector<8x128xf32>
    %cst_149 = arith.constant 1.000000e+00 : f32
    %544 = vector.broadcast %cst_149 : f32 to vector<8x128xf32>
    %545 = arith.addf %544, %543 : vector<8x128xf32>
    %546 = arith.divf %544, %545 : vector<8x128xf32>
    %547 = vector.extract_strided_slice %509 {offsets = [0, 256], sizes = [8, 128], strides = [1, 1]} : vector<8x512xf32> to vector<8x128xf32>
    %548 = math.tanh %547 : vector<8x128xf32>
    %549 = vector.extract_strided_slice %509 {offsets = [0, 384], sizes = [8, 128], strides = [1, 1]} : vector<8x512xf32> to vector<8x128xf32>
    %550 = arith.negf %549 : vector<8x128xf32>
    %551 = math.exp %550 : vector<8x128xf32>
    %cst_150 = arith.constant 1.000000e+00 : f32
    %552 = vector.broadcast %cst_150 : f32 to vector<8x128xf32>
    %553 = arith.addf %552, %551 : vector<8x128xf32>
    %554 = arith.divf %552, %553 : vector<8x128xf32>
    %555 = arith.mulf %546, %487 : vector<8x128xf32>
    %556 = arith.mulf %540, %548 : vector<8x128xf32>
    %557 = arith.addf %555, %556 : vector<8x128xf32>
    %558 = math.tanh %557 : vector<8x128xf32>
    %559 = arith.mulf %554, %558 : vector<8x128xf32>
    %560 = arith.index_cast %c7_i32_137 : i32 to index
    %c0_151 = arith.constant 0 : index
    %c0_152 = arith.constant 0 : index
    %561 = vector.load %arg5[%560, %c0_151, %c0_152] : memref<8x8x128xf32, #tpu.memory_space<vmem>>, vector<1x8x128xf32>
    %562 = vector.shape_cast %561 : vector<1x8x128xf32> to vector<8x128xf32>
    %563 = vector.shape_cast %534 : vector<8x128xf32> to vector<1x8x128xf32>
    tpu.vector_store %arg5[%560, %c0_151, %c0_152], %563 {strides = array<i32>} : memref<8x8x128xf32, #tpu.memory_space<vmem>>, vector<1x8x128xf32>,
    %c7_i32_153 = arith.constant 7 : i32
    %564 = arith.subi %c7_i32_153, %c7_i32_137 : i32
    %565 = arith.index_cast %564 : i32 to index
    %c0_154 = arith.constant 0 : index
    %c0_155 = arith.constant 0 : index
    %566 = vector.load %arg6[%565, %c0_154, %c0_155] : memref<8x8x128xf32, #tpu.memory_space<vmem>>, vector<1x8x128xf32>
    %567 = vector.shape_cast %566 : vector<1x8x128xf32> to vector<8x128xf32>
    %568 = vector.shape_cast %559 : vector<8x128xf32> to vector<1x8x128xf32>
    tpu.vector_store %arg6[%565, %c0_154, %c0_155], %568 {strides = array<i32>} : memref<8x8x128xf32, #tpu.memory_space<vmem>>, vector<1x8x128xf32>,
    %c8_i32 = arith.constant 8 : i32
    %c0_156 = arith.constant 0 : index
    %c0_157 = arith.constant 0 : index
    %569 = vector.load %arg7[%c0_156, %c0_157] : memref<8x128xf32, #tpu.memory_space<vmem>>, vector<8x128xf32>
    tpu.vector_store %arg7[%c0_156, %c0_157], %534 {strides = array<i32>} : memref<8x128xf32, #tpu.memory_space<vmem>>, vector<8x128xf32>,
    %c0_158 = arith.constant 0 : index
    %c0_159 = arith.constant 0 : index
    %570 = vector.load %arg8[%c0_158, %c0_159] : memref<8x128xf32, #tpu.memory_space<vmem>>, vector<8x128xf32>
    tpu.vector_store %arg8[%c0_158, %c0_159], %532 {strides = array<i32>} : memref<8x128xf32, #tpu.memory_space<vmem>>, vector<8x128xf32>,
    %c0_160 = arith.constant 0 : index
    %c0_161 = arith.constant 0 : index
    %571 = vector.load %arg9[%c0_160, %c0_161] : memref<8x128xf32, #tpu.memory_space<vmem>>, vector<8x128xf32>
    tpu.vector_store %arg9[%c0_160, %c0_161], %559 {strides = array<i32>} : memref<8x128xf32, #tpu.memory_space<vmem>>, vector<8x128xf32>,
    %c0_162 = arith.constant 0 : index
    %c0_163 = arith.constant 0 : index
    %572 = vector.load %arg10[%c0_162, %c0_163] : memref<8x128xf32, #tpu.memory_space<vmem>>, vector<8x128xf32>
    tpu.vector_store %arg10[%c0_162, %c0_163], %557 {strides = array<i32>} : memref<8x128xf32, #tpu.memory_space<vmem>>, vector<8x128xf32>,
    return
  }
  func.func @transform_0(%arg0: i32) -> (i32, i32, i32) {
    %c0_i32 = arith.constant 0 : i32
    %c0_i32_0 = arith.constant 0 : i32
    %c0_i32_1 = arith.constant 0 : i32
    return %arg0, %c0_i32, %c0_i32_0 : i32, i32, i32
  }
  func.func @transform_1(%arg0: i32) -> (i32, i32, i32) {
    %c0_i32 = arith.constant 0 : i32
    %0 = arith.subi %c0_i32, %arg0 : i32
    %c0_i32_0 = arith.constant 0 : i32
    %c0_i32_1 = arith.constant 0 : i32
    %c0_i32_2 = arith.constant 0 : i32
    return %0, %c0_i32_0, %c0_i32_1 : i32, i32, i32
  }
  func.func @transform_2(%arg0: i32) -> (i32, i32) {
    %c0_i32 = arith.constant 0 : i32
    %c0_i32_0 = arith.constant 0 : i32
    %c0_i32_1 = arith.constant 0 : i32
    return %c0_i32, %c0_i32_0 : i32, i32
  }
  func.func @transform_3(%arg0: i32) -> (i32, i32) {
    %c0_i32 = arith.constant 0 : i32
    %c0_i32_0 = arith.constant 0 : i32
    %c0_i32_1 = arith.constant 0 : i32
    return %c0_i32, %c0_i32_0 : i32, i32
  }
  func.func @transform_4(%arg0: i32) -> (i32, i32, i32) {
    %c0_i32 = arith.constant 0 : i32
    %c0_i32_0 = arith.constant 0 : i32
    %c0_i32_1 = arith.constant 0 : i32
    return %arg0, %c0_i32, %c0_i32_0 : i32, i32, i32
  }
  func.func @transform_5(%arg0: i32) -> (i32, i32, i32) {
    %c0_i32 = arith.constant 0 : i32
    %0 = arith.subi %c0_i32, %arg0 : i32
    %c0_i32_0 = arith.constant 0 : i32
    %c0_i32_1 = arith.constant 0 : i32
    %c0_i32_2 = arith.constant 0 : i32
    return %0, %c0_i32_0, %c0_i32_1 : i32, i32, i32
  }
}

module attributes {stable_mosaic.version = 11 : i64} {
  func.func @_bilstm_head_kernel(%arg0: i32, %arg1: memref<8x8x512xf32, #tpu.memory_space<vmem>>, %arg2: memref<8x8x512xf32, #tpu.memory_space<vmem>>, %arg3: memref<128x512xf32, #tpu.memory_space<vmem>>, %arg4: memref<128x512xf32, #tpu.memory_space<vmem>>, %arg5: memref<256x64xf32, #tpu.memory_space<vmem>>, %arg6: memref<1x64xf32, #tpu.memory_space<vmem>>, %arg7: memref<64x128xf32, #tpu.memory_space<vmem>>, %arg8: memref<1x128xf32, #tpu.memory_space<vmem>>, %arg9: memref<8x128xf32, #tpu.memory_space<vmem>>, %arg10: memref<8x128xf32, #tpu.memory_space<vmem>>, %arg11: memref<8x128xf32, #tpu.memory_space<vmem>>, %arg12: memref<8x128xf32, #tpu.memory_space<vmem>>, %arg13: memref<8x128xf32, #tpu.memory_space<vmem>>) attributes {dimension_semantics = [#tpu.dimension_semantics<arbitrary>], iteration_bounds = array<i64: 1>, scalar_prefetch = 0 : i64, scratch_operands = 4 : i64, tpu.core_type = #tpu.core_type<tc>, window_params = [{transform_indices = @transform_0, window_bounds = array<i64: 8, 8, 512>}, {transform_indices = @transform_1, window_bounds = array<i64: 8, 8, 512>}, {pipeline_mode = #tpu.pipeline_mode<synchronous>, transform_indices = @transform_2, window_bounds = array<i64: 128, 512>}, {pipeline_mode = #tpu.pipeline_mode<synchronous>, transform_indices = @transform_3, window_bounds = array<i64: 128, 512>}, {pipeline_mode = #tpu.pipeline_mode<synchronous>, transform_indices = @transform_4, window_bounds = array<i64: 256, 64>}, {pipeline_mode = #tpu.pipeline_mode<synchronous>, transform_indices = @transform_5, window_bounds = array<i64: 1, 64>}, {pipeline_mode = #tpu.pipeline_mode<synchronous>, transform_indices = @transform_6, window_bounds = array<i64: 64, 128>}, {pipeline_mode = #tpu.pipeline_mode<synchronous>, transform_indices = @transform_7, window_bounds = array<i64: 1, 128>}, {pipeline_mode = #tpu.pipeline_mode<synchronous>, transform_indices = @transform_8, window_bounds = array<i64: 8, 128>}]} {
    %c0_i32 = arith.constant 0 : i32
    %0 = arith.cmpi eq, %arg0, %c0_i32 : i32
    %1 = arith.extui %0 : i1 to i32
    %c0_i32_0 = arith.constant 0 : i32
    %2 = arith.cmpi ne, %1, %c0_i32_0 : i32
    scf.if %2 {
      %cst_126 = arith.constant 0.000000e+00 : f32
      %504 = vector.broadcast %cst_126 : f32 to vector<8x128xf32>
      %c0_127 = arith.constant 0 : index
      %c0_128 = arith.constant 0 : index
      %505 = vector.load %arg10[%c0_127, %c0_128] : memref<8x128xf32, #tpu.memory_space<vmem>>, vector<8x128xf32>
      tpu.vector_store %arg10[%c0_127, %c0_128], %504 {strides = array<i32>} : memref<8x128xf32, #tpu.memory_space<vmem>>, vector<8x128xf32>,
      %cst_129 = arith.constant 0.000000e+00 : f32
      %506 = vector.broadcast %cst_129 : f32 to vector<8x128xf32>
      %c0_130 = arith.constant 0 : index
      %c0_131 = arith.constant 0 : index
      %507 = vector.load %arg11[%c0_130, %c0_131] : memref<8x128xf32, #tpu.memory_space<vmem>>, vector<8x128xf32>
      tpu.vector_store %arg11[%c0_130, %c0_131], %506 {strides = array<i32>} : memref<8x128xf32, #tpu.memory_space<vmem>>, vector<8x128xf32>,
      %cst_132 = arith.constant 0.000000e+00 : f32
      %508 = vector.broadcast %cst_132 : f32 to vector<8x128xf32>
      %c0_133 = arith.constant 0 : index
      %c0_134 = arith.constant 0 : index
      %509 = vector.load %arg12[%c0_133, %c0_134] : memref<8x128xf32, #tpu.memory_space<vmem>>, vector<8x128xf32>
      tpu.vector_store %arg12[%c0_133, %c0_134], %508 {strides = array<i32>} : memref<8x128xf32, #tpu.memory_space<vmem>>, vector<8x128xf32>,
      %cst_135 = arith.constant 0.000000e+00 : f32
      %510 = vector.broadcast %cst_135 : f32 to vector<8x128xf32>
      %c0_136 = arith.constant 0 : index
      %c0_137 = arith.constant 0 : index
      %511 = vector.load %arg13[%c0_136, %c0_137] : memref<8x128xf32, #tpu.memory_space<vmem>>, vector<8x128xf32>
      tpu.vector_store %arg13[%c0_136, %c0_137], %510 {strides = array<i32>} : memref<8x128xf32, #tpu.memory_space<vmem>>, vector<8x128xf32>,
    } else {
    }
    %c0 = arith.constant 0 : index
    %c0_1 = arith.constant 0 : index
    %3 = vector.load %arg3[%c0, %c0_1] : memref<128x512xf32, #tpu.memory_space<vmem>>, vector<128x512xf32>
    %c0_2 = arith.constant 0 : index
    %c0_3 = arith.constant 0 : index
    %4 = vector.load %arg4[%c0_2, %c0_3] : memref<128x512xf32, #tpu.memory_space<vmem>>, vector<128x512xf32>
    %c0_4 = arith.constant 0 : index
    %c0_5 = arith.constant 0 : index
    %5 = vector.load %arg10[%c0_4, %c0_5] : memref<8x128xf32, #tpu.memory_space<vmem>>, vector<8x128xf32>
    %c0_6 = arith.constant 0 : index
    %c0_7 = arith.constant 0 : index
    %6 = vector.load %arg11[%c0_6, %c0_7] : memref<8x128xf32, #tpu.memory_space<vmem>>, vector<8x128xf32>
    %c0_8 = arith.constant 0 : index
    %c0_9 = arith.constant 0 : index
    %7 = vector.load %arg12[%c0_8, %c0_9] : memref<8x128xf32, #tpu.memory_space<vmem>>, vector<8x128xf32>
    %c0_10 = arith.constant 0 : index
    %c0_11 = arith.constant 0 : index
    %8 = vector.load %arg13[%c0_10, %c0_11] : memref<8x128xf32, #tpu.memory_space<vmem>>, vector<8x128xf32>
    %c0_i32_12 = arith.constant 0 : i32
    %9 = arith.index_cast %c0_i32_12 : i32 to index
    %c0_13 = arith.constant 0 : index
    %c0_14 = arith.constant 0 : index
    %10 = vector.load %arg1[%9, %c0_13, %c0_14] : memref<8x8x512xf32, #tpu.memory_space<vmem>>, vector<1x8x512xf32>
    %11 = vector.shape_cast %10 : vector<1x8x512xf32> to vector<8x512xf32>
    %cst = arith.constant dense<0.000000e+00> : vector<8x512xf32>
    %12 = tpu.matmul %5, %3, %cst {dimension_numbers = #tpu.dot_dimension_numbers<[1], [0], [0], [1], [0, 0, 1, 1], [], []>} : vector<8x128xf32>, vector<128x512xf32>, vector<8x512xf32> -> vector<8x512xf32>
    %13 = arith.addf %11, %12 : vector<8x512xf32>
    %c7_i32 = arith.constant 7 : i32
    %14 = arith.subi %c7_i32, %c0_i32_12 : i32
    %15 = arith.index_cast %14 : i32 to index
    %c0_15 = arith.constant 0 : index
    %c0_16 = arith.constant 0 : index
    %16 = vector.load %arg2[%15, %c0_15, %c0_16] : memref<8x8x512xf32, #tpu.memory_space<vmem>>, vector<1x8x512xf32>
    %17 = vector.shape_cast %16 : vector<1x8x512xf32> to vector<8x512xf32>
    %cst_17 = arith.constant dense<0.000000e+00> : vector<8x512xf32>
    %18 = tpu.matmul %7, %4, %cst_17 {dimension_numbers = #tpu.dot_dimension_numbers<[1], [0], [0], [1], [0, 0, 1, 1], [], []>} : vector<8x128xf32>, vector<128x512xf32>, vector<8x512xf32> -> vector<8x512xf32>
    %19 = arith.addf %17, %18 : vector<8x512xf32>
    %20 = vector.extract_strided_slice %13 {offsets = [0, 0], sizes = [8, 128], strides = [1, 1]} : vector<8x512xf32> to vector<8x128xf32>
    %21 = arith.negf %20 : vector<8x128xf32>
    %22 = math.exp %21 : vector<8x128xf32>
    %cst_18 = arith.constant 1.000000e+00 : f32
    %23 = vector.broadcast %cst_18 : f32 to vector<8x128xf32>
    %24 = arith.addf %23, %22 : vector<8x128xf32>
    %25 = arith.divf %23, %24 : vector<8x128xf32>
    %26 = vector.extract_strided_slice %13 {offsets = [0, 128], sizes = [8, 128], strides = [1, 1]} : vector<8x512xf32> to vector<8x128xf32>
    %27 = arith.negf %26 : vector<8x128xf32>
    %28 = math.exp %27 : vector<8x128xf32>
    %cst_19 = arith.constant 1.000000e+00 : f32
    %29 = vector.broadcast %cst_19 : f32 to vector<8x128xf32>
    %30 = arith.addf %29, %28 : vector<8x128xf32>
    %31 = arith.divf %29, %30 : vector<8x128xf32>
    %32 = vector.extract_strided_slice %13 {offsets = [0, 256], sizes = [8, 128], strides = [1, 1]} : vector<8x512xf32> to vector<8x128xf32>
    %33 = math.tanh %32 : vector<8x128xf32>
    %34 = vector.extract_strided_slice %13 {offsets = [0, 384], sizes = [8, 128], strides = [1, 1]} : vector<8x512xf32> to vector<8x128xf32>
    %35 = arith.negf %34 : vector<8x128xf32>
    %36 = math.exp %35 : vector<8x128xf32>
    %cst_20 = arith.constant 1.000000e+00 : f32
    %37 = vector.broadcast %cst_20 : f32 to vector<8x128xf32>
    %38 = arith.addf %37, %36 : vector<8x128xf32>
    %39 = arith.divf %37, %38 : vector<8x128xf32>
    %40 = arith.mulf %31, %6 : vector<8x128xf32>
    %41 = arith.mulf %25, %33 : vector<8x128xf32>
    %42 = arith.addf %40, %41 : vector<8x128xf32>
    %43 = math.tanh %42 : vector<8x128xf32>
    %44 = arith.mulf %39, %43 : vector<8x128xf32>
    %45 = vector.extract_strided_slice %19 {offsets = [0, 0], sizes = [8, 128], strides = [1, 1]} : vector<8x512xf32> to vector<8x128xf32>
    %46 = arith.negf %45 : vector<8x128xf32>
    %47 = math.exp %46 : vector<8x128xf32>
    %cst_21 = arith.constant 1.000000e+00 : f32
    %48 = vector.broadcast %cst_21 : f32 to vector<8x128xf32>
    %49 = arith.addf %48, %47 : vector<8x128xf32>
    %50 = arith.divf %48, %49 : vector<8x128xf32>
    %51 = vector.extract_strided_slice %19 {offsets = [0, 128], sizes = [8, 128], strides = [1, 1]} : vector<8x512xf32> to vector<8x128xf32>
    %52 = arith.negf %51 : vector<8x128xf32>
    %53 = math.exp %52 : vector<8x128xf32>
    %cst_22 = arith.constant 1.000000e+00 : f32
    %54 = vector.broadcast %cst_22 : f32 to vector<8x128xf32>
    %55 = arith.addf %54, %53 : vector<8x128xf32>
    %56 = arith.divf %54, %55 : vector<8x128xf32>
    %57 = vector.extract_strided_slice %19 {offsets = [0, 256], sizes = [8, 128], strides = [1, 1]} : vector<8x512xf32> to vector<8x128xf32>
    %58 = math.tanh %57 : vector<8x128xf32>
    %59 = vector.extract_strided_slice %19 {offsets = [0, 384], sizes = [8, 128], strides = [1, 1]} : vector<8x512xf32> to vector<8x128xf32>
    %60 = arith.negf %59 : vector<8x128xf32>
    %61 = math.exp %60 : vector<8x128xf32>
    %cst_23 = arith.constant 1.000000e+00 : f32
    %62 = vector.broadcast %cst_23 : f32 to vector<8x128xf32>
    %63 = arith.addf %62, %61 : vector<8x128xf32>
    %64 = arith.divf %62, %63 : vector<8x128xf32>
    %65 = arith.mulf %56, %8 : vector<8x128xf32>
    %66 = arith.mulf %50, %58 : vector<8x128xf32>
    %67 = arith.addf %65, %66 : vector<8x128xf32>
    %68 = math.tanh %67 : vector<8x128xf32>
    %69 = arith.mulf %64, %68 : vector<8x128xf32>
    %c1_i32 = arith.constant 1 : i32
    %70 = arith.index_cast %c1_i32 : i32 to index
    %c0_24 = arith.constant 0 : index
    %c0_25 = arith.constant 0 : index
    %71 = vector.load %arg1[%70, %c0_24, %c0_25] : memref<8x8x512xf32, #tpu.memory_space<vmem>>, vector<1x8x512xf32>
    %72 = vector.shape_cast %71 : vector<1x8x512xf32> to vector<8x512xf32>
    %cst_26 = arith.constant dense<0.000000e+00> : vector<8x512xf32>
    %73 = tpu.matmul %44, %3, %cst_26 {dimension_numbers = #tpu.dot_dimension_numbers<[1], [0], [0], [1], [0, 0, 1, 1], [], []>} : vector<8x128xf32>, vector<128x512xf32>, vector<8x512xf32> -> vector<8x512xf32>
    %74 = arith.addf %72, %73 : vector<8x512xf32>
    %c7_i32_27 = arith.constant 7 : i32
    %75 = arith.subi %c7_i32_27, %c1_i32 : i32
    %76 = arith.index_cast %75 : i32 to index
    %c0_28 = arith.constant 0 : index
    %c0_29 = arith.constant 0 : index
    %77 = vector.load %arg2[%76, %c0_28, %c0_29] : memref<8x8x512xf32, #tpu.memory_space<vmem>>, vector<1x8x512xf32>
    %78 = vector.shape_cast %77 : vector<1x8x512xf32> to vector<8x512xf32>
    %cst_30 = arith.constant dense<0.000000e+00> : vector<8x512xf32>
    %79 = tpu.matmul %69, %4, %cst_30 {dimension_numbers = #tpu.dot_dimension_numbers<[1], [0], [0], [1], [0, 0, 1, 1], [], []>} : vector<8x128xf32>, vector<128x512xf32>, vector<8x512xf32> -> vector<8x512xf32>
    %80 = arith.addf %78, %79 : vector<8x512xf32>
    %81 = vector.extract_strided_slice %74 {offsets = [0, 0], sizes = [8, 128], strides = [1, 1]} : vector<8x512xf32> to vector<8x128xf32>
    %82 = arith.negf %81 : vector<8x128xf32>
    %83 = math.exp %82 : vector<8x128xf32>
    %cst_31 = arith.constant 1.000000e+00 : f32
    %84 = vector.broadcast %cst_31 : f32 to vector<8x128xf32>
    %85 = arith.addf %84, %83 : vector<8x128xf32>
    %86 = arith.divf %84, %85 : vector<8x128xf32>
    %87 = vector.extract_strided_slice %74 {offsets = [0, 128], sizes = [8, 128], strides = [1, 1]} : vector<8x512xf32> to vector<8x128xf32>
    %88 = arith.negf %87 : vector<8x128xf32>
    %89 = math.exp %88 : vector<8x128xf32>
    %cst_32 = arith.constant 1.000000e+00 : f32
    %90 = vector.broadcast %cst_32 : f32 to vector<8x128xf32>
    %91 = arith.addf %90, %89 : vector<8x128xf32>
    %92 = arith.divf %90, %91 : vector<8x128xf32>
    %93 = vector.extract_strided_slice %74 {offsets = [0, 256], sizes = [8, 128], strides = [1, 1]} : vector<8x512xf32> to vector<8x128xf32>
    %94 = math.tanh %93 : vector<8x128xf32>
    %95 = vector.extract_strided_slice %74 {offsets = [0, 384], sizes = [8, 128], strides = [1, 1]} : vector<8x512xf32> to vector<8x128xf32>
    %96 = arith.negf %95 : vector<8x128xf32>
    %97 = math.exp %96 : vector<8x128xf32>
    %cst_33 = arith.constant 1.000000e+00 : f32
    %98 = vector.broadcast %cst_33 : f32 to vector<8x128xf32>
    %99 = arith.addf %98, %97 : vector<8x128xf32>
    %100 = arith.divf %98, %99 : vector<8x128xf32>
    %101 = arith.mulf %92, %42 : vector<8x128xf32>
    %102 = arith.mulf %86, %94 : vector<8x128xf32>
    %103 = arith.addf %101, %102 : vector<8x128xf32>
    %104 = math.tanh %103 : vector<8x128xf32>
    %105 = arith.mulf %100, %104 : vector<8x128xf32>
    %106 = vector.extract_strided_slice %80 {offsets = [0, 0], sizes = [8, 128], strides = [1, 1]} : vector<8x512xf32> to vector<8x128xf32>
    %107 = arith.negf %106 : vector<8x128xf32>
    %108 = math.exp %107 : vector<8x128xf32>
    %cst_34 = arith.constant 1.000000e+00 : f32
    %109 = vector.broadcast %cst_34 : f32 to vector<8x128xf32>
    %110 = arith.addf %109, %108 : vector<8x128xf32>
    %111 = arith.divf %109, %110 : vector<8x128xf32>
    %112 = vector.extract_strided_slice %80 {offsets = [0, 128], sizes = [8, 128], strides = [1, 1]} : vector<8x512xf32> to vector<8x128xf32>
    %113 = arith.negf %112 : vector<8x128xf32>
    %114 = math.exp %113 : vector<8x128xf32>
    %cst_35 = arith.constant 1.000000e+00 : f32
    %115 = vector.broadcast %cst_35 : f32 to vector<8x128xf32>
    %116 = arith.addf %115, %114 : vector<8x128xf32>
    %117 = arith.divf %115, %116 : vector<8x128xf32>
    %118 = vector.extract_strided_slice %80 {offsets = [0, 256], sizes = [8, 128], strides = [1, 1]} : vector<8x512xf32> to vector<8x128xf32>
    %119 = math.tanh %118 : vector<8x128xf32>
    %120 = vector.extract_strided_slice %80 {offsets = [0, 384], sizes = [8, 128], strides = [1, 1]} : vector<8x512xf32> to vector<8x128xf32>
    %121 = arith.negf %120 : vector<8x128xf32>
    %122 = math.exp %121 : vector<8x128xf32>
    %cst_36 = arith.constant 1.000000e+00 : f32
    %123 = vector.broadcast %cst_36 : f32 to vector<8x128xf32>
    %124 = arith.addf %123, %122 : vector<8x128xf32>
    %125 = arith.divf %123, %124 : vector<8x128xf32>
    %126 = arith.mulf %117, %67 : vector<8x128xf32>
    %127 = arith.mulf %111, %119 : vector<8x128xf32>
    %128 = arith.addf %126, %127 : vector<8x128xf32>
    %129 = math.tanh %128 : vector<8x128xf32>
    %130 = arith.mulf %125, %129 : vector<8x128xf32>
    %c2_i32 = arith.constant 2 : i32
    %131 = arith.index_cast %c2_i32 : i32 to index
    %c0_37 = arith.constant 0 : index
    %c0_38 = arith.constant 0 : index
    %132 = vector.load %arg1[%131, %c0_37, %c0_38] : memref<8x8x512xf32, #tpu.memory_space<vmem>>, vector<1x8x512xf32>
    %133 = vector.shape_cast %132 : vector<1x8x512xf32> to vector<8x512xf32>
    %cst_39 = arith.constant dense<0.000000e+00> : vector<8x512xf32>
    %134 = tpu.matmul %105, %3, %cst_39 {dimension_numbers = #tpu.dot_dimension_numbers<[1], [0], [0], [1], [0, 0, 1, 1], [], []>} : vector<8x128xf32>, vector<128x512xf32>, vector<8x512xf32> -> vector<8x512xf32>
    %135 = arith.addf %133, %134 : vector<8x512xf32>
    %c7_i32_40 = arith.constant 7 : i32
    %136 = arith.subi %c7_i32_40, %c2_i32 : i32
    %137 = arith.index_cast %136 : i32 to index
    %c0_41 = arith.constant 0 : index
    %c0_42 = arith.constant 0 : index
    %138 = vector.load %arg2[%137, %c0_41, %c0_42] : memref<8x8x512xf32, #tpu.memory_space<vmem>>, vector<1x8x512xf32>
    %139 = vector.shape_cast %138 : vector<1x8x512xf32> to vector<8x512xf32>
    %cst_43 = arith.constant dense<0.000000e+00> : vector<8x512xf32>
    %140 = tpu.matmul %130, %4, %cst_43 {dimension_numbers = #tpu.dot_dimension_numbers<[1], [0], [0], [1], [0, 0, 1, 1], [], []>} : vector<8x128xf32>, vector<128x512xf32>, vector<8x512xf32> -> vector<8x512xf32>
    %141 = arith.addf %139, %140 : vector<8x512xf32>
    %142 = vector.extract_strided_slice %135 {offsets = [0, 0], sizes = [8, 128], strides = [1, 1]} : vector<8x512xf32> to vector<8x128xf32>
    %143 = arith.negf %142 : vector<8x128xf32>
    %144 = math.exp %143 : vector<8x128xf32>
    %cst_44 = arith.constant 1.000000e+00 : f32
    %145 = vector.broadcast %cst_44 : f32 to vector<8x128xf32>
    %146 = arith.addf %145, %144 : vector<8x128xf32>
    %147 = arith.divf %145, %146 : vector<8x128xf32>
    %148 = vector.extract_strided_slice %135 {offsets = [0, 128], sizes = [8, 128], strides = [1, 1]} : vector<8x512xf32> to vector<8x128xf32>
    %149 = arith.negf %148 : vector<8x128xf32>
    %150 = math.exp %149 : vector<8x128xf32>
    %cst_45 = arith.constant 1.000000e+00 : f32
    %151 = vector.broadcast %cst_45 : f32 to vector<8x128xf32>
    %152 = arith.addf %151, %150 : vector<8x128xf32>
    %153 = arith.divf %151, %152 : vector<8x128xf32>
    %154 = vector.extract_strided_slice %135 {offsets = [0, 256], sizes = [8, 128], strides = [1, 1]} : vector<8x512xf32> to vector<8x128xf32>
    %155 = math.tanh %154 : vector<8x128xf32>
    %156 = vector.extract_strided_slice %135 {offsets = [0, 384], sizes = [8, 128], strides = [1, 1]} : vector<8x512xf32> to vector<8x128xf32>
    %157 = arith.negf %156 : vector<8x128xf32>
    %158 = math.exp %157 : vector<8x128xf32>
    %cst_46 = arith.constant 1.000000e+00 : f32
    %159 = vector.broadcast %cst_46 : f32 to vector<8x128xf32>
    %160 = arith.addf %159, %158 : vector<8x128xf32>
    %161 = arith.divf %159, %160 : vector<8x128xf32>
    %162 = arith.mulf %153, %103 : vector<8x128xf32>
    %163 = arith.mulf %147, %155 : vector<8x128xf32>
    %164 = arith.addf %162, %163 : vector<8x128xf32>
    %165 = math.tanh %164 : vector<8x128xf32>
    %166 = arith.mulf %161, %165 : vector<8x128xf32>
    %167 = vector.extract_strided_slice %141 {offsets = [0, 0], sizes = [8, 128], strides = [1, 1]} : vector<8x512xf32> to vector<8x128xf32>
    %168 = arith.negf %167 : vector<8x128xf32>
    %169 = math.exp %168 : vector<8x128xf32>
    %cst_47 = arith.constant 1.000000e+00 : f32
    %170 = vector.broadcast %cst_47 : f32 to vector<8x128xf32>
    %171 = arith.addf %170, %169 : vector<8x128xf32>
    %172 = arith.divf %170, %171 : vector<8x128xf32>
    %173 = vector.extract_strided_slice %141 {offsets = [0, 128], sizes = [8, 128], strides = [1, 1]} : vector<8x512xf32> to vector<8x128xf32>
    %174 = arith.negf %173 : vector<8x128xf32>
    %175 = math.exp %174 : vector<8x128xf32>
    %cst_48 = arith.constant 1.000000e+00 : f32
    %176 = vector.broadcast %cst_48 : f32 to vector<8x128xf32>
    %177 = arith.addf %176, %175 : vector<8x128xf32>
    %178 = arith.divf %176, %177 : vector<8x128xf32>
    %179 = vector.extract_strided_slice %141 {offsets = [0, 256], sizes = [8, 128], strides = [1, 1]} : vector<8x512xf32> to vector<8x128xf32>
    %180 = math.tanh %179 : vector<8x128xf32>
    %181 = vector.extract_strided_slice %141 {offsets = [0, 384], sizes = [8, 128], strides = [1, 1]} : vector<8x512xf32> to vector<8x128xf32>
    %182 = arith.negf %181 : vector<8x128xf32>
    %183 = math.exp %182 : vector<8x128xf32>
    %cst_49 = arith.constant 1.000000e+00 : f32
    %184 = vector.broadcast %cst_49 : f32 to vector<8x128xf32>
    %185 = arith.addf %184, %183 : vector<8x128xf32>
    %186 = arith.divf %184, %185 : vector<8x128xf32>
    %187 = arith.mulf %178, %128 : vector<8x128xf32>
    %188 = arith.mulf %172, %180 : vector<8x128xf32>
    %189 = arith.addf %187, %188 : vector<8x128xf32>
    %190 = math.tanh %189 : vector<8x128xf32>
    %191 = arith.mulf %186, %190 : vector<8x128xf32>
    %c3_i32 = arith.constant 3 : i32
    %192 = arith.index_cast %c3_i32 : i32 to index
    %c0_50 = arith.constant 0 : index
    %c0_51 = arith.constant 0 : index
    %193 = vector.load %arg1[%192, %c0_50, %c0_51] : memref<8x8x512xf32, #tpu.memory_space<vmem>>, vector<1x8x512xf32>
    %194 = vector.shape_cast %193 : vector<1x8x512xf32> to vector<8x512xf32>
    %cst_52 = arith.constant dense<0.000000e+00> : vector<8x512xf32>
    %195 = tpu.matmul %166, %3, %cst_52 {dimension_numbers = #tpu.dot_dimension_numbers<[1], [0], [0], [1], [0, 0, 1, 1], [], []>} : vector<8x128xf32>, vector<128x512xf32>, vector<8x512xf32> -> vector<8x512xf32>
    %196 = arith.addf %194, %195 : vector<8x512xf32>
    %c7_i32_53 = arith.constant 7 : i32
    %197 = arith.subi %c7_i32_53, %c3_i32 : i32
    %198 = arith.index_cast %197 : i32 to index
    %c0_54 = arith.constant 0 : index
    %c0_55 = arith.constant 0 : index
    %199 = vector.load %arg2[%198, %c0_54, %c0_55] : memref<8x8x512xf32, #tpu.memory_space<vmem>>, vector<1x8x512xf32>
    %200 = vector.shape_cast %199 : vector<1x8x512xf32> to vector<8x512xf32>
    %cst_56 = arith.constant dense<0.000000e+00> : vector<8x512xf32>
    %201 = tpu.matmul %191, %4, %cst_56 {dimension_numbers = #tpu.dot_dimension_numbers<[1], [0], [0], [1], [0, 0, 1, 1], [], []>} : vector<8x128xf32>, vector<128x512xf32>, vector<8x512xf32> -> vector<8x512xf32>
    %202 = arith.addf %200, %201 : vector<8x512xf32>
    %203 = vector.extract_strided_slice %196 {offsets = [0, 0], sizes = [8, 128], strides = [1, 1]} : vector<8x512xf32> to vector<8x128xf32>
    %204 = arith.negf %203 : vector<8x128xf32>
    %205 = math.exp %204 : vector<8x128xf32>
    %cst_57 = arith.constant 1.000000e+00 : f32
    %206 = vector.broadcast %cst_57 : f32 to vector<8x128xf32>
    %207 = arith.addf %206, %205 : vector<8x128xf32>
    %208 = arith.divf %206, %207 : vector<8x128xf32>
    %209 = vector.extract_strided_slice %196 {offsets = [0, 128], sizes = [8, 128], strides = [1, 1]} : vector<8x512xf32> to vector<8x128xf32>
    %210 = arith.negf %209 : vector<8x128xf32>
    %211 = math.exp %210 : vector<8x128xf32>
    %cst_58 = arith.constant 1.000000e+00 : f32
    %212 = vector.broadcast %cst_58 : f32 to vector<8x128xf32>
    %213 = arith.addf %212, %211 : vector<8x128xf32>
    %214 = arith.divf %212, %213 : vector<8x128xf32>
    %215 = vector.extract_strided_slice %196 {offsets = [0, 256], sizes = [8, 128], strides = [1, 1]} : vector<8x512xf32> to vector<8x128xf32>
    %216 = math.tanh %215 : vector<8x128xf32>
    %217 = vector.extract_strided_slice %196 {offsets = [0, 384], sizes = [8, 128], strides = [1, 1]} : vector<8x512xf32> to vector<8x128xf32>
    %218 = arith.negf %217 : vector<8x128xf32>
    %219 = math.exp %218 : vector<8x128xf32>
    %cst_59 = arith.constant 1.000000e+00 : f32
    %220 = vector.broadcast %cst_59 : f32 to vector<8x128xf32>
    %221 = arith.addf %220, %219 : vector<8x128xf32>
    %222 = arith.divf %220, %221 : vector<8x128xf32>
    %223 = arith.mulf %214, %164 : vector<8x128xf32>
    %224 = arith.mulf %208, %216 : vector<8x128xf32>
    %225 = arith.addf %223, %224 : vector<8x128xf32>
    %226 = math.tanh %225 : vector<8x128xf32>
    %227 = arith.mulf %222, %226 : vector<8x128xf32>
    %228 = vector.extract_strided_slice %202 {offsets = [0, 0], sizes = [8, 128], strides = [1, 1]} : vector<8x512xf32> to vector<8x128xf32>
    %229 = arith.negf %228 : vector<8x128xf32>
    %230 = math.exp %229 : vector<8x128xf32>
    %cst_60 = arith.constant 1.000000e+00 : f32
    %231 = vector.broadcast %cst_60 : f32 to vector<8x128xf32>
    %232 = arith.addf %231, %230 : vector<8x128xf32>
    %233 = arith.divf %231, %232 : vector<8x128xf32>
    %234 = vector.extract_strided_slice %202 {offsets = [0, 128], sizes = [8, 128], strides = [1, 1]} : vector<8x512xf32> to vector<8x128xf32>
    %235 = arith.negf %234 : vector<8x128xf32>
    %236 = math.exp %235 : vector<8x128xf32>
    %cst_61 = arith.constant 1.000000e+00 : f32
    %237 = vector.broadcast %cst_61 : f32 to vector<8x128xf32>
    %238 = arith.addf %237, %236 : vector<8x128xf32>
    %239 = arith.divf %237, %238 : vector<8x128xf32>
    %240 = vector.extract_strided_slice %202 {offsets = [0, 256], sizes = [8, 128], strides = [1, 1]} : vector<8x512xf32> to vector<8x128xf32>
    %241 = math.tanh %240 : vector<8x128xf32>
    %242 = vector.extract_strided_slice %202 {offsets = [0, 384], sizes = [8, 128], strides = [1, 1]} : vector<8x512xf32> to vector<8x128xf32>
    %243 = arith.negf %242 : vector<8x128xf32>
    %244 = math.exp %243 : vector<8x128xf32>
    %cst_62 = arith.constant 1.000000e+00 : f32
    %245 = vector.broadcast %cst_62 : f32 to vector<8x128xf32>
    %246 = arith.addf %245, %244 : vector<8x128xf32>
    %247 = arith.divf %245, %246 : vector<8x128xf32>
    %248 = arith.mulf %239, %189 : vector<8x128xf32>
    %249 = arith.mulf %233, %241 : vector<8x128xf32>
    %250 = arith.addf %248, %249 : vector<8x128xf32>
    %251 = math.tanh %250 : vector<8x128xf32>
    %252 = arith.mulf %247, %251 : vector<8x128xf32>
    %c4_i32 = arith.constant 4 : i32
    %253 = arith.index_cast %c4_i32 : i32 to index
    %c0_63 = arith.constant 0 : index
    %c0_64 = arith.constant 0 : index
    %254 = vector.load %arg1[%253, %c0_63, %c0_64] : memref<8x8x512xf32, #tpu.memory_space<vmem>>, vector<1x8x512xf32>
    %255 = vector.shape_cast %254 : vector<1x8x512xf32> to vector<8x512xf32>
    %cst_65 = arith.constant dense<0.000000e+00> : vector<8x512xf32>
    %256 = tpu.matmul %227, %3, %cst_65 {dimension_numbers = #tpu.dot_dimension_numbers<[1], [0], [0], [1], [0, 0, 1, 1], [], []>} : vector<8x128xf32>, vector<128x512xf32>, vector<8x512xf32> -> vector<8x512xf32>
    %257 = arith.addf %255, %256 : vector<8x512xf32>
    %c7_i32_66 = arith.constant 7 : i32
    %258 = arith.subi %c7_i32_66, %c4_i32 : i32
    %259 = arith.index_cast %258 : i32 to index
    %c0_67 = arith.constant 0 : index
    %c0_68 = arith.constant 0 : index
    %260 = vector.load %arg2[%259, %c0_67, %c0_68] : memref<8x8x512xf32, #tpu.memory_space<vmem>>, vector<1x8x512xf32>
    %261 = vector.shape_cast %260 : vector<1x8x512xf32> to vector<8x512xf32>
    %cst_69 = arith.constant dense<0.000000e+00> : vector<8x512xf32>
    %262 = tpu.matmul %252, %4, %cst_69 {dimension_numbers = #tpu.dot_dimension_numbers<[1], [0], [0], [1], [0, 0, 1, 1], [], []>} : vector<8x128xf32>, vector<128x512xf32>, vector<8x512xf32> -> vector<8x512xf32>
    %263 = arith.addf %261, %262 : vector<8x512xf32>
    %264 = vector.extract_strided_slice %257 {offsets = [0, 0], sizes = [8, 128], strides = [1, 1]} : vector<8x512xf32> to vector<8x128xf32>
    %265 = arith.negf %264 : vector<8x128xf32>
    %266 = math.exp %265 : vector<8x128xf32>
    %cst_70 = arith.constant 1.000000e+00 : f32
    %267 = vector.broadcast %cst_70 : f32 to vector<8x128xf32>
    %268 = arith.addf %267, %266 : vector<8x128xf32>
    %269 = arith.divf %267, %268 : vector<8x128xf32>
    %270 = vector.extract_strided_slice %257 {offsets = [0, 128], sizes = [8, 128], strides = [1, 1]} : vector<8x512xf32> to vector<8x128xf32>
    %271 = arith.negf %270 : vector<8x128xf32>
    %272 = math.exp %271 : vector<8x128xf32>
    %cst_71 = arith.constant 1.000000e+00 : f32
    %273 = vector.broadcast %cst_71 : f32 to vector<8x128xf32>
    %274 = arith.addf %273, %272 : vector<8x128xf32>
    %275 = arith.divf %273, %274 : vector<8x128xf32>
    %276 = vector.extract_strided_slice %257 {offsets = [0, 256], sizes = [8, 128], strides = [1, 1]} : vector<8x512xf32> to vector<8x128xf32>
    %277 = math.tanh %276 : vector<8x128xf32>
    %278 = vector.extract_strided_slice %257 {offsets = [0, 384], sizes = [8, 128], strides = [1, 1]} : vector<8x512xf32> to vector<8x128xf32>
    %279 = arith.negf %278 : vector<8x128xf32>
    %280 = math.exp %279 : vector<8x128xf32>
    %cst_72 = arith.constant 1.000000e+00 : f32
    %281 = vector.broadcast %cst_72 : f32 to vector<8x128xf32>
    %282 = arith.addf %281, %280 : vector<8x128xf32>
    %283 = arith.divf %281, %282 : vector<8x128xf32>
    %284 = arith.mulf %275, %225 : vector<8x128xf32>
    %285 = arith.mulf %269, %277 : vector<8x128xf32>
    %286 = arith.addf %284, %285 : vector<8x128xf32>
    %287 = math.tanh %286 : vector<8x128xf32>
    %288 = arith.mulf %283, %287 : vector<8x128xf32>
    %289 = vector.extract_strided_slice %263 {offsets = [0, 0], sizes = [8, 128], strides = [1, 1]} : vector<8x512xf32> to vector<8x128xf32>
    %290 = arith.negf %289 : vector<8x128xf32>
    %291 = math.exp %290 : vector<8x128xf32>
    %cst_73 = arith.constant 1.000000e+00 : f32
    %292 = vector.broadcast %cst_73 : f32 to vector<8x128xf32>
    %293 = arith.addf %292, %291 : vector<8x128xf32>
    %294 = arith.divf %292, %293 : vector<8x128xf32>
    %295 = vector.extract_strided_slice %263 {offsets = [0, 128], sizes = [8, 128], strides = [1, 1]} : vector<8x512xf32> to vector<8x128xf32>
    %296 = arith.negf %295 : vector<8x128xf32>
    %297 = math.exp %296 : vector<8x128xf32>
    %cst_74 = arith.constant 1.000000e+00 : f32
    %298 = vector.broadcast %cst_74 : f32 to vector<8x128xf32>
    %299 = arith.addf %298, %297 : vector<8x128xf32>
    %300 = arith.divf %298, %299 : vector<8x128xf32>
    %301 = vector.extract_strided_slice %263 {offsets = [0, 256], sizes = [8, 128], strides = [1, 1]} : vector<8x512xf32> to vector<8x128xf32>
    %302 = math.tanh %301 : vector<8x128xf32>
    %303 = vector.extract_strided_slice %263 {offsets = [0, 384], sizes = [8, 128], strides = [1, 1]} : vector<8x512xf32> to vector<8x128xf32>
    %304 = arith.negf %303 : vector<8x128xf32>
    %305 = math.exp %304 : vector<8x128xf32>
    %cst_75 = arith.constant 1.000000e+00 : f32
    %306 = vector.broadcast %cst_75 : f32 to vector<8x128xf32>
    %307 = arith.addf %306, %305 : vector<8x128xf32>
    %308 = arith.divf %306, %307 : vector<8x128xf32>
    %309 = arith.mulf %300, %250 : vector<8x128xf32>
    %310 = arith.mulf %294, %302 : vector<8x128xf32>
    %311 = arith.addf %309, %310 : vector<8x128xf32>
    %312 = math.tanh %311 : vector<8x128xf32>
    %313 = arith.mulf %308, %312 : vector<8x128xf32>
    %c5_i32 = arith.constant 5 : i32
    %314 = arith.index_cast %c5_i32 : i32 to index
    %c0_76 = arith.constant 0 : index
    %c0_77 = arith.constant 0 : index
    %315 = vector.load %arg1[%314, %c0_76, %c0_77] : memref<8x8x512xf32, #tpu.memory_space<vmem>>, vector<1x8x512xf32>
    %316 = vector.shape_cast %315 : vector<1x8x512xf32> to vector<8x512xf32>
    %cst_78 = arith.constant dense<0.000000e+00> : vector<8x512xf32>
    %317 = tpu.matmul %288, %3, %cst_78 {dimension_numbers = #tpu.dot_dimension_numbers<[1], [0], [0], [1], [0, 0, 1, 1], [], []>} : vector<8x128xf32>, vector<128x512xf32>, vector<8x512xf32> -> vector<8x512xf32>
    %318 = arith.addf %316, %317 : vector<8x512xf32>
    %c7_i32_79 = arith.constant 7 : i32
    %319 = arith.subi %c7_i32_79, %c5_i32 : i32
    %320 = arith.index_cast %319 : i32 to index
    %c0_80 = arith.constant 0 : index
    %c0_81 = arith.constant 0 : index
    %321 = vector.load %arg2[%320, %c0_80, %c0_81] : memref<8x8x512xf32, #tpu.memory_space<vmem>>, vector<1x8x512xf32>
    %322 = vector.shape_cast %321 : vector<1x8x512xf32> to vector<8x512xf32>
    %cst_82 = arith.constant dense<0.000000e+00> : vector<8x512xf32>
    %323 = tpu.matmul %313, %4, %cst_82 {dimension_numbers = #tpu.dot_dimension_numbers<[1], [0], [0], [1], [0, 0, 1, 1], [], []>} : vector<8x128xf32>, vector<128x512xf32>, vector<8x512xf32> -> vector<8x512xf32>
    %324 = arith.addf %322, %323 : vector<8x512xf32>
    %325 = vector.extract_strided_slice %318 {offsets = [0, 0], sizes = [8, 128], strides = [1, 1]} : vector<8x512xf32> to vector<8x128xf32>
    %326 = arith.negf %325 : vector<8x128xf32>
    %327 = math.exp %326 : vector<8x128xf32>
    %cst_83 = arith.constant 1.000000e+00 : f32
    %328 = vector.broadcast %cst_83 : f32 to vector<8x128xf32>
    %329 = arith.addf %328, %327 : vector<8x128xf32>
    %330 = arith.divf %328, %329 : vector<8x128xf32>
    %331 = vector.extract_strided_slice %318 {offsets = [0, 128], sizes = [8, 128], strides = [1, 1]} : vector<8x512xf32> to vector<8x128xf32>
    %332 = arith.negf %331 : vector<8x128xf32>
    %333 = math.exp %332 : vector<8x128xf32>
    %cst_84 = arith.constant 1.000000e+00 : f32
    %334 = vector.broadcast %cst_84 : f32 to vector<8x128xf32>
    %335 = arith.addf %334, %333 : vector<8x128xf32>
    %336 = arith.divf %334, %335 : vector<8x128xf32>
    %337 = vector.extract_strided_slice %318 {offsets = [0, 256], sizes = [8, 128], strides = [1, 1]} : vector<8x512xf32> to vector<8x128xf32>
    %338 = math.tanh %337 : vector<8x128xf32>
    %339 = vector.extract_strided_slice %318 {offsets = [0, 384], sizes = [8, 128], strides = [1, 1]} : vector<8x512xf32> to vector<8x128xf32>
    %340 = arith.negf %339 : vector<8x128xf32>
    %341 = math.exp %340 : vector<8x128xf32>
    %cst_85 = arith.constant 1.000000e+00 : f32
    %342 = vector.broadcast %cst_85 : f32 to vector<8x128xf32>
    %343 = arith.addf %342, %341 : vector<8x128xf32>
    %344 = arith.divf %342, %343 : vector<8x128xf32>
    %345 = arith.mulf %336, %286 : vector<8x128xf32>
    %346 = arith.mulf %330, %338 : vector<8x128xf32>
    %347 = arith.addf %345, %346 : vector<8x128xf32>
    %348 = math.tanh %347 : vector<8x128xf32>
    %349 = arith.mulf %344, %348 : vector<8x128xf32>
    %350 = vector.extract_strided_slice %324 {offsets = [0, 0], sizes = [8, 128], strides = [1, 1]} : vector<8x512xf32> to vector<8x128xf32>
    %351 = arith.negf %350 : vector<8x128xf32>
    %352 = math.exp %351 : vector<8x128xf32>
    %cst_86 = arith.constant 1.000000e+00 : f32
    %353 = vector.broadcast %cst_86 : f32 to vector<8x128xf32>
    %354 = arith.addf %353, %352 : vector<8x128xf32>
    %355 = arith.divf %353, %354 : vector<8x128xf32>
    %356 = vector.extract_strided_slice %324 {offsets = [0, 128], sizes = [8, 128], strides = [1, 1]} : vector<8x512xf32> to vector<8x128xf32>
    %357 = arith.negf %356 : vector<8x128xf32>
    %358 = math.exp %357 : vector<8x128xf32>
    %cst_87 = arith.constant 1.000000e+00 : f32
    %359 = vector.broadcast %cst_87 : f32 to vector<8x128xf32>
    %360 = arith.addf %359, %358 : vector<8x128xf32>
    %361 = arith.divf %359, %360 : vector<8x128xf32>
    %362 = vector.extract_strided_slice %324 {offsets = [0, 256], sizes = [8, 128], strides = [1, 1]} : vector<8x512xf32> to vector<8x128xf32>
    %363 = math.tanh %362 : vector<8x128xf32>
    %364 = vector.extract_strided_slice %324 {offsets = [0, 384], sizes = [8, 128], strides = [1, 1]} : vector<8x512xf32> to vector<8x128xf32>
    %365 = arith.negf %364 : vector<8x128xf32>
    %366 = math.exp %365 : vector<8x128xf32>
    %cst_88 = arith.constant 1.000000e+00 : f32
    %367 = vector.broadcast %cst_88 : f32 to vector<8x128xf32>
    %368 = arith.addf %367, %366 : vector<8x128xf32>
    %369 = arith.divf %367, %368 : vector<8x128xf32>
    %370 = arith.mulf %361, %311 : vector<8x128xf32>
    %371 = arith.mulf %355, %363 : vector<8x128xf32>
    %372 = arith.addf %370, %371 : vector<8x128xf32>
    %373 = math.tanh %372 : vector<8x128xf32>
    %374 = arith.mulf %369, %373 : vector<8x128xf32>
    %c6_i32 = arith.constant 6 : i32
    %375 = arith.index_cast %c6_i32 : i32 to index
    %c0_89 = arith.constant 0 : index
    %c0_90 = arith.constant 0 : index
    %376 = vector.load %arg1[%375, %c0_89, %c0_90] : memref<8x8x512xf32, #tpu.memory_space<vmem>>, vector<1x8x512xf32>
    %377 = vector.shape_cast %376 : vector<1x8x512xf32> to vector<8x512xf32>
    %cst_91 = arith.constant dense<0.000000e+00> : vector<8x512xf32>
    %378 = tpu.matmul %349, %3, %cst_91 {dimension_numbers = #tpu.dot_dimension_numbers<[1], [0], [0], [1], [0, 0, 1, 1], [], []>} : vector<8x128xf32>, vector<128x512xf32>, vector<8x512xf32> -> vector<8x512xf32>
    %379 = arith.addf %377, %378 : vector<8x512xf32>
    %c7_i32_92 = arith.constant 7 : i32
    %380 = arith.subi %c7_i32_92, %c6_i32 : i32
    %381 = arith.index_cast %380 : i32 to index
    %c0_93 = arith.constant 0 : index
    %c0_94 = arith.constant 0 : index
    %382 = vector.load %arg2[%381, %c0_93, %c0_94] : memref<8x8x512xf32, #tpu.memory_space<vmem>>, vector<1x8x512xf32>
    %383 = vector.shape_cast %382 : vector<1x8x512xf32> to vector<8x512xf32>
    %cst_95 = arith.constant dense<0.000000e+00> : vector<8x512xf32>
    %384 = tpu.matmul %374, %4, %cst_95 {dimension_numbers = #tpu.dot_dimension_numbers<[1], [0], [0], [1], [0, 0, 1, 1], [], []>} : vector<8x128xf32>, vector<128x512xf32>, vector<8x512xf32> -> vector<8x512xf32>
    %385 = arith.addf %383, %384 : vector<8x512xf32>
    %386 = vector.extract_strided_slice %379 {offsets = [0, 0], sizes = [8, 128], strides = [1, 1]} : vector<8x512xf32> to vector<8x128xf32>
    %387 = arith.negf %386 : vector<8x128xf32>
    %388 = math.exp %387 : vector<8x128xf32>
    %cst_96 = arith.constant 1.000000e+00 : f32
    %389 = vector.broadcast %cst_96 : f32 to vector<8x128xf32>
    %390 = arith.addf %389, %388 : vector<8x128xf32>
    %391 = arith.divf %389, %390 : vector<8x128xf32>
    %392 = vector.extract_strided_slice %379 {offsets = [0, 128], sizes = [8, 128], strides = [1, 1]} : vector<8x512xf32> to vector<8x128xf32>
    %393 = arith.negf %392 : vector<8x128xf32>
    %394 = math.exp %393 : vector<8x128xf32>
    %cst_97 = arith.constant 1.000000e+00 : f32
    %395 = vector.broadcast %cst_97 : f32 to vector<8x128xf32>
    %396 = arith.addf %395, %394 : vector<8x128xf32>
    %397 = arith.divf %395, %396 : vector<8x128xf32>
    %398 = vector.extract_strided_slice %379 {offsets = [0, 256], sizes = [8, 128], strides = [1, 1]} : vector<8x512xf32> to vector<8x128xf32>
    %399 = math.tanh %398 : vector<8x128xf32>
    %400 = vector.extract_strided_slice %379 {offsets = [0, 384], sizes = [8, 128], strides = [1, 1]} : vector<8x512xf32> to vector<8x128xf32>
    %401 = arith.negf %400 : vector<8x128xf32>
    %402 = math.exp %401 : vector<8x128xf32>
    %cst_98 = arith.constant 1.000000e+00 : f32
    %403 = vector.broadcast %cst_98 : f32 to vector<8x128xf32>
    %404 = arith.addf %403, %402 : vector<8x128xf32>
    %405 = arith.divf %403, %404 : vector<8x128xf32>
    %406 = arith.mulf %397, %347 : vector<8x128xf32>
    %407 = arith.mulf %391, %399 : vector<8x128xf32>
    %408 = arith.addf %406, %407 : vector<8x128xf32>
    %409 = math.tanh %408 : vector<8x128xf32>
    %410 = arith.mulf %405, %409 : vector<8x128xf32>
    %411 = vector.extract_strided_slice %385 {offsets = [0, 0], sizes = [8, 128], strides = [1, 1]} : vector<8x512xf32> to vector<8x128xf32>
    %412 = arith.negf %411 : vector<8x128xf32>
    %413 = math.exp %412 : vector<8x128xf32>
    %cst_99 = arith.constant 1.000000e+00 : f32
    %414 = vector.broadcast %cst_99 : f32 to vector<8x128xf32>
    %415 = arith.addf %414, %413 : vector<8x128xf32>
    %416 = arith.divf %414, %415 : vector<8x128xf32>
    %417 = vector.extract_strided_slice %385 {offsets = [0, 128], sizes = [8, 128], strides = [1, 1]} : vector<8x512xf32> to vector<8x128xf32>
    %418 = arith.negf %417 : vector<8x128xf32>
    %419 = math.exp %418 : vector<8x128xf32>
    %cst_100 = arith.constant 1.000000e+00 : f32
    %420 = vector.broadcast %cst_100 : f32 to vector<8x128xf32>
    %421 = arith.addf %420, %419 : vector<8x128xf32>
    %422 = arith.divf %420, %421 : vector<8x128xf32>
    %423 = vector.extract_strided_slice %385 {offsets = [0, 256], sizes = [8, 128], strides = [1, 1]} : vector<8x512xf32> to vector<8x128xf32>
    %424 = math.tanh %423 : vector<8x128xf32>
    %425 = vector.extract_strided_slice %385 {offsets = [0, 384], sizes = [8, 128], strides = [1, 1]} : vector<8x512xf32> to vector<8x128xf32>
    %426 = arith.negf %425 : vector<8x128xf32>
    %427 = math.exp %426 : vector<8x128xf32>
    %cst_101 = arith.constant 1.000000e+00 : f32
    %428 = vector.broadcast %cst_101 : f32 to vector<8x128xf32>
    %429 = arith.addf %428, %427 : vector<8x128xf32>
    %430 = arith.divf %428, %429 : vector<8x128xf32>
    %431 = arith.mulf %422, %372 : vector<8x128xf32>
    %432 = arith.mulf %416, %424 : vector<8x128xf32>
    %433 = arith.addf %431, %432 : vector<8x128xf32>
    %434 = math.tanh %433 : vector<8x128xf32>
    %435 = arith.mulf %430, %434 : vector<8x128xf32>
    %c7_i32_102 = arith.constant 7 : i32
    %436 = arith.index_cast %c7_i32_102 : i32 to index
    %c0_103 = arith.constant 0 : index
    %c0_104 = arith.constant 0 : index
    %437 = vector.load %arg1[%436, %c0_103, %c0_104] : memref<8x8x512xf32, #tpu.memory_space<vmem>>, vector<1x8x512xf32>
    %438 = vector.shape_cast %437 : vector<1x8x512xf32> to vector<8x512xf32>
    %cst_105 = arith.constant dense<0.000000e+00> : vector<8x512xf32>
    %439 = tpu.matmul %410, %3, %cst_105 {dimension_numbers = #tpu.dot_dimension_numbers<[1], [0], [0], [1], [0, 0, 1, 1], [], []>} : vector<8x128xf32>, vector<128x512xf32>, vector<8x512xf32> -> vector<8x512xf32>
    %440 = arith.addf %438, %439 : vector<8x512xf32>
    %c7_i32_106 = arith.constant 7 : i32
    %441 = arith.subi %c7_i32_106, %c7_i32_102 : i32
    %442 = arith.index_cast %441 : i32 to index
    %c0_107 = arith.constant 0 : index
    %c0_108 = arith.constant 0 : index
    %443 = vector.load %arg2[%442, %c0_107, %c0_108] : memref<8x8x512xf32, #tpu.memory_space<vmem>>, vector<1x8x512xf32>
    %444 = vector.shape_cast %443 : vector<1x8x512xf32> to vector<8x512xf32>
    %cst_109 = arith.constant dense<0.000000e+00> : vector<8x512xf32>
    %445 = tpu.matmul %435, %4, %cst_109 {dimension_numbers = #tpu.dot_dimension_numbers<[1], [0], [0], [1], [0, 0, 1, 1], [], []>} : vector<8x128xf32>, vector<128x512xf32>, vector<8x512xf32> -> vector<8x512xf32>
    %446 = arith.addf %444, %445 : vector<8x512xf32>
    %447 = vector.extract_strided_slice %440 {offsets = [0, 0], sizes = [8, 128], strides = [1, 1]} : vector<8x512xf32> to vector<8x128xf32>
    %448 = arith.negf %447 : vector<8x128xf32>
    %449 = math.exp %448 : vector<8x128xf32>
    %cst_110 = arith.constant 1.000000e+00 : f32
    %450 = vector.broadcast %cst_110 : f32 to vector<8x128xf32>
    %451 = arith.addf %450, %449 : vector<8x128xf32>
    %452 = arith.divf %450, %451 : vector<8x128xf32>
    %453 = vector.extract_strided_slice %440 {offsets = [0, 128], sizes = [8, 128], strides = [1, 1]} : vector<8x512xf32> to vector<8x128xf32>
    %454 = arith.negf %453 : vector<8x128xf32>
    %455 = math.exp %454 : vector<8x128xf32>
    %cst_111 = arith.constant 1.000000e+00 : f32
    %456 = vector.broadcast %cst_111 : f32 to vector<8x128xf32>
    %457 = arith.addf %456, %455 : vector<8x128xf32>
    %458 = arith.divf %456, %457 : vector<8x128xf32>
    %459 = vector.extract_strided_slice %440 {offsets = [0, 256], sizes = [8, 128], strides = [1, 1]} : vector<8x512xf32> to vector<8x128xf32>
    %460 = math.tanh %459 : vector<8x128xf32>
    %461 = vector.extract_strided_slice %440 {offsets = [0, 384], sizes = [8, 128], strides = [1, 1]} : vector<8x512xf32> to vector<8x128xf32>
    %462 = arith.negf %461 : vector<8x128xf32>
    %463 = math.exp %462 : vector<8x128xf32>
    %cst_112 = arith.constant 1.000000e+00 : f32
    %464 = vector.broadcast %cst_112 : f32 to vector<8x128xf32>
    %465 = arith.addf %464, %463 : vector<8x128xf32>
    %466 = arith.divf %464, %465 : vector<8x128xf32>
    %467 = arith.mulf %458, %408 : vector<8x128xf32>
    %468 = arith.mulf %452, %460 : vector<8x128xf32>
    %469 = arith.addf %467, %468 : vector<8x128xf32>
    %470 = math.tanh %469 : vector<8x128xf32>
    %471 = arith.mulf %466, %470 : vector<8x128xf32>
    %472 = vector.extract_strided_slice %446 {offsets = [0, 0], sizes = [8, 128], strides = [1, 1]} : vector<8x512xf32> to vector<8x128xf32>
    %473 = arith.negf %472 : vector<8x128xf32>
    %474 = math.exp %473 : vector<8x128xf32>
    %cst_113 = arith.constant 1.000000e+00 : f32
    %475 = vector.broadcast %cst_113 : f32 to vector<8x128xf32>
    %476 = arith.addf %475, %474 : vector<8x128xf32>
    %477 = arith.divf %475, %476 : vector<8x128xf32>
    %478 = vector.extract_strided_slice %446 {offsets = [0, 128], sizes = [8, 128], strides = [1, 1]} : vector<8x512xf32> to vector<8x128xf32>
    %479 = arith.negf %478 : vector<8x128xf32>
    %480 = math.exp %479 : vector<8x128xf32>
    %cst_114 = arith.constant 1.000000e+00 : f32
    %481 = vector.broadcast %cst_114 : f32 to vector<8x128xf32>
    %482 = arith.addf %481, %480 : vector<8x128xf32>
    %483 = arith.divf %481, %482 : vector<8x128xf32>
    %484 = vector.extract_strided_slice %446 {offsets = [0, 256], sizes = [8, 128], strides = [1, 1]} : vector<8x512xf32> to vector<8x128xf32>
    %485 = math.tanh %484 : vector<8x128xf32>
    %486 = vector.extract_strided_slice %446 {offsets = [0, 384], sizes = [8, 128], strides = [1, 1]} : vector<8x512xf32> to vector<8x128xf32>
    %487 = arith.negf %486 : vector<8x128xf32>
    %488 = math.exp %487 : vector<8x128xf32>
    %cst_115 = arith.constant 1.000000e+00 : f32
    %489 = vector.broadcast %cst_115 : f32 to vector<8x128xf32>
    %490 = arith.addf %489, %488 : vector<8x128xf32>
    %491 = arith.divf %489, %490 : vector<8x128xf32>
    %492 = arith.mulf %483, %433 : vector<8x128xf32>
    %493 = arith.mulf %477, %485 : vector<8x128xf32>
    %494 = arith.addf %492, %493 : vector<8x128xf32>
    %495 = math.tanh %494 : vector<8x128xf32>
    %496 = arith.mulf %491, %495 : vector<8x128xf32>
    %c8_i32 = arith.constant 8 : i32
    %c0_116 = arith.constant 0 : index
    %c0_117 = arith.constant 0 : index
    %497 = vector.load %arg10[%c0_116, %c0_117] : memref<8x128xf32, #tpu.memory_space<vmem>>, vector<8x128xf32>
    tpu.vector_store %arg10[%c0_116, %c0_117], %471 {strides = array<i32>} : memref<8x128xf32, #tpu.memory_space<vmem>>, vector<8x128xf32>,
    %c0_118 = arith.constant 0 : index
    %c0_119 = arith.constant 0 : index
    %498 = vector.load %arg11[%c0_118, %c0_119] : memref<8x128xf32, #tpu.memory_space<vmem>>, vector<8x128xf32>
    tpu.vector_store %arg11[%c0_118, %c0_119], %469 {strides = array<i32>} : memref<8x128xf32, #tpu.memory_space<vmem>>, vector<8x128xf32>,
    %c0_120 = arith.constant 0 : index
    %c0_121 = arith.constant 0 : index
    %499 = vector.load %arg12[%c0_120, %c0_121] : memref<8x128xf32, #tpu.memory_space<vmem>>, vector<8x128xf32>
    tpu.vector_store %arg12[%c0_120, %c0_121], %496 {strides = array<i32>} : memref<8x128xf32, #tpu.memory_space<vmem>>, vector<8x128xf32>,
    %c0_122 = arith.constant 0 : index
    %c0_123 = arith.constant 0 : index
    %500 = vector.load %arg13[%c0_122, %c0_123] : memref<8x128xf32, #tpu.memory_space<vmem>>, vector<8x128xf32>
    tpu.vector_store %arg13[%c0_122, %c0_123], %494 {strides = array<i32>} : memref<8x128xf32, #tpu.memory_space<vmem>>, vector<8x128xf32>,
    %c0_i32_124 = arith.constant 0 : i32
    %501 = arith.cmpi eq, %arg0, %c0_i32_124 : i32
    %502 = arith.extui %501 : i1 to i32
    %c0_i32_125 = arith.constant 0 : i32
    %503 = arith.cmpi ne, %502, %c0_i32_125 : i32
    scf.if %503 {
      %504 = tpu.concatenate %471, %496 in 1 : vector<8x128xf32>, vector<8x128xf32> -> vector<8x256xf32>
      %c0_126 = arith.constant 0 : index
      %c0_127 = arith.constant 0 : index
      %505 = vector.load %arg5[%c0_126, %c0_127] : memref<256x64xf32, #tpu.memory_space<vmem>>, vector<256x64xf32>
      %cst_128 = arith.constant dense<0.000000e+00> : vector<8x64xf32>
      %506 = tpu.matmul %504, %505, %cst_128 {dimension_numbers = #tpu.dot_dimension_numbers<[1], [0], [0], [1], [0, 0, 1, 1], [], []>} : vector<8x256xf32>, vector<256x64xf32>, vector<8x64xf32> -> vector<8x64xf32>
      %c0_129 = arith.constant 0 : index
      %c0_130 = arith.constant 0 : index
      %507 = vector.load %arg6[%c0_129, %c0_130] : memref<1x64xf32, #tpu.memory_space<vmem>>, vector<1x64xf32>
      %508 = vector.broadcast %507 : vector<1x64xf32> to vector<8x64xf32>
      %509 = arith.addf %506, %508 : vector<8x64xf32>
      %c0_131 = arith.constant 0 : index
      %c0_132 = arith.constant 0 : index
      %510 = vector.load %arg7[%c0_131, %c0_132] : memref<64x128xf32, #tpu.memory_space<vmem>>, vector<64x128xf32>
      %cst_133 = arith.constant dense<0.000000e+00> : vector<8x128xf32>
      %511 = tpu.matmul %509, %510, %cst_133 {dimension_numbers = #tpu.dot_dimension_numbers<[1], [0], [0], [1], [0, 0, 1, 1], [], []>} : vector<8x64xf32>, vector<64x128xf32>, vector<8x128xf32> -> vector<8x128xf32>
      %c0_134 = arith.constant 0 : index
      %c0_135 = arith.constant 0 : index
      %512 = vector.load %arg8[%c0_134, %c0_135] : memref<1x128xf32, #tpu.memory_space<vmem>>, vector<1x128xf32>
      %513 = vector.broadcast %512 : vector<1x128xf32> to vector<8x128xf32>
      %514 = arith.addf %511, %513 : vector<8x128xf32>
      %c0_136 = arith.constant 0 : index
      %c0_137 = arith.constant 0 : index
      %515 = vector.load %arg9[%c0_136, %c0_137] : memref<8x128xf32, #tpu.memory_space<vmem>>, vector<8x128xf32>
      tpu.vector_store %arg9[%c0_136, %c0_137], %514 {strides = array<i32>} : memref<8x128xf32, #tpu.memory_space<vmem>>, vector<8x128xf32>,
    } else {
    }
    return
  }
  func.func @transform_0(%arg0: i32) -> (i32, i32, i32) {
    %c0_i32 = arith.constant 0 : i32
    %c0_i32_0 = arith.constant 0 : i32
    %c0_i32_1 = arith.constant 0 : i32
    return %arg0, %c0_i32, %c0_i32_0 : i32, i32, i32
  }
  func.func @transform_1(%arg0: i32) -> (i32, i32, i32) {
    %c0_i32 = arith.constant 0 : i32
    %0 = arith.subi %c0_i32, %arg0 : i32
    %c0_i32_0 = arith.constant 0 : i32
    %c0_i32_1 = arith.constant 0 : i32
    %c0_i32_2 = arith.constant 0 : i32
    return %0, %c0_i32_0, %c0_i32_1 : i32, i32, i32
  }
  func.func @transform_2(%arg0: i32) -> (i32, i32) {
    %c0_i32 = arith.constant 0 : i32
    %c0_i32_0 = arith.constant 0 : i32
    %c0_i32_1 = arith.constant 0 : i32
    return %c0_i32, %c0_i32_0 : i32, i32
  }
  func.func @transform_3(%arg0: i32) -> (i32, i32) {
    %c0_i32 = arith.constant 0 : i32
    %c0_i32_0 = arith.constant 0 : i32
    %c0_i32_1 = arith.constant 0 : i32
    return %c0_i32, %c0_i32_0 : i32, i32
  }
  func.func @transform_4(%arg0: i32) -> (i32, i32) {
    %c0_i32 = arith.constant 0 : i32
    %c0_i32_0 = arith.constant 0 : i32
    %c0_i32_1 = arith.constant 0 : i32
    return %c0_i32, %c0_i32_0 : i32, i32
  }
  func.func @transform_5(%arg0: i32) -> (i32, i32) {
    %c0_i32 = arith.constant 0 : i32
    %c0_i32_0 = arith.constant 0 : i32
    %c0_i32_1 = arith.constant 0 : i32
    return %c0_i32, %c0_i32_0 : i32, i32
  }
  func.func @transform_6(%arg0: i32) -> (i32, i32) {
    %c0_i32 = arith.constant 0 : i32
    %c0_i32_0 = arith.constant 0 : i32
    %c0_i32_1 = arith.constant 0 : i32
    return %c0_i32, %c0_i32_0 : i32, i32
  }
  func.func @transform_7(%arg0: i32) -> (i32, i32) {
    %c0_i32 = arith.constant 0 : i32
    %c0_i32_0 = arith.constant 0 : i32
    %c0_i32_1 = arith.constant 0 : i32
    return %c0_i32, %c0_i32_0 : i32, i32
  }
  func.func @transform_8(%arg0: i32) -> (i32, i32) {
    %c0_i32 = arith.constant 0 : i32
    %c0_i32_0 = arith.constant 0 : i32
    %c0_i32_1 = arith.constant 0 : i32
    return %c0_i32, %c0_i32_0 : i32, i32
  }
}

</mosaic_0001>

<llo_original>
// kernel: rnn_lstm_forward.2
$region0: #{rnn_lstm_forward.2}
  #allocation0 [shape = 'u32[]', space=smem, size = 0x4, offset = 0x4, fixed_abs, tag = 'smem constant byte address 0x4 - core index']
  #allocation1 [shape = 'u32[144,128]{1,0:T(1,128)}', space=vmem, size = 0x12000, scoped, tag = 'internal scratch']
  #allocation2 [shape = 'f32[8,128]{1,0:T(8,128)}', space=vmem, size = 0x1000, scoped, tag = 'scratch operand']
  #allocation3 [shape = 'f32[8,128]{1,0:T(8,128)}', space=vmem, size = 0x1000, scoped, tag = 'scratch operand']
  #allocation4 [shape = 'f32[8,128]{1,0:T(8,128)}', space=vmem, size = 0x1000, scoped, tag = 'scratch operand']
  #allocation5 [shape = 'f32[8,128]{1,0:T(8,128)}', space=vmem, size = 0x1000, scoped, tag = 'scratch operand']
  %s0 = inlined_call_operand.vmem [shape: f32[8,8,512], index: 0, kind: input, shape index: {}]
  %s1 = inlined_call_operand.vmem [shape: f32[8,8,512], index: 1, kind: input, shape index: {}]
  %s2 = inlined_call_operand.vmem [shape: f32[128,512], index: 2, kind: input, shape index: {}]
  %s3 = inlined_call_operand.vmem [shape: f32[128,512], index: 3, kind: input, shape index: {}]
  %s4 = inlined_call_operand.vmem [shape: f32[8,8,128], index: 4, kind: output, shape index: {0}]
  %s5 = inlined_call_operand.vmem [shape: f32[8,8,128], index: 5, kind: output, shape index: {1}]
  %6 = xla_tuple %s4, %s5
  %s7 = sld [smem:[#allocation0]]
  $region38: #{rnn_lstm_forward.2} parent=0
    _
  %s9 = ssub.s32 1, %s7
  %s10 = scalar_select 0, %s9, %s7
  // Predicated region
  $region2: #{rnn_lstm_forward.2} parent=0 // pred_check
    _
  $region3: #{rnn_lstm_forward.2} parent=0 // pred_check_branch
    %12 = sbr.rel (0) target = $region5
  $region4: #{rnn_lstm_forward.2} parent=0 // pred_region
    _
  $region5: #{rnn_lstm_forward.2} parent=0 // pred_fallthru
    _
  // Predicated region
  $region6: #{rnn_lstm_forward.2} parent=0 // pred_check
    _
  $region7: #{rnn_lstm_forward.2} parent=0 // pred_check_branch
    %14 = sbr.rel (0) target = $region9
  $region8: #{rnn_lstm_forward.2} parent=0 // pred_region
    %s15 = ssub.s32 0, 0
    %s16 = smul.u32 8, %s15
    %p17 = scmp.lt.s32.totalorder %s16, 7
    %s18 = scalar_select %p17, %s16, 7
    %s19 = smul.addr %s18, 4
    %s20 = smul.addr %s19, 8
    %s21 = scalar_lea.vmem %s1, %s20
    %s22 = ssub.s32 0, 0
    %s23 = smul.u32 8, %s22
  $region9: #{rnn_lstm_forward.2} parent=0 // pred_fallthru
    _
  // Predicated region
  $region10: #{rnn_lstm_forward.2} parent=0 // pred_check
    _
  $region11: #{rnn_lstm_forward.2} parent=0 // pred_check_branch
    %25 = sbr.rel (0) target = $region13
  $region12: #{rnn_lstm_forward.2} parent=0 // pred_region
    _
  $region13: #{rnn_lstm_forward.2} parent=0 // pred_fallthru
    _
  // Predicated region
  $region14: #{rnn_lstm_forward.2} parent=0 // pred_check
    _
  $region15: #{rnn_lstm_forward.2} parent=0 // pred_check_branch
    %27 = sbr.rel (0) target = $region17
  $region16: #{rnn_lstm_forward.2} parent=0 // pred_region
    _
  $region17: #{rnn_lstm_forward.2} parent=0 // pred_fallthru
    _
  %s28 = ssub.s32 0, 0
  %s29 = smul.u32 8, %s28
  %p30 = scmp.lt.s32.totalorder %s29, 7
  %s31 = scalar_select %p30, %s29, 7
  %s32 = smul.addr %s31, 4
  %s33 = smul.addr %s32, 8
  %s34 = scalar_lea.vmem %s1, %s33
  %s35 = ssub.s32 0, 0
  %s36 = smul.u32 8, %s35
  %p37 = scmp.lt.s32.totalorder %s36, 7
  %s38 = scalar_select %p37, %s36, 7
  %s39 = smul.addr %s38, 8
  %s40 = scalar_lea.vmem %s5, %s39
  %s41 = ssub.s32 0, 0
  %s42 = smul.u32 8, %s41
  %p43 = scmp.lt.s32.totalorder %s42, 7
  %s44 = scalar_select %p43, %s42, 7
  %s45 = smul.addr %s44, 4
  %s46 = smul.addr %s45, 8
  %s47 = scalar_lea.vmem %s1, %s46
  %s48 = ssub.s32 0, 0
  %s49 = smul.u32 8, %s48
  %s50 = ssub.s32 0, 0
  %s51 = smul.u32 8, %s50
  %p52 = scmp.lt.s32.totalorder %s51, 7
  %s53 = scalar_select %p52, %s51, 7
  %s54 = smul.addr %s53, 8
  %s55 = scalar_lea.vmem %s5, %s54
  %s56 = ssub.s32 0, 0
  %s57 = smul.u32 8, %s56
  %p58 = scmp.eq.s32.totalorder 0, 0
  // Predicated region
  $region18: #{rnn_lstm_forward.2} parent=0 // pred_check
    %p59 = pneg %p58
  $region19: #{rnn_lstm_forward.2} parent=0 // pred_check_branch
    %61 = sbr.rel (%p59) target = $region21
  $region20: #{rnn_lstm_forward.2} parent=0 // pred_region
    %62 = vst [vmem:[#allocation2] sm:$0xff] 0.0
    %63 = vst [vmem:[#allocation3] sm:$0xff] 0.0
    %64 = vst [vmem:[#allocation4] sm:$0xff] 0.0
    %65 = vst [vmem:[#allocation5] sm:$0xff] 0.0
  $region21: #{rnn_lstm_forward.2} parent=0 // pred_fallthru
    _
  %v66 = vld [vmem:[%s2] sm:$0xff]
  %v67 = vld [vmem:[%s2 + $0x8] sm:$0xff]
  %v68 = vld [vmem:[%s2 + $0x10] sm:$0xff]
  %v69 = vld [vmem:[%s2 + $0x18] sm:$0xff]
  %v70 = vld [vmem:[%s2 + $0x20] sm:$0xff]
  %v71 = vld [vmem:[%s2 + $0x28] sm:$0xff]
  %v72 = vld [vmem:[%s2 + $0x30] sm:$0xff]
  %v73 = vld [vmem:[%s2 + $0x38] sm:$0xff]
  %v74 = vld [vmem:[%s2 + $0x40] sm:$0xff]
  %v75 = vld [vmem:[%s2 + $0x48] sm:$0xff]
  %v76 = vld [vmem:[%s2 + $0x50] sm:$0xff]
  %v77 = vld [vmem:[%s2 + $0x58] sm:$0xff]
  %v78 = vld [vmem:[%s2 + $0x60] sm:$0xff]
  %v79 = vld [vmem:[%s2 + $0x68] sm:$0xff]
  %v80 = vld [vmem:[%s2 + $0x70] sm:$0xff]
  %v81 = vld [vmem:[%s2 + $0x78] sm:$0xff]
  %v82 = vld [vmem:[%s2 + $0x80] sm:$0xff]
  %v83 = vld [vmem:[%s2 + $0x88] sm:$0xff]
  %v84 = vld [vmem:[%s2 + $0x90] sm:$0xff]
  %v85 = vld [vmem:[%s2 + $0x98] sm:$0xff]
  %v86 = vld [vmem:[%s2 + $0xa0] sm:$0xff]
  %v87 = vld [vmem:[%s2 + $0xa8] sm:$0xff]
  %v88 = vld [vmem:[%s2 + $0xb0] sm:$0xff]
  %v89 = vld [vmem:[%s2 + $0xb8] sm:$0xff]
  %v90 = vld [vmem:[%s2 + $0xc0] sm:$0xff]
  %v91 = vld [vmem:[%s2 + $0xc8] sm:$0xff]
  %v92 = vld [vmem:[%s2 + $0xd0] sm:$0xff]
  %v93 = vld [vmem:[%s2 + $0xd8] sm:$0xff]
  %v94 = vld [vmem:[%s2 + $0xe0] sm:$0xff]
  %v95 = vld [vmem:[%s2 + $0xe8] sm:$0xff]
  %v96 = vld [vmem:[%s2 + $0xf0] sm:$0xff]
  %v97 = vld [vmem:[%s2 + $0xf8] sm:$0xff]
  %v98 = vld [vmem:[%s2 + $0x100] sm:$0xff]
  %v99 = vld [vmem:[%s2 + $0x108] sm:$0xff]
  %v100 = vld [vmem:[%s2 + $0x110] sm:$0xff]
  %v101 = vld [vmem:[%s2 + $0x118] sm:$0xff]
  %v102 = vld [vmem:[%s2 + $0x120] sm:$0xff]
  %v103 = vld [vmem:[%s2 + $0x128] sm:$0xff]
  %v104 = vld [vmem:[%s2 + $0x130] sm:$0xff]
  %v105 = vld [vmem:[%s2 + $0x138] sm:$0xff]
  %v106 = vld [vmem:[%s2 + $0x140] sm:$0xff]
  %v107 = vld [vmem:[%s2 + $0x148] sm:$0xff]
  %v108 = vld [vmem:[%s2 + $0x150] sm:$0xff]
  %v109 = vld [vmem:[%s2 + $0x158] sm:$0xff]
  %v110 = vld [vmem:[%s2 + $0x160] sm:$0xff]
  %v111 = vld [vmem:[%s2 + $0x168] sm:$0xff]
  %v112 = vld [vmem:[%s2 + $0x170] sm:$0xff]
  %v113 = vld [vmem:[%s2 + $0x178] sm:$0xff]
  %v114 = vld [vmem:[%s2 + $0x180] sm:$0xff]
  %v115 = vld [vmem:[%s2 + $0x188] sm:$0xff]
  %v116 = vld [vmem:[%s2 + $0x190] sm:$0xff]
  %v117 = vld [vmem:[%s2 + $0x198] sm:$0xff]
  %v118 = vld [vmem:[%s2 + $0x1a0] sm:$0xff]
  %v119 = vld [vmem:[%s2 + $0x1a8] sm:$0xff]
  %v120 = vld [vmem:[%s2 + $0x1b0] sm:$0xff]
  %v121 = vld [vmem:[%s2 + $0x1b8] sm:$0xff]
  %v122 = vld [vmem:[%s2 + $0x1c0] sm:$0xff]
  %v123 = vld [vmem:[%s2 + $0x1c8] sm:$0xff]
  %v124 = vld [vmem:[%s2 + $0x1d0] sm:$0xff]
  %v125 = vld [vmem:[%s2 + $0x1d8] sm:$0xff]
  %v126 = vld [vmem:[%s2 + $0x1e0] sm:$0xff]
  %v127 = vld [vmem:[%s2 + $0x1e8] sm:$0xff]
  %v128 = vld [vmem:[%s2 + $0x1f0] sm:$0xff]
  %v129 = vld [vmem:[%s2 + $0x1f8] sm:$0xff]
  %v130 = vld [vmem:[%s3] sm:$0xff]
  %v131 = vld [vmem:[%s3 + $0x8] sm:$0xff]
  %v132 = vld [vmem:[%s3 + $0x10] sm:$0xff]
  %v133 = vld [vmem:[%s3 + $0x18] sm:$0xff]
  %v134 = vld [vmem:[%s3 + $0x20] sm:$0xff]
  %v135 = vld [vmem:[%s3 + $0x28] sm:$0xff]
  %v136 = vld [vmem:[%s3 + $0x30] sm:$0xff]
  %v137 = vld [vmem:[%s3 + $0x38] sm:$0xff]
  %v138 = vld [vmem:[%s3 + $0x40] sm:$0xff]
  %v139 = vld [vmem:[%s3 + $0x48] sm:$0xff]
  %v140 = vld [vmem:[%s3 + $0x50] sm:$0xff]
  %v141 = vld [vmem:[%s3 + $0x58] sm:$0xff]
  %v142 = vld [vmem:[%s3 + $0x60] sm:$0xff]
  %v143 = vld [vmem:[%s3 + $0x68] sm:$0xff]
  %v144 = vld [vmem:[%s3 + $0x70] sm:$0xff]
  %v145 = vld [vmem:[%s3 + $0x78] sm:$0xff]
  %v146 = vld [vmem:[%s3 + $0x80] sm:$0xff]
  %v147 = vld [vmem:[%s3 + $0x88] sm:$0xff]
  %v148 = vld [vmem:[%s3 + $0x90] sm:$0xff]
  %v149 = vld [vmem:[%s3 + $0x98] sm:$0xff]
  %v150 = vld [vmem:[%s3 + $0xa0] sm:$0xff]
  %v151 = vld [vmem:[%s3 + $0xa8] sm:$0xff]
  %v152 = vld [vmem:[%s3 + $0xb0] sm:$0xff]
  %v153 = vld [vmem:[%s3 + $0xb8] sm:$0xff]
  %v154 = vld [vmem:[%s3 + $0xc0] sm:$0xff]
  %v155 = vld [vmem:[%s3 + $0xc8] sm:$0xff]
  %v156 = vld [vmem:[%s3 + $0xd0] sm:$0xff]
  %v157 = vld [vmem:[%s3 + $0xd8] sm:$0xff]
  %v158 = vld [vmem:[%s3 + $0xe0] sm:$0xff]
  %v159 = vld [vmem:[%s3 + $0xe8] sm:$0xff]
  %v160 = vld [vmem:[%s3 + $0xf0] sm:$0xff]
  %v161 = vld [vmem:[%s3 + $0xf8] sm:$0xff]
  %v162 = vld [vmem:[%s3 + $0x100] sm:$0xff]
  %v163 = vld [vmem:[%s3 + $0x108] sm:$0xff]
  %v164 = vld [vmem:[%s3 + $0x110] sm:$0xff]
  %v165 = vld [vmem:[%s3 + $0x118] sm:$0xff]
  %v166 = vld [vmem:[%s3 + $0x120] sm:$0xff]
  %v167 = vld [vmem:[%s3 + $0x128] sm:$0xff]
  %v168 = vld [vmem:[%s3 + $0x130] sm:$0xff]
  %v169 = vld [vmem:[%s3 + $0x138] sm:$0xff]
  %v170 = vld [vmem:[%s3 + $0x140] sm:$0xff]
  %v171 = vld [vmem:[%s3 + $0x148] sm:$0xff]
  %v172 = vld [vmem:[%s3 + $0x150] sm:$0xff]
  %v173 = vld [vmem:[%s3 + $0x158] sm:$0xff]
  %v174 = vld [vmem:[%s3 + $0x160] sm:$0xff]
  %v175 = vld [vmem:[%s3 + $0x168] sm:$0xff]
  %v176 = vld [vmem:[%s3 + $0x170] sm:$0xff]
  %v177 = vld [vmem:[%s3 + $0x178] sm:$0xff]
  %v178 = vld [vmem:[%s3 + $0x180] sm:$0xff]
  %v179 = vld [vmem:[%s3 + $0x188] sm:$0xff]
  %v180 = vld [vmem:[%s3 + $0x190] sm:$0xff]
  %v181 = vld [vmem:[%s3 + $0x198] sm:$0xff]
  %v182 = vld [vmem:[%s3 + $0x1a0] sm:$0xff]
  %v183 = vld [vmem:[%s3 + $0x1a8] sm:$0xff]
  %v184 = vld [vmem:[%s3 + $0x1b0] sm:$0xff]
  %v185 = vld [vmem:[%s3 + $0x1b8] sm:$0xff]
  %v186 = vld [vmem:[%s3 + $0x1c0] sm:$0xff]
  %v187 = vld [vmem:[%s3 + $0x1c8] sm:$0xff]
  %v188 = vld [vmem:[%s3 + $0x1d0] sm:$0xff]
  %v189 = vld [vmem:[%s3 + $0x1d8] sm:$0xff]
  %v190 = vld [vmem:[%s3 + $0x1e0] sm:$0xff]
  %v191 = vld [vmem:[%s3 + $0x1e8] sm:$0xff]
  %v192 = vld [vmem:[%s3 + $0x1f0] sm:$0xff]
  %v193 = vld [vmem:[%s3 + $0x1f8] sm:$0xff]
  %v194 = vld [vmem:[#allocation2] sm:$0xff]
  %v195 = vld [vmem:[#allocation3] sm:$0xff]
  %v196 = vld [vmem:[#allocation4] sm:$0xff]
  %v197 = vld [vmem:[#allocation5] sm:$0xff]
  %v198 = vld [vmem:[%s0] sm:$0xff]
  %v199 = vld [vmem:[%s0 + $0x8] sm:$0xff]
  %v200 = vld [vmem:[%s0 + $0x10] sm:$0xff]
  %v201 = vld [vmem:[%s0 + $0x18] sm:$0xff]
  %202 = vmatprep.subr.mxu0 %v67
  %203 = vmatpush1.msra.mxu0 %v66
  %204 = vmatprep.subr.mxu0 %v71
  %205 = vmatpush1.msra.mxu0 %v70
  %206 = vmatprep.subr.mxu0 %v75
  %207 = vmatpush1.msra.mxu0 %v74
  %208 = vmatprep.subr.mxu0 %v79
  %209 = vmatpush1.msra.mxu0 %v78
  %210 = vmatprep.subr.mxu0 %v83
  %211 = vmatpush1.msra.mxu0 %v82
  %212 = vmatprep.subr.mxu0 %v87
  %213 = vmatpush1.msra.mxu0 %v86
  %214 = vmatprep.subr.mxu0 %v91
  %215 = vmatpush1.msra.mxu0 %v90
  %216 = vmatprep.subr.mxu0 %v95
  %217 = vmatpush1.msra.mxu0 %v94
  %218 = vmatprep.subr.mxu0 %v99
  %219 = vmatpush1.msra.mxu0 %v98
  %220 = vmatprep.subr.mxu0 %v103
  %221 = vmatpush1.msra.mxu0 %v102
  %222 = vmatprep.subr.mxu0 %v107
  %223 = vmatpush1.msra.mxu0 %v106
  %224 = vmatprep.subr.mxu0 %v111
  %225 = vmatpush1.msra.mxu0 %v110
  %226 = vmatprep.subr.mxu0 %v115
  %227 = vmatpush1.msra.mxu0 %v114
  %228 = vmatprep.subr.mxu0 %v119
  %229 = vmatpush1.msra.mxu0 %v118
  %230 = vmatprep.subr.mxu0 %v123
  %231 = vmatpush1.msra.mxu0 %v122
  %232 = vmatprep.subr.mxu0 %v127
  %233 = vmatpush1.msra.mxu0 %v126
  %234 = vmatprep.subr.mxu0 0.0
  %235 = vmatpush1.msra.mxu0 0.0
  %236 = vmatprep.subr.mxu0 0.0
  %237 = vmatpush1.msra.mxu0 0.0
  %238 = vmatprep.subr.mxu0 0.0
  %239 = vmatpush1.msra.mxu0 0.0
  %240 = vmatprep.subr.mxu0 0.0
  %241 = vmatpush1.msra.mxu0 0.0
  %242 = vmatprep.subr.mxu0 0.0
  %243 = vmatpush1.msra.mxu0 0.0
  %244 = vmatprep.subr.mxu0 0.0
  %245 = vmatpush1.msra.mxu0 0.0
  %246 = vmatprep.subr.mxu0 0.0
  %247 = vmatpush1.msra.mxu0 0.0
  %248 = vmatprep.subr.mxu0 0.0
  %249 = vmatpush1.msra.mxu0 0.0
  %250 = vmatprep.subr.mxu0 0.0
  %251 = vmatpush1.msra.mxu0 0.0
  %252 = vmatprep.subr.mxu0 0.0
  %253 = vmatpush1.msra.mxu0 0.0
  %254 = vmatprep.subr.mxu0 0.0
  %255 = vmatpush1.msra.mxu0 0.0
  %256 = vmatprep.subr.mxu0 0.0
  %257 = vmatpush1.msra.mxu0 0.0
  %258 = vmatprep.subr.mxu0 0.0
  %259 = vmatpush1.msra.mxu0 0.0
  %260 = vmatprep.subr.mxu0 0.0
  %261 = vmatpush1.msra.mxu0 0.0
  %262 = vmatprep.subr.mxu0 0.0
  %263 = vmatpush1.msra.mxu0 0.0
  %264 = vmatprep.subr.mxu0 0.0
  %265 = vmatpush1.msra.mxu0 0.0
  %266 = vmatprep.mubr.f32.mxu0 0.0
  %267 = vmatmul.mubr.f32.gmra.mrb[0].mxu0 %v194
  %v268 = vpop.f32.mrb[0].mxu0
  %v269 = vadd.f32 0.0, %v268
  %v270 = vpop.f32.mrb[0].mxu0
  %v271 = vadd.f32 0.0, %v270
  %272 = vdwg.mxu0
  %273 = vmatprep.subr.mxu0 %v69
  %274 = vmatpush1.msra.mxu0 %v68
  %275 = vmatprep.subr.mxu0 %v73
  %276 = vmatpush1.msra.mxu0 %v72
  %277 = vmatprep.subr.mxu0 %v77
  %278 = vmatpush1.msra.mxu0 %v76
  %279 = vmatprep.subr.mxu0 %v81
  %280 = vmatpush1.msra.mxu0 %v80
  %281 = vmatprep.subr.mxu0 %v85
  %282 = vmatpush1.msra.mxu0 %v84
  %283 = vmatprep.subr.mxu0 %v89
  %284 = vmatpush1.msra.mxu0 %v88
  %285 = vmatprep.subr.mxu0 %v93
  %286 = vmatpush1.msra.mxu0 %v92
  %287 = vmatprep.subr.mxu0 %v97
  %288 = vmatpush1.msra.mxu0 %v96
  %289 = vmatprep.subr.mxu0 %v101
  %290 = vmatpush1.msra.mxu0 %v100
  %291 = vmatprep.subr.mxu0 %v105
  %292 = vmatpush1.msra.mxu0 %v104
  %293 = vmatprep.subr.mxu0 %v109
  %294 = vmatpush1.msra.mxu0 %v108
  %295 = vmatprep.subr.mxu0 %v113
  %296 = vmatpush1.msra.mxu0 %v112
  %297 = vmatprep.subr.mxu0 %v117
  %298 = vmatpush1.msra.mxu0 %v116
  %299 = vmatprep.subr.mxu0 %v121
  %300 = vmatpush1.msra.mxu0 %v120
  %301 = vmatprep.subr.mxu0 %v125
  %302 = vmatpush1.msra.mxu0 %v124
  %303 = vmatprep.subr.mxu0 %v129
  %304 = vmatpush1.msra.mxu0 %v128
  %305 = vmatprep.subr.mxu0 0.0
  %306 = vmatpush1.msra.mxu0 0.0
  %307 = vmatprep.subr.mxu0 0.0
  %308 = vmatpush1.msra.mxu0 0.0
  %309 = vmatprep.subr.mxu0 0.0
  %310 = vmatpush1.msra.mxu0 0.0
  %311 = vmatprep.subr.mxu0 0.0
  %312 = vmatpush1.msra.mxu0 0.0
  %313 = vmatprep.subr.mxu0 0.0
  %314 = vmatpush1.msra.mxu0 0.0
  %315 = vmatprep.subr.mxu0 0.0
  %316 = vmatpush1.msra.mxu0 0.0
  %317 = vmatprep.subr.mxu0 0.0
  %318 = vmatpush1.msra.mxu0 0.0
  %319 = vmatprep.subr.mxu0 0.0
  %320 = vmatpush1.msra.mxu0 0.0
  %321 = vmatprep.subr.mxu0 0.0
  %322 = vmatpush1.msra.mxu0 0.0
  %323 = vmatprep.subr.mxu0 0.0
  %324 = vmatpush1.msra.mxu0 0.0
  %325 = vmatprep.subr.mxu0 0.0
  %326 = vmatpush1.msra.mxu0 0.0
  %327 = vmatprep.subr.mxu0 0.0
  %328 = vmatpush1.msra.mxu0 0.0
  %329 = vmatprep.subr.mxu0 0.0
  %330 = vmatpush1.msra.mxu0 0.0
  %331 = vmatprep.subr.mxu0 0.0
  %332 = vmatpush1.msra.mxu0 0.0
  %333 = vmatprep.subr.mxu0 0.0
  %334 = vmatpush1.msra.mxu0 0.0
  %335 = vmatprep.subr.mxu0 0.0
  %336 = vmatpush1.msra.mxu0 0.0
  %337 = vmatprep.mubr.f32.mxu0 0.0
  %338 = vmatmul.mubr.f32.gmra.mrb[0].mxu0 %v194
  %v339 = vpop.f32.mrb[0].mxu0
  %v340 = vadd.f32 0.0, %v339
  %v341 = vpop.f32.mrb[0].mxu0
  %v342 = vadd.f32 0.0, %v341
  %343 = vdwg.mxu0
  %v344 = vadd.f32 %v198, %v269
  %v345 = vadd.f32 %v199, %v271
  %v346 = vadd.f32 %v200, %v340
  %v347 = vadd.f32 %v201, %v342
  %s348 = scalar_lea.vmem %s47, 224
  %v349 = vld [vmem:[%s348] sm:$0xff]
  %v350 = vld [vmem:[%s348 + $0x8] sm:$0xff]
  %v351 = vld [vmem:[%s348 + $0x10] sm:$0xff]
  %v352 = vld [vmem:[%s348 + $0x18] sm:$0xff]
  %353 = vmatprep.subr.mxu0 %v131
  %354 = vmatpush1.msra.mxu0 %v130
  %355 = vmatprep.subr.mxu0 %v135
  %356 = vmatpush1.msra.mxu0 %v134
  %357 = vmatprep.subr.mxu0 %v139
  %358 = vmatpush1.msra.mxu0 %v138
  %359 = vmatprep.subr.mxu0 %v143
  %360 = vmatpush1.msra.mxu0 %v142
  %361 = vmatprep.subr.mxu0 %v147
  %362 = vmatpush1.msra.mxu0 %v146
  %363 = vmatprep.subr.mxu0 %v151
  %364 = vmatpush1.msra.mxu0 %v150
  %365 = vmatprep.subr.mxu0 %v155
  %366 = vmatpush1.msra.mxu0 %v154
  %367 = vmatprep.subr.mxu0 %v159
  %368 = vmatpush1.msra.mxu0 %v158
  %369 = vmatprep.subr.mxu0 %v163
  %370 = vmatpush1.msra.mxu0 %v162
  %371 = vmatprep.subr.mxu0 %v167
  %372 = vmatpush1.msra.mxu0 %v166
  %373 = vmatprep.subr.mxu0 %v171
  %374 = vmatpush1.msra.mxu0 %v170
  %375 = vmatprep.subr.mxu0 %v175
  %376 = vmatpush1.msra.mxu0 %v174
  %377 = vmatprep.subr.mxu0 %v179
  %378 = vmatpush1.msra.mxu0 %v178
  %379 = vmatprep.subr.mxu0 %v183
  %380 = vmatpush1.msra.mxu0 %v182
  %381 = vmatprep.subr.mxu0 %v187
  %382 = vmatpush1.msra.mxu0 %v186
  %383 = vmatprep.subr.mxu0 %v191
  %384 = vmatpush1.msra.mxu0 %v190
  %385 = vmatprep.subr.mxu0 0.0
  %386 = vmatpush1.msra.mxu0 0.0
  %387 = vmatprep.subr.mxu0 0.0
  %388 = vmatpush1.msra.mxu0 0.0
  %389 = vmatprep.subr.mxu0 0.0
  %390 = vmatpush1.msra.mxu0 0.0
  %391 = vmatprep.subr.mxu0 0.0
  %392 = vmatpush1.msra.mxu0 0.0
  %393 = vmatprep.subr.mxu0 0.0
  %394 = vmatpush1.msra.mxu0 0.0
  %395 = vmatprep.subr.mxu0 0.0
  %396 = vmatpush1.msra.mxu0 0.0
  %397 = vmatprep.subr.mxu0 0.0
  %398 = vmatpush1.msra.mxu0 0.0
  %399 = vmatprep.subr.mxu0 0.0
  %400 = vmatpush1.msra.mxu0 0.0
  %401 = vmatprep.subr.mxu0 0.0
  %402 = vmatpush1.msra.mxu0 0.0
  %403 = vmatprep.subr.mxu0 0.0
  %404 = vmatpush1.msra.mxu0 0.0
  %405 = vmatprep.subr.mxu0 0.0
  %406 = vmatpush1.msra.mxu0 0.0
  %407 = vmatprep.subr.mxu0 0.0
  %408 = vmatpush1.msra.mxu0 0.0
  %409 = vmatprep.subr.mxu0 0.0
  %410 = vmatpush1.msra.mxu0 0.0
  %411 = vmatprep.subr.mxu0 0.0
  %412 = vmatpush1.msra.mxu0 0.0
  %413 = vmatprep.subr.mxu0 0.0
  %414 = vmatpush1.msra.mxu0 0.0
  %415 = vmatprep.subr.mxu0 0.0
  %416 = vmatpush1.msra.mxu0 0.0
  %417 = vmatprep.mubr.f32.mxu0 0.0
  %418 = vmatmul.mubr.f32.gmra.mrb[0].mxu0 %v196
  %v419 = vpop.f32.mrb[0].mxu0
  %v420 = vadd.f32 0.0, %v419
  %v421 = vpop.f32.mrb[0].mxu0
  %v422 = vadd.f32 0.0, %v421
  %423 = vdwg.mxu0
  %424 = vmatprep.subr.mxu0 %v133
  %425 = vmatpush1.msra.mxu0 %v132
  %426 = vmatprep.subr.mxu0 %v137
  %427 = vmatpush1.msra.mxu0 %v136
  %428 = vmatprep.subr.mxu0 %v141
  %429 = vmatpush1.msra.mxu0 %v140
  %430 = vmatprep.subr.mxu0 %v145
  %431 = vmatpush1.msra.mxu0 %v144
  %432 = vmatprep.subr.mxu0 %v149
  %433 = vmatpush1.msra.mxu0 %v148
  %434 = vmatprep.subr.mxu0 %v153
  %435 = vmatpush1.msra.mxu0 %v152
  %436 = vmatprep.subr.mxu0 %v157
  %437 = vmatpush1.msra.mxu0 %v156
  %438 = vmatprep.subr.mxu0 %v161
  %439 = vmatpush1.msra.mxu0 %v160
  %440 = vmatprep.subr.mxu0 %v165
  %441 = vmatpush1.msra.mxu0 %v164
  %442 = vmatprep.subr.mxu0 %v169
  %443 = vmatpush1.msra.mxu0 %v168
  %444 = vmatprep.subr.mxu0 %v173
  %445 = vmatpush1.msra.mxu0 %v172
  %446 = vmatprep.subr.mxu0 %v177
  %447 = vmatpush1.msra.mxu0 %v176
  %448 = vmatprep.subr.mxu0 %v181
  %449 = vmatpush1.msra.mxu0 %v180
  %450 = vmatprep.subr.mxu0 %v185
  %451 = vmatpush1.msra.mxu0 %v184
  %452 = vmatprep.subr.mxu0 %v189
  %453 = vmatpush1.msra.mxu0 %v188
  %454 = vmatprep.subr.mxu0 %v193
  %455 = vmatpush1.msra.mxu0 %v192
  %456 = vmatprep.subr.mxu0 0.0
  %457 = vmatpush1.msra.mxu0 0.0
  %458 = vmatprep.subr.mxu0 0.0
  %459 = vmatpush1.msra.mxu0 0.0
  %460 = vmatprep.subr.mxu0 0.0
  %461 = vmatpush1.msra.mxu0 0.0
  %462 = vmatprep.subr.mxu0 0.0
  %463 = vmatpush1.msra.mxu0 0.0
  %464 = vmatprep.subr.mxu0 0.0
  %465 = vmatpush1.msra.mxu0 0.0
  %466 = vmatprep.subr.mxu0 0.0
  %467 = vmatpush1.msra.mxu0 0.0
  %468 = vmatprep.subr.mxu0 0.0
  %469 = vmatpush1.msra.mxu0 0.0
  %470 = vmatprep.subr.mxu0 0.0
  %471 = vmatpush1.msra.mxu0 0.0
  %472 = vmatprep.subr.mxu0 0.0
  %473 = vmatpush1.msra.mxu0 0.0
  %474 = vmatprep.subr.mxu0 0.0
  %475 = vmatpush1.msra.mxu0 0.0
  %476 = vmatprep.subr.mxu0 0.0
  %477 = vmatpush1.msra.mxu0 0.0
  %478 = vmatprep.subr.mxu0 0.0
  %479 = vmatpush1.msra.mxu0 0.0
  %480 = vmatprep.subr.mxu0 0.0
  %481 = vmatpush1.msra.mxu0 0.0
  %482 = vmatprep.subr.mxu0 0.0
  %483 = vmatpush1.msra.mxu0 0.0
  %484 = vmatprep.subr.mxu0 0.0
  %485 = vmatpush1.msra.mxu0 0.0
  %486 = vmatprep.subr.mxu0 0.0
  %487 = vmatpush1.msra.mxu0 0.0
  %488 = vmatprep.mubr.f32.mxu0 0.0
  %489 = vmatmul.mubr.f32.gmra.mrb[0].mxu0 %v196
  %v490 = vpop.f32.mrb[0].mxu0
  %v491 = vadd.f32 0.0, %v490
  %v492 = vpop.f32.mrb[0].mxu0
  %v493 = vadd.f32 0.0, %v492
  %494 = vdwg.mxu0
  %v495 = vadd.f32 %v349, %v420
  %v496 = vadd.f32 %v350, %v422
  %v497 = vadd.f32 %v351, %v491
  %v498 = vadd.f32 %v352, %v493
  %v499 = vxor.u32 %v344, 2147483648
  %v500 = vmul.f32 %v499, 1.442695
  %v501 = vpow.pop %v500
  %v502 = vadd.f32 %v501, 1.0
  %v503 = vrcp.pop %v502
  %v504 = vmul.f32 1.0, %v503
  %v505 = vxor.u32 %v345, 2147483648
  %v506 = vmul.f32 %v505, 1.442695
  %v507 = vpow.pop %v506
  %v508 = vadd.f32 %v507, 1.0
  %v509 = vrcp.pop %v508
  %v510 = vmul.f32 1.0, %v509
  %v511 = vtanh.pop %v346
  %v512 = vxor.u32 %v347, 2147483648
  %v513 = vmul.f32 %v512, 1.442695
  %v514 = vpow.pop %v513
  %v515 = vadd.f32 %v514, 1.0
  %v516 = vrcp.pop %v515
  %v517 = vmul.f32 1.0, %v516
  %v518 = vmul.f32 %v510, %v195
  %v519 = vmul.f32 %v504, %v511
  %v520 = vadd.f32 %v518, %v519
  %v521 = vtanh.pop %v520
  %v522 = vmul.f32 %v517, %v521
  %v523 = vxor.u32 %v495, 2147483648
  %v524 = vmul.f32 %v523, 1.442695
  %v525 = vpow.pop %v524
  %v526 = vadd.f32 %v525, 1.0
  %v527 = vrcp.pop %v526
  %v528 = vmul.f32 1.0, %v527
  %v529 = vxor.u32 %v496, 2147483648
  %v530 = vmul.f32 %v529, 1.442695
  %v531 = vpow.pop %v530
  %v532 = vadd.f32 %v531, 1.0
  %v533 = vrcp.pop %v532
  %v534 = vmul.f32 1.0, %v533
  %v535 = vtanh.pop %v497
  %v536 = vxor.u32 %v498, 2147483648
  %v537 = vmul.f32 %v536, 1.442695
  %v538 = vpow.pop %v537
  %v539 = vadd.f32 %v538, 1.0
  %v540 = vrcp.pop %v539
  %v541 = vmul.f32 1.0, %v540
  %v542 = vmul.f32 %v534, %v197
  %v543 = vmul.f32 %v528, %v535
  %v544 = vadd.f32 %v542, %v543
  %v545 = vtanh.pop %v544
  %v546 = vmul.f32 %v541, %v545
  %547 = vst [vmem:[%s4] sm:$0xff] %v522
  %s548 = scalar_lea.vmem %s55, 56
  %549 = vst [vmem:[%s548] sm:$0xff] %v546
  %s550 = scalar_lea.vmem %s0, 32
  %v551 = vld [vmem:[%s550] sm:$0xff]
  %v552 = vld [vmem:[%s550 + $0x8] sm:$0xff]
  %v553 = vld [vmem:[%s550 + $0x10] sm:$0xff]
  %v554 = vld [vmem:[%s550 + $0x18] sm:$0xff]
  %555 = vmatprep.subr.mxu0 %v67
  %556 = vmatpush1.msra.mxu0 %v66
  %557 = vmatprep.subr.mxu0 %v71
  %558 = vmatpush1.msra.mxu0 %v70
  %559 = vmatprep.subr.mxu0 %v75
  %560 = vmatpush1.msra.mxu0 %v74
  %561 = vmatprep.subr.mxu0 %v79
  %562 = vmatpush1.msra.mxu0 %v78
  %563 = vmatprep.subr.mxu0 %v83
  %564 = vmatpush1.msra.mxu0 %v82
  %565 = vmatprep.subr.mxu0 %v87
  %566 = vmatpush1.msra.mxu0 %v86
  %567 = vmatprep.subr.mxu0 %v91
  %568 = vmatpush1.msra.mxu0 %v90
  %569 = vmatprep.subr.mxu0 %v95
  %570 = vmatpush1.msra.mxu0 %v94
  %571 = vmatprep.subr.mxu0 %v99
  %572 = vmatpush1.msra.mxu0 %v98
  %573 = vmatprep.subr.mxu0 %v103
  %574 = vmatpush1.msra.mxu0 %v102
  %575 = vmatprep.subr.mxu0 %v107
  %576 = vmatpush1.msra.mxu0 %v106
  %577 = vmatprep.subr.mxu0 %v111
  %578 = vmatpush1.msra.mxu0 %v110
  %579 = vmatprep.subr.mxu0 %v115
  %580 = vmatpush1.msra.mxu0 %v114
  %581 = vmatprep.subr.mxu0 %v119
  %582 = vmatpush1.msra.mxu0 %v118
  %583 = vmatprep.subr.mxu0 %v123
  %584 = vmatpush1.msra.mxu0 %v122
  %585 = vmatprep.subr.mxu0 %v127
  %586 = vmatpush1.msra.mxu0 %v126
  %587 = vmatprep.subr.mxu0 0.0
  %588 = vmatpush1.msra.mxu0 0.0
  %589 = vmatprep.subr.mxu0 0.0
  %590 = vmatpush1.msra.mxu0 0.0
  %591 = vmatprep.subr.mxu0 0.0
  %592 = vmatpush1.msra.mxu0 0.0
  %593 = vmatprep.subr.mxu0 0.0
  %594 = vmatpush1.msra.mxu0 0.0
  %595 = vmatprep.subr.mxu0 0.0
  %596 = vmatpush1.msra.mxu0 0.0
  %597 = vmatprep.subr.mxu0 0.0
  %598 = vmatpush1.msra.mxu0 0.0
  %599 = vmatprep.subr.mxu0 0.0
  %600 = vmatpush1.msra.mxu0 0.0
  %601 = vmatprep.subr.mxu0 0.0
  %602 = vmatpush1.msra.mxu0 0.0
  %603 = vmatprep.subr.mxu0 0.0
  %604 = vmatpush1.msra.mxu0 0.0
  %605 = vmatprep.subr.mxu0 0.0
  %606 = vmatpush1.msra.mxu0 0.0
  %607 = vmatprep.subr.mxu0 0.0
  %608 = vmatpush1.msra.mxu0 0.0
  %609 = vmatprep.subr.mxu0 0.0
  %610 = vmatpush1.msra.mxu0 0.0
  %611 = vmatprep.subr.mxu0 0.0
  %612 = vmatpush1.msra.mxu0 0.0
  %613 = vmatprep.subr.mxu0 0.0
  %614 = vmatpush1.msra.mxu0 0.0
  %615 = vmatprep.subr.mxu0 0.0
  %616 = vmatpush1.msra.mxu0 0.0
  %617 = vmatprep.subr.mxu0 0.0
  %618 = vmatpush1.msra.mxu0 0.0
  %619 = vmatprep.mubr.f32.mxu0 0.0
  %620 = vmatmul.mubr.f32.gmra.mrb[0].mxu0 %v522
  %v621 = vpop.f32.mrb[0].mxu0
  %v622 = vadd.f32 0.0, %v621
  %v623 = vpop.f32.mrb[0].mxu0
  %v624 = vadd.f32 0.0, %v623
  %625 = vdwg.mxu0
  %626 = vmatprep.subr.mxu0 %v69
  %627 = vmatpush1.msra.mxu0 %v68
  %628 = vmatprep.subr.mxu0 %v73
  %629 = vmatpush1.msra.mxu0 %v72
  %630 = vmatprep.subr.mxu0 %v77
  %631 = vmatpush1.msra.mxu0 %v76
  %632 = vmatprep.subr.mxu0 %v81
  %633 = vmatpush1.msra.mxu0 %v80
  %634 = vmatprep.subr.mxu0 %v85
  %635 = vmatpush1.msra.mxu0 %v84
  %636 = vmatprep.subr.mxu0 %v89
  %637 = vmatpush1.msra.mxu0 %v88
  %638 = vmatprep.subr.mxu0 %v93
  %639 = vmatpush1.msra.mxu0 %v92
  %640 = vmatprep.subr.mxu0 %v97
  %641 = vmatpush1.msra.mxu0 %v96
  %642 = vmatprep.subr.mxu0 %v101
  %643 = vmatpush1.msra.mxu0 %v100
  %644 = vmatprep.subr.mxu0 %v105
  %645 = vmatpush1.msra.mxu0 %v104
  %646 = vmatprep.subr.mxu0 %v109
  %647 = vmatpush1.msra.mxu0 %v108
  %648 = vmatprep.subr.mxu0 %v113
  %649 = vmatpush1.msra.mxu0 %v112
  %650 = vmatprep.subr.mxu0 %v117
  %651 = vmatpush1.msra.mxu0 %v116
  %652 = vmatprep.subr.mxu0 %v121
  %653 = vmatpush1.msra.mxu0 %v120
  %654 = vmatprep.subr.mxu0 %v125
  %655 = vmatpush1.msra.mxu0 %v124
  %656 = vmatprep.subr.mxu0 %v129
  %657 = vmatpush1.msra.mxu0 %v128
  %658 = vmatprep.subr.mxu0 0.0
  %659 = vmatpush1.msra.mxu0 0.0
  %660 = vmatprep.subr.mxu0 0.0
  %661 = vmatpush1.msra.mxu0 0.0
  %662 = vmatprep.subr.mxu0 0.0
  %663 = vmatpush1.msra.mxu0 0.0
  %664 = vmatprep.subr.mxu0 0.0
  %665 = vmatpush1.msra.mxu0 0.0
  %666 = vmatprep.subr.mxu0 0.0
  %667 = vmatpush1.msra.mxu0 0.0
  %668 = vmatprep.subr.mxu0 0.0
  %669 = vmatpush1.msra.mxu0 0.0
  %670 = vmatprep.subr.mxu0 0.0
  %671 = vmatpush1.msra.mxu0 0.0
  %672 = vmatprep.subr.mxu0 0.0
  %673 = vmatpush1.msra.mxu0 0.0
  %674 = vmatprep.subr.mxu0 0.0
  %675 = vmatpush1.msra.mxu0 0.0
  %676 = vmatprep.subr.mxu0 0.0
  %677 = vmatpush1.msra.mxu0 0.0
  %678 = vmatprep.subr.mxu0 0.0
  %679 = vmatpush1.msra.mxu0 0.0
  %680 = vmatprep.subr.mxu0 0.0
  %681 = vmatpush1.msra.mxu0 0.0
  %682 = vmatprep.subr.mxu0 0.0
  %683 = vmatpush1.msra.mxu0 0.0
  %684 = vmatprep.subr.mxu0 0.0
  %685 = vmatpush1.msra.mxu0 0.0
  %686 = vmatprep.subr.mxu0 0.0
  %687 = vmatpush1.msra.mxu0 0.0
  %688 = vmatprep.subr.mxu0 0.0
  %689 = vmatpush1.msra.mxu0 0.0
  %690 = vmatprep.mubr.f32.mxu0 0.0
  %691 = vmatmul.mubr.f32.gmra.mrb[0].mxu0 %v522
  %v692 = vpop.f32.mrb[0].mxu0
  %v693 = vadd.f32 0.0, %v692
  %v694 = vpop.f32.mrb[0].mxu0
  %v695 = vadd.f32 0.0, %v694
  %696 = vdwg.mxu0
  %v697 = vadd.f32 %v551, %v622
  %v698 = vadd.f32 %v552, %v624
  %v699 = vadd.f32 %v553, %v693
  %v700 = vadd.f32 %v554, %v695
  %s701 = scalar_lea.vmem %s47, 192
  %v702 = vld [vmem:[%s701] sm:$0xff]
  %v703 = vld [vmem:[%s701 + $0x8] sm:$0xff]
  %v704 = vld [vmem:[%s701 + $0x10] sm:$0xff]
  %v705 = vld [vmem:[%s701 + $0x18] sm:$0xff]
  %706 = vmatprep.subr.mxu0 %v131
  %707 = vmatpush1.msra.mxu0 %v130
  %708 = vmatprep.subr.mxu0 %v135
  %709 = vmatpush1.msra.mxu0 %v134
  %710 = vmatprep.subr.mxu0 %v139
  %711 = vmatpush1.msra.mxu0 %v138
  %712 = vmatprep.subr.mxu0 %v143
  %713 = vmatpush1.msra.mxu0 %v142
  %714 = vmatprep.subr.mxu0 %v147
  %715 = vmatpush1.msra.mxu0 %v146
  %716 = vmatprep.subr.mxu0 %v151
  %717 = vmatpush1.msra.mxu0 %v150
  %718 = vmatprep.subr.mxu0 %v155
  %719 = vmatpush1.msra.mxu0 %v154
  %720 = vmatprep.subr.mxu0 %v159
  %721 = vmatpush1.msra.mxu0 %v158
  %722 = vmatprep.subr.mxu0 %v163
  %723 = vmatpush1.msra.mxu0 %v162
  %724 = vmatprep.subr.mxu0 %v167
  %725 = vmatpush1.msra.mxu0 %v166
  %726 = vmatprep.subr.mxu0 %v171
  %727 = vmatpush1.msra.mxu0 %v170
  %728 = vmatprep.subr.mxu0 %v175
  %729 = vmatpush1.msra.mxu0 %v174
  %730 = vmatprep.subr.mxu0 %v179
  %731 = vmatpush1.msra.mxu0 %v178
  %732 = vmatprep.subr.mxu0 %v183
  %733 = vmatpush1.msra.mxu0 %v182
  %734 = vmatprep.subr.mxu0 %v187
  %735 = vmatpush1.msra.mxu0 %v186
  %736 = vmatprep.subr.mxu0 %v191
  %737 = vmatpush1.msra.mxu0 %v190
  %738 = vmatprep.subr.mxu0 0.0
  %739 = vmatpush1.msra.mxu0 0.0
  %740 = vmatprep.subr.mxu0 0.0
  %741 = vmatpush1.msra.mxu0 0.0
  %742 = vmatprep.subr.mxu0 0.0
  %743 = vmatpush1.msra.mxu0 0.0
  %744 = vmatprep.subr.mxu0 0.0
  %745 = vmatpush1.msra.mxu0 0.0
  %746 = vmatprep.subr.mxu0 0.0
  %747 = vmatpush1.msra.mxu0 0.0
  %748 = vmatprep.subr.mxu0 0.0
  %749 = vmatpush1.msra.mxu0 0.0
  %750 = vmatprep.subr.mxu0 0.0
  %751 = vmatpush1.msra.mxu0 0.0
  %752 = vmatprep.subr.mxu0 0.0
  %753 = vmatpush1.msra.mxu0 0.0
  %754 = vmatprep.subr.mxu0 0.0
  %755 = vmatpush1.msra.mxu0 0.0
  %756 = vmatprep.subr.mxu0 0.0
  %757 = vmatpush1.msra.mxu0 0.0
  %758 = vmatprep.subr.mxu0 0.0
  %759 = vmatpush1.msra.mxu0 0.0
  %760 = vmatprep.subr.mxu0 0.0
  %761 = vmatpush1.msra.mxu0 0.0
  %762 = vmatprep.subr.mxu0 0.0
  %763 = vmatpush1.msra.mxu0 0.0
  %764 = vmatprep.subr.mxu0 0.0
  %765 = vmatpush1.msra.mxu0 0.0
  %766 = vmatprep.subr.mxu0 0.0
  %767 = vmatpush1.msra.mxu0 0.0
  %768 = vmatprep.subr.mxu0 0.0
  %769 = vmatpush1.msra.mxu0 0.0
  %770 = vmatprep.mubr.f32.mxu0 0.0
  %771 = vmatmul.mubr.f32.gmra.mrb[0].mxu0 %v546
  %v772 = vpop.f32.mrb[0].mxu0
  %v773 = vadd.f32 0.0, %v772
  %v774 = vpop.f32.mrb[0].mxu0
  %v775 = vadd.f32 0.0, %v774
  %776 = vdwg.mxu0
  %777 = vmatprep.subr.mxu0 %v133
  %778 = vmatpush1.msra.mxu0 %v132
  %779 = vmatprep.subr.mxu0 %v137
  %780 = vmatpush1.msra.mxu0 %v136
  %781 = vmatprep.subr.mxu0 %v141
  %782 = vmatpush1.msra.mxu0 %v140
  %783 = vmatprep.subr.mxu0 %v145
  %784 = vmatpush1.msra.mxu0 %v144
  %785 = vmatprep.subr.mxu0 %v149
  %786 = vmatpush1.msra.mxu0 %v148
  %787 = vmatprep.subr.mxu0 %v153
  %788 = vmatpush1.msra.mxu0 %v152
  %789 = vmatprep.subr.mxu0 %v157
  %790 = vmatpush1.msra.mxu0 %v156
  %791 = vmatprep.subr.mxu0 %v161
  %792 = vmatpush1.msra.mxu0 %v160
  %793 = vmatprep.subr.mxu0 %v165
  %794 = vmatpush1.msra.mxu0 %v164
  %795 = vmatprep.subr.mxu0 %v169
  %796 = vmatpush1.msra.mxu0 %v168
  %797 = vmatprep.subr.mxu0 %v173
  %798 = vmatpush1.msra.mxu0 %v172
  %799 = vmatprep.subr.mxu0 %v177
  %800 = vmatpush1.msra.mxu0 %v176
  %801 = vmatprep.subr.mxu0 %v181
  %802 = vmatpush1.msra.mxu0 %v180
  %803 = vmatprep.subr.mxu0 %v185
  %804 = vmatpush1.msra.mxu0 %v184
  %805 = vmatprep.subr.mxu0 %v189
  %806 = vmatpush1.msra.mxu0 %v188
  %807 = vmatprep.subr.mxu0 %v193
  %808 = vmatpush1.msra.mxu0 %v192
  %809 = vmatprep.subr.mxu0 0.0
  %810 = vmatpush1.msra.mxu0 0.0
  %811 = vmatprep.subr.mxu0 0.0
  %812 = vmatpush1.msra.mxu0 0.0
  %813 = vmatprep.subr.mxu0 0.0
  %814 = vmatpush1.msra.mxu0 0.0
  %815 = vmatprep.subr.mxu0 0.0
  %816 = vmatpush1.msra.mxu0 0.0
  %817 = vmatprep.subr.mxu0 0.0
  %818 = vmatpush1.msra.mxu0 0.0
  %819 = vmatprep.subr.mxu0 0.0
  %820 = vmatpush1.msra.mxu0 0.0
  %821 = vmatprep.subr.mxu0 0.0
  %822 = vmatpush1.msra.mxu0 0.0
  %823 = vmatprep.subr.mxu0 0.0
  %824 = vmatpush1.msra.mxu0 0.0
  %825 = vmatprep.subr.mxu0 0.0
  %826 = vmatpush1.msra.mxu0 0.0
  %827 = vmatprep.subr.mxu0 0.0
  %828 = vmatpush1.msra.mxu0 0.0
  %829 = vmatprep.subr.mxu0 0.0
  %830 = vmatpush1.msra.mxu0 0.0
  %831 = vmatprep.subr.mxu0 0.0
  %832 = vmatpush1.msra.mxu0 0.0
  %833 = vmatprep.subr.mxu0 0.0
  %834 = vmatpush1.msra.mxu0 0.0
  %835 = vmatprep.subr.mxu0 0.0
  %836 = vmatpush1.msra.mxu0 0.0
  %837 = vmatprep.subr.mxu0 0.0
  %838 = vmatpush1.msra.mxu0 0.0
  %839 = vmatprep.subr.mxu0 0.0
  %840 = vmatpush1.msra.mxu0 0.0
  %841 = vmatprep.mubr.f32.mxu0 0.0
  %842 = vmatmul.mubr.f32.gmra.mrb[0].mxu0 %v546
  %v843 = vpop.f32.mrb[0].mxu0
  %v844 = vadd.f32 0.0, %v843
  %v845 = vpop.f32.mrb[0].mxu0
  %v846 = vadd.f32 0.0, %v845
  %847 = vdwg.mxu0
  %v848 = vadd.f32 %v702, %v773
  %v849 = vadd.f32 %v703, %v775
  %v850 = vadd.f32 %v704, %v844
  %v851 = vadd.f32 %v705, %v846
  %v852 = vxor.u32 %v697, 2147483648
  %v853 = vmul.f32 %v852, 1.442695
  %v854 = vpow.pop %v853
  %v855 = vadd.f32 %v854, 1.0
  %v856 = vrcp.pop %v855
  %v857 = vmul.f32 1.0, %v856
  %v858 = vxor.u32 %v698, 2147483648
  %v859 = vmul.f32 %v858, 1.442695
  %v860 = vpow.pop %v859
  %v861 = vadd.f32 %v860, 1.0
  %v862 = vrcp.pop %v861
  %v863 = vmul.f32 1.0, %v862
  %v864 = vtanh.pop %v699
  %v865 = vxor.u32 %v700, 2147483648
  %v866 = vmul.f32 %v865, 1.442695
  %v867 = vpow.pop %v866
  %v868 = vadd.f32 %v867, 1.0
  %v869 = vrcp.pop %v868
  %v870 = vmul.f32 1.0, %v869
  %v871 = vmul.f32 %v863, %v520
  %v872 = vmul.f32 %v857, %v864
  %v873 = vadd.f32 %v871, %v872
  %v874 = vtanh.pop %v873
  %v875 = vmul.f32 %v870, %v874
  %v876 = vxor.u32 %v848, 2147483648
  %v877 = vmul.f32 %v876, 1.442695
  %v878 = vpow.pop %v877
  %v879 = vadd.f32 %v878, 1.0
  %v880 = vrcp.pop %v879
  %v881 = vmul.f32 1.0, %v880
  %v882 = vxor.u32 %v849, 2147483648
  %v883 = vmul.f32 %v882, 1.442695
  %v884 = vpow.pop %v883
  %v885 = vadd.f32 %v884, 1.0
  %v886 = vrcp.pop %v885
  %v887 = vmul.f32 1.0, %v886
  %v888 = vtanh.pop %v850
  %v889 = vxor.u32 %v851, 2147483648
  %v890 = vmul.f32 %v889, 1.442695
  %v891 = vpow.pop %v890
  %v892 = vadd.f32 %v891, 1.0
  %v893 = vrcp.pop %v892
  %v894 = vmul.f32 1.0, %v893
  %v895 = vmul.f32 %v887, %v544
  %v896 = vmul.f32 %v881, %v888
  %v897 = vadd.f32 %v895, %v896
  %v898 = vtanh.pop %v897
  %v899 = vmul.f32 %v894, %v898
  %s900 = scalar_lea.vmem %s4, 8
  %901 = vst [vmem:[%s900] sm:$0xff] %v875
  %s902 = scalar_lea.vmem %s55, 48
  %903 = vst [vmem:[%s902] sm:$0xff] %v899
  %s904 = scalar_lea.vmem %s0, 64
  %v905 = vld [vmem:[%s904] sm:$0xff]
  %v906 = vld [vmem:[%s904 + $0x8] sm:$0xff]
  %v907 = vld [vmem:[%s904 + $0x10] sm:$0xff]
  %v908 = vld [vmem:[%s904 + $0x18] sm:$0xff]
  %909 = vmatprep.subr.mxu0 %v67
  %910 = vmatpush1.msra.mxu0 %v66
  %911 = vmatprep.subr.mxu0 %v71
  %912 = vmatpush1.msra.mxu0 %v70
  %913 = vmatprep.subr.mxu0 %v75
  %914 = vmatpush1.msra.mxu0 %v74
  %915 = vmatprep.subr.mxu0 %v79
  %916 = vmatpush1.msra.mxu0 %v78
  %917 = vmatprep.subr.mxu0 %v83
  %918 = vmatpush1.msra.mxu0 %v82
  %919 = vmatprep.subr.mxu0 %v87
  %920 = vmatpush1.msra.mxu0 %v86
  %921 = vmatprep.subr.mxu0 %v91
  %922 = vmatpush1.msra.mxu0 %v90
  %923 = vmatprep.subr.mxu0 %v95
  %924 = vmatpush1.msra.mxu0 %v94
  %925 = vmatprep.subr.mxu0 %v99
  %926 = vmatpush1.msra.mxu0 %v98
  %927 = vmatprep.subr.mxu0 %v103
  %928 = vmatpush1.msra.mxu0 %v102
  %929 = vmatprep.subr.mxu0 %v107
  %930 = vmatpush1.msra.mxu0 %v106
  %931 = vmatprep.subr.mxu0 %v111
  %932 = vmatpush1.msra.mxu0 %v110
  %933 = vmatprep.subr.mxu0 %v115
  %934 = vmatpush1.msra.mxu0 %v114
  %935 = vmatprep.subr.mxu0 %v119
  %936 = vmatpush1.msra.mxu0 %v118
  %937 = vmatprep.subr.mxu0 %v123
  %938 = vmatpush1.msra.mxu0 %v122
  %939 = vmatprep.subr.mxu0 %v127
  %940 = vmatpush1.msra.mxu0 %v126
  %941 = vmatprep.subr.mxu0 0.0
  %942 = vmatpush1.msra.mxu0 0.0
  %943 = vmatprep.subr.mxu0 0.0
  %944 = vmatpush1.msra.mxu0 0.0
  %945 = vmatprep.subr.mxu0 0.0
  %946 = vmatpush1.msra.mxu0 0.0
  %947 = vmatprep.subr.mxu0 0.0
  %948 = vmatpush1.msra.mxu0 0.0
  %949 = vmatprep.subr.mxu0 0.0
  %950 = vmatpush1.msra.mxu0 0.0
  %951 = vmatprep.subr.mxu0 0.0
  %952 = vmatpush1.msra.mxu0 0.0
  %953 = vmatprep.subr.mxu0 0.0
  %954 = vmatpush1.msra.mxu0 0.0
  %955 = vmatprep.subr.mxu0 0.0
  %956 = vmatpush1.msra.mxu0 0.0
  %957 = vmatprep.subr.mxu0 0.0
  %958 = vmatpush1.msra.mxu0 0.0
  %959 = vmatprep.subr.mxu0 0.0
  %960 = vmatpush1.msra.mxu0 0.0
  %961 = vmatprep.subr.mxu0 0.0
  %962 = vmatpush1.msra.mxu0 0.0
  %963 = vmatprep.subr.mxu0 0.0
  %964 = vmatpush1.msra.mxu0 0.0
  %965 = vmatprep.subr.mxu0 0.0
  %966 = vmatpush1.msra.mxu0 0.0
  %967 = vmatprep.subr.mxu0 0.0
  %968 = vmatpush1.msra.mxu0 0.0
  %969 = vmatprep.subr.mxu0 0.0
  %970 = vmatpush1.msra.mxu0 0.0
  %971 = vmatprep.subr.mxu0 0.0
  %972 = vmatpush1.msra.mxu0 0.0
  %973 = vmatprep.mubr.f32.mxu0 0.0
  %974 = vmatmul.mubr.f32.gmra.mrb[0].mxu0 %v875
  %v975 = vpop.f32.mrb[0].mxu0
  %v976 = vadd.f32 0.0, %v975
  %v977 = vpop.f32.mrb[0].mxu0
  %v978 = vadd.f32 0.0, %v977
  %979 = vdwg.mxu0
  %980 = vmatprep.subr.mxu0 %v69
  %981 = vmatpush1.msra.mxu0 %v68
  %982 = vmatprep.subr.mxu0 %v73
  %983 = vmatpush1.msra.mxu0 %v72
  %984 = vmatprep.subr.mxu0 %v77
  %985 = vmatpush1.msra.mxu0 %v76
  %986 = vmatprep.subr.mxu0 %v81
  %987 = vmatpush1.msra.mxu0 %v80
  %988 = vmatprep.subr.mxu0 %v85
  %989 = vmatpush1.msra.mxu0 %v84
  %990 = vmatprep.subr.mxu0 %v89
  %991 = vmatpush1.msra.mxu0 %v88
  %992 = vmatprep.subr.mxu0 %v93
  %993 = vmatpush1.msra.mxu0 %v92
  %994 = vmatprep.subr.mxu0 %v97
  %995 = vmatpush1.msra.mxu0 %v96
  %996 = vmatprep.subr.mxu0 %v101
  %997 = vmatpush1.msra.mxu0 %v100
  %998 = vmatprep.subr.mxu0 %v105
  %999 = vmatpush1.msra.mxu0 %v104
  %1000 = vmatprep.subr.mxu0 %v109
  %1001 = vmatpush1.msra.mxu0 %v108
  %1002 = vmatprep.subr.mxu0 %v113
  %1003 = vmatpush1.msra.mxu0 %v112
  %1004 = vmatprep.subr.mxu0 %v117
  %1005 = vmatpush1.msra.mxu0 %v116
  %1006 = vmatprep.subr.mxu0 %v121
  %1007 = vmatpush1.msra.mxu0 %v120
  %1008 = vmatprep.subr.mxu0 %v125
  %1009 = vmatpush1.msra.mxu0 %v124
  %1010 = vmatprep.subr.mxu0 %v129
  %1011 = vmatpush1.msra.mxu0 %v128
  %1012 = vmatprep.subr.mxu0 0.0
  %1013 = vmatpush1.msra.mxu0 0.0
  %1014 = vmatprep.subr.mxu0 0.0
  %1015 = vmatpush1.msra.mxu0 0.0
  %1016 = vmatprep.subr.mxu0 0.0
  %1017 = vmatpush1.msra.mxu0 0.0
  %1018 = vmatprep.subr.mxu0 0.0
  %1019 = vmatpush1.msra.mxu0 0.0
  %1020 = vmatprep.subr.mxu0 0.0
  %1021 = vmatpush1.msra.mxu0 0.0
  %1022 = vmatprep.subr.mxu0 0.0
  %1023 = vmatpush1.msra.mxu0 0.0
  %1024 = vmatprep.subr.mxu0 0.0
  %1025 = vmatpush1.msra.mxu0 0.0
  %1026 = vmatprep.subr.mxu0 0.0
  %1027 = vmatpush1.msra.mxu0 0.0
  %1028 = vmatprep.subr.mxu0 0.0
  %1029 = vmatpush1.msra.mxu0 0.0
  %1030 = vmatprep.subr.mxu0 0.0
  %1031 = vmatpush1.msra.mxu0 0.0
  %1032 = vmatprep.subr.mxu0 0.0
  %1033 = vmatpush1.msra.mxu0 0.0
  %1034 = vmatprep.subr.mxu0 0.0
  %1035 = vmatpush1.msra.mxu0 0.0
  %1036 = vmatprep.subr.mxu0 0.0
  %1037 = vmatpush1.msra.mxu0 0.0
  %1038 = vmatprep.subr.mxu0 0.0
  %1039 = vmatpush1.msra.mxu0 0.0
  %1040 = vmatprep.subr.mxu0 0.0
  %1041 = vmatpush1.msra.mxu0 0.0
  %1042 = vmatprep.subr.mxu0 0.0
  %1043 = vmatpush1.msra.mxu0 0.0
  %1044 = vmatprep.mubr.f32.mxu0 0.0
  %1045 = vmatmul.mubr.f32.gmra.mrb[0].mxu0 %v875
  %v1046 = vpop.f32.mrb[0].mxu0
  %v1047 = vadd.f32 0.0, %v1046
  %v1048 = vpop.f32.mrb[0].mxu0
  %v1049 = vadd.f32 0.0, %v1048
  %1050 = vdwg.mxu0
  %v1051 = vadd.f32 %v905, %v976
  %v1052 = vadd.f32 %v906, %v978
  %v1053 = vadd.f32 %v907, %v1047
  %v1054 = vadd.f32 %v908, %v1049
  %s1055 = scalar_lea.vmem %s47, 160
  %v1056 = vld [vmem:[%s1055] sm:$0xff]
  %v1057 = vld [vmem:[%s1055 + $0x8] sm:$0xff]
  %v1058 = vld [vmem:[%s1055 + $0x10] sm:$0xff]
  %v1059 = vld [vmem:[%s1055 + $0x18] sm:$0xff]
  %1060 = vmatprep.subr.mxu0 %v131
  %1061 = vmatpush1.msra.mxu0 %v130
  %1062 = vmatprep.subr.mxu0 %v135
  %1063 = vmatpush1.msra.mxu0 %v134
  %1064 = vmatprep.subr.mxu0 %v139
  %1065 = vmatpush1.msra.mxu0 %v138
  %1066 = vmatprep.subr.mxu0 %v143
  %1067 = vmatpush1.msra.mxu0 %v142
  %1068 = vmatprep.subr.mxu0 %v147
  %1069 = vmatpush1.msra.mxu0 %v146
  %1070 = vmatprep.subr.mxu0 %v151
  %1071 = vmatpush1.msra.mxu0 %v150
  %1072 = vmatprep.subr.mxu0 %v155
  %1073 = vmatpush1.msra.mxu0 %v154
  %1074 = vmatprep.subr.mxu0 %v159
  %1075 = vmatpush1.msra.mxu0 %v158
  %1076 = vmatprep.subr.mxu0 %v163
  %1077 = vmatpush1.msra.mxu0 %v162
  %1078 = vmatprep.subr.mxu0 %v167
  %1079 = vmatpush1.msra.mxu0 %v166
  %1080 = vmatprep.subr.mxu0 %v171
  %1081 = vmatpush1.msra.mxu0 %v170
  %1082 = vmatprep.subr.mxu0 %v175
  %1083 = vmatpush1.msra.mxu0 %v174
  %1084 = vmatprep.subr.mxu0 %v179
  %1085 = vmatpush1.msra.mxu0 %v178
  %1086 = vmatprep.subr.mxu0 %v183
  %1087 = vmatpush1.msra.mxu0 %v182
  %1088 = vmatprep.subr.mxu0 %v187
  %1089 = vmatpush1.msra.mxu0 %v186
  %1090 = vmatprep.subr.mxu0 %v191
  %1091 = vmatpush1.msra.mxu0 %v190
  %1092 = vmatprep.subr.mxu0 0.0
  %1093 = vmatpush1.msra.mxu0 0.0
  %1094 = vmatprep.subr.mxu0 0.0
  %1095 = vmatpush1.msra.mxu0 0.0
  %1096 = vmatprep.subr.mxu0 0.0
  %1097 = vmatpush1.msra.mxu0 0.0
  %1098 = vmatprep.subr.mxu0 0.0
  %1099 = vmatpush1.msra.mxu0 0.0
  %1100 = vmatprep.subr.mxu0 0.0
  %1101 = vmatpush1.msra.mxu0 0.0
  %1102 = vmatprep.subr.mxu0 0.0
  %1103 = vmatpush1.msra.mxu0 0.0
  %1104 = vmatprep.subr.mxu0 0.0
  %1105 = vmatpush1.msra.mxu0 0.0
  %1106 = vmatprep.subr.mxu0 0.0
  %1107 = vmatpush1.msra.mxu0 0.0
  %1108 = vmatprep.subr.mxu0 0.0
  %1109 = vmatpush1.msra.mxu0 0.0
  %1110 = vmatprep.subr.mxu0 0.0
  %1111 = vmatpush1.msra.mxu0 0.0
  %1112 = vmatprep.subr.mxu0 0.0
  %1113 = vmatpush1.msra.mxu0 0.0
  %1114 = vmatprep.subr.mxu0 0.0
  %1115 = vmatpush1.msra.mxu0 0.0
  %1116 = vmatprep.subr.mxu0 0.0
  %1117 = vmatpush1.msra.mxu0 0.0
  %1118 = vmatprep.subr.mxu0 0.0
  %1119 = vmatpush1.msra.mxu0 0.0
  %1120 = vmatprep.subr.mxu0 0.0
  %1121 = vmatpush1.msra.mxu0 0.0
  %1122 = vmatprep.subr.mxu0 0.0
  %1123 = vmatpush1.msra.mxu0 0.0
  %1124 = vmatprep.mubr.f32.mxu0 0.0
  %1125 = vmatmul.mubr.f32.gmra.mrb[0].mxu0 %v899
  %v1126 = vpop.f32.mrb[0].mxu0
  %v1127 = vadd.f32 0.0, %v1126
  %v1128 = vpop.f32.mrb[0].mxu0
  %v1129 = vadd.f32 0.0, %v1128
  %1130 = vdwg.mxu0
  %1131 = vmatprep.subr.mxu0 %v133
  %1132 = vmatpush1.msra.mxu0 %v132
  %1133 = vmatprep.subr.mxu0 %v137
  %1134 = vmatpush1.msra.mxu0 %v136
  %1135 = vmatprep.subr.mxu0 %v141
  %1136 = vmatpush1.msra.mxu0 %v140
  %1137 = vmatprep.subr.mxu0 %v145
  %1138 = vmatpush1.msra.mxu0 %v144
  %1139 = vmatprep.subr.mxu0 %v149
  %1140 = vmatpush1.msra.mxu0 %v148
  %1141 = vmatprep.subr.mxu0 %v153
  %1142 = vmatpush1.msra.mxu0 %v152
  %1143 = vmatprep.subr.mxu0 %v157
  %1144 = vmatpush1.msra.mxu0 %v156
  %1145 = vmatprep.subr.mxu0 %v161
  %1146 = vmatpush1.msra.mxu0 %v160
  %1147 = vmatprep.subr.mxu0 %v165
  %1148 = vmatpush1.msra.mxu0 %v164
  %1149 = vmatprep.subr.mxu0 %v169
  %1150 = vmatpush1.msra.mxu0 %v168
  %1151 = vmatprep.subr.mxu0 %v173
  %1152 = vmatpush1.msra.mxu0 %v172
  %1153 = vmatprep.subr.mxu0 %v177
  %1154 = vmatpush1.msra.mxu0 %v176
  %1155 = vmatprep.subr.mxu0 %v181
  %1156 = vmatpush1.msra.mxu0 %v180
  %1157 = vmatprep.subr.mxu0 %v185
  %1158 = vmatpush1.msra.mxu0 %v184
  %1159 = vmatprep.subr.mxu0 %v189
  %1160 = vmatpush1.msra.mxu0 %v188
  %1161 = vmatprep.subr.mxu0 %v193
  %1162 = vmatpush1.msra.mxu0 %v192
  %1163 = vmatprep.subr.mxu0 0.0
  %1164 = vmatpush1.msra.mxu0 0.0
  %1165 = vmatprep.subr.mxu0 0.0
  %1166 = vmatpush1.msra.mxu0 0.0
  %1167 = vmatprep.subr.mxu0 0.0
  %1168 = vmatpush1.msra.mxu0 0.0
  %1169 = vmatprep.subr.mxu0 0.0
  %1170 = vmatpush1.msra.mxu0 0.0
  %1171 = vmatprep.subr.mxu0 0.0
  %1172 = vmatpush1.msra.mxu0 0.0
  %1173 = vmatprep.subr.mxu0 0.0
  %1174 = vmatpush1.msra.mxu0 0.0
  %1175 = vmatprep.subr.mxu0 0.0
  %1176 = vmatpush1.msra.mxu0 0.0
  %1177 = vmatprep.subr.mxu0 0.0
  %1178 = vmatpush1.msra.mxu0 0.0
  %1179 = vmatprep.subr.mxu0 0.0
  %1180 = vmatpush1.msra.mxu0 0.0
  %1181 = vmatprep.subr.mxu0 0.0
  %1182 = vmatpush1.msra.mxu0 0.0
  %1183 = vmatprep.subr.mxu0 0.0
  %1184 = vmatpush1.msra.mxu0 0.0
  %1185 = vmatprep.subr.mxu0 0.0
  %1186 = vmatpush1.msra.mxu0 0.0
  %1187 = vmatprep.subr.mxu0 0.0
  %1188 = vmatpush1.msra.mxu0 0.0
  %1189 = vmatprep.subr.mxu0 0.0
  %1190 = vmatpush1.msra.mxu0 0.0
  %1191 = vmatprep.subr.mxu0 0.0
  %1192 = vmatpush1.msra.mxu0 0.0
  %1193 = vmatprep.subr.mxu0 0.0
  %1194 = vmatpush1.msra.mxu0 0.0
  %1195 = vmatprep.mubr.f32.mxu0 0.0
  %1196 = vmatmul.mubr.f32.gmra.mrb[0].mxu0 %v899
  %v1197 = vpop.f32.mrb[0].mxu0
  %v1198 = vadd.f32 0.0, %v1197
  %v1199 = vpop.f32.mrb[0].mxu0
  %v1200 = vadd.f32 0.0, %v1199
  %1201 = vdwg.mxu0
  %v1202 = vadd.f32 %v1056, %v1127
  %v1203 = vadd.f32 %v1057, %v1129
  %v1204 = vadd.f32 %v1058, %v1198
  %v1205 = vadd.f32 %v1059, %v1200
  %v1206 = vxor.u32 %v1051, 2147483648
  %v1207 = vmul.f32 %v1206, 1.442695
  %v1208 = vpow.pop %v1207
  %v1209 = vadd.f32 %v1208, 1.0
  %v1210 = vrcp.pop %v1209
  %v1211 = vmul.f32 1.0, %v1210
  %v1212 = vxor.u32 %v1052, 2147483648
  %v1213 = vmul.f32 %v1212, 1.442695
  %v1214 = vpow.pop %v1213
  %v1215 = vadd.f32 %v1214, 1.0
  %v1216 = vrcp.pop %v1215
  %v1217 = vmul.f32 1.0, %v1216
  %v1218 = vtanh.pop %v1053
  %v1219 = vxor.u32 %v1054, 2147483648
  %v1220 = vmul.f32 %v1219, 1.442695
  %v1221 = vpow.pop %v1220
  %v1222 = vadd.f32 %v1221, 1.0
  %v1223 = vrcp.pop %v1222
  %v1224 = vmul.f32 1.0, %v1223
  %v1225 = vmul.f32 %v1217, %v873
  %v1226 = vmul.f32 %v1211, %v1218
  %v1227 = vadd.f32 %v1225, %v1226
  %v1228 = vtanh.pop %v1227
  %v1229 = vmul.f32 %v1224, %v1228
  %v1230 = vxor.u32 %v1202, 2147483648
  %v1231 = vmul.f32 %v1230, 1.442695
  %v1232 = vpow.pop %v1231
  %v1233 = vadd.f32 %v1232, 1.0
  %v1234 = vrcp.pop %v1233
  %v1235 = vmul.f32 1.0, %v1234
  %v1236 = vxor.u32 %v1203, 2147483648
  %v1237 = vmul.f32 %v1236, 1.442695
  %v1238 = vpow.pop %v1237
  %v1239 = vadd.f32 %v1238, 1.0
  %v1240 = vrcp.pop %v1239
  %v1241 = vmul.f32 1.0, %v1240
  %v1242 = vtanh.pop %v1204
  %v1243 = vxor.u32 %v1205, 2147483648
  %v1244 = vmul.f32 %v1243, 1.442695
  %v1245 = vpow.pop %v1244
  %v1246 = vadd.f32 %v1245, 1.0
  %v1247 = vrcp.pop %v1246
  %v1248 = vmul.f32 1.0, %v1247
  %v1249 = vmul.f32 %v1241, %v897
  %v1250 = vmul.f32 %v1235, %v1242
  %v1251 = vadd.f32 %v1249, %v1250
  %v1252 = vtanh.pop %v1251
  %v1253 = vmul.f32 %v1248, %v1252
  %s1254 = scalar_lea.vmem %s4, 16
  %1255 = vst [vmem:[%s1254] sm:$0xff] %v1229
  %s1256 = scalar_lea.vmem %s55, 40
  %1257 = vst [vmem:[%s1256] sm:$0xff] %v1253
  %s1258 = scalar_lea.vmem %s0, 96
  %v1259 = vld [vmem:[%s1258] sm:$0xff]
  %v1260 = vld [vmem:[%s1258 + $0x8] sm:$0xff]
  %v1261 = vld [vmem:[%s1258 + $0x10] sm:$0xff]
  %v1262 = vld [vmem:[%s1258 + $0x18] sm:$0xff]
  %1263 = vmatprep.subr.mxu0 %v67
  %1264 = vmatpush1.msra.mxu0 %v66
  %1265 = vmatprep.subr.mxu0 %v71
  %1266 = vmatpush1.msra.mxu0 %v70
  %1267 = vmatprep.subr.mxu0 %v75
  %1268 = vmatpush1.msra.mxu0 %v74
  %1269 = vmatprep.subr.mxu0 %v79
  %1270 = vmatpush1.msra.mxu0 %v78
  %1271 = vmatprep.subr.mxu0 %v83
  %1272 = vmatpush1.msra.mxu0 %v82
  %1273 = vmatprep.subr.mxu0 %v87
  %1274 = vmatpush1.msra.mxu0 %v86
  %1275 = vmatprep.subr.mxu0 %v91
  %1276 = vmatpush1.msra.mxu0 %v90
  %1277 = vmatprep.subr.mxu0 %v95
  %1278 = vmatpush1.msra.mxu0 %v94
  %1279 = vmatprep.subr.mxu0 %v99
  %1280 = vmatpush1.msra.mxu0 %v98
  %1281 = vmatprep.subr.mxu0 %v103
  %1282 = vmatpush1.msra.mxu0 %v102
  %1283 = vmatprep.subr.mxu0 %v107
  %1284 = vmatpush1.msra.mxu0 %v106
  %1285 = vmatprep.subr.mxu0 %v111
  %1286 = vmatpush1.msra.mxu0 %v110
  %1287 = vmatprep.subr.mxu0 %v115
  %1288 = vmatpush1.msra.mxu0 %v114
  %1289 = vmatprep.subr.mxu0 %v119
  %1290 = vmatpush1.msra.mxu0 %v118
  %1291 = vmatprep.subr.mxu0 %v123
  %1292 = vmatpush1.msra.mxu0 %v122
  %1293 = vmatprep.subr.mxu0 %v127
  %1294 = vmatpush1.msra.mxu0 %v126
  %1295 = vmatprep.subr.mxu0 0.0
  %1296 = vmatpush1.msra.mxu0 0.0
  %1297 = vmatprep.subr.mxu0 0.0
  %1298 = vmatpush1.msra.mxu0 0.0
  %1299 = vmatprep.subr.mxu0 0.0
  %1300 = vmatpush1.msra.mxu0 0.0
  %1301 = vmatprep.subr.mxu0 0.0
  %1302 = vmatpush1.msra.mxu0 0.0
  %1303 = vmatprep.subr.mxu0 0.0
  %1304 = vmatpush1.msra.mxu0 0.0
  %1305 = vmatprep.subr.mxu0 0.0
  %1306 = vmatpush1.msra.mxu0 0.0
  %1307 = vmatprep.subr.mxu0 0.0
  %1308 = vmatpush1.msra.mxu0 0.0
  %1309 = vmatprep.subr.mxu0 0.0
  %1310 = vmatpush1.msra.mxu0 0.0
  %1311 = vmatprep.subr.mxu0 0.0
  %1312 = vmatpush1.msra.mxu0 0.0
  %1313 = vmatprep.subr.mxu0 0.0
  %1314 = vmatpush1.msra.mxu0 0.0
  %1315 = vmatprep.subr.mxu0 0.0
  %1316 = vmatpush1.msra.mxu0 0.0
  %1317 = vmatprep.subr.mxu0 0.0
  %1318 = vmatpush1.msra.mxu0 0.0
  %1319 = vmatprep.subr.mxu0 0.0
  %1320 = vmatpush1.msra.mxu0 0.0
  %1321 = vmatprep.subr.mxu0 0.0
  %1322 = vmatpush1.msra.mxu0 0.0
  %1323 = vmatprep.subr.mxu0 0.0
  %1324 = vmatpush1.msra.mxu0 0.0
  %1325 = vmatprep.subr.mxu0 0.0
  %1326 = vmatpush1.msra.mxu0 0.0
  %1327 = vmatprep.mubr.f32.mxu0 0.0
  %1328 = vmatmul.mubr.f32.gmra.mrb[0].mxu0 %v1229
  %v1329 = vpop.f32.mrb[0].mxu0
  %v1330 = vadd.f32 0.0, %v1329
  %v1331 = vpop.f32.mrb[0].mxu0
  %v1332 = vadd.f32 0.0, %v1331
  %1333 = vdwg.mxu0
  %1334 = vmatprep.subr.mxu0 %v69
  %1335 = vmatpush1.msra.mxu0 %v68
  %1336 = vmatprep.subr.mxu0 %v73
  %1337 = vmatpush1.msra.mxu0 %v72
  %1338 = vmatprep.subr.mxu0 %v77
  %1339 = vmatpush1.msra.mxu0 %v76
  %1340 = vmatprep.subr.mxu0 %v81
  %1341 = vmatpush1.msra.mxu0 %v80
  %1342 = vmatprep.subr.mxu0 %v85
  %1343 = vmatpush1.msra.mxu0 %v84
  %1344 = vmatprep.subr.mxu0 %v89
  %1345 = vmatpush1.msra.mxu0 %v88
  %1346 = vmatprep.subr.mxu0 %v93
  %1347 = vmatpush1.msra.mxu0 %v92
  %1348 = vmatprep.subr.mxu0 %v97
  %1349 = vmatpush1.msra.mxu0 %v96
  %1350 = vmatprep.subr.mxu0 %v101
  %1351 = vmatpush1.msra.mxu0 %v100
  %1352 = vmatprep.subr.mxu0 %v105
  %1353 = vmatpush1.msra.mxu0 %v104
  %1354 = vmatprep.subr.mxu0 %v109
  %1355 = vmatpush1.msra.mxu0 %v108
  %1356 = vmatprep.subr.mxu0 %v113
  %1357 = vmatpush1.msra.mxu0 %v112
  %1358 = vmatprep.subr.mxu0 %v117
  %1359 = vmatpush1.msra.mxu0 %v116
  %1360 = vmatprep.subr.mxu0 %v121
  %1361 = vmatpush1.msra.mxu0 %v120
  %1362 = vmatprep.subr.mxu0 %v125
  %1363 = vmatpush1.msra.mxu0 %v124
  %1364 = vmatprep.subr.mxu0 %v129
  %1365 = vmatpush1.msra.mxu0 %v128
  %1366 = vmatprep.subr.mxu0 0.0
  %1367 = vmatpush1.msra.mxu0 0.0
  %1368 = vmatprep.subr.mxu0 0.0
  %1369 = vmatpush1.msra.mxu0 0.0
  %1370 = vmatprep.subr.mxu0 0.0
  %1371 = vmatpush1.msra.mxu0 0.0
  %1372 = vmatprep.subr.mxu0 0.0
  %1373 = vmatpush1.msra.mxu0 0.0
  %1374 = vmatprep.subr.mxu0 0.0
  %1375 = vmatpush1.msra.mxu0 0.0
  %1376 = vmatprep.subr.mxu0 0.0
  %1377 = vmatpush1.msra.mxu0 0.0
  %1378 = vmatprep.subr.mxu0 0.0
  %1379 = vmatpush1.msra.mxu0 0.0
  %1380 = vmatprep.subr.mxu0 0.0
  %1381 = vmatpush1.msra.mxu0 0.0
  %1382 = vmatprep.subr.mxu0 0.0
  %1383 = vmatpush1.msra.mxu0 0.0
  %1384 = vmatprep.subr.mxu0 0.0
  %1385 = vmatpush1.msra.mxu0 0.0
  %1386 = vmatprep.subr.mxu0 0.0
  %1387 = vmatpush1.msra.mxu0 0.0
  %1388 = vmatprep.subr.mxu0 0.0
  %1389 = vmatpush1.msra.mxu0 0.0
  %1390 = vmatprep.subr.mxu0 0.0
  %1391 = vmatpush1.msra.mxu0 0.0
  %1392 = vmatprep.subr.mxu0 0.0
  %1393 = vmatpush1.msra.mxu0 0.0
  %1394 = vmatprep.subr.mxu0 0.0
  %1395 = vmatpush1.msra.mxu0 0.0
  %1396 = vmatprep.subr.mxu0 0.0
  %1397 = vmatpush1.msra.mxu0 0.0
  %1398 = vmatprep.mubr.f32.mxu0 0.0
  %1399 = vmatmul.mubr.f32.gmra.mrb[0].mxu0 %v1229
  %v1400 = vpop.f32.mrb[0].mxu0
  %v1401 = vadd.f32 0.0, %v1400
  %v1402 = vpop.f32.mrb[0].mxu0
  %v1403 = vadd.f32 0.0, %v1402
  %1404 = vdwg.mxu0
  %v1405 = vadd.f32 %v1259, %v1330
  %v1406 = vadd.f32 %v1260, %v1332
  %v1407 = vadd.f32 %v1261, %v1401
  %v1408 = vadd.f32 %v1262, %v1403
  %s1409 = scalar_lea.vmem %s47, 128
  %v1410 = vld [vmem:[%s1409] sm:$0xff]
  %v1411 = vld [vmem:[%s1409 + $0x8] sm:$0xff]
  %v1412 = vld [vmem:[%s1409 + $0x10] sm:$0xff]
  %v1413 = vld [vmem:[%s1409 + $0x18] sm:$0xff]
  %1414 = vmatprep.subr.mxu0 %v131
  %1415 = vmatpush1.msra.mxu0 %v130
  %1416 = vmatprep.subr.mxu0 %v135
  %1417 = vmatpush1.msra.mxu0 %v134
  %1418 = vmatprep.subr.mxu0 %v139
  %1419 = vmatpush1.msra.mxu0 %v138
  %1420 = vmatprep.subr.mxu0 %v143
  %1421 = vmatpush1.msra.mxu0 %v142
  %1422 = vmatprep.subr.mxu0 %v147
  %1423 = vmatpush1.msra.mxu0 %v146
  %1424 = vmatprep.subr.mxu0 %v151
  %1425 = vmatpush1.msra.mxu0 %v150
  %1426 = vmatprep.subr.mxu0 %v155
  %1427 = vmatpush1.msra.mxu0 %v154
  %1428 = vmatprep.subr.mxu0 %v159
  %1429 = vmatpush1.msra.mxu0 %v158
  %1430 = vmatprep.subr.mxu0 %v163
  %1431 = vmatpush1.msra.mxu0 %v162
  %1432 = vmatprep.subr.mxu0 %v167
  %1433 = vmatpush1.msra.mxu0 %v166
  %1434 = vmatprep.subr.mxu0 %v171
  %1435 = vmatpush1.msra.mxu0 %v170
  %1436 = vmatprep.subr.mxu0 %v175
  %1437 = vmatpush1.msra.mxu0 %v174
  %1438 = vmatprep.subr.mxu0 %v179
  %1439 = vmatpush1.msra.mxu0 %v178
  %1440 = vmatprep.subr.mxu0 %v183
  %1441 = vmatpush1.msra.mxu0 %v182
  %1442 = vmatprep.subr.mxu0 %v187
  %1443 = vmatpush1.msra.mxu0 %v186
  %1444 = vmatprep.subr.mxu0 %v191
  %1445 = vmatpush1.msra.mxu0 %v190
  %1446 = vmatprep.subr.mxu0 0.0
  %1447 = vmatpush1.msra.mxu0 0.0
  %1448 = vmatprep.subr.mxu0 0.0
  %1449 = vmatpush1.msra.mxu0 0.0
  %1450 = vmatprep.subr.mxu0 0.0
  %1451 = vmatpush1.msra.mxu0 0.0
  %1452 = vmatprep.subr.mxu0 0.0
  %1453 = vmatpush1.msra.mxu0 0.0
  %1454 = vmatprep.subr.mxu0 0.0
  %1455 = vmatpush1.msra.mxu0 0.0
  %1456 = vmatprep.subr.mxu0 0.0
  %1457 = vmatpush1.msra.mxu0 0.0
  %1458 = vmatprep.subr.mxu0 0.0
  %1459 = vmatpush1.msra.mxu0 0.0
  %1460 = vmatprep.subr.mxu0 0.0
  %1461 = vmatpush1.msra.mxu0 0.0
  %1462 = vmatprep.subr.mxu0 0.0
  %1463 = vmatpush1.msra.mxu0 0.0
  %1464 = vmatprep.subr.mxu0 0.0
  %1465 = vmatpush1.msra.mxu0 0.0
  %1466 = vmatprep.subr.mxu0 0.0
  %1467 = vmatpush1.msra.mxu0 0.0
  %1468 = vmatprep.subr.mxu0 0.0
  %1469 = vmatpush1.msra.mxu0 0.0
  %1470 = vmatprep.subr.mxu0 0.0
  %1471 = vmatpush1.msra.mxu0 0.0
  %1472 = vmatprep.subr.mxu0 0.0
  %1473 = vmatpush1.msra.mxu0 0.0
  %1474 = vmatprep.subr.mxu0 0.0
  %1475 = vmatpush1.msra.mxu0 0.0
  %1476 = vmatprep.subr.mxu0 0.0
  %1477 = vmatpush1.msra.mxu0 0.0
  %1478 = vmatprep.mubr.f32.mxu0 0.0
  %1479 = vmatmul.mubr.f32.gmra.mrb[0].mxu0 %v1253
  %v1480 = vpop.f32.mrb[0].mxu0
  %v1481 = vadd.f32 0.0, %v1480
  %v1482 = vpop.f32.mrb[0].mxu0
  %v1483 = vadd.f32 0.0, %v1482
  %1484 = vdwg.mxu0
  %1485 = vmatprep.subr.mxu0 %v133
  %1486 = vmatpush1.msra.mxu0 %v132
  %1487 = vmatprep.subr.mxu0 %v137
  %1488 = vmatpush1.msra.mxu0 %v136
  %1489 = vmatprep.subr.mxu0 %v141
  %1490 = vmatpush1.msra.mxu0 %v140
  %1491 = vmatprep.subr.mxu0 %v145
  %1492 = vmatpush1.msra.mxu0 %v144
  %1493 = vmatprep.subr.mxu0 %v149
  %1494 = vmatpush1.msra.mxu0 %v148
  %1495 = vmatprep.subr.mxu0 %v153
  %1496 = vmatpush1.msra.mxu0 %v152
  %1497 = vmatprep.subr.mxu0 %v157
  %1498 = vmatpush1.msra.mxu0 %v156
  %1499 = vmatprep.subr.mxu0 %v161
  %1500 = vmatpush1.msra.mxu0 %v160
  %1501 = vmatprep.subr.mxu0 %v165
  %1502 = vmatpush1.msra.mxu0 %v164
  %1503 = vmatprep.subr.mxu0 %v169
  %1504 = vmatpush1.msra.mxu0 %v168
  %1505 = vmatprep.subr.mxu0 %v173
  %1506 = vmatpush1.msra.mxu0 %v172
  %1507 = vmatprep.subr.mxu0 %v177
  %1508 = vmatpush1.msra.mxu0 %v176
  %1509 = vmatprep.subr.mxu0 %v181
  %1510 = vmatpush1.msra.mxu0 %v180
  %1511 = vmatprep.subr.mxu0 %v185
  %1512 = vmatpush1.msra.mxu0 %v184
  %1513 = vmatprep.subr.mxu0 %v189
  %1514 = vmatpush1.msra.mxu0 %v188
  %1515 = vmatprep.subr.mxu0 %v193
  %1516 = vmatpush1.msra.mxu0 %v192
  %1517 = vmatprep.subr.mxu0 0.0
  %1518 = vmatpush1.msra.mxu0 0.0
  %1519 = vmatprep.subr.mxu0 0.0
  %1520 = vmatpush1.msra.mxu0 0.0
  %1521 = vmatprep.subr.mxu0 0.0
  %1522 = vmatpush1.msra.mxu0 0.0
  %1523 = vmatprep.subr.mxu0 0.0
  %1524 = vmatpush1.msra.mxu0 0.0
  %1525 = vmatprep.subr.mxu0 0.0
  %1526 = vmatpush1.msra.mxu0 0.0
  %1527 = vmatprep.subr.mxu0 0.0
  %1528 = vmatpush1.msra.mxu0 0.0
  %1529 = vmatprep.subr.mxu0 0.0
  %1530 = vmatpush1.msra.mxu0 0.0
  %1531 = vmatprep.subr.mxu0 0.0
  %1532 = vmatpush1.msra.mxu0 0.0
  %1533 = vmatprep.subr.mxu0 0.0
  %1534 = vmatpush1.msra.mxu0 0.0
  %1535 = vmatprep.subr.mxu0 0.0
  %1536 = vmatpush1.msra.mxu0 0.0
  %1537 = vmatprep.subr.mxu0 0.0
  %1538 = vmatpush1.msra.mxu0 0.0
  %1539 = vmatprep.subr.mxu0 0.0
  %1540 = vmatpush1.msra.mxu0 0.0
  %1541 = vmatprep.subr.mxu0 0.0
  %1542 = vmatpush1.msra.mxu0 0.0
  %1543 = vmatprep.subr.mxu0 0.0
  %1544 = vmatpush1.msra.mxu0 0.0
  %1545 = vmatprep.subr.mxu0 0.0
  %1546 = vmatpush1.msra.mxu0 0.0
  %1547 = vmatprep.subr.mxu0 0.0
  %1548 = vmatpush1.msra.mxu0 0.0
  %1549 = vmatprep.mubr.f32.mxu0 0.0
  %1550 = vmatmul.mubr.f32.gmra.mrb[0].mxu0 %v1253
  %v1551 = vpop.f32.mrb[0].mxu0
  %v1552 = vadd.f32 0.0, %v1551
  %v1553 = vpop.f32.mrb[0].mxu0
  %v1554 = vadd.f32 0.0, %v1553
  %1555 = vdwg.mxu0
  %v1556 = vadd.f32 %v1410, %v1481
  %v1557 = vadd.f32 %v1411, %v1483
  %v1558 = vadd.f32 %v1412, %v1552
  %v1559 = vadd.f32 %v1413, %v1554
  %v1560 = vxor.u32 %v1405, 2147483648
  %v1561 = vmul.f32 %v1560, 1.442695
  %v1562 = vpow.pop %v1561
  %v1563 = vadd.f32 %v1562, 1.0
  %v1564 = vrcp.pop %v1563
  %v1565 = vmul.f32 1.0, %v1564
  %v1566 = vxor.u32 %v1406, 2147483648
  %v1567 = vmul.f32 %v1566, 1.442695
  %v1568 = vpow.pop %v1567
  %v1569 = vadd.f32 %v1568, 1.0
  %v1570 = vrcp.pop %v1569
  %v1571 = vmul.f32 1.0, %v1570
  %v1572 = vtanh.pop %v1407
  %v1573 = vxor.u32 %v1408, 2147483648
  %v1574 = vmul.f32 %v1573, 1.442695
  %v1575 = vpow.pop %v1574
  %v1576 = vadd.f32 %v1575, 1.0
  %v1577 = vrcp.pop %v1576
  %v1578 = vmul.f32 1.0, %v1577
  %v1579 = vmul.f32 %v1571, %v1227
  %v1580 = vmul.f32 %v1565, %v1572
  %v1581 = vadd.f32 %v1579, %v1580
  %v1582 = vtanh.pop %v1581
  %v1583 = vmul.f32 %v1578, %v1582
  %v1584 = vxor.u32 %v1556, 2147483648
  %v1585 = vmul.f32 %v1584, 1.442695
  %v1586 = vpow.pop %v1585
  %v1587 = vadd.f32 %v1586, 1.0
  %v1588 = vrcp.pop %v1587
  %v1589 = vmul.f32 1.0, %v1588
  %v1590 = vxor.u32 %v1557, 2147483648
  %v1591 = vmul.f32 %v1590, 1.442695
  %v1592 = vpow.pop %v1591
  %v1593 = vadd.f32 %v1592, 1.0
  %v1594 = vrcp.pop %v1593
  %v1595 = vmul.f32 1.0, %v1594
  %v1596 = vtanh.pop %v1558
  %v1597 = vxor.u32 %v1559, 2147483648
  %v1598 = vmul.f32 %v1597, 1.442695
  %v1599 = vpow.pop %v1598
  %v1600 = vadd.f32 %v1599, 1.0
  %v1601 = vrcp.pop %v1600
  %v1602 = vmul.f32 1.0, %v1601
  %v1603 = vmul.f32 %v1595, %v1251
  %v1604 = vmul.f32 %v1589, %v1596
  %v1605 = vadd.f32 %v1603, %v1604
  %v1606 = vtanh.pop %v1605
  %v1607 = vmul.f32 %v1602, %v1606
  %s1608 = scalar_lea.vmem %s4, 24
  %1609 = vst [vmem:[%s1608] sm:$0xff] %v1583
  %s1610 = scalar_lea.vmem %s55, 32
  %1611 = vst [vmem:[%s1610] sm:$0xff] %v1607
  %s1612 = scalar_lea.vmem %s0, 128
  %v1613 = vld [vmem:[%s1612] sm:$0xff]
  %v1614 = vld [vmem:[%s1612 + $0x8] sm:$0xff]
  %v1615 = vld [vmem:[%s1612 + $0x10] sm:$0xff]
  %v1616 = vld [vmem:[%s1612 + $0x18] sm:$0xff]
  %1617 = vmatprep.subr.mxu0 %v67
  %1618 = vmatpush1.msra.mxu0 %v66
  %1619 = vmatprep.subr.mxu0 %v71
  %1620 = vmatpush1.msra.mxu0 %v70
  %1621 = vmatprep.subr.mxu0 %v75
  %1622 = vmatpush1.msra.mxu0 %v74
  %1623 = vmatprep.subr.mxu0 %v79
  %1624 = vmatpush1.msra.mxu0 %v78
  %1625 = vmatprep.subr.mxu0 %v83
  %1626 = vmatpush1.msra.mxu0 %v82
  %1627 = vmatprep.subr.mxu0 %v87
  %1628 = vmatpush1.msra.mxu0 %v86
  %1629 = vmatprep.subr.mxu0 %v91
  %1630 = vmatpush1.msra.mxu0 %v90
  %1631 = vmatprep.subr.mxu0 %v95
  %1632 = vmatpush1.msra.mxu0 %v94
  %1633 = vmatprep.subr.mxu0 %v99
  %1634 = vmatpush1.msra.mxu0 %v98
  %1635 = vmatprep.subr.mxu0 %v103
  %1636 = vmatpush1.msra.mxu0 %v102
  %1637 = vmatprep.subr.mxu0 %v107
  %1638 = vmatpush1.msra.mxu0 %v106
  %1639 = vmatprep.subr.mxu0 %v111
  %1640 = vmatpush1.msra.mxu0 %v110
  %1641 = vmatprep.subr.mxu0 %v115
  %1642 = vmatpush1.msra.mxu0 %v114
  %1643 = vmatprep.subr.mxu0 %v119
  %1644 = vmatpush1.msra.mxu0 %v118
  %1645 = vmatprep.subr.mxu0 %v123
  %1646 = vmatpush1.msra.mxu0 %v122
  %1647 = vmatprep.subr.mxu0 %v127
  %1648 = vmatpush1.msra.mxu0 %v126
  %1649 = vmatprep.subr.mxu0 0.0
  %1650 = vmatpush1.msra.mxu0 0.0
  %1651 = vmatprep.subr.mxu0 0.0
  %1652 = vmatpush1.msra.mxu0 0.0
  %1653 = vmatprep.subr.mxu0 0.0
  %1654 = vmatpush1.msra.mxu0 0.0
  %1655 = vmatprep.subr.mxu0 0.0
  %1656 = vmatpush1.msra.mxu0 0.0
  %1657 = vmatprep.subr.mxu0 0.0
  %1658 = vmatpush1.msra.mxu0 0.0
  %1659 = vmatprep.subr.mxu0 0.0
  %1660 = vmatpush1.msra.mxu0 0.0
  %1661 = vmatprep.subr.mxu0 0.0
  %1662 = vmatpush1.msra.mxu0 0.0
  %1663 = vmatprep.subr.mxu0 0.0
  %1664 = vmatpush1.msra.mxu0 0.0
  %1665 = vmatprep.subr.mxu0 0.0
  %1666 = vmatpush1.msra.mxu0 0.0
  %1667 = vmatprep.subr.mxu0 0.0
  %1668 = vmatpush1.msra.mxu0 0.0
  %1669 = vmatprep.subr.mxu0 0.0
  %1670 = vmatpush1.msra.mxu0 0.0
  %1671 = vmatprep.subr.mxu0 0.0
  %1672 = vmatpush1.msra.mxu0 0.0
  %1673 = vmatprep.subr.mxu0 0.0
  %1674 = vmatpush1.msra.mxu0 0.0
  %1675 = vmatprep.subr.mxu0 0.0
  %1676 = vmatpush1.msra.mxu0 0.0
  %1677 = vmatprep.subr.mxu0 0.0
  %1678 = vmatpush1.msra.mxu0 0.0
  %1679 = vmatprep.subr.mxu0 0.0
  %1680 = vmatpush1.msra.mxu0 0.0
  %1681 = vmatprep.mubr.f32.mxu0 0.0
  %1682 = vmatmul.mubr.f32.gmra.mrb[0].mxu0 %v1583
  %v1683 = vpop.f32.mrb[0].mxu0
  %v1684 = vadd.f32 0.0, %v1683
  %v1685 = vpop.f32.mrb[0].mxu0
  %v1686 = vadd.f32 0.0, %v1685
  %1687 = vdwg.mxu0
  %1688 = vmatprep.subr.mxu0 %v69
  %1689 = vmatpush1.msra.mxu0 %v68
  %1690 = vmatprep.subr.mxu0 %v73
  %1691 = vmatpush1.msra.mxu0 %v72
  %1692 = vmatprep.subr.mxu0 %v77
  %1693 = vmatpush1.msra.mxu0 %v76
  %1694 = vmatprep.subr.mxu0 %v81
  %1695 = vmatpush1.msra.mxu0 %v80
  %1696 = vmatprep.subr.mxu0 %v85
  %1697 = vmatpush1.msra.mxu0 %v84
  %1698 = vmatprep.subr.mxu0 %v89
  %1699 = vmatpush1.msra.mxu0 %v88
  %1700 = vmatprep.subr.mxu0 %v93
  %1701 = vmatpush1.msra.mxu0 %v92
  %1702 = vmatprep.subr.mxu0 %v97
  %1703 = vmatpush1.msra.mxu0 %v96
  %1704 = vmatprep.subr.mxu0 %v101
  %1705 = vmatpush1.msra.mxu0 %v100
  %1706 = vmatprep.subr.mxu0 %v105
  %1707 = vmatpush1.msra.mxu0 %v104
  %1708 = vmatprep.subr.mxu0 %v109
  %1709 = vmatpush1.msra.mxu0 %v108
  %1710 = vmatprep.subr.mxu0 %v113
  %1711 = vmatpush1.msra.mxu0 %v112
  %1712 = vmatprep.subr.mxu0 %v117
  %1713 = vmatpush1.msra.mxu0 %v116
  %1714 = vmatprep.subr.mxu0 %v121
  %1715 = vmatpush1.msra.mxu0 %v120
  %1716 = vmatprep.subr.mxu0 %v125
  %1717 = vmatpush1.msra.mxu0 %v124
  %1718 = vmatprep.subr.mxu0 %v129
  %1719 = vmatpush1.msra.mxu0 %v128
  %1720 = vmatprep.subr.mxu0 0.0
  %1721 = vmatpush1.msra.mxu0 0.0
  %1722 = vmatprep.subr.mxu0 0.0
  %1723 = vmatpush1.msra.mxu0 0.0
  %1724 = vmatprep.subr.mxu0 0.0
  %1725 = vmatpush1.msra.mxu0 0.0
  %1726 = vmatprep.subr.mxu0 0.0
  %1727 = vmatpush1.msra.mxu0 0.0
  %1728 = vmatprep.subr.mxu0 0.0
  %1729 = vmatpush1.msra.mxu0 0.0
  %1730 = vmatprep.subr.mxu0 0.0
  %1731 = vmatpush1.msra.mxu0 0.0
  %1732 = vmatprep.subr.mxu0 0.0
  %1733 = vmatpush1.msra.mxu0 0.0
  %1734 = vmatprep.subr.mxu0 0.0
  %1735 = vmatpush1.msra.mxu0 0.0
  %1736 = vmatprep.subr.mxu0 0.0
  %1737 = vmatpush1.msra.mxu0 0.0
  %1738 = vmatprep.subr.mxu0 0.0
  %1739 = vmatpush1.msra.mxu0 0.0
  %1740 = vmatprep.subr.mxu0 0.0
  %1741 = vmatpush1.msra.mxu0 0.0
  %1742 = vmatprep.subr.mxu0 0.0
  %1743 = vmatpush1.msra.mxu0 0.0
  %1744 = vmatprep.subr.mxu0 0.0
  %1745 = vmatpush1.msra.mxu0 0.0
  %1746 = vmatprep.subr.mxu0 0.0
  %1747 = vmatpush1.msra.mxu0 0.0
  %1748 = vmatprep.subr.mxu0 0.0
  %1749 = vmatpush1.msra.mxu0 0.0
  %1750 = vmatprep.subr.mxu0 0.0
  %1751 = vmatpush1.msra.mxu0 0.0
  %1752 = vmatprep.mubr.f32.mxu0 0.0
  %1753 = vmatmul.mubr.f32.gmra.mrb[0].mxu0 %v1583
  %v1754 = vpop.f32.mrb[0].mxu0
  %v1755 = vadd.f32 0.0, %v1754
  %v1756 = vpop.f32.mrb[0].mxu0
  %v1757 = vadd.f32 0.0, %v1756
  %1758 = vdwg.mxu0
  %v1759 = vadd.f32 %v1613, %v1684
  %v1760 = vadd.f32 %v1614, %v1686
  %v1761 = vadd.f32 %v1615, %v1755
  %v1762 = vadd.f32 %v1616, %v1757
  %s1763 = scalar_lea.vmem %s47, 96
  %v1764 = vld [vmem:[%s1763] sm:$0xff]
  %v1765 = vld [vmem:[%s1763 + $0x8] sm:$0xff]
  %v1766 = vld [vmem:[%s1763 + $0x10] sm:$0xff]
  %v1767 = vld [vmem:[%s1763 + $0x18] sm:$0xff]
  %1768 = vmatprep.subr.mxu0 %v131
  %1769 = vmatpush1.msra.mxu0 %v130
  %1770 = vmatprep.subr.mxu0 %v135
  %1771 = vmatpush1.msra.mxu0 %v134
  %1772 = vmatprep.subr.mxu0 %v139
  %1773 = vmatpush1.msra.mxu0 %v138
  %1774 = vmatprep.subr.mxu0 %v143
  %1775 = vmatpush1.msra.mxu0 %v142
  %1776 = vmatprep.subr.mxu0 %v147
  %1777 = vmatpush1.msra.mxu0 %v146
  %1778 = vmatprep.subr.mxu0 %v151
  %1779 = vmatpush1.msra.mxu0 %v150
  %1780 = vmatprep.subr.mxu0 %v155
  %1781 = vmatpush1.msra.mxu0 %v154
  %1782 = vmatprep.subr.mxu0 %v159
  %1783 = vmatpush1.msra.mxu0 %v158
  %1784 = vmatprep.subr.mxu0 %v163
  %1785 = vmatpush1.msra.mxu0 %v162
  %1786 = vmatprep.subr.mxu0 %v167
  %1787 = vmatpush1.msra.mxu0 %v166
  %1788 = vmatprep.subr.mxu0 %v171
  %1789 = vmatpush1.msra.mxu0 %v170
  %1790 = vmatprep.subr.mxu0 %v175
  %1791 = vmatpush1.msra.mxu0 %v174
  %1792 = vmatprep.subr.mxu0 %v179
  %1793 = vmatpush1.msra.mxu0 %v178
  %1794 = vmatprep.subr.mxu0 %v183
  %1795 = vmatpush1.msra.mxu0 %v182
  %1796 = vmatprep.subr.mxu0 %v187
  %1797 = vmatpush1.msra.mxu0 %v186
  %1798 = vmatprep.subr.mxu0 %v191
  %1799 = vmatpush1.msra.mxu0 %v190
  %1800 = vmatprep.subr.mxu0 0.0
  %1801 = vmatpush1.msra.mxu0 0.0
  %1802 = vmatprep.subr.mxu0 0.0
  %1803 = vmatpush1.msra.mxu0 0.0
  %1804 = vmatprep.subr.mxu0 0.0
  %1805 = vmatpush1.msra.mxu0 0.0
  %1806 = vmatprep.subr.mxu0 0.0
  %1807 = vmatpush1.msra.mxu0 0.0
  %1808 = vmatprep.subr.mxu0 0.0
  %1809 = vmatpush1.msra.mxu0 0.0
  %1810 = vmatprep.subr.mxu0 0.0
  %1811 = vmatpush1.msra.mxu0 0.0
  %1812 = vmatprep.subr.mxu0 0.0
  %1813 = vmatpush1.msra.mxu0 0.0
  %1814 = vmatprep.subr.mxu0 0.0
  %1815 = vmatpush1.msra.mxu0 0.0
  %1816 = vmatprep.subr.mxu0 0.0
  %1817 = vmatpush1.msra.mxu0 0.0
  %1818 = vmatprep.subr.mxu0 0.0
  %1819 = vmatpush1.msra.mxu0 0.0
  %1820 = vmatprep.subr.mxu0 0.0
  %1821 = vmatpush1.msra.mxu0 0.0
  %1822 = vmatprep.subr.mxu0 0.0
  %1823 = vmatpush1.msra.mxu0 0.0
  %1824 = vmatprep.subr.mxu0 0.0
  %1825 = vmatpush1.msra.mxu0 0.0
  %1826 = vmatprep.subr.mxu0 0.0
  %1827 = vmatpush1.msra.mxu0 0.0
  %1828 = vmatprep.subr.mxu0 0.0
  %1829 = vmatpush1.msra.mxu0 0.0
  %1830 = vmatprep.subr.mxu0 0.0
  %1831 = vmatpush1.msra.mxu0 0.0
  %1832 = vmatprep.mubr.f32.mxu0 0.0
  %1833 = vmatmul.mubr.f32.gmra.mrb[0].mxu0 %v1607
  %v1834 = vpop.f32.mrb[0].mxu0
  %v1835 = vadd.f32 0.0, %v1834
  %v1836 = vpop.f32.mrb[0].mxu0
  %v1837 = vadd.f32 0.0, %v1836
  %1838 = vdwg.mxu0
  %1839 = vmatprep.subr.mxu0 %v133
  %1840 = vmatpush1.msra.mxu0 %v132
  %1841 = vmatprep.subr.mxu0 %v137
  %1842 = vmatpush1.msra.mxu0 %v136
  %1843 = vmatprep.subr.mxu0 %v141
  %1844 = vmatpush1.msra.mxu0 %v140
  %1845 = vmatprep.subr.mxu0 %v145
  %1846 = vmatpush1.msra.mxu0 %v144
  %1847 = vmatprep.subr.mxu0 %v149
  %1848 = vmatpush1.msra.mxu0 %v148
  %1849 = vmatprep.subr.mxu0 %v153
  %1850 = vmatpush1.msra.mxu0 %v152
  %1851 = vmatprep.subr.mxu0 %v157
  %1852 = vmatpush1.msra.mxu0 %v156
  %1853 = vmatprep.subr.mxu0 %v161
  %1854 = vmatpush1.msra.mxu0 %v160
  %1855 = vmatprep.subr.mxu0 %v165
  %1856 = vmatpush1.msra.mxu0 %v164
  %1857 = vmatprep.subr.mxu0 %v169
  %1858 = vmatpush1.msra.mxu0 %v168
  %1859 = vmatprep.subr.mxu0 %v173
  %1860 = vmatpush1.msra.mxu0 %v172
  %1861 = vmatprep.subr.mxu0 %v177
  %1862 = vmatpush1.msra.mxu0 %v176
  %1863 = vmatprep.subr.mxu0 %v181
  %1864 = vmatpush1.msra.mxu0 %v180
  %1865 = vmatprep.subr.mxu0 %v185
  %1866 = vmatpush1.msra.mxu0 %v184
  %1867 = vmatprep.subr.mxu0 %v189
  %1868 = vmatpush1.msra.mxu0 %v188
  %1869 = vmatprep.subr.mxu0 %v193
  %1870 = vmatpush1.msra.mxu0 %v192
  %1871 = vmatprep.subr.mxu0 0.0
  %1872 = vmatpush1.msra.mxu0 0.0
  %1873 = vmatprep.subr.mxu0 0.0
  %1874 = vmatpush1.msra.mxu0 0.0
  %1875 = vmatprep.subr.mxu0 0.0
  %1876 = vmatpush1.msra.mxu0 0.0
  %1877 = vmatprep.subr.mxu0 0.0
  %1878 = vmatpush1.msra.mxu0 0.0
  %1879 = vmatprep.subr.mxu0 0.0
  %1880 = vmatpush1.msra.mxu0 0.0
  %1881 = vmatprep.subr.mxu0 0.0
  %1882 = vmatpush1.msra.mxu0 0.0
  %1883 = vmatprep.subr.mxu0 0.0
  %1884 = vmatpush1.msra.mxu0 0.0
  %1885 = vmatprep.subr.mxu0 0.0
  %1886 = vmatpush1.msra.mxu0 0.0
  %1887 = vmatprep.subr.mxu0 0.0
  %1888 = vmatpush1.msra.mxu0 0.0
  %1889 = vmatprep.subr.mxu0 0.0
  %1890 = vmatpush1.msra.mxu0 0.0
  %1891 = vmatprep.subr.mxu0 0.0
  %1892 = vmatpush1.msra.mxu0 0.0
  %1893 = vmatprep.subr.mxu0 0.0
  %1894 = vmatpush1.msra.mxu0 0.0
  %1895 = vmatprep.subr.mxu0 0.0
  %1896 = vmatpush1.msra.mxu0 0.0
  %1897 = vmatprep.subr.mxu0 0.0
  %1898 = vmatpush1.msra.mxu0 0.0
  %1899 = vmatprep.subr.mxu0 0.0
  %1900 = vmatpush1.msra.mxu0 0.0
  %1901 = vmatprep.subr.mxu0 0.0
  %1902 = vmatpush1.msra.mxu0 0.0
  %1903 = vmatprep.mubr.f32.mxu0 0.0
  %1904 = vmatmul.mubr.f32.gmra.mrb[0].mxu0 %v1607
  %v1905 = vpop.f32.mrb[0].mxu0
  %v1906 = vadd.f32 0.0, %v1905
  %v1907 = vpop.f32.mrb[0].mxu0
  %v1908 = vadd.f32 0.0, %v1907
  %1909 = vdwg.mxu0
  %v1910 = vadd.f32 %v1764, %v1835
  %v1911 = vadd.f32 %v1765, %v1837
  %v1912 = vadd.f32 %v1766, %v1906
  %v1913 = vadd.f32 %v1767, %v1908
  %v1914 = vxor.u32 %v1759, 2147483648
  %v1915 = vmul.f32 %v1914, 1.442695
  %v1916 = vpow.pop %v1915
  %v1917 = vadd.f32 %v1916, 1.0
  %v1918 = vrcp.pop %v1917
  %v1919 = vmul.f32 1.0, %v1918
  %v1920 = vxor.u32 %v1760, 2147483648
  %v1921 = vmul.f32 %v1920, 1.442695
  %v1922 = vpow.pop %v1921
  %v1923 = vadd.f32 %v1922, 1.0
  %v1924 = vrcp.pop %v1923
  %v1925 = vmul.f32 1.0, %v1924
  %v1926 = vtanh.pop %v1761
  %v1927 = vxor.u32 %v1762, 2147483648
  %v1928 = vmul.f32 %v1927, 1.442695
  %v1929 = vpow.pop %v1928
  %v1930 = vadd.f32 %v1929, 1.0
  %v1931 = vrcp.pop %v1930
  %v1932 = vmul.f32 1.0, %v1931
  %v1933 = vmul.f32 %v1925, %v1581
  %v1934 = vmul.f32 %v1919, %v1926
  %v1935 = vadd.f32 %v1933, %v1934
  %v1936 = vtanh.pop %v1935
  %v1937 = vmul.f32 %v1932, %v1936
  %v1938 = vxor.u32 %v1910, 2147483648
  %v1939 = vmul.f32 %v1938, 1.442695
  %v1940 = vpow.pop %v1939
  %v1941 = vadd.f32 %v1940, 1.0
  %v1942 = vrcp.pop %v1941
  %v1943 = vmul.f32 1.0, %v1942
  %v1944 = vxor.u32 %v1911, 2147483648
  %v1945 = vmul.f32 %v1944, 1.442695
  %v1946 = vpow.pop %v1945
  %v1947 = vadd.f32 %v1946, 1.0
  %v1948 = vrcp.pop %v1947
  %v1949 = vmul.f32 1.0, %v1948
  %v1950 = vtanh.pop %v1912
  %v1951 = vxor.u32 %v1913, 2147483648
  %v1952 = vmul.f32 %v1951, 1.442695
  %v1953 = vpow.pop %v1952
  %v1954 = vadd.f32 %v1953, 1.0
  %v1955 = vrcp.pop %v1954
  %v1956 = vmul.f32 1.0, %v1955
  %v1957 = vmul.f32 %v1949, %v1605
  %v1958 = vmul.f32 %v1943, %v1950
  %v1959 = vadd.f32 %v1957, %v1958
  %v1960 = vtanh.pop %v1959
  %v1961 = vmul.f32 %v1956, %v1960
  %s1962 = scalar_lea.vmem %s4, 32
  %1963 = vst [vmem:[%s1962] sm:$0xff] %v1937
  %s1964 = scalar_lea.vmem %s55, 24
  %1965 = vst [vmem:[%s1964] sm:$0xff] %v1961
  %s1966 = scalar_lea.vmem %s0, 160
  %v1967 = vld [vmem:[%s1966] sm:$0xff]
  %v1968 = vld [vmem:[%s1966 + $0x8] sm:$0xff]
  %v1969 = vld [vmem:[%s1966 + $0x10] sm:$0xff]
  %v1970 = vld [vmem:[%s1966 + $0x18] sm:$0xff]
  %1971 = vmatprep.subr.mxu0 %v67
  %1972 = vmatpush1.msra.mxu0 %v66
  %1973 = vmatprep.subr.mxu0 %v71
  %1974 = vmatpush1.msra.mxu0 %v70
  %1975 = vmatprep.subr.mxu0 %v75
  %1976 = vmatpush1.msra.mxu0 %v74
  %1977 = vmatprep.subr.mxu0 %v79
  %1978 = vmatpush1.msra.mxu0 %v78
  %1979 = vmatprep.subr.mxu0 %v83
  %1980 = vmatpush1.msra.mxu0 %v82
  %1981 = vmatprep.subr.mxu0 %v87
  %1982 = vmatpush1.msra.mxu0 %v86
  %1983 = vmatprep.subr.mxu0 %v91
  %1984 = vmatpush1.msra.mxu0 %v90
  %1985 = vmatprep.subr.mxu0 %v95
  %1986 = vmatpush1.msra.mxu0 %v94
  %1987 = vmatprep.subr.mxu0 %v99
  %1988 = vmatpush1.msra.mxu0 %v98
  %1989 = vmatprep.subr.mxu0 %v103
  %1990 = vmatpush1.msra.mxu0 %v102
  %1991 = vmatprep.subr.mxu0 %v107
  %1992 = vmatpush1.msra.mxu0 %v106
  %1993 = vmatprep.subr.mxu0 %v111
  %1994 = vmatpush1.msra.mxu0 %v110
  %1995 = vmatprep.subr.mxu0 %v115
  %1996 = vmatpush1.msra.mxu0 %v114
  %1997 = vmatprep.subr.mxu0 %v119
  %1998 = vmatpush1.msra.mxu0 %v118
  %1999 = vmatprep.subr.mxu0 %v123
  %2000 = vmatpush1.msra.mxu0 %v122
  %2001 = vmatprep.subr.mxu0 %v127
  %2002 = vmatpush1.msra.mxu0 %v126
  %2003 = vmatprep.subr.mxu0 0.0
  %2004 = vmatpush1.msra.mxu0 0.0
  %2005 = vmatprep.subr.mxu0 0.0
  %2006 = vmatpush1.msra.mxu0 0.0
  %2007 = vmatprep.subr.mxu0 0.0
  %2008 = vmatpush1.msra.mxu0 0.0
  %2009 = vmatprep.subr.mxu0 0.0
  %2010 = vmatpush1.msra.mxu0 0.0
  %2011 = vmatprep.subr.mxu0 0.0
  %2012 = vmatpush1.msra.mxu0 0.0
  %2013 = vmatprep.subr.mxu0 0.0
  %2014 = vmatpush1.msra.mxu0 0.0
  %2015 = vmatprep.subr.mxu0 0.0
  %2016 = vmatpush1.msra.mxu0 0.0
  %2017 = vmatprep.subr.mxu0 0.0
  %2018 = vmatpush1.msra.mxu0 0.0
  %2019 = vmatprep.subr.mxu0 0.0
  %2020 = vmatpush1.msra.mxu0 0.0
  %2021 = vmatprep.subr.mxu0 0.0
  %2022 = vmatpush1.msra.mxu0 0.0
  %2023 = vmatprep.subr.mxu0 0.0
  %2024 = vmatpush1.msra.mxu0 0.0
  %2025 = vmatprep.subr.mxu0 0.0
  %2026 = vmatpush1.msra.mxu0 0.0
  %2027 = vmatprep.subr.mxu0 0.0
  %2028 = vmatpush1.msra.mxu0 0.0
  %2029 = vmatprep.subr.mxu0 0.0
  %2030 = vmatpush1.msra.mxu0 0.0
  %2031 = vmatprep.subr.mxu0 0.0
  %2032 = vmatpush1.msra.mxu0 0.0
  %2033 = vmatprep.subr.mxu0 0.0
  %2034 = vmatpush1.msra.mxu0 0.0
  %2035 = vmatprep.mubr.f32.mxu0 0.0
  %2036 = vmatmul.mubr.f32.gmra.mrb[0].mxu0 %v1937
  %v2037 = vpop.f32.mrb[0].mxu0
  %v2038 = vadd.f32 0.0, %v2037
  %v2039 = vpop.f32.mrb[0].mxu0
  %v2040 = vadd.f32 0.0, %v2039
  %2041 = vdwg.mxu0
  %2042 = vmatprep.subr.mxu0 %v69
  %2043 = vmatpush1.msra.mxu0 %v68
  %2044 = vmatprep.subr.mxu0 %v73
  %2045 = vmatpush1.msra.mxu0 %v72
  %2046 = vmatprep.subr.mxu0 %v77
  %2047 = vmatpush1.msra.mxu0 %v76
  %2048 = vmatprep.subr.mxu0 %v81
  %2049 = vmatpush1.msra.mxu0 %v80
  %2050 = vmatprep.subr.mxu0 %v85
  %2051 = vmatpush1.msra.mxu0 %v84
  %2052 = vmatprep.subr.mxu0 %v89
  %2053 = vmatpush1.msra.mxu0 %v88
  %2054 = vmatprep.subr.mxu0 %v93
  %2055 = vmatpush1.msra.mxu0 %v92
  %2056 = vmatprep.subr.mxu0 %v97
  %2057 = vmatpush1.msra.mxu0 %v96
  %2058 = vmatprep.subr.mxu0 %v101
  %2059 = vmatpush1.msra.mxu0 %v100
  %2060 = vmatprep.subr.mxu0 %v105
  %2061 = vmatpush1.msra.mxu0 %v104
  %2062 = vmatprep.subr.mxu0 %v109
  %2063 = vmatpush1.msra.mxu0 %v108
  %2064 = vmatprep.subr.mxu0 %v113
  %2065 = vmatpush1.msra.mxu0 %v112
  %2066 = vmatprep.subr.mxu0 %v117
  %2067 = vmatpush1.msra.mxu0 %v116
  %2068 = vmatprep.subr.mxu0 %v121
  %2069 = vmatpush1.msra.mxu0 %v120
  %2070 = vmatprep.subr.mxu0 %v125
  %2071 = vmatpush1.msra.mxu0 %v124
  %2072 = vmatprep.subr.mxu0 %v129
  %2073 = vmatpush1.msra.mxu0 %v128
  %2074 = vmatprep.subr.mxu0 0.0
  %2075 = vmatpush1.msra.mxu0 0.0
  %2076 = vmatprep.subr.mxu0 0.0
  %2077 = vmatpush1.msra.mxu0 0.0
  %2078 = vmatprep.subr.mxu0 0.0
  %2079 = vmatpush1.msra.mxu0 0.0
  %2080 = vmatprep.subr.mxu0 0.0
  %2081 = vmatpush1.msra.mxu0 0.0
  %2082 = vmatprep.subr.mxu0 0.0
  %2083 = vmatpush1.msra.mxu0 0.0
  %2084 = vmatprep.subr.mxu0 0.0
  %2085 = vmatpush1.msra.mxu0 0.0
  %2086 = vmatprep.subr.mxu0 0.0
  %2087 = vmatpush1.msra.mxu0 0.0
  %2088 = vmatprep.subr.mxu0 0.0
  %2089 = vmatpush1.msra.mxu0 0.0
  %2090 = vmatprep.subr.mxu0 0.0
  %2091 = vmatpush1.msra.mxu0 0.0
  %2092 = vmatprep.subr.mxu0 0.0
  %2093 = vmatpush1.msra.mxu0 0.0
  %2094 = vmatprep.subr.mxu0 0.0
  %2095 = vmatpush1.msra.mxu0 0.0
  %2096 = vmatprep.subr.mxu0 0.0
  %2097 = vmatpush1.msra.mxu0 0.0
  %2098 = vmatprep.subr.mxu0 0.0
  %2099 = vmatpush1.msra.mxu0 0.0
  %2100 = vmatprep.subr.mxu0 0.0
  %2101 = vmatpush1.msra.mxu0 0.0
  %2102 = vmatprep.subr.mxu0 0.0
  %2103 = vmatpush1.msra.mxu0 0.0
  %2104 = vmatprep.subr.mxu0 0.0
  %2105 = vmatpush1.msra.mxu0 0.0
  %2106 = vmatprep.mubr.f32.mxu0 0.0
  %2107 = vmatmul.mubr.f32.gmra.mrb[0].mxu0 %v1937
  %v2108 = vpop.f32.mrb[0].mxu0
  %v2109 = vadd.f32 0.0, %v2108
  %v2110 = vpop.f32.mrb[0].mxu0
  %v2111 = vadd.f32 0.0, %v2110
  %2112 = vdwg.mxu0
  %v2113 = vadd.f32 %v1967, %v2038
  %v2114 = vadd.f32 %v1968, %v2040
  %v2115 = vadd.f32 %v1969, %v2109
  %v2116 = vadd.f32 %v1970, %v2111
  %s2117 = scalar_lea.vmem %s47, 64
  %v2118 = vld [vmem:[%s2117] sm:$0xff]
  %v2119 = vld [vmem:[%s2117 + $0x8] sm:$0xff]
  %v2120 = vld [vmem:[%s2117 + $0x10] sm:$0xff]
  %v2121 = vld [vmem:[%s2117 + $0x18] sm:$0xff]
  %2122 = vmatprep.subr.mxu0 %v131
  %2123 = vmatpush1.msra.mxu0 %v130
  %2124 = vmatprep.subr.mxu0 %v135
  %2125 = vmatpush1.msra.mxu0 %v134
  %2126 = vmatprep.subr.mxu0 %v139
  %2127 = vmatpush1.msra.mxu0 %v138
  %2128 = vmatprep.subr.mxu0 %v143
  %2129 = vmatpush1.msra.mxu0 %v142
  %2130 = vmatprep.subr.mxu0 %v147
  %2131 = vmatpush1.msra.mxu0 %v146
  %2132 = vmatprep.subr.mxu0 %v151
  %2133 = vmatpush1.msra.mxu0 %v150
  %2134 = vmatprep.subr.mxu0 %v155
  %2135 = vmatpush1.msra.mxu0 %v154
  %2136 = vmatprep.subr.mxu0 %v159
  %2137 = vmatpush1.msra.mxu0 %v158
  %2138 = vmatprep.subr.mxu0 %v163
  %2139 = vmatpush1.msra.mxu0 %v162
  %2140 = vmatprep.subr.mxu0 %v167
  %2141 = vmatpush1.msra.mxu0 %v166
  %2142 = vmatprep.subr.mxu0 %v171
  %2143 = vmatpush1.msra.mxu0 %v170
  %2144 = vmatprep.subr.mxu0 %v175
  %2145 = vmatpush1.msra.mxu0 %v174
  %2146 = vmatprep.subr.mxu0 %v179
  %2147 = vmatpush1.msra.mxu0 %v178
  %2148 = vmatprep.subr.mxu0 %v183
  %2149 = vmatpush1.msra.mxu0 %v182
  %2150 = vmatprep.subr.mxu0 %v187
  %2151 = vmatpush1.msra.mxu0 %v186
  %2152 = vmatprep.subr.mxu0 %v191
  %2153 = vmatpush1.msra.mxu0 %v190
  %2154 = vmatprep.subr.mxu0 0.0
  %2155 = vmatpush1.msra.mxu0 0.0
  %2156 = vmatprep.subr.mxu0 0.0
  %2157 = vmatpush1.msra.mxu0 0.0
  %2158 = vmatprep.subr.mxu0 0.0
  %2159 = vmatpush1.msra.mxu0 0.0
  %2160 = vmatprep.subr.mxu0 0.0
  %2161 = vmatpush1.msra.mxu0 0.0
  %2162 = vmatprep.subr.mxu0 0.0
  %2163 = vmatpush1.msra.mxu0 0.0
  %2164 = vmatprep.subr.mxu0 0.0
  %2165 = vmatpush1.msra.mxu0 0.0
  %2166 = vmatprep.subr.mxu0 0.0
  %2167 = vmatpush1.msra.mxu0 0.0
  %2168 = vmatprep.subr.mxu0 0.0
  %2169 = vmatpush1.msra.mxu0 0.0
  %2170 = vmatprep.subr.mxu0 0.0
  %2171 = vmatpush1.msra.mxu0 0.0
  %2172 = vmatprep.subr.mxu0 0.0
  %2173 = vmatpush1.msra.mxu0 0.0
  %2174 = vmatprep.subr.mxu0 0.0
  %2175 = vmatpush1.msra.mxu0 0.0
  %2176 = vmatprep.subr.mxu0 0.0
  %2177 = vmatpush1.msra.mxu0 0.0
  %2178 = vmatprep.subr.mxu0 0.0
  %2179 = vmatpush1.msra.mxu0 0.0
  %2180 = vmatprep.subr.mxu0 0.0
  %2181 = vmatpush1.msra.mxu0 0.0
  %2182 = vmatprep.subr.mxu0 0.0
  %2183 = vmatpush1.msra.mxu0 0.0
  %2184 = vmatprep.subr.mxu0 0.0
  %2185 = vmatpush1.msra.mxu0 0.0
  %2186 = vmatprep.mubr.f32.mxu0 0.0
  %2187 = vmatmul.mubr.f32.gmra.mrb[0].mxu0 %v1961
  %v2188 = vpop.f32.mrb[0].mxu0
  %v2189 = vadd.f32 0.0, %v2188
  %v2190 = vpop.f32.mrb[0].mxu0
  %v2191 = vadd.f32 0.0, %v2190
  %2192 = vdwg.mxu0
  %2193 = vmatprep.subr.mxu0 %v133
  %2194 = vmatpush1.msra.mxu0 %v132
  %2195 = vmatprep.subr.mxu0 %v137
  %2196 = vmatpush1.msra.mxu0 %v136
  %2197 = vmatprep.subr.mxu0 %v141
  %2198 = vmatpush1.msra.mxu0 %v140
  %2199 = vmatprep.subr.mxu0 %v145
  %2200 = vmatpush1.msra.mxu0 %v144
  %2201 = vmatprep.subr.mxu0 %v149
  %2202 = vmatpush1.msra.mxu0 %v148
  %2203 = vmatprep.subr.mxu0 %v153
  %2204 = vmatpush1.msra.mxu0 %v152
  %2205 = vmatprep.subr.mxu0 %v157
  %2206 = vmatpush1.msra.mxu0 %v156
  %2207 = vmatprep.subr.mxu0 %v161
  %2208 = vmatpush1.msra.mxu0 %v160
  %2209 = vmatprep.subr.mxu0 %v165
  %2210 = vmatpush1.msra.mxu0 %v164
  %2211 = vmatprep.subr.mxu0 %v169
  %2212 = vmatpush1.msra.mxu0 %v168
  %2213 = vmatprep.subr.mxu0 %v173
  %2214 = vmatpush1.msra.mxu0 %v172
  %2215 = vmatprep.subr.mxu0 %v177
  %2216 = vmatpush1.msra.mxu0 %v176
  %2217 = vmatprep.subr.mxu0 %v181
  %2218 = vmatpush1.msra.mxu0 %v180
  %2219 = vmatprep.subr.mxu0 %v185
  %2220 = vmatpush1.msra.mxu0 %v184
  %2221 = vmatprep.subr.mxu0 %v189
  %2222 = vmatpush1.msra.mxu0 %v188
  %2223 = vmatprep.subr.mxu0 %v193
  %2224 = vmatpush1.msra.mxu0 %v192
  %2225 = vmatprep.subr.mxu0 0.0
  %2226 = vmatpush1.msra.mxu0 0.0
  %2227 = vmatprep.subr.mxu0 0.0
  %2228 = vmatpush1.msra.mxu0 0.0
  %2229 = vmatprep.subr.mxu0 0.0
  %2230 = vmatpush1.msra.mxu0 0.0
  %2231 = vmatprep.subr.mxu0 0.0
  %2232 = vmatpush1.msra.mxu0 0.0
  %2233 = vmatprep.subr.mxu0 0.0
  %2234 = vmatpush1.msra.mxu0 0.0
  %2235 = vmatprep.subr.mxu0 0.0
  %2236 = vmatpush1.msra.mxu0 0.0
  %2237 = vmatprep.subr.mxu0 0.0
  %2238 = vmatpush1.msra.mxu0 0.0
  %2239 = vmatprep.subr.mxu0 0.0
  %2240 = vmatpush1.msra.mxu0 0.0
  %2241 = vmatprep.subr.mxu0 0.0
  %2242 = vmatpush1.msra.mxu0 0.0
  %2243 = vmatprep.subr.mxu0 0.0
  %2244 = vmatpush1.msra.mxu0 0.0
  %2245 = vmatprep.subr.mxu0 0.0
  %2246 = vmatpush1.msra.mxu0 0.0
  %2247 = vmatprep.subr.mxu0 0.0
  %2248 = vmatpush1.msra.mxu0 0.0
  %2249 = vmatprep.subr.mxu0 0.0
  %2250 = vmatpush1.msra.mxu0 0.0
  %2251 = vmatprep.subr.mxu0 0.0
  %2252 = vmatpush1.msra.mxu0 0.0
  %2253 = vmatprep.subr.mxu0 0.0
  %2254 = vmatpush1.msra.mxu0 0.0
  %2255 = vmatprep.subr.mxu0 0.0
  %2256 = vmatpush1.msra.mxu0 0.0
  %2257 = vmatprep.mubr.f32.mxu0 0.0
  %2258 = vmatmul.mubr.f32.gmra.mrb[0].mxu0 %v1961
  %v2259 = vpop.f32.mrb[0].mxu0
  %v2260 = vadd.f32 0.0, %v2259
  %v2261 = vpop.f32.mrb[0].mxu0
  %v2262 = vadd.f32 0.0, %v2261
  %2263 = vdwg.mxu0
  %v2264 = vadd.f32 %v2118, %v2189
  %v2265 = vadd.f32 %v2119, %v2191
  %v2266 = vadd.f32 %v2120, %v2260
  %v2267 = vadd.f32 %v2121, %v2262
  %v2268 = vxor.u32 %v2113, 2147483648
  %v2269 = vmul.f32 %v2268, 1.442695
  %v2270 = vpow.pop %v2269
  %v2271 = vadd.f32 %v2270, 1.0
  %v2272 = vrcp.pop %v2271
  %v2273 = vmul.f32 1.0, %v2272
  %v2274 = vxor.u32 %v2114, 2147483648
  %v2275 = vmul.f32 %v2274, 1.442695
  %v2276 = vpow.pop %v2275
  %v2277 = vadd.f32 %v2276, 1.0
  %v2278 = vrcp.pop %v2277
  %v2279 = vmul.f32 1.0, %v2278
  %v2280 = vtanh.pop %v2115
  %v2281 = vxor.u32 %v2116, 2147483648
  %v2282 = vmul.f32 %v2281, 1.442695
  %v2283 = vpow.pop %v2282
  %v2284 = vadd.f32 %v2283, 1.0
  %v2285 = vrcp.pop %v2284
  %v2286 = vmul.f32 1.0, %v2285
  %v2287 = vmul.f32 %v2279, %v1935
  %v2288 = vmul.f32 %v2273, %v2280
  %v2289 = vadd.f32 %v2287, %v2288
  %v2290 = vtanh.pop %v2289
  %v2291 = vmul.f32 %v2286, %v2290
  %v2292 = vxor.u32 %v2264, 2147483648
  %v2293 = vmul.f32 %v2292, 1.442695
  %v2294 = vpow.pop %v2293
  %v2295 = vadd.f32 %v2294, 1.0
  %v2296 = vrcp.pop %v2295
  %v2297 = vmul.f32 1.0, %v2296
  %v2298 = vxor.u32 %v2265, 2147483648
  %v2299 = vmul.f32 %v2298, 1.442695
  %v2300 = vpow.pop %v2299
  %v2301 = vadd.f32 %v2300, 1.0
  %v2302 = vrcp.pop %v2301
  %v2303 = vmul.f32 1.0, %v2302
  %v2304 = vtanh.pop %v2266
  %v2305 = vxor.u32 %v2267, 2147483648
  %v2306 = vmul.f32 %v2305, 1.442695
  %v2307 = vpow.pop %v2306
  %v2308 = vadd.f32 %v2307, 1.0
  %v2309 = vrcp.pop %v2308
  %v2310 = vmul.f32 1.0, %v2309
  %v2311 = vmul.f32 %v2303, %v1959
  %v2312 = vmul.f32 %v2297, %v2304
  %v2313 = vadd.f32 %v2311, %v2312
  %v2314 = vtanh.pop %v2313
  %v2315 = vmul.f32 %v2310, %v2314
  %s2316 = scalar_lea.vmem %s4, 40
  %2317 = vst [vmem:[%s2316] sm:$0xff] %v2291
  %s2318 = scalar_lea.vmem %s55, 16
  %2319 = vst [vmem:[%s2318] sm:$0xff] %v2315
  %s2320 = scalar_lea.vmem %s0, 192
  %v2321 = vld [vmem:[%s2320] sm:$0xff]
  %v2322 = vld [vmem:[%s2320 + $0x8] sm:$0xff]
  %v2323 = vld [vmem:[%s2320 + $0x10] sm:$0xff]
  %v2324 = vld [vmem:[%s2320 + $0x18] sm:$0xff]
  %2325 = vmatprep.subr.mxu0 %v67
  %2326 = vmatpush1.msra.mxu0 %v66
  %2327 = vmatprep.subr.mxu0 %v71
  %2328 = vmatpush1.msra.mxu0 %v70
  %2329 = vmatprep.subr.mxu0 %v75
  %2330 = vmatpush1.msra.mxu0 %v74
  %2331 = vmatprep.subr.mxu0 %v79
  %2332 = vmatpush1.msra.mxu0 %v78
  %2333 = vmatprep.subr.mxu0 %v83
  %2334 = vmatpush1.msra.mxu0 %v82
  %2335 = vmatprep.subr.mxu0 %v87
  %2336 = vmatpush1.msra.mxu0 %v86
  %2337 = vmatprep.subr.mxu0 %v91
  %2338 = vmatpush1.msra.mxu0 %v90
  %2339 = vmatprep.subr.mxu0 %v95
  %2340 = vmatpush1.msra.mxu0 %v94
  %2341 = vmatprep.subr.mxu0 %v99
  %2342 = vmatpush1.msra.mxu0 %v98
  %2343 = vmatprep.subr.mxu0 %v103
  %2344 = vmatpush1.msra.mxu0 %v102
  %2345 = vmatprep.subr.mxu0 %v107
  %2346 = vmatpush1.msra.mxu0 %v106
  %2347 = vmatprep.subr.mxu0 %v111
  %2348 = vmatpush1.msra.mxu0 %v110
  %2349 = vmatprep.subr.mxu0 %v115
  %2350 = vmatpush1.msra.mxu0 %v114
  %2351 = vmatprep.subr.mxu0 %v119
  %2352 = vmatpush1.msra.mxu0 %v118
  %2353 = vmatprep.subr.mxu0 %v123
  %2354 = vmatpush1.msra.mxu0 %v122
  %2355 = vmatprep.subr.mxu0 %v127
  %2356 = vmatpush1.msra.mxu0 %v126
  %2357 = vmatprep.subr.mxu0 0.0
  %2358 = vmatpush1.msra.mxu0 0.0
  %2359 = vmatprep.subr.mxu0 0.0
  %2360 = vmatpush1.msra.mxu0 0.0
  %2361 = vmatprep.subr.mxu0 0.0
  %2362 = vmatpush1.msra.mxu0 0.0
  %2363 = vmatprep.subr.mxu0 0.0
  %2364 = vmatpush1.msra.mxu0 0.0
  %2365 = vmatprep.subr.mxu0 0.0
  %2366 = vmatpush1.msra.mxu0 0.0
  %2367 = vmatprep.subr.mxu0 0.0
  %2368 = vmatpush1.msra.mxu0 0.0
  %2369 = vmatprep.subr.mxu0 0.0
  %2370 = vmatpush1.msra.mxu0 0.0
  %2371 = vmatprep.subr.mxu0 0.0
  %2372 = vmatpush1.msra.mxu0 0.0
  %2373 = vmatprep.subr.mxu0 0.0
  %2374 = vmatpush1.msra.mxu0 0.0
  %2375 = vmatprep.subr.mxu0 0.0
  %2376 = vmatpush1.msra.mxu0 0.0
  %2377 = vmatprep.subr.mxu0 0.0
  %2378 = vmatpush1.msra.mxu0 0.0
  %2379 = vmatprep.subr.mxu0 0.0
  %2380 = vmatpush1.msra.mxu0 0.0
  %2381 = vmatprep.subr.mxu0 0.0
  %2382 = vmatpush1.msra.mxu0 0.0
  %2383 = vmatprep.subr.mxu0 0.0
  %2384 = vmatpush1.msra.mxu0 0.0
  %2385 = vmatprep.subr.mxu0 0.0
  %2386 = vmatpush1.msra.mxu0 0.0
  %2387 = vmatprep.subr.mxu0 0.0
  %2388 = vmatpush1.msra.mxu0 0.0
  %2389 = vmatprep.mubr.f32.mxu0 0.0
  %2390 = vmatmul.mubr.f32.gmra.mrb[0].mxu0 %v2291
  %v2391 = vpop.f32.mrb[0].mxu0
  %v2392 = vadd.f32 0.0, %v2391
  %v2393 = vpop.f32.mrb[0].mxu0
  %v2394 = vadd.f32 0.0, %v2393
  %2395 = vdwg.mxu0
  %2396 = vmatprep.subr.mxu0 %v69
  %2397 = vmatpush1.msra.mxu0 %v68
  %2398 = vmatprep.subr.mxu0 %v73
  %2399 = vmatpush1.msra.mxu0 %v72
  %2400 = vmatprep.subr.mxu0 %v77
  %2401 = vmatpush1.msra.mxu0 %v76
  %2402 = vmatprep.subr.mxu0 %v81
  %2403 = vmatpush1.msra.mxu0 %v80
  %2404 = vmatprep.subr.mxu0 %v85
  %2405 = vmatpush1.msra.mxu0 %v84
  %2406 = vmatprep.subr.mxu0 %v89
  %2407 = vmatpush1.msra.mxu0 %v88
  %2408 = vmatprep.subr.mxu0 %v93
  %2409 = vmatpush1.msra.mxu0 %v92
  %2410 = vmatprep.subr.mxu0 %v97
  %2411 = vmatpush1.msra.mxu0 %v96
  %2412 = vmatprep.subr.mxu0 %v101
  %2413 = vmatpush1.msra.mxu0 %v100
  %2414 = vmatprep.subr.mxu0 %v105
  %2415 = vmatpush1.msra.mxu0 %v104
  %2416 = vmatprep.subr.mxu0 %v109
  %2417 = vmatpush1.msra.mxu0 %v108
  %2418 = vmatprep.subr.mxu0 %v113
  %2419 = vmatpush1.msra.mxu0 %v112
  %2420 = vmatprep.subr.mxu0 %v117
  %2421 = vmatpush1.msra.mxu0 %v116
  %2422 = vmatprep.subr.mxu0 %v121
  %2423 = vmatpush1.msra.mxu0 %v120
  %2424 = vmatprep.subr.mxu0 %v125
  %2425 = vmatpush1.msra.mxu0 %v124
  %2426 = vmatprep.subr.mxu0 %v129
  %2427 = vmatpush1.msra.mxu0 %v128
  %2428 = vmatprep.subr.mxu0 0.0
  %2429 = vmatpush1.msra.mxu0 0.0
  %2430 = vmatprep.subr.mxu0 0.0
  %2431 = vmatpush1.msra.mxu0 0.0
  %2432 = vmatprep.subr.mxu0 0.0
  %2433 = vmatpush1.msra.mxu0 0.0
  %2434 = vmatprep.subr.mxu0 0.0
  %2435 = vmatpush1.msra.mxu0 0.0
  %2436 = vmatprep.subr.mxu0 0.0
  %2437 = vmatpush1.msra.mxu0 0.0
  %2438 = vmatprep.subr.mxu0 0.0
  %2439 = vmatpush1.msra.mxu0 0.0
  %2440 = vmatprep.subr.mxu0 0.0
  %2441 = vmatpush1.msra.mxu0 0.0
  %2442 = vmatprep.subr.mxu0 0.0
  %2443 = vmatpush1.msra.mxu0 0.0
  %2444 = vmatprep.subr.mxu0 0.0
  %2445 = vmatpush1.msra.mxu0 0.0
  %2446 = vmatprep.subr.mxu0 0.0
  %2447 = vmatpush1.msra.mxu0 0.0
  %2448 = vmatprep.subr.mxu0 0.0
  %2449 = vmatpush1.msra.mxu0 0.0
  %2450 = vmatprep.subr.mxu0 0.0
  %2451 = vmatpush1.msra.mxu0 0.0
  %2452 = vmatprep.subr.mxu0 0.0
  %2453 = vmatpush1.msra.mxu0 0.0
  %2454 = vmatprep.subr.mxu0 0.0
  %2455 = vmatpush1.msra.mxu0 0.0
  %2456 = vmatprep.subr.mxu0 0.0
  %2457 = vmatpush1.msra.mxu0 0.0
  %2458 = vmatprep.subr.mxu0 0.0
  %2459 = vmatpush1.msra.mxu0 0.0
  %2460 = vmatprep.mubr.f32.mxu0 0.0
  %2461 = vmatmul.mubr.f32.gmra.mrb[0].mxu0 %v2291
  %v2462 = vpop.f32.mrb[0].mxu0
  %v2463 = vadd.f32 0.0, %v2462
  %v2464 = vpop.f32.mrb[0].mxu0
  %v2465 = vadd.f32 0.0, %v2464
  %2466 = vdwg.mxu0
  %v2467 = vadd.f32 %v2321, %v2392
  %v2468 = vadd.f32 %v2322, %v2394
  %v2469 = vadd.f32 %v2323, %v2463
  %v2470 = vadd.f32 %v2324, %v2465
  %s2471 = scalar_lea.vmem %s47, 32
  %v2472 = vld [vmem:[%s2471] sm:$0xff]
  %v2473 = vld [vmem:[%s2471 + $0x8] sm:$0xff]
  %v2474 = vld [vmem:[%s2471 + $0x10] sm:$0xff]
  %v2475 = vld [vmem:[%s2471 + $0x18] sm:$0xff]
  %2476 = vmatprep.subr.mxu0 %v131
  %2477 = vmatpush1.msra.mxu0 %v130
  %2478 = vmatprep.subr.mxu0 %v135
  %2479 = vmatpush1.msra.mxu0 %v134
  %2480 = vmatprep.subr.mxu0 %v139
  %2481 = vmatpush1.msra.mxu0 %v138
  %2482 = vmatprep.subr.mxu0 %v143
  %2483 = vmatpush1.msra.mxu0 %v142
  %2484 = vmatprep.subr.mxu0 %v147
  %2485 = vmatpush1.msra.mxu0 %v146
  %2486 = vmatprep.subr.mxu0 %v151
  %2487 = vmatpush1.msra.mxu0 %v150
  %2488 = vmatprep.subr.mxu0 %v155
  %2489 = vmatpush1.msra.mxu0 %v154
  %2490 = vmatprep.subr.mxu0 %v159
  %2491 = vmatpush1.msra.mxu0 %v158
  %2492 = vmatprep.subr.mxu0 %v163
  %2493 = vmatpush1.msra.mxu0 %v162
  %2494 = vmatprep.subr.mxu0 %v167
  %2495 = vmatpush1.msra.mxu0 %v166
  %2496 = vmatprep.subr.mxu0 %v171
  %2497 = vmatpush1.msra.mxu0 %v170
  %2498 = vmatprep.subr.mxu0 %v175
  %2499 = vmatpush1.msra.mxu0 %v174
  %2500 = vmatprep.subr.mxu0 %v179
  %2501 = vmatpush1.msra.mxu0 %v178
  %2502 = vmatprep.subr.mxu0 %v183
  %2503 = vmatpush1.msra.mxu0 %v182
  %2504 = vmatprep.subr.mxu0 %v187
  %2505 = vmatpush1.msra.mxu0 %v186
  %2506 = vmatprep.subr.mxu0 %v191
  %2507 = vmatpush1.msra.mxu0 %v190
  %2508 = vmatprep.subr.mxu0 0.0
  %2509 = vmatpush1.msra.mxu0 0.0
  %2510 = vmatprep.subr.mxu0 0.0
  %2511 = vmatpush1.msra.mxu0 0.0
  %2512 = vmatprep.subr.mxu0 0.0
  %2513 = vmatpush1.msra.mxu0 0.0
  %2514 = vmatprep.subr.mxu0 0.0
  %2515 = vmatpush1.msra.mxu0 0.0
  %2516 = vmatprep.subr.mxu0 0.0
  %2517 = vmatpush1.msra.mxu0 0.0
  %2518 = vmatprep.subr.mxu0 0.0
  %2519 = vmatpush1.msra.mxu0 0.0
  %2520 = vmatprep.subr.mxu0 0.0
  %2521 = vmatpush1.msra.mxu0 0.0
  %2522 = vmatprep.subr.mxu0 0.0
  %2523 = vmatpush1.msra.mxu0 0.0
  %2524 = vmatprep.subr.mxu0 0.0
  %2525 = vmatpush1.msra.mxu0 0.0
  %2526 = vmatprep.subr.mxu0 0.0
  %2527 = vmatpush1.msra.mxu0 0.0
  %2528 = vmatprep.subr.mxu0 0.0
  %2529 = vmatpush1.msra.mxu0 0.0
  %2530 = vmatprep.subr.mxu0 0.0
  %2531 = vmatpush1.msra.mxu0 0.0
  %2532 = vmatprep.subr.mxu0 0.0
  %2533 = vmatpush1.msra.mxu0 0.0
  %2534 = vmatprep.subr.mxu0 0.0
  %2535 = vmatpush1.msra.mxu0 0.0
  %2536 = vmatprep.subr.mxu0 0.0
  %2537 = vmatpush1.msra.mxu0 0.0
  %2538 = vmatprep.subr.mxu0 0.0
  %2539 = vmatpush1.msra.mxu0 0.0
  %2540 = vmatprep.mubr.f32.mxu0 0.0
  %2541 = vmatmul.mubr.f32.gmra.mrb[0].mxu0 %v2315
  %v2542 = vpop.f32.mrb[0].mxu0
  %v2543 = vadd.f32 0.0, %v2542
  %v2544 = vpop.f32.mrb[0].mxu0
  %v2545 = vadd.f32 0.0, %v2544
  %2546 = vdwg.mxu0
  %2547 = vmatprep.subr.mxu0 %v133
  %2548 = vmatpush1.msra.mxu0 %v132
  %2549 = vmatprep.subr.mxu0 %v137
  %2550 = vmatpush1.msra.mxu0 %v136
  %2551 = vmatprep.subr.mxu0 %v141
  %2552 = vmatpush1.msra.mxu0 %v140
  %2553 = vmatprep.subr.mxu0 %v145
  %2554 = vmatpush1.msra.mxu0 %v144
  %2555 = vmatprep.subr.mxu0 %v149
  %2556 = vmatpush1.msra.mxu0 %v148
  %2557 = vmatprep.subr.mxu0 %v153
  %2558 = vmatpush1.msra.mxu0 %v152
  %2559 = vmatprep.subr.mxu0 %v157
  %2560 = vmatpush1.msra.mxu0 %v156
  %2561 = vmatprep.subr.mxu0 %v161
  %2562 = vmatpush1.msra.mxu0 %v160
  %2563 = vmatprep.subr.mxu0 %v165
  %2564 = vmatpush1.msra.mxu0 %v164
  %2565 = vmatprep.subr.mxu0 %v169
  %2566 = vmatpush1.msra.mxu0 %v168
  %2567 = vmatprep.subr.mxu0 %v173
  %2568 = vmatpush1.msra.mxu0 %v172
  %2569 = vmatprep.subr.mxu0 %v177
  %2570 = vmatpush1.msra.mxu0 %v176
  %2571 = vmatprep.subr.mxu0 %v181
  %2572 = vmatpush1.msra.mxu0 %v180
  %2573 = vmatprep.subr.mxu0 %v185
  %2574 = vmatpush1.msra.mxu0 %v184
  %2575 = vmatprep.subr.mxu0 %v189
  %2576 = vmatpush1.msra.mxu0 %v188
  %2577 = vmatprep.subr.mxu0 %v193
  %2578 = vmatpush1.msra.mxu0 %v192
  %2579 = vmatprep.subr.mxu0 0.0
  %2580 = vmatpush1.msra.mxu0 0.0
  %2581 = vmatprep.subr.mxu0 0.0
  %2582 = vmatpush1.msra.mxu0 0.0
  %2583 = vmatprep.subr.mxu0 0.0
  %2584 = vmatpush1.msra.mxu0 0.0
  %2585 = vmatprep.subr.mxu0 0.0
  %2586 = vmatpush1.msra.mxu0 0.0
  %2587 = vmatprep.subr.mxu0 0.0
  %2588 = vmatpush1.msra.mxu0 0.0
  %2589 = vmatprep.subr.mxu0 0.0
  %2590 = vmatpush1.msra.mxu0 0.0
  %2591 = vmatprep.subr.mxu0 0.0
  %2592 = vmatpush1.msra.mxu0 0.0
  %2593 = vmatprep.subr.mxu0 0.0
  %2594 = vmatpush1.msra.mxu0 0.0
  %2595 = vmatprep.subr.mxu0 0.0
  %2596 = vmatpush1.msra.mxu0 0.0
  %2597 = vmatprep.subr.mxu0 0.0
  %2598 = vmatpush1.msra.mxu0 0.0
  %2599 = vmatprep.subr.mxu0 0.0
  %2600 = vmatpush1.msra.mxu0 0.0
  %2601 = vmatprep.subr.mxu0 0.0
  %2602 = vmatpush1.msra.mxu0 0.0
  %2603 = vmatprep.subr.mxu0 0.0
  %2604 = vmatpush1.msra.mxu0 0.0
  %2605 = vmatprep.subr.mxu0 0.0
  %2606 = vmatpush1.msra.mxu0 0.0
  %2607 = vmatprep.subr.mxu0 0.0
  %2608 = vmatpush1.msra.mxu0 0.0
  %2609 = vmatprep.subr.mxu0 0.0
  %2610 = vmatpush1.msra.mxu0 0.0
  %2611 = vmatprep.mubr.f32.mxu0 0.0
  %2612 = vmatmul.mubr.f32.gmra.mrb[0].mxu0 %v2315
  %v2613 = vpop.f32.mrb[0].mxu0
  %v2614 = vadd.f32 0.0, %v2613
  %v2615 = vpop.f32.mrb[0].mxu0
  %v2616 = vadd.f32 0.0, %v2615
  %2617 = vdwg.mxu0
  %v2618 = vadd.f32 %v2472, %v2543
  %v2619 = vadd.f32 %v2473, %v2545
  %v2620 = vadd.f32 %v2474, %v2614
  %v2621 = vadd.f32 %v2475, %v2616
  %v2622 = vxor.u32 %v2467, 2147483648
  %v2623 = vmul.f32 %v2622, 1.442695
  %v2624 = vpow.pop %v2623
  %v2625 = vadd.f32 %v2624, 1.0
  %v2626 = vrcp.pop %v2625
  %v2627 = vmul.f32 1.0, %v2626
  %v2628 = vxor.u32 %v2468, 2147483648
  %v2629 = vmul.f32 %v2628, 1.442695
  %v2630 = vpow.pop %v2629
  %v2631 = vadd.f32 %v2630, 1.0
  %v2632 = vrcp.pop %v2631
  %v2633 = vmul.f32 1.0, %v2632
  %v2634 = vtanh.pop %v2469
  %v2635 = vxor.u32 %v2470, 2147483648
  %v2636 = vmul.f32 %v2635, 1.442695
  %v2637 = vpow.pop %v2636
  %v2638 = vadd.f32 %v2637, 1.0
  %v2639 = vrcp.pop %v2638
  %v2640 = vmul.f32 1.0, %v2639
  %v2641 = vmul.f32 %v2633, %v2289
  %v2642 = vmul.f32 %v2627, %v2634
  %v2643 = vadd.f32 %v2641, %v2642
  %v2644 = vtanh.pop %v2643
  %v2645 = vmul.f32 %v2640, %v2644
  %v2646 = vxor.u32 %v2618, 2147483648
  %v2647 = vmul.f32 %v2646, 1.442695
  %v2648 = vpow.pop %v2647
  %v2649 = vadd.f32 %v2648, 1.0
  %v2650 = vrcp.pop %v2649
  %v2651 = vmul.f32 1.0, %v2650
  %v2652 = vxor.u32 %v2619, 2147483648
  %v2653 = vmul.f32 %v2652, 1.442695
  %v2654 = vpow.pop %v2653
  %v2655 = vadd.f32 %v2654, 1.0
  %v2656 = vrcp.pop %v2655
  %v2657 = vmul.f32 1.0, %v2656
  %v2658 = vtanh.pop %v2620
  %v2659 = vxor.u32 %v2621, 2147483648
  %v2660 = vmul.f32 %v2659, 1.442695
  %v2661 = vpow.pop %v2660
  %v2662 = vadd.f32 %v2661, 1.0
  %v2663 = vrcp.pop %v2662
  %v2664 = vmul.f32 1.0, %v2663
  %v2665 = vmul.f32 %v2657, %v2313
  %v2666 = vmul.f32 %v2651, %v2658
  %v2667 = vadd.f32 %v2665, %v2666
  %v2668 = vtanh.pop %v2667
  %v2669 = vmul.f32 %v2664, %v2668
  %s2670 = scalar_lea.vmem %s4, 48
  %2671 = vst [vmem:[%s2670] sm:$0xff] %v2645
  %s2672 = scalar_lea.vmem %s55, 8
  %2673 = vst [vmem:[%s2672] sm:$0xff] %v2669
  %s2674 = scalar_lea.vmem %s0, 224
  %v2675 = vld [vmem:[%s2674] sm:$0xff]
  %v2676 = vld [vmem:[%s2674 + $0x8] sm:$0xff]
  %v2677 = vld [vmem:[%s2674 + $0x10] sm:$0xff]
  %v2678 = vld [vmem:[%s2674 + $0x18] sm:$0xff]
  %2679 = vmatprep.subr.mxu0 %v67
  %2680 = vmatpush1.msra.mxu0 %v66
  %2681 = vmatprep.subr.mxu0 %v71
  %2682 = vmatpush1.msra.mxu0 %v70
  %2683 = vmatprep.subr.mxu0 %v75
  %2684 = vmatpush1.msra.mxu0 %v74
  %2685 = vmatprep.subr.mxu0 %v79
  %2686 = vmatpush1.msra.mxu0 %v78
  %2687 = vmatprep.subr.mxu0 %v83
  %2688 = vmatpush1.msra.mxu0 %v82
  %2689 = vmatprep.subr.mxu0 %v87
  %2690 = vmatpush1.msra.mxu0 %v86
  %2691 = vmatprep.subr.mxu0 %v91
  %2692 = vmatpush1.msra.mxu0 %v90
  %2693 = vmatprep.subr.mxu0 %v95
  %2694 = vmatpush1.msra.mxu0 %v94
  %2695 = vmatprep.subr.mxu0 %v99
  %2696 = vmatpush1.msra.mxu0 %v98
  %2697 = vmatprep.subr.mxu0 %v103
  %2698 = vmatpush1.msra.mxu0 %v102
  %2699 = vmatprep.subr.mxu0 %v107
  %2700 = vmatpush1.msra.mxu0 %v106
  %2701 = vmatprep.subr.mxu0 %v111
  %2702 = vmatpush1.msra.mxu0 %v110
  %2703 = vmatprep.subr.mxu0 %v115
  %2704 = vmatpush1.msra.mxu0 %v114
  %2705 = vmatprep.subr.mxu0 %v119
  %2706 = vmatpush1.msra.mxu0 %v118
  %2707 = vmatprep.subr.mxu0 %v123
  %2708 = vmatpush1.msra.mxu0 %v122
  %2709 = vmatprep.subr.mxu0 %v127
  %2710 = vmatpush1.msra.mxu0 %v126
  %2711 = vmatprep.subr.mxu0 0.0
  %2712 = vmatpush1.msra.mxu0 0.0
  %2713 = vmatprep.subr.mxu0 0.0
  %2714 = vmatpush1.msra.mxu0 0.0
  %2715 = vmatprep.subr.mxu0 0.0
  %2716 = vmatpush1.msra.mxu0 0.0
  %2717 = vmatprep.subr.mxu0 0.0
  %2718 = vmatpush1.msra.mxu0 0.0
  %2719 = vmatprep.subr.mxu0 0.0
  %2720 = vmatpush1.msra.mxu0 0.0
  %2721 = vmatprep.subr.mxu0 0.0
  %2722 = vmatpush1.msra.mxu0 0.0
  %2723 = vmatprep.subr.mxu0 0.0
  %2724 = vmatpush1.msra.mxu0 0.0
  %2725 = vmatprep.subr.mxu0 0.0
  %2726 = vmatpush1.msra.mxu0 0.0
  %2727 = vmatprep.subr.mxu0 0.0
  %2728 = vmatpush1.msra.mxu0 0.0
  %2729 = vmatprep.subr.mxu0 0.0
  %2730 = vmatpush1.msra.mxu0 0.0
  %2731 = vmatprep.subr.mxu0 0.0
  %2732 = vmatpush1.msra.mxu0 0.0
  %2733 = vmatprep.subr.mxu0 0.0
  %2734 = vmatpush1.msra.mxu0 0.0
  %2735 = vmatprep.subr.mxu0 0.0
  %2736 = vmatpush1.msra.mxu0 0.0
  %2737 = vmatprep.subr.mxu0 0.0
  %2738 = vmatpush1.msra.mxu0 0.0
  %2739 = vmatprep.subr.mxu0 0.0
  %2740 = vmatpush1.msra.mxu0 0.0
  %2741 = vmatprep.subr.mxu0 0.0
  %2742 = vmatpush1.msra.mxu0 0.0
  %2743 = vmatprep.mubr.f32.mxu0 0.0
  %2744 = vmatmul.mubr.f32.gmra.mrb[0].mxu0 %v2645
  %v2745 = vpop.f32.mrb[0].mxu0
  %v2746 = vadd.f32 0.0, %v2745
  %v2747 = vpop.f32.mrb[0].mxu0
  %v2748 = vadd.f32 0.0, %v2747
  %2749 = vdwg.mxu0
  %2750 = vmatprep.subr.mxu0 %v69
  %2751 = vmatpush1.msra.mxu0 %v68
  %2752 = vmatprep.subr.mxu0 %v73
  %2753 = vmatpush1.msra.mxu0 %v72
  %2754 = vmatprep.subr.mxu0 %v77
  %2755 = vmatpush1.msra.mxu0 %v76
  %2756 = vmatprep.subr.mxu0 %v81
  %2757 = vmatpush1.msra.mxu0 %v80
  %2758 = vmatprep.subr.mxu0 %v85
  %2759 = vmatpush1.msra.mxu0 %v84
  %2760 = vmatprep.subr.mxu0 %v89
  %2761 = vmatpush1.msra.mxu0 %v88
  %2762 = vmatprep.subr.mxu0 %v93
  %2763 = vmatpush1.msra.mxu0 %v92
  %2764 = vmatprep.subr.mxu0 %v97
  %2765 = vmatpush1.msra.mxu0 %v96
  %2766 = vmatprep.subr.mxu0 %v101
  %2767 = vmatpush1.msra.mxu0 %v100
  %2768 = vmatprep.subr.mxu0 %v105
  %2769 = vmatpush1.msra.mxu0 %v104
  %2770 = vmatprep.subr.mxu0 %v109
  %2771 = vmatpush1.msra.mxu0 %v108
  %2772 = vmatprep.subr.mxu0 %v113
  %2773 = vmatpush1.msra.mxu0 %v112
  %2774 = vmatprep.subr.mxu0 %v117
  %2775 = vmatpush1.msra.mxu0 %v116
  %2776 = vmatprep.subr.mxu0 %v121
  %2777 = vmatpush1.msra.mxu0 %v120
  %2778 = vmatprep.subr.mxu0 %v125
  %2779 = vmatpush1.msra.mxu0 %v124
  %2780 = vmatprep.subr.mxu0 %v129
  %2781 = vmatpush1.msra.mxu0 %v128
  %2782 = vmatprep.subr.mxu0 0.0
  %2783 = vmatpush1.msra.mxu0 0.0
  %2784 = vmatprep.subr.mxu0 0.0
  %2785 = vmatpush1.msra.mxu0 0.0
  %2786 = vmatprep.subr.mxu0 0.0
  %2787 = vmatpush1.msra.mxu0 0.0
  %2788 = vmatprep.subr.mxu0 0.0
  %2789 = vmatpush1.msra.mxu0 0.0
  %2790 = vmatprep.subr.mxu0 0.0
  %2791 = vmatpush1.msra.mxu0 0.0
  %2792 = vmatprep.subr.mxu0 0.0
  %2793 = vmatpush1.msra.mxu0 0.0
  %2794 = vmatprep.subr.mxu0 0.0
  %2795 = vmatpush1.msra.mxu0 0.0
  %2796 = vmatprep.subr.mxu0 0.0
  %2797 = vmatpush1.msra.mxu0 0.0
  %2798 = vmatprep.subr.mxu0 0.0
  %2799 = vmatpush1.msra.mxu0 0.0
  %2800 = vmatprep.subr.mxu0 0.0
  %2801 = vmatpush1.msra.mxu0 0.0
  %2802 = vmatprep.subr.mxu0 0.0
  %2803 = vmatpush1.msra.mxu0 0.0
  %2804 = vmatprep.subr.mxu0 0.0
  %2805 = vmatpush1.msra.mxu0 0.0
  %2806 = vmatprep.subr.mxu0 0.0
  %2807 = vmatpush1.msra.mxu0 0.0
  %2808 = vmatprep.subr.mxu0 0.0
  %2809 = vmatpush1.msra.mxu0 0.0
  %2810 = vmatprep.subr.mxu0 0.0
  %2811 = vmatpush1.msra.mxu0 0.0
  %2812 = vmatprep.subr.mxu0 0.0
  %2813 = vmatpush1.msra.mxu0 0.0
  %2814 = vmatprep.mubr.f32.mxu0 0.0
  %2815 = vmatmul.mubr.f32.gmra.mrb[0].mxu0 %v2645
  %v2816 = vpop.f32.mrb[0].mxu0
  %v2817 = vadd.f32 0.0, %v2816
  %v2818 = vpop.f32.mrb[0].mxu0
  %v2819 = vadd.f32 0.0, %v2818
  %2820 = vdwg.mxu0
  %v2821 = vadd.f32 %v2675, %v2746
  %v2822 = vadd.f32 %v2676, %v2748
  %v2823 = vadd.f32 %v2677, %v2817
  %v2824 = vadd.f32 %v2678, %v2819
  %v2825 = vld [vmem:[%s47] sm:$0xff]
  %v2826 = vld [vmem:[%s47 + $0x8] sm:$0xff]
  %v2827 = vld [vmem:[%s47 + $0x10] sm:$0xff]
  %v2828 = vld [vmem:[%s47 + $0x18] sm:$0xff]
  %2829 = vmatprep.subr.mxu0 %v131
  %2830 = vmatpush1.msra.mxu0 %v130
  %2831 = vmatprep.subr.mxu0 %v135
  %2832 = vmatpush1.msra.mxu0 %v134
  %2833 = vmatprep.subr.mxu0 %v139
  %2834 = vmatpush1.msra.mxu0 %v138
  %2835 = vmatprep.subr.mxu0 %v143
  %2836 = vmatpush1.msra.mxu0 %v142
  %2837 = vmatprep.subr.mxu0 %v147
  %2838 = vmatpush1.msra.mxu0 %v146
  %2839 = vmatprep.subr.mxu0 %v151
  %2840 = vmatpush1.msra.mxu0 %v150
  %2841 = vmatprep.subr.mxu0 %v155
  %2842 = vmatpush1.msra.mxu0 %v154
  %2843 = vmatprep.subr.mxu0 %v159
  %2844 = vmatpush1.msra.mxu0 %v158
  %2845 = vmatprep.subr.mxu0 %v163
  %2846 = vmatpush1.msra.mxu0 %v162
  %2847 = vmatprep.subr.mxu0 %v167
  %2848 = vmatpush1.msra.mxu0 %v166
  %2849 = vmatprep.subr.mxu0 %v171
  %2850 = vmatpush1.msra.mxu0 %v170
  %2851 = vmatprep.subr.mxu0 %v175
  %2852 = vmatpush1.msra.mxu0 %v174
  %2853 = vmatprep.subr.mxu0 %v179
  %2854 = vmatpush1.msra.mxu0 %v178
  %2855 = vmatprep.subr.mxu0 %v183
  %2856 = vmatpush1.msra.mxu0 %v182
  %2857 = vmatprep.subr.mxu0 %v187
  %2858 = vmatpush1.msra.mxu0 %v186
  %2859 = vmatprep.subr.mxu0 %v191
  %2860 = vmatpush1.msra.mxu0 %v190
  %2861 = vmatprep.subr.mxu0 0.0
  %2862 = vmatpush1.msra.mxu0 0.0
  %2863 = vmatprep.subr.mxu0 0.0
  %2864 = vmatpush1.msra.mxu0 0.0
  %2865 = vmatprep.subr.mxu0 0.0
  %2866 = vmatpush1.msra.mxu0 0.0
  %2867 = vmatprep.subr.mxu0 0.0
  %2868 = vmatpush1.msra.mxu0 0.0
  %2869 = vmatprep.subr.mxu0 0.0
  %2870 = vmatpush1.msra.mxu0 0.0
  %2871 = vmatprep.subr.mxu0 0.0
  %2872 = vmatpush1.msra.mxu0 0.0
  %2873 = vmatprep.subr.mxu0 0.0
  %2874 = vmatpush1.msra.mxu0 0.0
  %2875 = vmatprep.subr.mxu0 0.0
  %2876 = vmatpush1.msra.mxu0 0.0
  %2877 = vmatprep.subr.mxu0 0.0
  %2878 = vmatpush1.msra.mxu0 0.0
  %2879 = vmatprep.subr.mxu0 0.0
  %2880 = vmatpush1.msra.mxu0 0.0
  %2881 = vmatprep.subr.mxu0 0.0
  %2882 = vmatpush1.msra.mxu0 0.0
  %2883 = vmatprep.subr.mxu0 0.0
  %2884 = vmatpush1.msra.mxu0 0.0
  %2885 = vmatprep.subr.mxu0 0.0
  %2886 = vmatpush1.msra.mxu0 0.0
  %2887 = vmatprep.subr.mxu0 0.0
  %2888 = vmatpush1.msra.mxu0 0.0
  %2889 = vmatprep.subr.mxu0 0.0
  %2890 = vmatpush1.msra.mxu0 0.0
  %2891 = vmatprep.subr.mxu0 0.0
  %2892 = vmatpush1.msra.mxu0 0.0
  %2893 = vmatprep.mubr.f32.mxu0 0.0
  %2894 = vmatmul.mubr.f32.gmra.mrb[0].mxu0 %v2669
  %v2895 = vpop.f32.mrb[0].mxu0
  %v2896 = vadd.f32 0.0, %v2895
  %v2897 = vpop.f32.mrb[0].mxu0
  %v2898 = vadd.f32 0.0, %v2897
  %2899 = vdwg.mxu0
  %2900 = vmatprep.subr.mxu0 %v133
  %2901 = vmatpush1.msra.mxu0 %v132
  %2902 = vmatprep.subr.mxu0 %v137
  %2903 = vmatpush1.msra.mxu0 %v136
  %2904 = vmatprep.subr.mxu0 %v141
  %2905 = vmatpush1.msra.mxu0 %v140
  %2906 = vmatprep.subr.mxu0 %v145
  %2907 = vmatpush1.msra.mxu0 %v144
  %2908 = vmatprep.subr.mxu0 %v149
  %2909 = vmatpush1.msra.mxu0 %v148
  %2910 = vmatprep.subr.mxu0 %v153
  %2911 = vmatpush1.msra.mxu0 %v152
  %2912 = vmatprep.subr.mxu0 %v157
  %2913 = vmatpush1.msra.mxu0 %v156
  %2914 = vmatprep.subr.mxu0 %v161
  %2915 = vmatpush1.msra.mxu0 %v160
  %2916 = vmatprep.subr.mxu0 %v165
  %2917 = vmatpush1.msra.mxu0 %v164
  %2918 = vmatprep.subr.mxu0 %v169
  %2919 = vmatpush1.msra.mxu0 %v168
  %2920 = vmatprep.subr.mxu0 %v173
  %2921 = vmatpush1.msra.mxu0 %v172
  %2922 = vmatprep.subr.mxu0 %v177
  %2923 = vmatpush1.msra.mxu0 %v176
  %2924 = vmatprep.subr.mxu0 %v181
  %2925 = vmatpush1.msra.mxu0 %v180
  %2926 = vmatprep.subr.mxu0 %v185
  %2927 = vmatpush1.msra.mxu0 %v184
  %2928 = vmatprep.subr.mxu0 %v189
  %2929 = vmatpush1.msra.mxu0 %v188
  %2930 = vmatprep.subr.mxu0 %v193
  %2931 = vmatpush1.msra.mxu0 %v192
  %2932 = vmatprep.subr.mxu0 0.0
  %2933 = vmatpush1.msra.mxu0 0.0
  %2934 = vmatprep.subr.mxu0 0.0
  %2935 = vmatpush1.msra.mxu0 0.0
  %2936 = vmatprep.subr.mxu0 0.0
  %2937 = vmatpush1.msra.mxu0 0.0
  %2938 = vmatprep.subr.mxu0 0.0
  %2939 = vmatpush1.msra.mxu0 0.0
  %2940 = vmatprep.subr.mxu0 0.0
  %2941 = vmatpush1.msra.mxu0 0.0
  %2942 = vmatprep.subr.mxu0 0.0
  %2943 = vmatpush1.msra.mxu0 0.0
  %2944 = vmatprep.subr.mxu0 0.0
  %2945 = vmatpush1.msra.mxu0 0.0
  %2946 = vmatprep.subr.mxu0 0.0
  %2947 = vmatpush1.msra.mxu0 0.0
  %2948 = vmatprep.subr.mxu0 0.0
  %2949 = vmatpush1.msra.mxu0 0.0
  %2950 = vmatprep.subr.mxu0 0.0
  %2951 = vmatpush1.msra.mxu0 0.0
  %2952 = vmatprep.subr.mxu0 0.0
  %2953 = vmatpush1.msra.mxu0 0.0
  %2954 = vmatprep.subr.mxu0 0.0
  %2955 = vmatpush1.msra.mxu0 0.0
  %2956 = vmatprep.subr.mxu0 0.0
  %2957 = vmatpush1.msra.mxu0 0.0
  %2958 = vmatprep.subr.mxu0 0.0
  %2959 = vmatpush1.msra.mxu0 0.0
  %2960 = vmatprep.subr.mxu0 0.0
  %2961 = vmatpush1.msra.mxu0 0.0
  %2962 = vmatprep.subr.mxu0 0.0
  %2963 = vmatpush1.msra.mxu0 0.0
  %2964 = vmatprep.mubr.f32.mxu0 0.0
  %2965 = vmatmul.mubr.f32.gmra.mrb[0].mxu0 %v2669
  %v2966 = vpop.f32.mrb[0].mxu0
  %v2967 = vadd.f32 0.0, %v2966
  %v2968 = vpop.f32.mrb[0].mxu0
  %v2969 = vadd.f32 0.0, %v2968
  %2970 = vdwg.mxu0
  %v2971 = vadd.f32 %v2825, %v2896
  %v2972 = vadd.f32 %v2826, %v2898
  %v2973 = vadd.f32 %v2827, %v2967
  %v2974 = vadd.f32 %v2828, %v2969
  %v2975 = vxor.u32 %v2821, 2147483648
  %v2976 = vmul.f32 %v2975, 1.442695
  %v2977 = vpow.pop %v2976
  %v2978 = vadd.f32 %v2977, 1.0
  %v2979 = vrcp.pop %v2978
  %v2980 = vmul.f32 1.0, %v2979
  %v2981 = vxor.u32 %v2822, 2147483648
  %v2982 = vmul.f32 %v2981, 1.442695
  %v2983 = vpow.pop %v2982
  %v2984 = vadd.f32 %v2983, 1.0
  %v2985 = vrcp.pop %v2984
  %v2986 = vmul.f32 1.0, %v2985
  %v2987 = vtanh.pop %v2823
  %v2988 = vxor.u32 %v2824, 2147483648
  %v2989 = vmul.f32 %v2988, 1.442695
  %v2990 = vpow.pop %v2989
  %v2991 = vadd.f32 %v2990, 1.0
  %v2992 = vrcp.pop %v2991
  %v2993 = vmul.f32 1.0, %v2992
  %v2994 = vmul.f32 %v2986, %v2643
  %v2995 = vmul.f32 %v2980, %v2987
  %v2996 = vadd.f32 %v2994, %v2995
  %v2997 = vtanh.pop %v2996
  %v2998 = vmul.f32 %v2993, %v2997
  %v2999 = vxor.u32 %v2971, 2147483648
  %v3000 = vmul.f32 %v2999, 1.442695
  %v3001 = vpow.pop %v3000
  %v3002 = vadd.f32 %v3001, 1.0
  %v3003 = vrcp.pop %v3002
  %v3004 = vmul.f32 1.0, %v3003
  %v3005 = vxor.u32 %v2972, 2147483648
  %v3006 = vmul.f32 %v3005, 1.442695
  %v3007 = vpow.pop %v3006
  %v3008 = vadd.f32 %v3007, 1.0
  %v3009 = vrcp.pop %v3008
  %v3010 = vmul.f32 1.0, %v3009
  %v3011 = vtanh.pop %v2973
  %v3012 = vxor.u32 %v2974, 2147483648
  %v3013 = vmul.f32 %v3012, 1.442695
  %v3014 = vpow.pop %v3013
  %v3015 = vadd.f32 %v3014, 1.0
  %v3016 = vrcp.pop %v3015
  %v3017 = vmul.f32 1.0, %v3016
  %v3018 = vmul.f32 %v3010, %v2667
  %v3019 = vmul.f32 %v3004, %v3011
  %v3020 = vadd.f32 %v3018, %v3019
  %v3021 = vtanh.pop %v3020
  %v3022 = vmul.f32 %v3017, %v3021
  %s3023 = scalar_lea.vmem %s4, 56
  %3024 = vst [vmem:[%s3023] sm:$0xff] %v2998
  %3025 = vst [vmem:[%s55] sm:$0xff] %v3022
  %3026 = vst [vmem:[#allocation2] sm:$0xff] %v2998
  %3027 = vst [vmem:[#allocation3] sm:$0xff] %v2996
  %3028 = vst [vmem:[#allocation4] sm:$0xff] %v3022
  %3029 = vst [vmem:[#allocation5] sm:$0xff] %v3020
  %s3030 = ssub.s32 0, 0
  %s3031 = smul.u32 8, %s3030
  %p3032 = scmp.lt.s32.totalorder %s3031, 7
  %s3033 = scalar_select %p3032, %s3031, 7
  %s3034 = smul.addr %s3033, 8
  %s3035 = scalar_lea.vmem %s5, %s3034
  // Predicated region
  $region22: #{rnn_lstm_forward.2} parent=0 // pred_check
    _
  $region23: #{rnn_lstm_forward.2} parent=0 // pred_check_branch
    %3037 = sbr.rel (0) target = $region25
  $region24: #{rnn_lstm_forward.2} parent=0 // pred_region
    _
  $region25: #{rnn_lstm_forward.2} parent=0 // pred_fallthru
    _
  // Predicated region
  $region26: #{rnn_lstm_forward.2} parent=0 // pred_check
    _
  $region27: #{rnn_lstm_forward.2} parent=0 // pred_check_branch
    %3039 = sbr.rel (0) target = $region29
  $region28: #{rnn_lstm_forward.2} parent=0 // pred_region
    %s3040 = ssub.s32 0, 0
    %s3041 = smul.u32 8, %s3040
  $region29: #{rnn_lstm_forward.2} parent=0 // pred_fallthru
    _
  // Predicated region
  $region30: #{rnn_lstm_forward.2} parent=0 // pred_check
    _
  $region31: #{rnn_lstm_forward.2} parent=0 // pred_check_branch
    %3043 = sbr.rel (0) target = $region33
  $region32: #{rnn_lstm_forward.2} parent=0 // pred_region
    _
  $region33: #{rnn_lstm_forward.2} parent=0 // pred_fallthru
    _
  // Predicated region
  $region34: #{rnn_lstm_forward.2} parent=0 // pred_check
    _
  $region35: #{rnn_lstm_forward.2} parent=0 // pred_check_branch
    %3045 = sbr.rel (0) target = $region37
  $region36: #{rnn_lstm_forward.2} parent=0 // pred_region
    %s3046 = ssub.s32 0, 0
    %s3047 = smul.u32 8, %s3046
    %p3048 = scmp.lt.s32.totalorder %s3047, 7
    %s3049 = scalar_select %p3048, %s3047, 7
    %s3050 = smul.addr %s3049, 8
    %s3051 = scalar_lea.vmem %s5, %s3050
  $region37: #{rnn_lstm_forward.2} parent=0 // pred_fallthru
    _

// kernel: rnn_lstm_forward.3
$region0: #{rnn_lstm_forward.3}
  #allocation0 [shape = 'u32[]', space=smem, size = 0x4, offset = 0x4, fixed_abs, tag = 'smem constant byte address 0x4 - core index']
  #allocation1 [shape = 'u32[144,128]{1,0:T(1,128)}', space=vmem, size = 0x12000, scoped, tag = 'internal scratch']
  #allocation2 [shape = 'f32[8,128]{1,0:T(8,128)}', space=vmem, size = 0x1000, scoped, tag = 'scratch operand']
  #allocation3 [shape = 'f32[8,128]{1,0:T(8,128)}', space=vmem, size = 0x1000, scoped, tag = 'scratch operand']
  #allocation4 [shape = 'f32[8,128]{1,0:T(8,128)}', space=vmem, size = 0x1000, scoped, tag = 'scratch operand']
  #allocation5 [shape = 'f32[8,128]{1,0:T(8,128)}', space=vmem, size = 0x1000, scoped, tag = 'scratch operand']
  %s0 = inlined_call_operand.vmem [shape: f32[8,8,512], index: 0, kind: input, shape index: {}]
  %s1 = inlined_call_operand.vmem [shape: f32[8,8,512], index: 1, kind: input, shape index: {}]
  %s2 = inlined_call_operand.vmem [shape: f32[128,512], index: 2, kind: input, shape index: {}]
  %s3 = inlined_call_operand.vmem [shape: f32[128,512], index: 3, kind: input, shape index: {}]
  %s4 = inlined_call_operand.vmem [shape: f32[256,64], index: 4, kind: input, shape index: {}]
  %s5 = inlined_call_operand.vmem [shape: f32[1,64], index: 5, kind: input, shape index: {}]
  %s6 = inlined_call_operand.vmem [shape: f32[64,128], index: 6, kind: input, shape index: {}]
  %s7 = inlined_call_operand.vmem [shape: f32[1,128], index: 7, kind: input, shape index: {}]
  %s8 = inlined_call_operand.vmem [shape: f32[8,128], index: 8, kind: output, shape index: {}]
  %s9 = sld [smem:[#allocation0]]
  $region50: #{rnn_lstm_forward.3} parent=0
    _
  %s11 = ssub.s32 1, %s9
  %s12 = scalar_select 0, %s11, %s9
  // Predicated region
  $region2: #{rnn_lstm_forward.3} parent=0 // pred_check
    _
  $region3: #{rnn_lstm_forward.3} parent=0 // pred_check_branch
    %14 = sbr.rel (0) target = $region5
  $region4: #{rnn_lstm_forward.3} parent=0 // pred_region
    _
  $region5: #{rnn_lstm_forward.3} parent=0 // pred_fallthru
    _
  // Predicated region
  $region6: #{rnn_lstm_forward.3} parent=0 // pred_check
    _
  $region7: #{rnn_lstm_forward.3} parent=0 // pred_check_branch
    %16 = sbr.rel (0) target = $region9
  $region8: #{rnn_lstm_forward.3} parent=0 // pred_region
    %s17 = ssub.s32 0, 0
    %s18 = smul.u32 8, %s17
    %p19 = scmp.lt.s32.totalorder %s18, 7
    %s20 = scalar_select %p19, %s18, 7
    %s21 = smul.addr %s20, 4
    %s22 = smul.addr %s21, 8
    %s23 = scalar_lea.vmem %s1, %s22
    %s24 = ssub.s32 0, 0
    %s25 = smul.u32 8, %s24
  $region9: #{rnn_lstm_forward.3} parent=0 // pred_fallthru
    _
  // Predicated region
  $region10: #{rnn_lstm_forward.3} parent=0 // pred_check
    _
  $region11: #{rnn_lstm_forward.3} parent=0 // pred_check_branch
    %27 = sbr.rel (0) target = $region13
  $region12: #{rnn_lstm_forward.3} parent=0 // pred_region
    _
  $region13: #{rnn_lstm_forward.3} parent=0 // pred_fallthru
    _
  // Predicated region
  $region14: #{rnn_lstm_forward.3} parent=0 // pred_check
    _
  $region15: #{rnn_lstm_forward.3} parent=0 // pred_check_branch
    %29 = sbr.rel (0) target = $region17
  $region16: #{rnn_lstm_forward.3} parent=0 // pred_region
    _
  $region17: #{rnn_lstm_forward.3} parent=0 // pred_fallthru
    _
  // Predicated region
  $region18: #{rnn_lstm_forward.3} parent=0 // pred_check
    _
  $region19: #{rnn_lstm_forward.3} parent=0 // pred_check_branch
    %31 = sbr.rel (0) target = $region21
  $region20: #{rnn_lstm_forward.3} parent=0 // pred_region
    _
  $region21: #{rnn_lstm_forward.3} parent=0 // pred_fallthru
    _
  // Predicated region
  $region22: #{rnn_lstm_forward.3} parent=0 // pred_check
    _
  $region23: #{rnn_lstm_forward.3} parent=0 // pred_check_branch
    %33 = sbr.rel (0) target = $region25
  $region24: #{rnn_lstm_forward.3} parent=0 // pred_region
    _
  $region25: #{rnn_lstm_forward.3} parent=0 // pred_fallthru
    _
  // Predicated region
  $region26: #{rnn_lstm_forward.3} parent=0 // pred_check
    _
  $region27: #{rnn_lstm_forward.3} parent=0 // pred_check_branch
    %35 = sbr.rel (0) target = $region29
  $region28: #{rnn_lstm_forward.3} parent=0 // pred_region
    _
  $region29: #{rnn_lstm_forward.3} parent=0 // pred_fallthru
    _
  // Predicated region
  $region30: #{rnn_lstm_forward.3} parent=0 // pred_check
    _
  $region31: #{rnn_lstm_forward.3} parent=0 // pred_check_branch
    %37 = sbr.rel (0) target = $region33
  $region32: #{rnn_lstm_forward.3} parent=0 // pred_region
    _
  $region33: #{rnn_lstm_forward.3} parent=0 // pred_fallthru
    _
  %s38 = ssub.s32 0, 0
  %s39 = smul.u32 8, %s38
  %p40 = scmp.lt.s32.totalorder %s39, 7
  %s41 = scalar_select %p40, %s39, 7
  %s42 = smul.addr %s41, 4
  %s43 = smul.addr %s42, 8
  %s44 = scalar_lea.vmem %s1, %s43
  %s45 = ssub.s32 0, 0
  %s46 = smul.u32 8, %s45
  %p47 = scmp.lt.s32.totalorder %s46, 7
  %s48 = scalar_select %p47, %s46, 7
  %s49 = smul.addr %s48, 4
  %s50 = smul.addr %s49, 8
  %s51 = scalar_lea.vmem %s1, %s50
  %s52 = ssub.s32 0, 0
  %s53 = smul.u32 8, %s52
  %p54 = scmp.eq.s32.totalorder 0, 0
  // Predicated region
  $region34: #{rnn_lstm_forward.3} parent=0 // pred_check
    %p55 = pneg %p54
  $region35: #{rnn_lstm_forward.3} parent=0 // pred_check_branch
    %57 = sbr.rel (%p55) target = $region37
  $region36: #{rnn_lstm_forward.3} parent=0 // pred_region
    %58 = vst [vmem:[#allocation2] sm:$0xff] 0.0
    %59 = vst [vmem:[#allocation3] sm:$0xff] 0.0
    %60 = vst [vmem:[#allocation4] sm:$0xff] 0.0
    %61 = vst [vmem:[#allocation5] sm:$0xff] 0.0
  $region37: #{rnn_lstm_forward.3} parent=0 // pred_fallthru
    _
  %v62 = vld [vmem:[%s2] sm:$0xff]
  %v63 = vld [vmem:[%s2 + $0x8] sm:$0xff]
  %v64 = vld [vmem:[%s2 + $0x10] sm:$0xff]
  %v65 = vld [vmem:[%s2 + $0x18] sm:$0xff]
  %v66 = vld [vmem:[%s2 + $0x20] sm:$0xff]
  %v67 = vld [vmem:[%s2 + $0x28] sm:$0xff]
  %v68 = vld [vmem:[%s2 + $0x30] sm:$0xff]
  %v69 = vld [vmem:[%s2 + $0x38] sm:$0xff]
  %v70 = vld [vmem:[%s2 + $0x40] sm:$0xff]
  %v71 = vld [vmem:[%s2 + $0x48] sm:$0xff]
  %v72 = vld [vmem:[%s2 + $0x50] sm:$0xff]
  %v73 = vld [vmem:[%s2 + $0x58] sm:$0xff]
  %v74 = vld [vmem:[%s2 + $0x60] sm:$0xff]
  %v75 = vld [vmem:[%s2 + $0x68] sm:$0xff]
  %v76 = vld [vmem:[%s2 + $0x70] sm:$0xff]
  %v77 = vld [vmem:[%s2 + $0x78] sm:$0xff]
  %v78 = vld [vmem:[%s2 + $0x80] sm:$0xff]
  %v79 = vld [vmem:[%s2 + $0x88] sm:$0xff]
  %v80 = vld [vmem:[%s2 + $0x90] sm:$0xff]
  %v81 = vld [vmem:[%s2 + $0x98] sm:$0xff]
  %v82 = vld [vmem:[%s2 + $0xa0] sm:$0xff]
  %v83 = vld [vmem:[%s2 + $0xa8] sm:$0xff]
  %v84 = vld [vmem:[%s2 + $0xb0] sm:$0xff]
  %v85 = vld [vmem:[%s2 + $0xb8] sm:$0xff]
  %v86 = vld [vmem:[%s2 + $0xc0] sm:$0xff]
  %v87 = vld [vmem:[%s2 + $0xc8] sm:$0xff]
  %v88 = vld [vmem:[%s2 + $0xd0] sm:$0xff]
  %v89 = vld [vmem:[%s2 + $0xd8] sm:$0xff]
  %v90 = vld [vmem:[%s2 + $0xe0] sm:$0xff]
  %v91 = vld [vmem:[%s2 + $0xe8] sm:$0xff]
  %v92 = vld [vmem:[%s2 + $0xf0] sm:$0xff]
  %v93 = vld [vmem:[%s2 + $0xf8] sm:$0xff]
  %v94 = vld [vmem:[%s2 + $0x100] sm:$0xff]
  %v95 = vld [vmem:[%s2 + $0x108] sm:$0xff]
  %v96 = vld [vmem:[%s2 + $0x110] sm:$0xff]
  %v97 = vld [vmem:[%s2 + $0x118] sm:$0xff]
  %v98 = vld [vmem:[%s2 + $0x120] sm:$0xff]
  %v99 = vld [vmem:[%s2 + $0x128] sm:$0xff]
  %v100 = vld [vmem:[%s2 + $0x130] sm:$0xff]
  %v101 = vld [vmem:[%s2 + $0x138] sm:$0xff]
  %v102 = vld [vmem:[%s2 + $0x140] sm:$0xff]
  %v103 = vld [vmem:[%s2 + $0x148] sm:$0xff]
  %v104 = vld [vmem:[%s2 + $0x150] sm:$0xff]
  %v105 = vld [vmem:[%s2 + $0x158] sm:$0xff]
  %v106 = vld [vmem:[%s2 + $0x160] sm:$0xff]
  %v107 = vld [vmem:[%s2 + $0x168] sm:$0xff]
  %v108 = vld [vmem:[%s2 + $0x170] sm:$0xff]
  %v109 = vld [vmem:[%s2 + $0x178] sm:$0xff]
  %v110 = vld [vmem:[%s2 + $0x180] sm:$0xff]
  %v111 = vld [vmem:[%s2 + $0x188] sm:$0xff]
  %v112 = vld [vmem:[%s2 + $0x190] sm:$0xff]
  %v113 = vld [vmem:[%s2 + $0x198] sm:$0xff]
  %v114 = vld [vmem:[%s2 + $0x1a0] sm:$0xff]
  %v115 = vld [vmem:[%s2 + $0x1a8] sm:$0xff]
  %v116 = vld [vmem:[%s2 + $0x1b0] sm:$0xff]
  %v117 = vld [vmem:[%s2 + $0x1b8] sm:$0xff]
  %v118 = vld [vmem:[%s2 + $0x1c0] sm:$0xff]
  %v119 = vld [vmem:[%s2 + $0x1c8] sm:$0xff]
  %v120 = vld [vmem:[%s2 + $0x1d0] sm:$0xff]
  %v121 = vld [vmem:[%s2 + $0x1d8] sm:$0xff]
  %v122 = vld [vmem:[%s2 + $0x1e0] sm:$0xff]
  %v123 = vld [vmem:[%s2 + $0x1e8] sm:$0xff]
  %v124 = vld [vmem:[%s2 + $0x1f0] sm:$0xff]
  %v125 = vld [vmem:[%s2 + $0x1f8] sm:$0xff]
  %v126 = vld [vmem:[%s3] sm:$0xff]
  %v127 = vld [vmem:[%s3 + $0x8] sm:$0xff]
  %v128 = vld [vmem:[%s3 + $0x10] sm:$0xff]
  %v129 = vld [vmem:[%s3 + $0x18] sm:$0xff]
  %v130 = vld [vmem:[%s3 + $0x20] sm:$0xff]
  %v131 = vld [vmem:[%s3 + $0x28] sm:$0xff]
  %v132 = vld [vmem:[%s3 + $0x30] sm:$0xff]
  %v133 = vld [vmem:[%s3 + $0x38] sm:$0xff]
  %v134 = vld [vmem:[%s3 + $0x40] sm:$0xff]
  %v135 = vld [vmem:[%s3 + $0x48] sm:$0xff]
  %v136 = vld [vmem:[%s3 + $0x50] sm:$0xff]
  %v137 = vld [vmem:[%s3 + $0x58] sm:$0xff]
  %v138 = vld [vmem:[%s3 + $0x60] sm:$0xff]
  %v139 = vld [vmem:[%s3 + $0x68] sm:$0xff]
  %v140 = vld [vmem:[%s3 + $0x70] sm:$0xff]
  %v141 = vld [vmem:[%s3 + $0x78] sm:$0xff]
  %v142 = vld [vmem:[%s3 + $0x80] sm:$0xff]
  %v143 = vld [vmem:[%s3 + $0x88] sm:$0xff]
  %v144 = vld [vmem:[%s3 + $0x90] sm:$0xff]
  %v145 = vld [vmem:[%s3 + $0x98] sm:$0xff]
  %v146 = vld [vmem:[%s3 + $0xa0] sm:$0xff]
  %v147 = vld [vmem:[%s3 + $0xa8] sm:$0xff]
  %v148 = vld [vmem:[%s3 + $0xb0] sm:$0xff]
  %v149 = vld [vmem:[%s3 + $0xb8] sm:$0xff]
  %v150 = vld [vmem:[%s3 + $0xc0] sm:$0xff]
  %v151 = vld [vmem:[%s3 + $0xc8] sm:$0xff]
  %v152 = vld [vmem:[%s3 + $0xd0] sm:$0xff]
  %v153 = vld [vmem:[%s3 + $0xd8] sm:$0xff]
  %v154 = vld [vmem:[%s3 + $0xe0] sm:$0xff]
  %v155 = vld [vmem:[%s3 + $0xe8] sm:$0xff]
  %v156 = vld [vmem:[%s3 + $0xf0] sm:$0xff]
  %v157 = vld [vmem:[%s3 + $0xf8] sm:$0xff]
  %v158 = vld [vmem:[%s3 + $0x100] sm:$0xff]
  %v159 = vld [vmem:[%s3 + $0x108] sm:$0xff]
  %v160 = vld [vmem:[%s3 + $0x110] sm:$0xff]
  %v161 = vld [vmem:[%s3 + $0x118] sm:$0xff]
  %v162 = vld [vmem:[%s3 + $0x120] sm:$0xff]
  %v163 = vld [vmem:[%s3 + $0x128] sm:$0xff]
  %v164 = vld [vmem:[%s3 + $0x130] sm:$0xff]
  %v165 = vld [vmem:[%s3 + $0x138] sm:$0xff]
  %v166 = vld [vmem:[%s3 + $0x140] sm:$0xff]
  %v167 = vld [vmem:[%s3 + $0x148] sm:$0xff]
  %v168 = vld [vmem:[%s3 + $0x150] sm:$0xff]
  %v169 = vld [vmem:[%s3 + $0x158] sm:$0xff]
  %v170 = vld [vmem:[%s3 + $0x160] sm:$0xff]
  %v171 = vld [vmem:[%s3 + $0x168] sm:$0xff]
  %v172 = vld [vmem:[%s3 + $0x170] sm:$0xff]
  %v173 = vld [vmem:[%s3 + $0x178] sm:$0xff]
  %v174 = vld [vmem:[%s3 + $0x180] sm:$0xff]
  %v175 = vld [vmem:[%s3 + $0x188] sm:$0xff]
  %v176 = vld [vmem:[%s3 + $0x190] sm:$0xff]
  %v177 = vld [vmem:[%s3 + $0x198] sm:$0xff]
  %v178 = vld [vmem:[%s3 + $0x1a0] sm:$0xff]
  %v179 = vld [vmem:[%s3 + $0x1a8] sm:$0xff]
  %v180 = vld [vmem:[%s3 + $0x1b0] sm:$0xff]
  %v181 = vld [vmem:[%s3 + $0x1b8] sm:$0xff]
  %v182 = vld [vmem:[%s3 + $0x1c0] sm:$0xff]
  %v183 = vld [vmem:[%s3 + $0x1c8] sm:$0xff]
  %v184 = vld [vmem:[%s3 + $0x1d0] sm:$0xff]
  %v185 = vld [vmem:[%s3 + $0x1d8] sm:$0xff]
  %v186 = vld [vmem:[%s3 + $0x1e0] sm:$0xff]
  %v187 = vld [vmem:[%s3 + $0x1e8] sm:$0xff]
  %v188 = vld [vmem:[%s3 + $0x1f0] sm:$0xff]
  %v189 = vld [vmem:[%s3 + $0x1f8] sm:$0xff]
  %v190 = vld [vmem:[#allocation2] sm:$0xff]
  %v191 = vld [vmem:[#allocation3] sm:$0xff]
  %v192 = vld [vmem:[#allocation4] sm:$0xff]
  %v193 = vld [vmem:[#allocation5] sm:$0xff]
  %v194 = vld [vmem:[%s0] sm:$0xff]
  %v195 = vld [vmem:[%s0 + $0x8] sm:$0xff]
  %v196 = vld [vmem:[%s0 + $0x10] sm:$0xff]
  %v197 = vld [vmem:[%s0 + $0x18] sm:$0xff]
  %198 = vmatprep.subr.mxu0 %v63
  %199 = vmatpush1.msra.mxu0 %v62
  %200 = vmatprep.subr.mxu0 %v67
  %201 = vmatpush1.msra.mxu0 %v66
  %202 = vmatprep.subr.mxu0 %v71
  %203 = vmatpush1.msra.mxu0 %v70
  %204 = vmatprep.subr.mxu0 %v75
  %205 = vmatpush1.msra.mxu0 %v74
  %206 = vmatprep.subr.mxu0 %v79
  %207 = vmatpush1.msra.mxu0 %v78
  %208 = vmatprep.subr.mxu0 %v83
  %209 = vmatpush1.msra.mxu0 %v82
  %210 = vmatprep.subr.mxu0 %v87
  %211 = vmatpush1.msra.mxu0 %v86
  %212 = vmatprep.subr.mxu0 %v91
  %213 = vmatpush1.msra.mxu0 %v90
  %214 = vmatprep.subr.mxu0 %v95
  %215 = vmatpush1.msra.mxu0 %v94
  %216 = vmatprep.subr.mxu0 %v99
  %217 = vmatpush1.msra.mxu0 %v98
  %218 = vmatprep.subr.mxu0 %v103
  %219 = vmatpush1.msra.mxu0 %v102
  %220 = vmatprep.subr.mxu0 %v107
  %221 = vmatpush1.msra.mxu0 %v106
  %222 = vmatprep.subr.mxu0 %v111
  %223 = vmatpush1.msra.mxu0 %v110
  %224 = vmatprep.subr.mxu0 %v115
  %225 = vmatpush1.msra.mxu0 %v114
  %226 = vmatprep.subr.mxu0 %v119
  %227 = vmatpush1.msra.mxu0 %v118
  %228 = vmatprep.subr.mxu0 %v123
  %229 = vmatpush1.msra.mxu0 %v122
  %230 = vmatprep.subr.mxu0 0.0
  %231 = vmatpush1.msra.mxu0 0.0
  %232 = vmatprep.subr.mxu0 0.0
  %233 = vmatpush1.msra.mxu0 0.0
  %234 = vmatprep.subr.mxu0 0.0
  %235 = vmatpush1.msra.mxu0 0.0
  %236 = vmatprep.subr.mxu0 0.0
  %237 = vmatpush1.msra.mxu0 0.0
  %238 = vmatprep.subr.mxu0 0.0
  %239 = vmatpush1.msra.mxu0 0.0
  %240 = vmatprep.subr.mxu0 0.0
  %241 = vmatpush1.msra.mxu0 0.0
  %242 = vmatprep.subr.mxu0 0.0
  %243 = vmatpush1.msra.mxu0 0.0
  %244 = vmatprep.subr.mxu0 0.0
  %245 = vmatpush1.msra.mxu0 0.0
  %246 = vmatprep.subr.mxu0 0.0
  %247 = vmatpush1.msra.mxu0 0.0
  %248 = vmatprep.subr.mxu0 0.0
  %249 = vmatpush1.msra.mxu0 0.0
  %250 = vmatprep.subr.mxu0 0.0
  %251 = vmatpush1.msra.mxu0 0.0
  %252 = vmatprep.subr.mxu0 0.0
  %253 = vmatpush1.msra.mxu0 0.0
  %254 = vmatprep.subr.mxu0 0.0
  %255 = vmatpush1.msra.mxu0 0.0
  %256 = vmatprep.subr.mxu0 0.0
  %257 = vmatpush1.msra.mxu0 0.0
  %258 = vmatprep.subr.mxu0 0.0
  %259 = vmatpush1.msra.mxu0 0.0
  %260 = vmatprep.subr.mxu0 0.0
  %261 = vmatpush1.msra.mxu0 0.0
  %262 = vmatprep.mubr.f32.mxu0 0.0
  %263 = vmatmul.mubr.f32.gmra.mrb[0].mxu0 %v190
  %v264 = vpop.f32.mrb[0].mxu0
  %v265 = vadd.f32 0.0, %v264
  %v266 = vpop.f32.mrb[0].mxu0
  %v267 = vadd.f32 0.0, %v266
  %268 = vdwg.mxu0
  %269 = vmatprep.subr.mxu0 %v65
  %270 = vmatpush1.msra.mxu0 %v64
  %271 = vmatprep.subr.mxu0 %v69
  %272 = vmatpush1.msra.mxu0 %v68
  %273 = vmatprep.subr.mxu0 %v73
  %274 = vmatpush1.msra.mxu0 %v72
  %275 = vmatprep.subr.mxu0 %v77
  %276 = vmatpush1.msra.mxu0 %v76
  %277 = vmatprep.subr.mxu0 %v81
  %278 = vmatpush1.msra.mxu0 %v80
  %279 = vmatprep.subr.mxu0 %v85
  %280 = vmatpush1.msra.mxu0 %v84
  %281 = vmatprep.subr.mxu0 %v89
  %282 = vmatpush1.msra.mxu0 %v88
  %283 = vmatprep.subr.mxu0 %v93
  %284 = vmatpush1.msra.mxu0 %v92
  %285 = vmatprep.subr.mxu0 %v97
  %286 = vmatpush1.msra.mxu0 %v96
  %287 = vmatprep.subr.mxu0 %v101
  %288 = vmatpush1.msra.mxu0 %v100
  %289 = vmatprep.subr.mxu0 %v105
  %290 = vmatpush1.msra.mxu0 %v104
  %291 = vmatprep.subr.mxu0 %v109
  %292 = vmatpush1.msra.mxu0 %v108
  %293 = vmatprep.subr.mxu0 %v113
  %294 = vmatpush1.msra.mxu0 %v112
  %295 = vmatprep.subr.mxu0 %v117
  %296 = vmatpush1.msra.mxu0 %v116
  %297 = vmatprep.subr.mxu0 %v121
  %298 = vmatpush1.msra.mxu0 %v120
  %299 = vmatprep.subr.mxu0 %v125
  %300 = vmatpush1.msra.mxu0 %v124
  %301 = vmatprep.subr.mxu0 0.0
  %302 = vmatpush1.msra.mxu0 0.0
  %303 = vmatprep.subr.mxu0 0.0
  %304 = vmatpush1.msra.mxu0 0.0
  %305 = vmatprep.subr.mxu0 0.0
  %306 = vmatpush1.msra.mxu0 0.0
  %307 = vmatprep.subr.mxu0 0.0
  %308 = vmatpush1.msra.mxu0 0.0
  %309 = vmatprep.subr.mxu0 0.0
  %310 = vmatpush1.msra.mxu0 0.0
  %311 = vmatprep.subr.mxu0 0.0
  %312 = vmatpush1.msra.mxu0 0.0
  %313 = vmatprep.subr.mxu0 0.0
  %314 = vmatpush1.msra.mxu0 0.0
  %315 = vmatprep.subr.mxu0 0.0
  %316 = vmatpush1.msra.mxu0 0.0
  %317 = vmatprep.subr.mxu0 0.0
  %318 = vmatpush1.msra.mxu0 0.0
  %319 = vmatprep.subr.mxu0 0.0
  %320 = vmatpush1.msra.mxu0 0.0
  %321 = vmatprep.subr.mxu0 0.0
  %322 = vmatpush1.msra.mxu0 0.0
  %323 = vmatprep.subr.mxu0 0.0
  %324 = vmatpush1.msra.mxu0 0.0
  %325 = vmatprep.subr.mxu0 0.0
  %326 = vmatpush1.msra.mxu0 0.0
  %327 = vmatprep.subr.mxu0 0.0
  %328 = vmatpush1.msra.mxu0 0.0
  %329 = vmatprep.subr.mxu0 0.0
  %330 = vmatpush1.msra.mxu0 0.0
  %331 = vmatprep.subr.mxu0 0.0
  %332 = vmatpush1.msra.mxu0 0.0
  %333 = vmatprep.mubr.f32.mxu0 0.0
  %334 = vmatmul.mubr.f32.gmra.mrb[0].mxu0 %v190
  %v335 = vpop.f32.mrb[0].mxu0
  %v336 = vadd.f32 0.0, %v335
  %v337 = vpop.f32.mrb[0].mxu0
  %v338 = vadd.f32 0.0, %v337
  %339 = vdwg.mxu0
  %v340 = vadd.f32 %v194, %v265
  %v341 = vadd.f32 %v195, %v267
  %v342 = vadd.f32 %v196, %v336
  %v343 = vadd.f32 %v197, %v338
  %s344 = scalar_lea.vmem %s51, 224
  %v345 = vld [vmem:[%s344] sm:$0xff]
  %v346 = vld [vmem:[%s344 + $0x8] sm:$0xff]
  %v347 = vld [vmem:[%s344 + $0x10] sm:$0xff]
  %v348 = vld [vmem:[%s344 + $0x18] sm:$0xff]
  %349 = vmatprep.subr.mxu0 %v127
  %350 = vmatpush1.msra.mxu0 %v126
  %351 = vmatprep.subr.mxu0 %v131
  %352 = vmatpush1.msra.mxu0 %v130
  %353 = vmatprep.subr.mxu0 %v135
  %354 = vmatpush1.msra.mxu0 %v134
  %355 = vmatprep.subr.mxu0 %v139
  %356 = vmatpush1.msra.mxu0 %v138
  %357 = vmatprep.subr.mxu0 %v143
  %358 = vmatpush1.msra.mxu0 %v142
  %359 = vmatprep.subr.mxu0 %v147
  %360 = vmatpush1.msra.mxu0 %v146
  %361 = vmatprep.subr.mxu0 %v151
  %362 = vmatpush1.msra.mxu0 %v150
  %363 = vmatprep.subr.mxu0 %v155
  %364 = vmatpush1.msra.mxu0 %v154
  %365 = vmatprep.subr.mxu0 %v159
  %366 = vmatpush1.msra.mxu0 %v158
  %367 = vmatprep.subr.mxu0 %v163
  %368 = vmatpush1.msra.mxu0 %v162
  %369 = vmatprep.subr.mxu0 %v167
  %370 = vmatpush1.msra.mxu0 %v166
  %371 = vmatprep.subr.mxu0 %v171
  %372 = vmatpush1.msra.mxu0 %v170
  %373 = vmatprep.subr.mxu0 %v175
  %374 = vmatpush1.msra.mxu0 %v174
  %375 = vmatprep.subr.mxu0 %v179
  %376 = vmatpush1.msra.mxu0 %v178
  %377 = vmatprep.subr.mxu0 %v183
  %378 = vmatpush1.msra.mxu0 %v182
  %379 = vmatprep.subr.mxu0 %v187
  %380 = vmatpush1.msra.mxu0 %v186
  %381 = vmatprep.subr.mxu0 0.0
  %382 = vmatpush1.msra.mxu0 0.0
  %383 = vmatprep.subr.mxu0 0.0
  %384 = vmatpush1.msra.mxu0 0.0
  %385 = vmatprep.subr.mxu0 0.0
  %386 = vmatpush1.msra.mxu0 0.0
  %387 = vmatprep.subr.mxu0 0.0
  %388 = vmatpush1.msra.mxu0 0.0
  %389 = vmatprep.subr.mxu0 0.0
  %390 = vmatpush1.msra.mxu0 0.0
  %391 = vmatprep.subr.mxu0 0.0
  %392 = vmatpush1.msra.mxu0 0.0
  %393 = vmatprep.subr.mxu0 0.0
  %394 = vmatpush1.msra.mxu0 0.0
  %395 = vmatprep.subr.mxu0 0.0
  %396 = vmatpush1.msra.mxu0 0.0
  %397 = vmatprep.subr.mxu0 0.0
  %398 = vmatpush1.msra.mxu0 0.0
  %399 = vmatprep.subr.mxu0 0.0
  %400 = vmatpush1.msra.mxu0 0.0
  %401 = vmatprep.subr.mxu0 0.0
  %402 = vmatpush1.msra.mxu0 0.0
  %403 = vmatprep.subr.mxu0 0.0
  %404 = vmatpush1.msra.mxu0 0.0
  %405 = vmatprep.subr.mxu0 0.0
  %406 = vmatpush1.msra.mxu0 0.0
  %407 = vmatprep.subr.mxu0 0.0
  %408 = vmatpush1.msra.mxu0 0.0
  %409 = vmatprep.subr.mxu0 0.0
  %410 = vmatpush1.msra.mxu0 0.0
  %411 = vmatprep.subr.mxu0 0.0
  %412 = vmatpush1.msra.mxu0 0.0
  %413 = vmatprep.mubr.f32.mxu0 0.0
  %414 = vmatmul.mubr.f32.gmra.mrb[0].mxu0 %v192
  %v415 = vpop.f32.mrb[0].mxu0
  %v416 = vadd.f32 0.0, %v415
  %v417 = vpop.f32.mrb[0].mxu0
  %v418 = vadd.f32 0.0, %v417
  %419 = vdwg.mxu0
  %420 = vmatprep.subr.mxu0 %v129
  %421 = vmatpush1.msra.mxu0 %v128
  %422 = vmatprep.subr.mxu0 %v133
  %423 = vmatpush1.msra.mxu0 %v132
  %424 = vmatprep.subr.mxu0 %v137
  %425 = vmatpush1.msra.mxu0 %v136
  %426 = vmatprep.subr.mxu0 %v141
  %427 = vmatpush1.msra.mxu0 %v140
  %428 = vmatprep.subr.mxu0 %v145
  %429 = vmatpush1.msra.mxu0 %v144
  %430 = vmatprep.subr.mxu0 %v149
  %431 = vmatpush1.msra.mxu0 %v148
  %432 = vmatprep.subr.mxu0 %v153
  %433 = vmatpush1.msra.mxu0 %v152
  %434 = vmatprep.subr.mxu0 %v157
  %435 = vmatpush1.msra.mxu0 %v156
  %436 = vmatprep.subr.mxu0 %v161
  %437 = vmatpush1.msra.mxu0 %v160
  %438 = vmatprep.subr.mxu0 %v165
  %439 = vmatpush1.msra.mxu0 %v164
  %440 = vmatprep.subr.mxu0 %v169
  %441 = vmatpush1.msra.mxu0 %v168
  %442 = vmatprep.subr.mxu0 %v173
  %443 = vmatpush1.msra.mxu0 %v172
  %444 = vmatprep.subr.mxu0 %v177
  %445 = vmatpush1.msra.mxu0 %v176
  %446 = vmatprep.subr.mxu0 %v181
  %447 = vmatpush1.msra.mxu0 %v180
  %448 = vmatprep.subr.mxu0 %v185
  %449 = vmatpush1.msra.mxu0 %v184
  %450 = vmatprep.subr.mxu0 %v189
  %451 = vmatpush1.msra.mxu0 %v188
  %452 = vmatprep.subr.mxu0 0.0
  %453 = vmatpush1.msra.mxu0 0.0
  %454 = vmatprep.subr.mxu0 0.0
  %455 = vmatpush1.msra.mxu0 0.0
  %456 = vmatprep.subr.mxu0 0.0
  %457 = vmatpush1.msra.mxu0 0.0
  %458 = vmatprep.subr.mxu0 0.0
  %459 = vmatpush1.msra.mxu0 0.0
  %460 = vmatprep.subr.mxu0 0.0
  %461 = vmatpush1.msra.mxu0 0.0
  %462 = vmatprep.subr.mxu0 0.0
  %463 = vmatpush1.msra.mxu0 0.0
  %464 = vmatprep.subr.mxu0 0.0
  %465 = vmatpush1.msra.mxu0 0.0
  %466 = vmatprep.subr.mxu0 0.0
  %467 = vmatpush1.msra.mxu0 0.0
  %468 = vmatprep.subr.mxu0 0.0
  %469 = vmatpush1.msra.mxu0 0.0
  %470 = vmatprep.subr.mxu0 0.0
  %471 = vmatpush1.msra.mxu0 0.0
  %472 = vmatprep.subr.mxu0 0.0
  %473 = vmatpush1.msra.mxu0 0.0
  %474 = vmatprep.subr.mxu0 0.0
  %475 = vmatpush1.msra.mxu0 0.0
  %476 = vmatprep.subr.mxu0 0.0
  %477 = vmatpush1.msra.mxu0 0.0
  %478 = vmatprep.subr.mxu0 0.0
  %479 = vmatpush1.msra.mxu0 0.0
  %480 = vmatprep.subr.mxu0 0.0
  %481 = vmatpush1.msra.mxu0 0.0
  %482 = vmatprep.subr.mxu0 0.0
  %483 = vmatpush1.msra.mxu0 0.0
  %484 = vmatprep.mubr.f32.mxu0 0.0
  %485 = vmatmul.mubr.f32.gmra.mrb[0].mxu0 %v192
  %v486 = vpop.f32.mrb[0].mxu0
  %v487 = vadd.f32 0.0, %v486
  %v488 = vpop.f32.mrb[0].mxu0
  %v489 = vadd.f32 0.0, %v488
  %490 = vdwg.mxu0
  %v491 = vadd.f32 %v345, %v416
  %v492 = vadd.f32 %v346, %v418
  %v493 = vadd.f32 %v347, %v487
  %v494 = vadd.f32 %v348, %v489
  %v495 = vxor.u32 %v340, 2147483648
  %v496 = vmul.f32 %v495, 1.442695
  %v497 = vpow.pop %v496
  %v498 = vadd.f32 %v497, 1.0
  %v499 = vrcp.pop %v498
  %v500 = vmul.f32 1.0, %v499
  %v501 = vxor.u32 %v341, 2147483648
  %v502 = vmul.f32 %v501, 1.442695
  %v503 = vpow.pop %v502
  %v504 = vadd.f32 %v503, 1.0
  %v505 = vrcp.pop %v504
  %v506 = vmul.f32 1.0, %v505
  %v507 = vtanh.pop %v342
  %v508 = vxor.u32 %v343, 2147483648
  %v509 = vmul.f32 %v508, 1.442695
  %v510 = vpow.pop %v509
  %v511 = vadd.f32 %v510, 1.0
  %v512 = vrcp.pop %v511
  %v513 = vmul.f32 1.0, %v512
  %v514 = vmul.f32 %v506, %v191
  %v515 = vmul.f32 %v500, %v507
  %v516 = vadd.f32 %v514, %v515
  %v517 = vtanh.pop %v516
  %v518 = vmul.f32 %v513, %v517
  %v519 = vxor.u32 %v491, 2147483648
  %v520 = vmul.f32 %v519, 1.442695
  %v521 = vpow.pop %v520
  %v522 = vadd.f32 %v521, 1.0
  %v523 = vrcp.pop %v522
  %v524 = vmul.f32 1.0, %v523
  %v525 = vxor.u32 %v492, 2147483648
  %v526 = vmul.f32 %v525, 1.442695
  %v527 = vpow.pop %v526
  %v528 = vadd.f32 %v527, 1.0
  %v529 = vrcp.pop %v528
  %v530 = vmul.f32 1.0, %v529
  %v531 = vtanh.pop %v493
  %v532 = vxor.u32 %v494, 2147483648
  %v533 = vmul.f32 %v532, 1.442695
  %v534 = vpow.pop %v533
  %v535 = vadd.f32 %v534, 1.0
  %v536 = vrcp.pop %v535
  %v537 = vmul.f32 1.0, %v536
  %v538 = vmul.f32 %v530, %v193
  %v539 = vmul.f32 %v524, %v531
  %v540 = vadd.f32 %v538, %v539
  %v541 = vtanh.pop %v540
  %v542 = vmul.f32 %v537, %v541
  %s543 = scalar_lea.vmem %s0, 32
  %v544 = vld [vmem:[%s543] sm:$0xff]
  %v545 = vld [vmem:[%s543 + $0x8] sm:$0xff]
  %v546 = vld [vmem:[%s543 + $0x10] sm:$0xff]
  %v547 = vld [vmem:[%s543 + $0x18] sm:$0xff]
  %548 = vmatprep.subr.mxu0 %v63
  %549 = vmatpush1.msra.mxu0 %v62
  %550 = vmatprep.subr.mxu0 %v67
  %551 = vmatpush1.msra.mxu0 %v66
  %552 = vmatprep.subr.mxu0 %v71
  %553 = vmatpush1.msra.mxu0 %v70
  %554 = vmatprep.subr.mxu0 %v75
  %555 = vmatpush1.msra.mxu0 %v74
  %556 = vmatprep.subr.mxu0 %v79
  %557 = vmatpush1.msra.mxu0 %v78
  %558 = vmatprep.subr.mxu0 %v83
  %559 = vmatpush1.msra.mxu0 %v82
  %560 = vmatprep.subr.mxu0 %v87
  %561 = vmatpush1.msra.mxu0 %v86
  %562 = vmatprep.subr.mxu0 %v91
  %563 = vmatpush1.msra.mxu0 %v90
  %564 = vmatprep.subr.mxu0 %v95
  %565 = vmatpush1.msra.mxu0 %v94
  %566 = vmatprep.subr.mxu0 %v99
  %567 = vmatpush1.msra.mxu0 %v98
  %568 = vmatprep.subr.mxu0 %v103
  %569 = vmatpush1.msra.mxu0 %v102
  %570 = vmatprep.subr.mxu0 %v107
  %571 = vmatpush1.msra.mxu0 %v106
  %572 = vmatprep.subr.mxu0 %v111
  %573 = vmatpush1.msra.mxu0 %v110
  %574 = vmatprep.subr.mxu0 %v115
  %575 = vmatpush1.msra.mxu0 %v114
  %576 = vmatprep.subr.mxu0 %v119
  %577 = vmatpush1.msra.mxu0 %v118
  %578 = vmatprep.subr.mxu0 %v123
  %579 = vmatpush1.msra.mxu0 %v122
  %580 = vmatprep.subr.mxu0 0.0
  %581 = vmatpush1.msra.mxu0 0.0
  %582 = vmatprep.subr.mxu0 0.0
  %583 = vmatpush1.msra.mxu0 0.0
  %584 = vmatprep.subr.mxu0 0.0
  %585 = vmatpush1.msra.mxu0 0.0
  %586 = vmatprep.subr.mxu0 0.0
  %587 = vmatpush1.msra.mxu0 0.0
  %588 = vmatprep.subr.mxu0 0.0
  %589 = vmatpush1.msra.mxu0 0.0
  %590 = vmatprep.subr.mxu0 0.0
  %591 = vmatpush1.msra.mxu0 0.0
  %592 = vmatprep.subr.mxu0 0.0
  %593 = vmatpush1.msra.mxu0 0.0
  %594 = vmatprep.subr.mxu0 0.0
  %595 = vmatpush1.msra.mxu0 0.0
  %596 = vmatprep.subr.mxu0 0.0
  %597 = vmatpush1.msra.mxu0 0.0
  %598 = vmatprep.subr.mxu0 0.0
  %599 = vmatpush1.msra.mxu0 0.0
  %600 = vmatprep.subr.mxu0 0.0
  %601 = vmatpush1.msra.mxu0 0.0
  %602 = vmatprep.subr.mxu0 0.0
  %603 = vmatpush1.msra.mxu0 0.0
  %604 = vmatprep.subr.mxu0 0.0
  %605 = vmatpush1.msra.mxu0 0.0
  %606 = vmatprep.subr.mxu0 0.0
  %607 = vmatpush1.msra.mxu0 0.0
  %608 = vmatprep.subr.mxu0 0.0
  %609 = vmatpush1.msra.mxu0 0.0
  %610 = vmatprep.subr.mxu0 0.0
  %611 = vmatpush1.msra.mxu0 0.0
  %612 = vmatprep.mubr.f32.mxu0 0.0
  %613 = vmatmul.mubr.f32.gmra.mrb[0].mxu0 %v518
  %v614 = vpop.f32.mrb[0].mxu0
  %v615 = vadd.f32 0.0, %v614
  %v616 = vpop.f32.mrb[0].mxu0
  %v617 = vadd.f32 0.0, %v616
  %618 = vdwg.mxu0
  %619 = vmatprep.subr.mxu0 %v65
  %620 = vmatpush1.msra.mxu0 %v64
  %621 = vmatprep.subr.mxu0 %v69
  %622 = vmatpush1.msra.mxu0 %v68
  %623 = vmatprep.subr.mxu0 %v73
  %624 = vmatpush1.msra.mxu0 %v72
  %625 = vmatprep.subr.mxu0 %v77
  %626 = vmatpush1.msra.mxu0 %v76
  %627 = vmatprep.subr.mxu0 %v81
  %628 = vmatpush1.msra.mxu0 %v80
  %629 = vmatprep.subr.mxu0 %v85
  %630 = vmatpush1.msra.mxu0 %v84
  %631 = vmatprep.subr.mxu0 %v89
  %632 = vmatpush1.msra.mxu0 %v88
  %633 = vmatprep.subr.mxu0 %v93
  %634 = vmatpush1.msra.mxu0 %v92
  %635 = vmatprep.subr.mxu0 %v97
  %636 = vmatpush1.msra.mxu0 %v96
  %637 = vmatprep.subr.mxu0 %v101
  %638 = vmatpush1.msra.mxu0 %v100
  %639 = vmatprep.subr.mxu0 %v105
  %640 = vmatpush1.msra.mxu0 %v104
  %641 = vmatprep.subr.mxu0 %v109
  %642 = vmatpush1.msra.mxu0 %v108
  %643 = vmatprep.subr.mxu0 %v113
  %644 = vmatpush1.msra.mxu0 %v112
  %645 = vmatprep.subr.mxu0 %v117
  %646 = vmatpush1.msra.mxu0 %v116
  %647 = vmatprep.subr.mxu0 %v121
  %648 = vmatpush1.msra.mxu0 %v120
  %649 = vmatprep.subr.mxu0 %v125
  %650 = vmatpush1.msra.mxu0 %v124
  %651 = vmatprep.subr.mxu0 0.0
  %652 = vmatpush1.msra.mxu0 0.0
  %653 = vmatprep.subr.mxu0 0.0
  %654 = vmatpush1.msra.mxu0 0.0
  %655 = vmatprep.subr.mxu0 0.0
  %656 = vmatpush1.msra.mxu0 0.0
  %657 = vmatprep.subr.mxu0 0.0
  %658 = vmatpush1.msra.mxu0 0.0
  %659 = vmatprep.subr.mxu0 0.0
  %660 = vmatpush1.msra.mxu0 0.0
  %661 = vmatprep.subr.mxu0 0.0
  %662 = vmatpush1.msra.mxu0 0.0
  %663 = vmatprep.subr.mxu0 0.0
  %664 = vmatpush1.msra.mxu0 0.0
  %665 = vmatprep.subr.mxu0 0.0
  %666 = vmatpush1.msra.mxu0 0.0
  %667 = vmatprep.subr.mxu0 0.0
  %668 = vmatpush1.msra.mxu0 0.0
  %669 = vmatprep.subr.mxu0 0.0
  %670 = vmatpush1.msra.mxu0 0.0
  %671 = vmatprep.subr.mxu0 0.0
  %672 = vmatpush1.msra.mxu0 0.0
  %673 = vmatprep.subr.mxu0 0.0
  %674 = vmatpush1.msra.mxu0 0.0
  %675 = vmatprep.subr.mxu0 0.0
  %676 = vmatpush1.msra.mxu0 0.0
  %677 = vmatprep.subr.mxu0 0.0
  %678 = vmatpush1.msra.mxu0 0.0
  %679 = vmatprep.subr.mxu0 0.0
  %680 = vmatpush1.msra.mxu0 0.0
  %681 = vmatprep.subr.mxu0 0.0
  %682 = vmatpush1.msra.mxu0 0.0
  %683 = vmatprep.mubr.f32.mxu0 0.0
  %684 = vmatmul.mubr.f32.gmra.mrb[0].mxu0 %v518
  %v685 = vpop.f32.mrb[0].mxu0
  %v686 = vadd.f32 0.0, %v685
  %v687 = vpop.f32.mrb[0].mxu0
  %v688 = vadd.f32 0.0, %v687
  %689 = vdwg.mxu0
  %v690 = vadd.f32 %v544, %v615
  %v691 = vadd.f32 %v545, %v617
  %v692 = vadd.f32 %v546, %v686
  %v693 = vadd.f32 %v547, %v688
  %s694 = scalar_lea.vmem %s51, 192
  %v695 = vld [vmem:[%s694] sm:$0xff]
  %v696 = vld [vmem:[%s694 + $0x8] sm:$0xff]
  %v697 = vld [vmem:[%s694 + $0x10] sm:$0xff]
  %v698 = vld [vmem:[%s694 + $0x18] sm:$0xff]
  %699 = vmatprep.subr.mxu0 %v127
  %700 = vmatpush1.msra.mxu0 %v126
  %701 = vmatprep.subr.mxu0 %v131
  %702 = vmatpush1.msra.mxu0 %v130
  %703 = vmatprep.subr.mxu0 %v135
  %704 = vmatpush1.msra.mxu0 %v134
  %705 = vmatprep.subr.mxu0 %v139
  %706 = vmatpush1.msra.mxu0 %v138
  %707 = vmatprep.subr.mxu0 %v143
  %708 = vmatpush1.msra.mxu0 %v142
  %709 = vmatprep.subr.mxu0 %v147
  %710 = vmatpush1.msra.mxu0 %v146
  %711 = vmatprep.subr.mxu0 %v151
  %712 = vmatpush1.msra.mxu0 %v150
  %713 = vmatprep.subr.mxu0 %v155
  %714 = vmatpush1.msra.mxu0 %v154
  %715 = vmatprep.subr.mxu0 %v159
  %716 = vmatpush1.msra.mxu0 %v158
  %717 = vmatprep.subr.mxu0 %v163
  %718 = vmatpush1.msra.mxu0 %v162
  %719 = vmatprep.subr.mxu0 %v167
  %720 = vmatpush1.msra.mxu0 %v166
  %721 = vmatprep.subr.mxu0 %v171
  %722 = vmatpush1.msra.mxu0 %v170
  %723 = vmatprep.subr.mxu0 %v175
  %724 = vmatpush1.msra.mxu0 %v174
  %725 = vmatprep.subr.mxu0 %v179
  %726 = vmatpush1.msra.mxu0 %v178
  %727 = vmatprep.subr.mxu0 %v183
  %728 = vmatpush1.msra.mxu0 %v182
  %729 = vmatprep.subr.mxu0 %v187
  %730 = vmatpush1.msra.mxu0 %v186
  %731 = vmatprep.subr.mxu0 0.0
  %732 = vmatpush1.msra.mxu0 0.0
  %733 = vmatprep.subr.mxu0 0.0
  %734 = vmatpush1.msra.mxu0 0.0
  %735 = vmatprep.subr.mxu0 0.0
  %736 = vmatpush1.msra.mxu0 0.0
  %737 = vmatprep.subr.mxu0 0.0
  %738 = vmatpush1.msra.mxu0 0.0
  %739 = vmatprep.subr.mxu0 0.0
  %740 = vmatpush1.msra.mxu0 0.0
  %741 = vmatprep.subr.mxu0 0.0
  %742 = vmatpush1.msra.mxu0 0.0
  %743 = vmatprep.subr.mxu0 0.0
  %744 = vmatpush1.msra.mxu0 0.0
  %745 = vmatprep.subr.mxu0 0.0
  %746 = vmatpush1.msra.mxu0 0.0
  %747 = vmatprep.subr.mxu0 0.0
  %748 = vmatpush1.msra.mxu0 0.0
  %749 = vmatprep.subr.mxu0 0.0
  %750 = vmatpush1.msra.mxu0 0.0
  %751 = vmatprep.subr.mxu0 0.0
  %752 = vmatpush1.msra.mxu0 0.0
  %753 = vmatprep.subr.mxu0 0.0
  %754 = vmatpush1.msra.mxu0 0.0
  %755 = vmatprep.subr.mxu0 0.0
  %756 = vmatpush1.msra.mxu0 0.0
  %757 = vmatprep.subr.mxu0 0.0
  %758 = vmatpush1.msra.mxu0 0.0
  %759 = vmatprep.subr.mxu0 0.0
  %760 = vmatpush1.msra.mxu0 0.0
  %761 = vmatprep.subr.mxu0 0.0
  %762 = vmatpush1.msra.mxu0 0.0
  %763 = vmatprep.mubr.f32.mxu0 0.0
  %764 = vmatmul.mubr.f32.gmra.mrb[0].mxu0 %v542
  %v765 = vpop.f32.mrb[0].mxu0
  %v766 = vadd.f32 0.0, %v765
  %v767 = vpop.f32.mrb[0].mxu0
  %v768 = vadd.f32 0.0, %v767
  %769 = vdwg.mxu0
  %770 = vmatprep.subr.mxu0 %v129
  %771 = vmatpush1.msra.mxu0 %v128
  %772 = vmatprep.subr.mxu0 %v133
  %773 = vmatpush1.msra.mxu0 %v132
  %774 = vmatprep.subr.mxu0 %v137
  %775 = vmatpush1.msra.mxu0 %v136
  %776 = vmatprep.subr.mxu0 %v141
  %777 = vmatpush1.msra.mxu0 %v140
  %778 = vmatprep.subr.mxu0 %v145
  %779 = vmatpush1.msra.mxu0 %v144
  %780 = vmatprep.subr.mxu0 %v149
  %781 = vmatpush1.msra.mxu0 %v148
  %782 = vmatprep.subr.mxu0 %v153
  %783 = vmatpush1.msra.mxu0 %v152
  %784 = vmatprep.subr.mxu0 %v157
  %785 = vmatpush1.msra.mxu0 %v156
  %786 = vmatprep.subr.mxu0 %v161
  %787 = vmatpush1.msra.mxu0 %v160
  %788 = vmatprep.subr.mxu0 %v165
  %789 = vmatpush1.msra.mxu0 %v164
  %790 = vmatprep.subr.mxu0 %v169
  %791 = vmatpush1.msra.mxu0 %v168
  %792 = vmatprep.subr.mxu0 %v173
  %793 = vmatpush1.msra.mxu0 %v172
  %794 = vmatprep.subr.mxu0 %v177
  %795 = vmatpush1.msra.mxu0 %v176
  %796 = vmatprep.subr.mxu0 %v181
  %797 = vmatpush1.msra.mxu0 %v180
  %798 = vmatprep.subr.mxu0 %v185
  %799 = vmatpush1.msra.mxu0 %v184
  %800 = vmatprep.subr.mxu0 %v189
  %801 = vmatpush1.msra.mxu0 %v188
  %802 = vmatprep.subr.mxu0 0.0
  %803 = vmatpush1.msra.mxu0 0.0
  %804 = vmatprep.subr.mxu0 0.0
  %805 = vmatpush1.msra.mxu0 0.0
  %806 = vmatprep.subr.mxu0 0.0
  %807 = vmatpush1.msra.mxu0 0.0
  %808 = vmatprep.subr.mxu0 0.0
  %809 = vmatpush1.msra.mxu0 0.0
  %810 = vmatprep.subr.mxu0 0.0
  %811 = vmatpush1.msra.mxu0 0.0
  %812 = vmatprep.subr.mxu0 0.0
  %813 = vmatpush1.msra.mxu0 0.0
  %814 = vmatprep.subr.mxu0 0.0
  %815 = vmatpush1.msra.mxu0 0.0
  %816 = vmatprep.subr.mxu0 0.0
  %817 = vmatpush1.msra.mxu0 0.0
  %818 = vmatprep.subr.mxu0 0.0
  %819 = vmatpush1.msra.mxu0 0.0
  %820 = vmatprep.subr.mxu0 0.0
  %821 = vmatpush1.msra.mxu0 0.0
  %822 = vmatprep.subr.mxu0 0.0
  %823 = vmatpush1.msra.mxu0 0.0
  %824 = vmatprep.subr.mxu0 0.0
  %825 = vmatpush1.msra.mxu0 0.0
  %826 = vmatprep.subr.mxu0 0.0
  %827 = vmatpush1.msra.mxu0 0.0
  %828 = vmatprep.subr.mxu0 0.0
  %829 = vmatpush1.msra.mxu0 0.0
  %830 = vmatprep.subr.mxu0 0.0
  %831 = vmatpush1.msra.mxu0 0.0
  %832 = vmatprep.subr.mxu0 0.0
  %833 = vmatpush1.msra.mxu0 0.0
  %834 = vmatprep.mubr.f32.mxu0 0.0
  %835 = vmatmul.mubr.f32.gmra.mrb[0].mxu0 %v542
  %v836 = vpop.f32.mrb[0].mxu0
  %v837 = vadd.f32 0.0, %v836
  %v838 = vpop.f32.mrb[0].mxu0
  %v839 = vadd.f32 0.0, %v838
  %840 = vdwg.mxu0
  %v841 = vadd.f32 %v695, %v766
  %v842 = vadd.f32 %v696, %v768
  %v843 = vadd.f32 %v697, %v837
  %v844 = vadd.f32 %v698, %v839
  %v845 = vxor.u32 %v690, 2147483648
  %v846 = vmul.f32 %v845, 1.442695
  %v847 = vpow.pop %v846
  %v848 = vadd.f32 %v847, 1.0
  %v849 = vrcp.pop %v848
  %v850 = vmul.f32 1.0, %v849
  %v851 = vxor.u32 %v691, 2147483648
  %v852 = vmul.f32 %v851, 1.442695
  %v853 = vpow.pop %v852
  %v854 = vadd.f32 %v853, 1.0
  %v855 = vrcp.pop %v854
  %v856 = vmul.f32 1.0, %v855
  %v857 = vtanh.pop %v692
  %v858 = vxor.u32 %v693, 2147483648
  %v859 = vmul.f32 %v858, 1.442695
  %v860 = vpow.pop %v859
  %v861 = vadd.f32 %v860, 1.0
  %v862 = vrcp.pop %v861
  %v863 = vmul.f32 1.0, %v862
  %v864 = vmul.f32 %v856, %v516
  %v865 = vmul.f32 %v850, %v857
  %v866 = vadd.f32 %v864, %v865
  %v867 = vtanh.pop %v866
  %v868 = vmul.f32 %v863, %v867
  %v869 = vxor.u32 %v841, 2147483648
  %v870 = vmul.f32 %v869, 1.442695
  %v871 = vpow.pop %v870
  %v872 = vadd.f32 %v871, 1.0
  %v873 = vrcp.pop %v872
  %v874 = vmul.f32 1.0, %v873
  %v875 = vxor.u32 %v842, 2147483648
  %v876 = vmul.f32 %v875, 1.442695
  %v877 = vpow.pop %v876
  %v878 = vadd.f32 %v877, 1.0
  %v879 = vrcp.pop %v878
  %v880 = vmul.f32 1.0, %v879
  %v881 = vtanh.pop %v843
  %v882 = vxor.u32 %v844, 2147483648
  %v883 = vmul.f32 %v882, 1.442695
  %v884 = vpow.pop %v883
  %v885 = vadd.f32 %v884, 1.0
  %v886 = vrcp.pop %v885
  %v887 = vmul.f32 1.0, %v886
  %v888 = vmul.f32 %v880, %v540
  %v889 = vmul.f32 %v874, %v881
  %v890 = vadd.f32 %v888, %v889
  %v891 = vtanh.pop %v890
  %v892 = vmul.f32 %v887, %v891
  %s893 = scalar_lea.vmem %s0, 64
  %v894 = vld [vmem:[%s893] sm:$0xff]
  %v895 = vld [vmem:[%s893 + $0x8] sm:$0xff]
  %v896 = vld [vmem:[%s893 + $0x10] sm:$0xff]
  %v897 = vld [vmem:[%s893 + $0x18] sm:$0xff]
  %898 = vmatprep.subr.mxu0 %v63
  %899 = vmatpush1.msra.mxu0 %v62
  %900 = vmatprep.subr.mxu0 %v67
  %901 = vmatpush1.msra.mxu0 %v66
  %902 = vmatprep.subr.mxu0 %v71
  %903 = vmatpush1.msra.mxu0 %v70
  %904 = vmatprep.subr.mxu0 %v75
  %905 = vmatpush1.msra.mxu0 %v74
  %906 = vmatprep.subr.mxu0 %v79
  %907 = vmatpush1.msra.mxu0 %v78
  %908 = vmatprep.subr.mxu0 %v83
  %909 = vmatpush1.msra.mxu0 %v82
  %910 = vmatprep.subr.mxu0 %v87
  %911 = vmatpush1.msra.mxu0 %v86
  %912 = vmatprep.subr.mxu0 %v91
  %913 = vmatpush1.msra.mxu0 %v90
  %914 = vmatprep.subr.mxu0 %v95
  %915 = vmatpush1.msra.mxu0 %v94
  %916 = vmatprep.subr.mxu0 %v99
  %917 = vmatpush1.msra.mxu0 %v98
  %918 = vmatprep.subr.mxu0 %v103
  %919 = vmatpush1.msra.mxu0 %v102
  %920 = vmatprep.subr.mxu0 %v107
  %921 = vmatpush1.msra.mxu0 %v106
  %922 = vmatprep.subr.mxu0 %v111
  %923 = vmatpush1.msra.mxu0 %v110
  %924 = vmatprep.subr.mxu0 %v115
  %925 = vmatpush1.msra.mxu0 %v114
  %926 = vmatprep.subr.mxu0 %v119
  %927 = vmatpush1.msra.mxu0 %v118
  %928 = vmatprep.subr.mxu0 %v123
  %929 = vmatpush1.msra.mxu0 %v122
  %930 = vmatprep.subr.mxu0 0.0
  %931 = vmatpush1.msra.mxu0 0.0
  %932 = vmatprep.subr.mxu0 0.0
  %933 = vmatpush1.msra.mxu0 0.0
  %934 = vmatprep.subr.mxu0 0.0
  %935 = vmatpush1.msra.mxu0 0.0
  %936 = vmatprep.subr.mxu0 0.0
  %937 = vmatpush1.msra.mxu0 0.0
  %938 = vmatprep.subr.mxu0 0.0
  %939 = vmatpush1.msra.mxu0 0.0
  %940 = vmatprep.subr.mxu0 0.0
  %941 = vmatpush1.msra.mxu0 0.0
  %942 = vmatprep.subr.mxu0 0.0
  %943 = vmatpush1.msra.mxu0 0.0
  %944 = vmatprep.subr.mxu0 0.0
  %945 = vmatpush1.msra.mxu0 0.0
  %946 = vmatprep.subr.mxu0 0.0
  %947 = vmatpush1.msra.mxu0 0.0
  %948 = vmatprep.subr.mxu0 0.0
  %949 = vmatpush1.msra.mxu0 0.0
  %950 = vmatprep.subr.mxu0 0.0
  %951 = vmatpush1.msra.mxu0 0.0
  %952 = vmatprep.subr.mxu0 0.0
  %953 = vmatpush1.msra.mxu0 0.0
  %954 = vmatprep.subr.mxu0 0.0
  %955 = vmatpush1.msra.mxu0 0.0
  %956 = vmatprep.subr.mxu0 0.0
  %957 = vmatpush1.msra.mxu0 0.0
  %958 = vmatprep.subr.mxu0 0.0
  %959 = vmatpush1.msra.mxu0 0.0
  %960 = vmatprep.subr.mxu0 0.0
  %961 = vmatpush1.msra.mxu0 0.0
  %962 = vmatprep.mubr.f32.mxu0 0.0
  %963 = vmatmul.mubr.f32.gmra.mrb[0].mxu0 %v868
  %v964 = vpop.f32.mrb[0].mxu0
  %v965 = vadd.f32 0.0, %v964
  %v966 = vpop.f32.mrb[0].mxu0
  %v967 = vadd.f32 0.0, %v966
  %968 = vdwg.mxu0
  %969 = vmatprep.subr.mxu0 %v65
  %970 = vmatpush1.msra.mxu0 %v64
  %971 = vmatprep.subr.mxu0 %v69
  %972 = vmatpush1.msra.mxu0 %v68
  %973 = vmatprep.subr.mxu0 %v73
  %974 = vmatpush1.msra.mxu0 %v72
  %975 = vmatprep.subr.mxu0 %v77
  %976 = vmatpush1.msra.mxu0 %v76
  %977 = vmatprep.subr.mxu0 %v81
  %978 = vmatpush1.msra.mxu0 %v80
  %979 = vmatprep.subr.mxu0 %v85
  %980 = vmatpush1.msra.mxu0 %v84
  %981 = vmatprep.subr.mxu0 %v89
  %982 = vmatpush1.msra.mxu0 %v88
  %983 = vmatprep.subr.mxu0 %v93
  %984 = vmatpush1.msra.mxu0 %v92
  %985 = vmatprep.subr.mxu0 %v97
  %986 = vmatpush1.msra.mxu0 %v96
  %987 = vmatprep.subr.mxu0 %v101
  %988 = vmatpush1.msra.mxu0 %v100
  %989 = vmatprep.subr.mxu0 %v105
  %990 = vmatpush1.msra.mxu0 %v104
  %991 = vmatprep.subr.mxu0 %v109
  %992 = vmatpush1.msra.mxu0 %v108
  %993 = vmatprep.subr.mxu0 %v113
  %994 = vmatpush1.msra.mxu0 %v112
  %995 = vmatprep.subr.mxu0 %v117
  %996 = vmatpush1.msra.mxu0 %v116
  %997 = vmatprep.subr.mxu0 %v121
  %998 = vmatpush1.msra.mxu0 %v120
  %999 = vmatprep.subr.mxu0 %v125
  %1000 = vmatpush1.msra.mxu0 %v124
  %1001 = vmatprep.subr.mxu0 0.0
  %1002 = vmatpush1.msra.mxu0 0.0
  %1003 = vmatprep.subr.mxu0 0.0
  %1004 = vmatpush1.msra.mxu0 0.0
  %1005 = vmatprep.subr.mxu0 0.0
  %1006 = vmatpush1.msra.mxu0 0.0
  %1007 = vmatprep.subr.mxu0 0.0
  %1008 = vmatpush1.msra.mxu0 0.0
  %1009 = vmatprep.subr.mxu0 0.0
  %1010 = vmatpush1.msra.mxu0 0.0
  %1011 = vmatprep.subr.mxu0 0.0
  %1012 = vmatpush1.msra.mxu0 0.0
  %1013 = vmatprep.subr.mxu0 0.0
  %1014 = vmatpush1.msra.mxu0 0.0
  %1015 = vmatprep.subr.mxu0 0.0
  %1016 = vmatpush1.msra.mxu0 0.0
  %1017 = vmatprep.subr.mxu0 0.0
  %1018 = vmatpush1.msra.mxu0 0.0
  %1019 = vmatprep.subr.mxu0 0.0
  %1020 = vmatpush1.msra.mxu0 0.0
  %1021 = vmatprep.subr.mxu0 0.0
  %1022 = vmatpush1.msra.mxu0 0.0
  %1023 = vmatprep.subr.mxu0 0.0
  %1024 = vmatpush1.msra.mxu0 0.0
  %1025 = vmatprep.subr.mxu0 0.0
  %1026 = vmatpush1.msra.mxu0 0.0
  %1027 = vmatprep.subr.mxu0 0.0
  %1028 = vmatpush1.msra.mxu0 0.0
  %1029 = vmatprep.subr.mxu0 0.0
  %1030 = vmatpush1.msra.mxu0 0.0
  %1031 = vmatprep.subr.mxu0 0.0
  %1032 = vmatpush1.msra.mxu0 0.0
  %1033 = vmatprep.mubr.f32.mxu0 0.0
  %1034 = vmatmul.mubr.f32.gmra.mrb[0].mxu0 %v868
  %v1035 = vpop.f32.mrb[0].mxu0
  %v1036 = vadd.f32 0.0, %v1035
  %v1037 = vpop.f32.mrb[0].mxu0
  %v1038 = vadd.f32 0.0, %v1037
  %1039 = vdwg.mxu0
  %v1040 = vadd.f32 %v894, %v965
  %v1041 = vadd.f32 %v895, %v967
  %v1042 = vadd.f32 %v896, %v1036
  %v1043 = vadd.f32 %v897, %v1038
  %s1044 = scalar_lea.vmem %s51, 160
  %v1045 = vld [vmem:[%s1044] sm:$0xff]
  %v1046 = vld [vmem:[%s1044 + $0x8] sm:$0xff]
  %v1047 = vld [vmem:[%s1044 + $0x10] sm:$0xff]
  %v1048 = vld [vmem:[%s1044 + $0x18] sm:$0xff]
  %1049 = vmatprep.subr.mxu0 %v127
  %1050 = vmatpush1.msra.mxu0 %v126
  %1051 = vmatprep.subr.mxu0 %v131
  %1052 = vmatpush1.msra.mxu0 %v130
  %1053 = vmatprep.subr.mxu0 %v135
  %1054 = vmatpush1.msra.mxu0 %v134
  %1055 = vmatprep.subr.mxu0 %v139
  %1056 = vmatpush1.msra.mxu0 %v138
  %1057 = vmatprep.subr.mxu0 %v143
  %1058 = vmatpush1.msra.mxu0 %v142
  %1059 = vmatprep.subr.mxu0 %v147
  %1060 = vmatpush1.msra.mxu0 %v146
  %1061 = vmatprep.subr.mxu0 %v151
  %1062 = vmatpush1.msra.mxu0 %v150
  %1063 = vmatprep.subr.mxu0 %v155
  %1064 = vmatpush1.msra.mxu0 %v154
  %1065 = vmatprep.subr.mxu0 %v159
  %1066 = vmatpush1.msra.mxu0 %v158
  %1067 = vmatprep.subr.mxu0 %v163
  %1068 = vmatpush1.msra.mxu0 %v162
  %1069 = vmatprep.subr.mxu0 %v167
  %1070 = vmatpush1.msra.mxu0 %v166
  %1071 = vmatprep.subr.mxu0 %v171
  %1072 = vmatpush1.msra.mxu0 %v170
  %1073 = vmatprep.subr.mxu0 %v175
  %1074 = vmatpush1.msra.mxu0 %v174
  %1075 = vmatprep.subr.mxu0 %v179
  %1076 = vmatpush1.msra.mxu0 %v178
  %1077 = vmatprep.subr.mxu0 %v183
  %1078 = vmatpush1.msra.mxu0 %v182
  %1079 = vmatprep.subr.mxu0 %v187
  %1080 = vmatpush1.msra.mxu0 %v186
  %1081 = vmatprep.subr.mxu0 0.0
  %1082 = vmatpush1.msra.mxu0 0.0
  %1083 = vmatprep.subr.mxu0 0.0
  %1084 = vmatpush1.msra.mxu0 0.0
  %1085 = vmatprep.subr.mxu0 0.0
  %1086 = vmatpush1.msra.mxu0 0.0
  %1087 = vmatprep.subr.mxu0 0.0
  %1088 = vmatpush1.msra.mxu0 0.0
  %1089 = vmatprep.subr.mxu0 0.0
  %1090 = vmatpush1.msra.mxu0 0.0
  %1091 = vmatprep.subr.mxu0 0.0
  %1092 = vmatpush1.msra.mxu0 0.0
  %1093 = vmatprep.subr.mxu0 0.0
  %1094 = vmatpush1.msra.mxu0 0.0
  %1095 = vmatprep.subr.mxu0 0.0
  %1096 = vmatpush1.msra.mxu0 0.0
  %1097 = vmatprep.subr.mxu0 0.0
  %1098 = vmatpush1.msra.mxu0 0.0
  %1099 = vmatprep.subr.mxu0 0.0
  %1100 = vmatpush1.msra.mxu0 0.0
  %1101 = vmatprep.subr.mxu0 0.0
  %1102 = vmatpush1.msra.mxu0 0.0
  %1103 = vmatprep.subr.mxu0 0.0
  %1104 = vmatpush1.msra.mxu0 0.0
  %1105 = vmatprep.subr.mxu0 0.0
  %1106 = vmatpush1.msra.mxu0 0.0
  %1107 = vmatprep.subr.mxu0 0.0
  %1108 = vmatpush1.msra.mxu0 0.0
  %1109 = vmatprep.subr.mxu0 0.0
  %1110 = vmatpush1.msra.mxu0 0.0
  %1111 = vmatprep.subr.mxu0 0.0
  %1112 = vmatpush1.msra.mxu0 0.0
  %1113 = vmatprep.mubr.f32.mxu0 0.0
  %1114 = vmatmul.mubr.f32.gmra.mrb[0].mxu0 %v892
  %v1115 = vpop.f32.mrb[0].mxu0
  %v1116 = vadd.f32 0.0, %v1115
  %v1117 = vpop.f32.mrb[0].mxu0
  %v1118 = vadd.f32 0.0, %v1117
  %1119 = vdwg.mxu0
  %1120 = vmatprep.subr.mxu0 %v129
  %1121 = vmatpush1.msra.mxu0 %v128
  %1122 = vmatprep.subr.mxu0 %v133
  %1123 = vmatpush1.msra.mxu0 %v132
  %1124 = vmatprep.subr.mxu0 %v137
  %1125 = vmatpush1.msra.mxu0 %v136
  %1126 = vmatprep.subr.mxu0 %v141
  %1127 = vmatpush1.msra.mxu0 %v140
  %1128 = vmatprep.subr.mxu0 %v145
  %1129 = vmatpush1.msra.mxu0 %v144
  %1130 = vmatprep.subr.mxu0 %v149
  %1131 = vmatpush1.msra.mxu0 %v148
  %1132 = vmatprep.subr.mxu0 %v153
  %1133 = vmatpush1.msra.mxu0 %v152
  %1134 = vmatprep.subr.mxu0 %v157
  %1135 = vmatpush1.msra.mxu0 %v156
  %1136 = vmatprep.subr.mxu0 %v161
  %1137 = vmatpush1.msra.mxu0 %v160
  %1138 = vmatprep.subr.mxu0 %v165
  %1139 = vmatpush1.msra.mxu0 %v164
  %1140 = vmatprep.subr.mxu0 %v169
  %1141 = vmatpush1.msra.mxu0 %v168
  %1142 = vmatprep.subr.mxu0 %v173
  %1143 = vmatpush1.msra.mxu0 %v172
  %1144 = vmatprep.subr.mxu0 %v177
  %1145 = vmatpush1.msra.mxu0 %v176
  %1146 = vmatprep.subr.mxu0 %v181
  %1147 = vmatpush1.msra.mxu0 %v180
  %1148 = vmatprep.subr.mxu0 %v185
  %1149 = vmatpush1.msra.mxu0 %v184
  %1150 = vmatprep.subr.mxu0 %v189
  %1151 = vmatpush1.msra.mxu0 %v188
  %1152 = vmatprep.subr.mxu0 0.0
  %1153 = vmatpush1.msra.mxu0 0.0
  %1154 = vmatprep.subr.mxu0 0.0
  %1155 = vmatpush1.msra.mxu0 0.0
  %1156 = vmatprep.subr.mxu0 0.0
  %1157 = vmatpush1.msra.mxu0 0.0
  %1158 = vmatprep.subr.mxu0 0.0
  %1159 = vmatpush1.msra.mxu0 0.0
  %1160 = vmatprep.subr.mxu0 0.0
  %1161 = vmatpush1.msra.mxu0 0.0
  %1162 = vmatprep.subr.mxu0 0.0
  %1163 = vmatpush1.msra.mxu0 0.0
  %1164 = vmatprep.subr.mxu0 0.0
  %1165 = vmatpush1.msra.mxu0 0.0
  %1166 = vmatprep.subr.mxu0 0.0
  %1167 = vmatpush1.msra.mxu0 0.0
  %1168 = vmatprep.subr.mxu0 0.0
  %1169 = vmatpush1.msra.mxu0 0.0
  %1170 = vmatprep.subr.mxu0 0.0
  %1171 = vmatpush1.msra.mxu0 0.0
  %1172 = vmatprep.subr.mxu0 0.0
  %1173 = vmatpush1.msra.mxu0 0.0
  %1174 = vmatprep.subr.mxu0 0.0
  %1175 = vmatpush1.msra.mxu0 0.0
  %1176 = vmatprep.subr.mxu0 0.0
  %1177 = vmatpush1.msra.mxu0 0.0
  %1178 = vmatprep.subr.mxu0 0.0
  %1179 = vmatpush1.msra.mxu0 0.0
  %1180 = vmatprep.subr.mxu0 0.0
  %1181 = vmatpush1.msra.mxu0 0.0
  %1182 = vmatprep.subr.mxu0 0.0
  %1183 = vmatpush1.msra.mxu0 0.0
  %1184 = vmatprep.mubr.f32.mxu0 0.0
  %1185 = vmatmul.mubr.f32.gmra.mrb[0].mxu0 %v892
  %v1186 = vpop.f32.mrb[0].mxu0
  %v1187 = vadd.f32 0.0, %v1186
  %v1188 = vpop.f32.mrb[0].mxu0
  %v1189 = vadd.f32 0.0, %v1188
  %1190 = vdwg.mxu0
  %v1191 = vadd.f32 %v1045, %v1116
  %v1192 = vadd.f32 %v1046, %v1118
  %v1193 = vadd.f32 %v1047, %v1187
  %v1194 = vadd.f32 %v1048, %v1189
  %v1195 = vxor.u32 %v1040, 2147483648
  %v1196 = vmul.f32 %v1195, 1.442695
  %v1197 = vpow.pop %v1196
  %v1198 = vadd.f32 %v1197, 1.0
  %v1199 = vrcp.pop %v1198
  %v1200 = vmul.f32 1.0, %v1199
  %v1201 = vxor.u32 %v1041, 2147483648
  %v1202 = vmul.f32 %v1201, 1.442695
  %v1203 = vpow.pop %v1202
  %v1204 = vadd.f32 %v1203, 1.0
  %v1205 = vrcp.pop %v1204
  %v1206 = vmul.f32 1.0, %v1205
  %v1207 = vtanh.pop %v1042
  %v1208 = vxor.u32 %v1043, 2147483648
  %v1209 = vmul.f32 %v1208, 1.442695
  %v1210 = vpow.pop %v1209
  %v1211 = vadd.f32 %v1210, 1.0
  %v1212 = vrcp.pop %v1211
  %v1213 = vmul.f32 1.0, %v1212
  %v1214 = vmul.f32 %v1206, %v866
  %v1215 = vmul.f32 %v1200, %v1207
  %v1216 = vadd.f32 %v1214, %v1215
  %v1217 = vtanh.pop %v1216
  %v1218 = vmul.f32 %v1213, %v1217
  %v1219 = vxor.u32 %v1191, 2147483648
  %v1220 = vmul.f32 %v1219, 1.442695
  %v1221 = vpow.pop %v1220
  %v1222 = vadd.f32 %v1221, 1.0
  %v1223 = vrcp.pop %v1222
  %v1224 = vmul.f32 1.0, %v1223
  %v1225 = vxor.u32 %v1192, 2147483648
  %v1226 = vmul.f32 %v1225, 1.442695
  %v1227 = vpow.pop %v1226
  %v1228 = vadd.f32 %v1227, 1.0
  %v1229 = vrcp.pop %v1228
  %v1230 = vmul.f32 1.0, %v1229
  %v1231 = vtanh.pop %v1193
  %v1232 = vxor.u32 %v1194, 2147483648
  %v1233 = vmul.f32 %v1232, 1.442695
  %v1234 = vpow.pop %v1233
  %v1235 = vadd.f32 %v1234, 1.0
  %v1236 = vrcp.pop %v1235
  %v1237 = vmul.f32 1.0, %v1236
  %v1238 = vmul.f32 %v1230, %v890
  %v1239 = vmul.f32 %v1224, %v1231
  %v1240 = vadd.f32 %v1238, %v1239
  %v1241 = vtanh.pop %v1240
  %v1242 = vmul.f32 %v1237, %v1241
  %s1243 = scalar_lea.vmem %s0, 96
  %v1244 = vld [vmem:[%s1243] sm:$0xff]
  %v1245 = vld [vmem:[%s1243 + $0x8] sm:$0xff]
  %v1246 = vld [vmem:[%s1243 + $0x10] sm:$0xff]
  %v1247 = vld [vmem:[%s1243 + $0x18] sm:$0xff]
  %1248 = vmatprep.subr.mxu0 %v63
  %1249 = vmatpush1.msra.mxu0 %v62
  %1250 = vmatprep.subr.mxu0 %v67
  %1251 = vmatpush1.msra.mxu0 %v66
  %1252 = vmatprep.subr.mxu0 %v71
  %1253 = vmatpush1.msra.mxu0 %v70
  %1254 = vmatprep.subr.mxu0 %v75
  %1255 = vmatpush1.msra.mxu0 %v74
  %1256 = vmatprep.subr.mxu0 %v79
  %1257 = vmatpush1.msra.mxu0 %v78
  %1258 = vmatprep.subr.mxu0 %v83
  %1259 = vmatpush1.msra.mxu0 %v82
  %1260 = vmatprep.subr.mxu0 %v87
  %1261 = vmatpush1.msra.mxu0 %v86
  %1262 = vmatprep.subr.mxu0 %v91
  %1263 = vmatpush1.msra.mxu0 %v90
  %1264 = vmatprep.subr.mxu0 %v95
  %1265 = vmatpush1.msra.mxu0 %v94
  %1266 = vmatprep.subr.mxu0 %v99
  %1267 = vmatpush1.msra.mxu0 %v98
  %1268 = vmatprep.subr.mxu0 %v103
  %1269 = vmatpush1.msra.mxu0 %v102
  %1270 = vmatprep.subr.mxu0 %v107
  %1271 = vmatpush1.msra.mxu0 %v106
  %1272 = vmatprep.subr.mxu0 %v111
  %1273 = vmatpush1.msra.mxu0 %v110
  %1274 = vmatprep.subr.mxu0 %v115
  %1275 = vmatpush1.msra.mxu0 %v114
  %1276 = vmatprep.subr.mxu0 %v119
  %1277 = vmatpush1.msra.mxu0 %v118
  %1278 = vmatprep.subr.mxu0 %v123
  %1279 = vmatpush1.msra.mxu0 %v122
  %1280 = vmatprep.subr.mxu0 0.0
  %1281 = vmatpush1.msra.mxu0 0.0
  %1282 = vmatprep.subr.mxu0 0.0
  %1283 = vmatpush1.msra.mxu0 0.0
  %1284 = vmatprep.subr.mxu0 0.0
  %1285 = vmatpush1.msra.mxu0 0.0
  %1286 = vmatprep.subr.mxu0 0.0
  %1287 = vmatpush1.msra.mxu0 0.0
  %1288 = vmatprep.subr.mxu0 0.0
  %1289 = vmatpush1.msra.mxu0 0.0
  %1290 = vmatprep.subr.mxu0 0.0
  %1291 = vmatpush1.msra.mxu0 0.0
  %1292 = vmatprep.subr.mxu0 0.0
  %1293 = vmatpush1.msra.mxu0 0.0
  %1294 = vmatprep.subr.mxu0 0.0
  %1295 = vmatpush1.msra.mxu0 0.0
  %1296 = vmatprep.subr.mxu0 0.0
  %1297 = vmatpush1.msra.mxu0 0.0
  %1298 = vmatprep.subr.mxu0 0.0
  %1299 = vmatpush1.msra.mxu0 0.0
  %1300 = vmatprep.subr.mxu0 0.0
  %1301 = vmatpush1.msra.mxu0 0.0
  %1302 = vmatprep.subr.mxu0 0.0
  %1303 = vmatpush1.msra.mxu0 0.0
  %1304 = vmatprep.subr.mxu0 0.0
  %1305 = vmatpush1.msra.mxu0 0.0
  %1306 = vmatprep.subr.mxu0 0.0
  %1307 = vmatpush1.msra.mxu0 0.0
  %1308 = vmatprep.subr.mxu0 0.0
  %1309 = vmatpush1.msra.mxu0 0.0
  %1310 = vmatprep.subr.mxu0 0.0
  %1311 = vmatpush1.msra.mxu0 0.0
  %1312 = vmatprep.mubr.f32.mxu0 0.0
  %1313 = vmatmul.mubr.f32.gmra.mrb[0].mxu0 %v1218
  %v1314 = vpop.f32.mrb[0].mxu0
  %v1315 = vadd.f32 0.0, %v1314
  %v1316 = vpop.f32.mrb[0].mxu0
  %v1317 = vadd.f32 0.0, %v1316
  %1318 = vdwg.mxu0
  %1319 = vmatprep.subr.mxu0 %v65
  %1320 = vmatpush1.msra.mxu0 %v64
  %1321 = vmatprep.subr.mxu0 %v69
  %1322 = vmatpush1.msra.mxu0 %v68
  %1323 = vmatprep.subr.mxu0 %v73
  %1324 = vmatpush1.msra.mxu0 %v72
  %1325 = vmatprep.subr.mxu0 %v77
  %1326 = vmatpush1.msra.mxu0 %v76
  %1327 = vmatprep.subr.mxu0 %v81
  %1328 = vmatpush1.msra.mxu0 %v80
  %1329 = vmatprep.subr.mxu0 %v85
  %1330 = vmatpush1.msra.mxu0 %v84
  %1331 = vmatprep.subr.mxu0 %v89
  %1332 = vmatpush1.msra.mxu0 %v88
  %1333 = vmatprep.subr.mxu0 %v93
  %1334 = vmatpush1.msra.mxu0 %v92
  %1335 = vmatprep.subr.mxu0 %v97
  %1336 = vmatpush1.msra.mxu0 %v96
  %1337 = vmatprep.subr.mxu0 %v101
  %1338 = vmatpush1.msra.mxu0 %v100
  %1339 = vmatprep.subr.mxu0 %v105
  %1340 = vmatpush1.msra.mxu0 %v104
  %1341 = vmatprep.subr.mxu0 %v109
  %1342 = vmatpush1.msra.mxu0 %v108
  %1343 = vmatprep.subr.mxu0 %v113
  %1344 = vmatpush1.msra.mxu0 %v112
  %1345 = vmatprep.subr.mxu0 %v117
  %1346 = vmatpush1.msra.mxu0 %v116
  %1347 = vmatprep.subr.mxu0 %v121
  %1348 = vmatpush1.msra.mxu0 %v120
  %1349 = vmatprep.subr.mxu0 %v125
  %1350 = vmatpush1.msra.mxu0 %v124
  %1351 = vmatprep.subr.mxu0 0.0
  %1352 = vmatpush1.msra.mxu0 0.0
  %1353 = vmatprep.subr.mxu0 0.0
  %1354 = vmatpush1.msra.mxu0 0.0
  %1355 = vmatprep.subr.mxu0 0.0
  %1356 = vmatpush1.msra.mxu0 0.0
  %1357 = vmatprep.subr.mxu0 0.0
  %1358 = vmatpush1.msra.mxu0 0.0
  %1359 = vmatprep.subr.mxu0 0.0
  %1360 = vmatpush1.msra.mxu0 0.0
  %1361 = vmatprep.subr.mxu0 0.0
  %1362 = vmatpush1.msra.mxu0 0.0
  %1363 = vmatprep.subr.mxu0 0.0
  %1364 = vmatpush1.msra.mxu0 0.0
  %1365 = vmatprep.subr.mxu0 0.0
  %1366 = vmatpush1.msra.mxu0 0.0
  %1367 = vmatprep.subr.mxu0 0.0
  %1368 = vmatpush1.msra.mxu0 0.0
  %1369 = vmatprep.subr.mxu0 0.0
  %1370 = vmatpush1.msra.mxu0 0.0
  %1371 = vmatprep.subr.mxu0 0.0
  %1372 = vmatpush1.msra.mxu0 0.0
  %1373 = vmatprep.subr.mxu0 0.0
  %1374 = vmatpush1.msra.mxu0 0.0
  %1375 = vmatprep.subr.mxu0 0.0
  %1376 = vmatpush1.msra.mxu0 0.0
  %1377 = vmatprep.subr.mxu0 0.0
  %1378 = vmatpush1.msra.mxu0 0.0
  %1379 = vmatprep.subr.mxu0 0.0
  %1380 = vmatpush1.msra.mxu0 0.0
  %1381 = vmatprep.subr.mxu0 0.0
  %1382 = vmatpush1.msra.mxu0 0.0
  %1383 = vmatprep.mubr.f32.mxu0 0.0
  %1384 = vmatmul.mubr.f32.gmra.mrb[0].mxu0 %v1218
  %v1385 = vpop.f32.mrb[0].mxu0
  %v1386 = vadd.f32 0.0, %v1385
  %v1387 = vpop.f32.mrb[0].mxu0
  %v1388 = vadd.f32 0.0, %v1387
  %1389 = vdwg.mxu0
  %v1390 = vadd.f32 %v1244, %v1315
  %v1391 = vadd.f32 %v1245, %v1317
  %v1392 = vadd.f32 %v1246, %v1386
  %v1393 = vadd.f32 %v1247, %v1388
  %s1394 = scalar_lea.vmem %s51, 128
  %v1395 = vld [vmem:[%s1394] sm:$0xff]
  %v1396 = vld [vmem:[%s1394 + $0x8] sm:$0xff]
  %v1397 = vld [vmem:[%s1394 + $0x10] sm:$0xff]
  %v1398 = vld [vmem:[%s1394 + $0x18] sm:$0xff]
  %1399 = vmatprep.subr.mxu0 %v127
  %1400 = vmatpush1.msra.mxu0 %v126
  %1401 = vmatprep.subr.mxu0 %v131
  %1402 = vmatpush1.msra.mxu0 %v130
  %1403 = vmatprep.subr.mxu0 %v135
  %1404 = vmatpush1.msra.mxu0 %v134
  %1405 = vmatprep.subr.mxu0 %v139
  %1406 = vmatpush1.msra.mxu0 %v138
  %1407 = vmatprep.subr.mxu0 %v143
  %1408 = vmatpush1.msra.mxu0 %v142
  %1409 = vmatprep.subr.mxu0 %v147
  %1410 = vmatpush1.msra.mxu0 %v146
  %1411 = vmatprep.subr.mxu0 %v151
  %1412 = vmatpush1.msra.mxu0 %v150
  %1413 = vmatprep.subr.mxu0 %v155
  %1414 = vmatpush1.msra.mxu0 %v154
  %1415 = vmatprep.subr.mxu0 %v159
  %1416 = vmatpush1.msra.mxu0 %v158
  %1417 = vmatprep.subr.mxu0 %v163
  %1418 = vmatpush1.msra.mxu0 %v162
  %1419 = vmatprep.subr.mxu0 %v167
  %1420 = vmatpush1.msra.mxu0 %v166
  %1421 = vmatprep.subr.mxu0 %v171
  %1422 = vmatpush1.msra.mxu0 %v170
  %1423 = vmatprep.subr.mxu0 %v175
  %1424 = vmatpush1.msra.mxu0 %v174
  %1425 = vmatprep.subr.mxu0 %v179
  %1426 = vmatpush1.msra.mxu0 %v178
  %1427 = vmatprep.subr.mxu0 %v183
  %1428 = vmatpush1.msra.mxu0 %v182
  %1429 = vmatprep.subr.mxu0 %v187
  %1430 = vmatpush1.msra.mxu0 %v186
  %1431 = vmatprep.subr.mxu0 0.0
  %1432 = vmatpush1.msra.mxu0 0.0
  %1433 = vmatprep.subr.mxu0 0.0
  %1434 = vmatpush1.msra.mxu0 0.0
  %1435 = vmatprep.subr.mxu0 0.0
  %1436 = vmatpush1.msra.mxu0 0.0
  %1437 = vmatprep.subr.mxu0 0.0
  %1438 = vmatpush1.msra.mxu0 0.0
  %1439 = vmatprep.subr.mxu0 0.0
  %1440 = vmatpush1.msra.mxu0 0.0
  %1441 = vmatprep.subr.mxu0 0.0
  %1442 = vmatpush1.msra.mxu0 0.0
  %1443 = vmatprep.subr.mxu0 0.0
  %1444 = vmatpush1.msra.mxu0 0.0
  %1445 = vmatprep.subr.mxu0 0.0
  %1446 = vmatpush1.msra.mxu0 0.0
  %1447 = vmatprep.subr.mxu0 0.0
  %1448 = vmatpush1.msra.mxu0 0.0
  %1449 = vmatprep.subr.mxu0 0.0
  %1450 = vmatpush1.msra.mxu0 0.0
  %1451 = vmatprep.subr.mxu0 0.0
  %1452 = vmatpush1.msra.mxu0 0.0
  %1453 = vmatprep.subr.mxu0 0.0
  %1454 = vmatpush1.msra.mxu0 0.0
  %1455 = vmatprep.subr.mxu0 0.0
  %1456 = vmatpush1.msra.mxu0 0.0
  %1457 = vmatprep.subr.mxu0 0.0
  %1458 = vmatpush1.msra.mxu0 0.0
  %1459 = vmatprep.subr.mxu0 0.0
  %1460 = vmatpush1.msra.mxu0 0.0
  %1461 = vmatprep.subr.mxu0 0.0
  %1462 = vmatpush1.msra.mxu0 0.0
  %1463 = vmatprep.mubr.f32.mxu0 0.0
  %1464 = vmatmul.mubr.f32.gmra.mrb[0].mxu0 %v1242
  %v1465 = vpop.f32.mrb[0].mxu0
  %v1466 = vadd.f32 0.0, %v1465
  %v1467 = vpop.f32.mrb[0].mxu0
  %v1468 = vadd.f32 0.0, %v1467
  %1469 = vdwg.mxu0
  %1470 = vmatprep.subr.mxu0 %v129
  %1471 = vmatpush1.msra.mxu0 %v128
  %1472 = vmatprep.subr.mxu0 %v133
  %1473 = vmatpush1.msra.mxu0 %v132
  %1474 = vmatprep.subr.mxu0 %v137
  %1475 = vmatpush1.msra.mxu0 %v136
  %1476 = vmatprep.subr.mxu0 %v141
  %1477 = vmatpush1.msra.mxu0 %v140
  %1478 = vmatprep.subr.mxu0 %v145
  %1479 = vmatpush1.msra.mxu0 %v144
  %1480 = vmatprep.subr.mxu0 %v149
  %1481 = vmatpush1.msra.mxu0 %v148
  %1482 = vmatprep.subr.mxu0 %v153
  %1483 = vmatpush1.msra.mxu0 %v152
  %1484 = vmatprep.subr.mxu0 %v157
  %1485 = vmatpush1.msra.mxu0 %v156
  %1486 = vmatprep.subr.mxu0 %v161
  %1487 = vmatpush1.msra.mxu0 %v160
  %1488 = vmatprep.subr.mxu0 %v165
  %1489 = vmatpush1.msra.mxu0 %v164
  %1490 = vmatprep.subr.mxu0 %v169
  %1491 = vmatpush1.msra.mxu0 %v168
  %1492 = vmatprep.subr.mxu0 %v173
  %1493 = vmatpush1.msra.mxu0 %v172
  %1494 = vmatprep.subr.mxu0 %v177
  %1495 = vmatpush1.msra.mxu0 %v176
  %1496 = vmatprep.subr.mxu0 %v181
  %1497 = vmatpush1.msra.mxu0 %v180
  %1498 = vmatprep.subr.mxu0 %v185
  %1499 = vmatpush1.msra.mxu0 %v184
  %1500 = vmatprep.subr.mxu0 %v189
  %1501 = vmatpush1.msra.mxu0 %v188
  %1502 = vmatprep.subr.mxu0 0.0
  %1503 = vmatpush1.msra.mxu0 0.0
  %1504 = vmatprep.subr.mxu0 0.0
  %1505 = vmatpush1.msra.mxu0 0.0
  %1506 = vmatprep.subr.mxu0 0.0
  %1507 = vmatpush1.msra.mxu0 0.0
  %1508 = vmatprep.subr.mxu0 0.0
  %1509 = vmatpush1.msra.mxu0 0.0
  %1510 = vmatprep.subr.mxu0 0.0
  %1511 = vmatpush1.msra.mxu0 0.0
  %1512 = vmatprep.subr.mxu0 0.0
  %1513 = vmatpush1.msra.mxu0 0.0
  %1514 = vmatprep.subr.mxu0 0.0
  %1515 = vmatpush1.msra.mxu0 0.0
  %1516 = vmatprep.subr.mxu0 0.0
  %1517 = vmatpush1.msra.mxu0 0.0
  %1518 = vmatprep.subr.mxu0 0.0
  %1519 = vmatpush1.msra.mxu0 0.0
  %1520 = vmatprep.subr.mxu0 0.0
  %1521 = vmatpush1.msra.mxu0 0.0
  %1522 = vmatprep.subr.mxu0 0.0
  %1523 = vmatpush1.msra.mxu0 0.0
  %1524 = vmatprep.subr.mxu0 0.0
  %1525 = vmatpush1.msra.mxu0 0.0
  %1526 = vmatprep.subr.mxu0 0.0
  %1527 = vmatpush1.msra.mxu0 0.0
  %1528 = vmatprep.subr.mxu0 0.0
  %1529 = vmatpush1.msra.mxu0 0.0
  %1530 = vmatprep.subr.mxu0 0.0
  %1531 = vmatpush1.msra.mxu0 0.0
  %1532 = vmatprep.subr.mxu0 0.0
  %1533 = vmatpush1.msra.mxu0 0.0
  %1534 = vmatprep.mubr.f32.mxu0 0.0
  %1535 = vmatmul.mubr.f32.gmra.mrb[0].mxu0 %v1242
  %v1536 = vpop.f32.mrb[0].mxu0
  %v1537 = vadd.f32 0.0, %v1536
  %v1538 = vpop.f32.mrb[0].mxu0
  %v1539 = vadd.f32 0.0, %v1538
  %1540 = vdwg.mxu0
  %v1541 = vadd.f32 %v1395, %v1466
  %v1542 = vadd.f32 %v1396, %v1468
  %v1543 = vadd.f32 %v1397, %v1537
  %v1544 = vadd.f32 %v1398, %v1539
  %v1545 = vxor.u32 %v1390, 2147483648
  %v1546 = vmul.f32 %v1545, 1.442695
  %v1547 = vpow.pop %v1546
  %v1548 = vadd.f32 %v1547, 1.0
  %v1549 = vrcp.pop %v1548
  %v1550 = vmul.f32 1.0, %v1549
  %v1551 = vxor.u32 %v1391, 2147483648
  %v1552 = vmul.f32 %v1551, 1.442695
  %v1553 = vpow.pop %v1552
  %v1554 = vadd.f32 %v1553, 1.0
  %v1555 = vrcp.pop %v1554
  %v1556 = vmul.f32 1.0, %v1555
  %v1557 = vtanh.pop %v1392
  %v1558 = vxor.u32 %v1393, 2147483648
  %v1559 = vmul.f32 %v1558, 1.442695
  %v1560 = vpow.pop %v1559
  %v1561 = vadd.f32 %v1560, 1.0
  %v1562 = vrcp.pop %v1561
  %v1563 = vmul.f32 1.0, %v1562
  %v1564 = vmul.f32 %v1556, %v1216
  %v1565 = vmul.f32 %v1550, %v1557
  %v1566 = vadd.f32 %v1564, %v1565
  %v1567 = vtanh.pop %v1566
  %v1568 = vmul.f32 %v1563, %v1567
  %v1569 = vxor.u32 %v1541, 2147483648
  %v1570 = vmul.f32 %v1569, 1.442695
  %v1571 = vpow.pop %v1570
  %v1572 = vadd.f32 %v1571, 1.0
  %v1573 = vrcp.pop %v1572
  %v1574 = vmul.f32 1.0, %v1573
  %v1575 = vxor.u32 %v1542, 2147483648
  %v1576 = vmul.f32 %v1575, 1.442695
  %v1577 = vpow.pop %v1576
  %v1578 = vadd.f32 %v1577, 1.0
  %v1579 = vrcp.pop %v1578
  %v1580 = vmul.f32 1.0, %v1579
  %v1581 = vtanh.pop %v1543
  %v1582 = vxor.u32 %v1544, 2147483648
  %v1583 = vmul.f32 %v1582, 1.442695
  %v1584 = vpow.pop %v1583
  %v1585 = vadd.f32 %v1584, 1.0
  %v1586 = vrcp.pop %v1585
  %v1587 = vmul.f32 1.0, %v1586
  %v1588 = vmul.f32 %v1580, %v1240
  %v1589 = vmul.f32 %v1574, %v1581
  %v1590 = vadd.f32 %v1588, %v1589
  %v1591 = vtanh.pop %v1590
  %v1592 = vmul.f32 %v1587, %v1591
  %s1593 = scalar_lea.vmem %s0, 128
  %v1594 = vld [vmem:[%s1593] sm:$0xff]
  %v1595 = vld [vmem:[%s1593 + $0x8] sm:$0xff]
  %v1596 = vld [vmem:[%s1593 + $0x10] sm:$0xff]
  %v1597 = vld [vmem:[%s1593 + $0x18] sm:$0xff]
  %1598 = vmatprep.subr.mxu0 %v63
  %1599 = vmatpush1.msra.mxu0 %v62
  %1600 = vmatprep.subr.mxu0 %v67
  %1601 = vmatpush1.msra.mxu0 %v66
  %1602 = vmatprep.subr.mxu0 %v71
  %1603 = vmatpush1.msra.mxu0 %v70
  %1604 = vmatprep.subr.mxu0 %v75
  %1605 = vmatpush1.msra.mxu0 %v74
  %1606 = vmatprep.subr.mxu0 %v79
  %1607 = vmatpush1.msra.mxu0 %v78
  %1608 = vmatprep.subr.mxu0 %v83
  %1609 = vmatpush1.msra.mxu0 %v82
  %1610 = vmatprep.subr.mxu0 %v87
  %1611 = vmatpush1.msra.mxu0 %v86
  %1612 = vmatprep.subr.mxu0 %v91
  %1613 = vmatpush1.msra.mxu0 %v90
  %1614 = vmatprep.subr.mxu0 %v95
  %1615 = vmatpush1.msra.mxu0 %v94
  %1616 = vmatprep.subr.mxu0 %v99
  %1617 = vmatpush1.msra.mxu0 %v98
  %1618 = vmatprep.subr.mxu0 %v103
  %1619 = vmatpush1.msra.mxu0 %v102
  %1620 = vmatprep.subr.mxu0 %v107
  %1621 = vmatpush1.msra.mxu0 %v106
  %1622 = vmatprep.subr.mxu0 %v111
  %1623 = vmatpush1.msra.mxu0 %v110
  %1624 = vmatprep.subr.mxu0 %v115
  %1625 = vmatpush1.msra.mxu0 %v114
  %1626 = vmatprep.subr.mxu0 %v119
  %1627 = vmatpush1.msra.mxu0 %v118
  %1628 = vmatprep.subr.mxu0 %v123
  %1629 = vmatpush1.msra.mxu0 %v122
  %1630 = vmatprep.subr.mxu0 0.0
  %1631 = vmatpush1.msra.mxu0 0.0
  %1632 = vmatprep.subr.mxu0 0.0
  %1633 = vmatpush1.msra.mxu0 0.0
  %1634 = vmatprep.subr.mxu0 0.0
  %1635 = vmatpush1.msra.mxu0 0.0
  %1636 = vmatprep.subr.mxu0 0.0
  %1637 = vmatpush1.msra.mxu0 0.0
  %1638 = vmatprep.subr.mxu0 0.0
  %1639 = vmatpush1.msra.mxu0 0.0
  %1640 = vmatprep.subr.mxu0 0.0
  %1641 = vmatpush1.msra.mxu0 0.0
  %1642 = vmatprep.subr.mxu0 0.0
  %1643 = vmatpush1.msra.mxu0 0.0
  %1644 = vmatprep.subr.mxu0 0.0
  %1645 = vmatpush1.msra.mxu0 0.0
  %1646 = vmatprep.subr.mxu0 0.0
  %1647 = vmatpush1.msra.mxu0 0.0
  %1648 = vmatprep.subr.mxu0 0.0
  %1649 = vmatpush1.msra.mxu0 0.0
  %1650 = vmatprep.subr.mxu0 0.0
  %1651 = vmatpush1.msra.mxu0 0.0
  %1652 = vmatprep.subr.mxu0 0.0
  %1653 = vmatpush1.msra.mxu0 0.0
  %1654 = vmatprep.subr.mxu0 0.0
  %1655 = vmatpush1.msra.mxu0 0.0
  %1656 = vmatprep.subr.mxu0 0.0
  %1657 = vmatpush1.msra.mxu0 0.0
  %1658 = vmatprep.subr.mxu0 0.0
  %1659 = vmatpush1.msra.mxu0 0.0
  %1660 = vmatprep.subr.mxu0 0.0
  %1661 = vmatpush1.msra.mxu0 0.0
  %1662 = vmatprep.mubr.f32.mxu0 0.0
  %1663 = vmatmul.mubr.f32.gmra.mrb[0].mxu0 %v1568
  %v1664 = vpop.f32.mrb[0].mxu0
  %v1665 = vadd.f32 0.0, %v1664
  %v1666 = vpop.f32.mrb[0].mxu0
  %v1667 = vadd.f32 0.0, %v1666
  %1668 = vdwg.mxu0
  %1669 = vmatprep.subr.mxu0 %v65
  %1670 = vmatpush1.msra.mxu0 %v64
  %1671 = vmatprep.subr.mxu0 %v69
  %1672 = vmatpush1.msra.mxu0 %v68
  %1673 = vmatprep.subr.mxu0 %v73
  %1674 = vmatpush1.msra.mxu0 %v72
  %1675 = vmatprep.subr.mxu0 %v77
  %1676 = vmatpush1.msra.mxu0 %v76
  %1677 = vmatprep.subr.mxu0 %v81
  %1678 = vmatpush1.msra.mxu0 %v80
  %1679 = vmatprep.subr.mxu0 %v85
  %1680 = vmatpush1.msra.mxu0 %v84
  %1681 = vmatprep.subr.mxu0 %v89
  %1682 = vmatpush1.msra.mxu0 %v88
  %1683 = vmatprep.subr.mxu0 %v93
  %1684 = vmatpush1.msra.mxu0 %v92
  %1685 = vmatprep.subr.mxu0 %v97
  %1686 = vmatpush1.msra.mxu0 %v96
  %1687 = vmatprep.subr.mxu0 %v101
  %1688 = vmatpush1.msra.mxu0 %v100
  %1689 = vmatprep.subr.mxu0 %v105
  %1690 = vmatpush1.msra.mxu0 %v104
  %1691 = vmatprep.subr.mxu0 %v109
  %1692 = vmatpush1.msra.mxu0 %v108
  %1693 = vmatprep.subr.mxu0 %v113
  %1694 = vmatpush1.msra.mxu0 %v112
  %1695 = vmatprep.subr.mxu0 %v117
  %1696 = vmatpush1.msra.mxu0 %v116
  %1697 = vmatprep.subr.mxu0 %v121
  %1698 = vmatpush1.msra.mxu0 %v120
  %1699 = vmatprep.subr.mxu0 %v125
  %1700 = vmatpush1.msra.mxu0 %v124
  %1701 = vmatprep.subr.mxu0 0.0
  %1702 = vmatpush1.msra.mxu0 0.0
  %1703 = vmatprep.subr.mxu0 0.0
  %1704 = vmatpush1.msra.mxu0 0.0
  %1705 = vmatprep.subr.mxu0 0.0
  %1706 = vmatpush1.msra.mxu0 0.0
  %1707 = vmatprep.subr.mxu0 0.0
  %1708 = vmatpush1.msra.mxu0 0.0
  %1709 = vmatprep.subr.mxu0 0.0
  %1710 = vmatpush1.msra.mxu0 0.0
  %1711 = vmatprep.subr.mxu0 0.0
  %1712 = vmatpush1.msra.mxu0 0.0
  %1713 = vmatprep.subr.mxu0 0.0
  %1714 = vmatpush1.msra.mxu0 0.0
  %1715 = vmatprep.subr.mxu0 0.0
  %1716 = vmatpush1.msra.mxu0 0.0
  %1717 = vmatprep.subr.mxu0 0.0
  %1718 = vmatpush1.msra.mxu0 0.0
  %1719 = vmatprep.subr.mxu0 0.0
  %1720 = vmatpush1.msra.mxu0 0.0
  %1721 = vmatprep.subr.mxu0 0.0
  %1722 = vmatpush1.msra.mxu0 0.0
  %1723 = vmatprep.subr.mxu0 0.0
  %1724 = vmatpush1.msra.mxu0 0.0
  %1725 = vmatprep.subr.mxu0 0.0
  %1726 = vmatpush1.msra.mxu0 0.0
  %1727 = vmatprep.subr.mxu0 0.0
  %1728 = vmatpush1.msra.mxu0 0.0
  %1729 = vmatprep.subr.mxu0 0.0
  %1730 = vmatpush1.msra.mxu0 0.0
  %1731 = vmatprep.subr.mxu0 0.0
  %1732 = vmatpush1.msra.mxu0 0.0
  %1733 = vmatprep.mubr.f32.mxu0 0.0
  %1734 = vmatmul.mubr.f32.gmra.mrb[0].mxu0 %v1568
  %v1735 = vpop.f32.mrb[0].mxu0
  %v1736 = vadd.f32 0.0, %v1735
  %v1737 = vpop.f32.mrb[0].mxu0
  %v1738 = vadd.f32 0.0, %v1737
  %1739 = vdwg.mxu0
  %v1740 = vadd.f32 %v1594, %v1665
  %v1741 = vadd.f32 %v1595, %v1667
  %v1742 = vadd.f32 %v1596, %v1736
  %v1743 = vadd.f32 %v1597, %v1738
  %s1744 = scalar_lea.vmem %s51, 96
  %v1745 = vld [vmem:[%s1744] sm:$0xff]
  %v1746 = vld [vmem:[%s1744 + $0x8] sm:$0xff]
  %v1747 = vld [vmem:[%s1744 + $0x10] sm:$0xff]
  %v1748 = vld [vmem:[%s1744 + $0x18] sm:$0xff]
  %1749 = vmatprep.subr.mxu0 %v127
  %1750 = vmatpush1.msra.mxu0 %v126
  %1751 = vmatprep.subr.mxu0 %v131
  %1752 = vmatpush1.msra.mxu0 %v130
  %1753 = vmatprep.subr.mxu0 %v135
  %1754 = vmatpush1.msra.mxu0 %v134
  %1755 = vmatprep.subr.mxu0 %v139
  %1756 = vmatpush1.msra.mxu0 %v138
  %1757 = vmatprep.subr.mxu0 %v143
  %1758 = vmatpush1.msra.mxu0 %v142
  %1759 = vmatprep.subr.mxu0 %v147
  %1760 = vmatpush1.msra.mxu0 %v146
  %1761 = vmatprep.subr.mxu0 %v151
  %1762 = vmatpush1.msra.mxu0 %v150
  %1763 = vmatprep.subr.mxu0 %v155
  %1764 = vmatpush1.msra.mxu0 %v154
  %1765 = vmatprep.subr.mxu0 %v159
  %1766 = vmatpush1.msra.mxu0 %v158
  %1767 = vmatprep.subr.mxu0 %v163
  %1768 = vmatpush1.msra.mxu0 %v162
  %1769 = vmatprep.subr.mxu0 %v167
  %1770 = vmatpush1.msra.mxu0 %v166
  %1771 = vmatprep.subr.mxu0 %v171
  %1772 = vmatpush1.msra.mxu0 %v170
  %1773 = vmatprep.subr.mxu0 %v175
  %1774 = vmatpush1.msra.mxu0 %v174
  %1775 = vmatprep.subr.mxu0 %v179
  %1776 = vmatpush1.msra.mxu0 %v178
  %1777 = vmatprep.subr.mxu0 %v183
  %1778 = vmatpush1.msra.mxu0 %v182
  %1779 = vmatprep.subr.mxu0 %v187
  %1780 = vmatpush1.msra.mxu0 %v186
  %1781 = vmatprep.subr.mxu0 0.0
  %1782 = vmatpush1.msra.mxu0 0.0
  %1783 = vmatprep.subr.mxu0 0.0
  %1784 = vmatpush1.msra.mxu0 0.0
  %1785 = vmatprep.subr.mxu0 0.0
  %1786 = vmatpush1.msra.mxu0 0.0
  %1787 = vmatprep.subr.mxu0 0.0
  %1788 = vmatpush1.msra.mxu0 0.0
  %1789 = vmatprep.subr.mxu0 0.0
  %1790 = vmatpush1.msra.mxu0 0.0
  %1791 = vmatprep.subr.mxu0 0.0
  %1792 = vmatpush1.msra.mxu0 0.0
  %1793 = vmatprep.subr.mxu0 0.0
  %1794 = vmatpush1.msra.mxu0 0.0
  %1795 = vmatprep.subr.mxu0 0.0
  %1796 = vmatpush1.msra.mxu0 0.0
  %1797 = vmatprep.subr.mxu0 0.0
  %1798 = vmatpush1.msra.mxu0 0.0
  %1799 = vmatprep.subr.mxu0 0.0
  %1800 = vmatpush1.msra.mxu0 0.0
  %1801 = vmatprep.subr.mxu0 0.0
  %1802 = vmatpush1.msra.mxu0 0.0
  %1803 = vmatprep.subr.mxu0 0.0
  %1804 = vmatpush1.msra.mxu0 0.0
  %1805 = vmatprep.subr.mxu0 0.0
  %1806 = vmatpush1.msra.mxu0 0.0
  %1807 = vmatprep.subr.mxu0 0.0
  %1808 = vmatpush1.msra.mxu0 0.0
  %1809 = vmatprep.subr.mxu0 0.0
  %1810 = vmatpush1.msra.mxu0 0.0
  %1811 = vmatprep.subr.mxu0 0.0
  %1812 = vmatpush1.msra.mxu0 0.0
  %1813 = vmatprep.mubr.f32.mxu0 0.0
  %1814 = vmatmul.mubr.f32.gmra.mrb[0].mxu0 %v1592
  %v1815 = vpop.f32.mrb[0].mxu0
  %v1816 = vadd.f32 0.0, %v1815
  %v1817 = vpop.f32.mrb[0].mxu0
  %v1818 = vadd.f32 0.0, %v1817
  %1819 = vdwg.mxu0
  %1820 = vmatprep.subr.mxu0 %v129
  %1821 = vmatpush1.msra.mxu0 %v128
  %1822 = vmatprep.subr.mxu0 %v133
  %1823 = vmatpush1.msra.mxu0 %v132
  %1824 = vmatprep.subr.mxu0 %v137
  %1825 = vmatpush1.msra.mxu0 %v136
  %1826 = vmatprep.subr.mxu0 %v141
  %1827 = vmatpush1.msra.mxu0 %v140
  %1828 = vmatprep.subr.mxu0 %v145
  %1829 = vmatpush1.msra.mxu0 %v144
  %1830 = vmatprep.subr.mxu0 %v149
  %1831 = vmatpush1.msra.mxu0 %v148
  %1832 = vmatprep.subr.mxu0 %v153
  %1833 = vmatpush1.msra.mxu0 %v152
  %1834 = vmatprep.subr.mxu0 %v157
  %1835 = vmatpush1.msra.mxu0 %v156
  %1836 = vmatprep.subr.mxu0 %v161
  %1837 = vmatpush1.msra.mxu0 %v160
  %1838 = vmatprep.subr.mxu0 %v165
  %1839 = vmatpush1.msra.mxu0 %v164
  %1840 = vmatprep.subr.mxu0 %v169
  %1841 = vmatpush1.msra.mxu0 %v168
  %1842 = vmatprep.subr.mxu0 %v173
  %1843 = vmatpush1.msra.mxu0 %v172
  %1844 = vmatprep.subr.mxu0 %v177
  %1845 = vmatpush1.msra.mxu0 %v176
  %1846 = vmatprep.subr.mxu0 %v181
  %1847 = vmatpush1.msra.mxu0 %v180
  %1848 = vmatprep.subr.mxu0 %v185
  %1849 = vmatpush1.msra.mxu0 %v184
  %1850 = vmatprep.subr.mxu0 %v189
  %1851 = vmatpush1.msra.mxu0 %v188
  %1852 = vmatprep.subr.mxu0 0.0
  %1853 = vmatpush1.msra.mxu0 0.0
  %1854 = vmatprep.subr.mxu0 0.0
  %1855 = vmatpush1.msra.mxu0 0.0
  %1856 = vmatprep.subr.mxu0 0.0
  %1857 = vmatpush1.msra.mxu0 0.0
  %1858 = vmatprep.subr.mxu0 0.0
  %1859 = vmatpush1.msra.mxu0 0.0
  %1860 = vmatprep.subr.mxu0 0.0
  %1861 = vmatpush1.msra.mxu0 0.0
  %1862 = vmatprep.subr.mxu0 0.0
  %1863 = vmatpush1.msra.mxu0 0.0
  %1864 = vmatprep.subr.mxu0 0.0
  %1865 = vmatpush1.msra.mxu0 0.0
  %1866 = vmatprep.subr.mxu0 0.0
  %1867 = vmatpush1.msra.mxu0 0.0
  %1868 = vmatprep.subr.mxu0 0.0
  %1869 = vmatpush1.msra.mxu0 0.0
  %1870 = vmatprep.subr.mxu0 0.0
  %1871 = vmatpush1.msra.mxu0 0.0
  %1872 = vmatprep.subr.mxu0 0.0
  %1873 = vmatpush1.msra.mxu0 0.0
  %1874 = vmatprep.subr.mxu0 0.0
  %1875 = vmatpush1.msra.mxu0 0.0
  %1876 = vmatprep.subr.mxu0 0.0
  %1877 = vmatpush1.msra.mxu0 0.0
  %1878 = vmatprep.subr.mxu0 0.0
  %1879 = vmatpush1.msra.mxu0 0.0
  %1880 = vmatprep.subr.mxu0 0.0
  %1881 = vmatpush1.msra.mxu0 0.0
  %1882 = vmatprep.subr.mxu0 0.0
  %1883 = vmatpush1.msra.mxu0 0.0
  %1884 = vmatprep.mubr.f32.mxu0 0.0
  %1885 = vmatmul.mubr.f32.gmra.mrb[0].mxu0 %v1592
  %v1886 = vpop.f32.mrb[0].mxu0
  %v1887 = vadd.f32 0.0, %v1886
  %v1888 = vpop.f32.mrb[0].mxu0
  %v1889 = vadd.f32 0.0, %v1888
  %1890 = vdwg.mxu0
  %v1891 = vadd.f32 %v1745, %v1816
  %v1892 = vadd.f32 %v1746, %v1818
  %v1893 = vadd.f32 %v1747, %v1887
  %v1894 = vadd.f32 %v1748, %v1889
  %v1895 = vxor.u32 %v1740, 2147483648
  %v1896 = vmul.f32 %v1895, 1.442695
  %v1897 = vpow.pop %v1896
  %v1898 = vadd.f32 %v1897, 1.0
  %v1899 = vrcp.pop %v1898
  %v1900 = vmul.f32 1.0, %v1899
  %v1901 = vxor.u32 %v1741, 2147483648
  %v1902 = vmul.f32 %v1901, 1.442695
  %v1903 = vpow.pop %v1902
  %v1904 = vadd.f32 %v1903, 1.0
  %v1905 = vrcp.pop %v1904
  %v1906 = vmul.f32 1.0, %v1905
  %v1907 = vtanh.pop %v1742
  %v1908 = vxor.u32 %v1743, 2147483648
  %v1909 = vmul.f32 %v1908, 1.442695
  %v1910 = vpow.pop %v1909
  %v1911 = vadd.f32 %v1910, 1.0
  %v1912 = vrcp.pop %v1911
  %v1913 = vmul.f32 1.0, %v1912
  %v1914 = vmul.f32 %v1906, %v1566
  %v1915 = vmul.f32 %v1900, %v1907
  %v1916 = vadd.f32 %v1914, %v1915
  %v1917 = vtanh.pop %v1916
  %v1918 = vmul.f32 %v1913, %v1917
  %v1919 = vxor.u32 %v1891, 2147483648
  %v1920 = vmul.f32 %v1919, 1.442695
  %v1921 = vpow.pop %v1920
  %v1922 = vadd.f32 %v1921, 1.0
  %v1923 = vrcp.pop %v1922
  %v1924 = vmul.f32 1.0, %v1923
  %v1925 = vxor.u32 %v1892, 2147483648
  %v1926 = vmul.f32 %v1925, 1.442695
  %v1927 = vpow.pop %v1926
  %v1928 = vadd.f32 %v1927, 1.0
  %v1929 = vrcp.pop %v1928
  %v1930 = vmul.f32 1.0, %v1929
  %v1931 = vtanh.pop %v1893
  %v1932 = vxor.u32 %v1894, 2147483648
  %v1933 = vmul.f32 %v1932, 1.442695
  %v1934 = vpow.pop %v1933
  %v1935 = vadd.f32 %v1934, 1.0
  %v1936 = vrcp.pop %v1935
  %v1937 = vmul.f32 1.0, %v1936
  %v1938 = vmul.f32 %v1930, %v1590
  %v1939 = vmul.f32 %v1924, %v1931
  %v1940 = vadd.f32 %v1938, %v1939
  %v1941 = vtanh.pop %v1940
  %v1942 = vmul.f32 %v1937, %v1941
  %s1943 = scalar_lea.vmem %s0, 160
  %v1944 = vld [vmem:[%s1943] sm:$0xff]
  %v1945 = vld [vmem:[%s1943 + $0x8] sm:$0xff]
  %v1946 = vld [vmem:[%s1943 + $0x10] sm:$0xff]
  %v1947 = vld [vmem:[%s1943 + $0x18] sm:$0xff]
  %1948 = vmatprep.subr.mxu0 %v63
  %1949 = vmatpush1.msra.mxu0 %v62
  %1950 = vmatprep.subr.mxu0 %v67
  %1951 = vmatpush1.msra.mxu0 %v66
  %1952 = vmatprep.subr.mxu0 %v71
  %1953 = vmatpush1.msra.mxu0 %v70
  %1954 = vmatprep.subr.mxu0 %v75
  %1955 = vmatpush1.msra.mxu0 %v74
  %1956 = vmatprep.subr.mxu0 %v79
  %1957 = vmatpush1.msra.mxu0 %v78
  %1958 = vmatprep.subr.mxu0 %v83
  %1959 = vmatpush1.msra.mxu0 %v82
  %1960 = vmatprep.subr.mxu0 %v87
  %1961 = vmatpush1.msra.mxu0 %v86
  %1962 = vmatprep.subr.mxu0 %v91
  %1963 = vmatpush1.msra.mxu0 %v90
  %1964 = vmatprep.subr.mxu0 %v95
  %1965 = vmatpush1.msra.mxu0 %v94
  %1966 = vmatprep.subr.mxu0 %v99
  %1967 = vmatpush1.msra.mxu0 %v98
  %1968 = vmatprep.subr.mxu0 %v103
  %1969 = vmatpush1.msra.mxu0 %v102
  %1970 = vmatprep.subr.mxu0 %v107
  %1971 = vmatpush1.msra.mxu0 %v106
  %1972 = vmatprep.subr.mxu0 %v111
  %1973 = vmatpush1.msra.mxu0 %v110
  %1974 = vmatprep.subr.mxu0 %v115
  %1975 = vmatpush1.msra.mxu0 %v114
  %1976 = vmatprep.subr.mxu0 %v119
  %1977 = vmatpush1.msra.mxu0 %v118
  %1978 = vmatprep.subr.mxu0 %v123
  %1979 = vmatpush1.msra.mxu0 %v122
  %1980 = vmatprep.subr.mxu0 0.0
  %1981 = vmatpush1.msra.mxu0 0.0
  %1982 = vmatprep.subr.mxu0 0.0
  %1983 = vmatpush1.msra.mxu0 0.0
  %1984 = vmatprep.subr.mxu0 0.0
  %1985 = vmatpush1.msra.mxu0 0.0
  %1986 = vmatprep.subr.mxu0 0.0
  %1987 = vmatpush1.msra.mxu0 0.0
  %1988 = vmatprep.subr.mxu0 0.0
  %1989 = vmatpush1.msra.mxu0 0.0
  %1990 = vmatprep.subr.mxu0 0.0
  %1991 = vmatpush1.msra.mxu0 0.0
  %1992 = vmatprep.subr.mxu0 0.0
  %1993 = vmatpush1.msra.mxu0 0.0
  %1994 = vmatprep.subr.mxu0 0.0
  %1995 = vmatpush1.msra.mxu0 0.0
  %1996 = vmatprep.subr.mxu0 0.0
  %1997 = vmatpush1.msra.mxu0 0.0
  %1998 = vmatprep.subr.mxu0 0.0
  %1999 = vmatpush1.msra.mxu0 0.0
  %2000 = vmatprep.subr.mxu0 0.0
  %2001 = vmatpush1.msra.mxu0 0.0
  %2002 = vmatprep.subr.mxu0 0.0
  %2003 = vmatpush1.msra.mxu0 0.0
  %2004 = vmatprep.subr.mxu0 0.0
  %2005 = vmatpush1.msra.mxu0 0.0
  %2006 = vmatprep.subr.mxu0 0.0
  %2007 = vmatpush1.msra.mxu0 0.0
  %2008 = vmatprep.subr.mxu0 0.0
  %2009 = vmatpush1.msra.mxu0 0.0
  %2010 = vmatprep.subr.mxu0 0.0
  %2011 = vmatpush1.msra.mxu0 0.0
  %2012 = vmatprep.mubr.f32.mxu0 0.0
  %2013 = vmatmul.mubr.f32.gmra.mrb[0].mxu0 %v1918
  %v2014 = vpop.f32.mrb[0].mxu0
  %v2015 = vadd.f32 0.0, %v2014
  %v2016 = vpop.f32.mrb[0].mxu0
  %v2017 = vadd.f32 0.0, %v2016
  %2018 = vdwg.mxu0
  %2019 = vmatprep.subr.mxu0 %v65
  %2020 = vmatpush1.msra.mxu0 %v64
  %2021 = vmatprep.subr.mxu0 %v69
  %2022 = vmatpush1.msra.mxu0 %v68
  %2023 = vmatprep.subr.mxu0 %v73
  %2024 = vmatpush1.msra.mxu0 %v72
  %2025 = vmatprep.subr.mxu0 %v77
  %2026 = vmatpush1.msra.mxu0 %v76
  %2027 = vmatprep.subr.mxu0 %v81
  %2028 = vmatpush1.msra.mxu0 %v80
  %2029 = vmatprep.subr.mxu0 %v85
  %2030 = vmatpush1.msra.mxu0 %v84
  %2031 = vmatprep.subr.mxu0 %v89
  %2032 = vmatpush1.msra.mxu0 %v88
  %2033 = vmatprep.subr.mxu0 %v93
  %2034 = vmatpush1.msra.mxu0 %v92
  %2035 = vmatprep.subr.mxu0 %v97
  %2036 = vmatpush1.msra.mxu0 %v96
  %2037 = vmatprep.subr.mxu0 %v101
  %2038 = vmatpush1.msra.mxu0 %v100
  %2039 = vmatprep.subr.mxu0 %v105
  %2040 = vmatpush1.msra.mxu0 %v104
  %2041 = vmatprep.subr.mxu0 %v109
  %2042 = vmatpush1.msra.mxu0 %v108
  %2043 = vmatprep.subr.mxu0 %v113
  %2044 = vmatpush1.msra.mxu0 %v112
  %2045 = vmatprep.subr.mxu0 %v117
  %2046 = vmatpush1.msra.mxu0 %v116
  %2047 = vmatprep.subr.mxu0 %v121
  %2048 = vmatpush1.msra.mxu0 %v120
  %2049 = vmatprep.subr.mxu0 %v125
  %2050 = vmatpush1.msra.mxu0 %v124
  %2051 = vmatprep.subr.mxu0 0.0
  %2052 = vmatpush1.msra.mxu0 0.0
  %2053 = vmatprep.subr.mxu0 0.0
  %2054 = vmatpush1.msra.mxu0 0.0
  %2055 = vmatprep.subr.mxu0 0.0
  %2056 = vmatpush1.msra.mxu0 0.0
  %2057 = vmatprep.subr.mxu0 0.0
  %2058 = vmatpush1.msra.mxu0 0.0
  %2059 = vmatprep.subr.mxu0 0.0
  %2060 = vmatpush1.msra.mxu0 0.0
  %2061 = vmatprep.subr.mxu0 0.0
  %2062 = vmatpush1.msra.mxu0 0.0
  %2063 = vmatprep.subr.mxu0 0.0
  %2064 = vmatpush1.msra.mxu0 0.0
  %2065 = vmatprep.subr.mxu0 0.0
  %2066 = vmatpush1.msra.mxu0 0.0
  %2067 = vmatprep.subr.mxu0 0.0
  %2068 = vmatpush1.msra.mxu0 0.0
  %2069 = vmatprep.subr.mxu0 0.0
  %2070 = vmatpush1.msra.mxu0 0.0
  %2071 = vmatprep.subr.mxu0 0.0
  %2072 = vmatpush1.msra.mxu0 0.0
  %2073 = vmatprep.subr.mxu0 0.0
  %2074 = vmatpush1.msra.mxu0 0.0
  %2075 = vmatprep.subr.mxu0 0.0
  %2076 = vmatpush1.msra.mxu0 0.0
  %2077 = vmatprep.subr.mxu0 0.0
  %2078 = vmatpush1.msra.mxu0 0.0
  %2079 = vmatprep.subr.mxu0 0.0
  %2080 = vmatpush1.msra.mxu0 0.0
  %2081 = vmatprep.subr.mxu0 0.0
  %2082 = vmatpush1.msra.mxu0 0.0
  %2083 = vmatprep.mubr.f32.mxu0 0.0
  %2084 = vmatmul.mubr.f32.gmra.mrb[0].mxu0 %v1918
  %v2085 = vpop.f32.mrb[0].mxu0
  %v2086 = vadd.f32 0.0, %v2085
  %v2087 = vpop.f32.mrb[0].mxu0
  %v2088 = vadd.f32 0.0, %v2087
  %2089 = vdwg.mxu0
  %v2090 = vadd.f32 %v1944, %v2015
  %v2091 = vadd.f32 %v1945, %v2017
  %v2092 = vadd.f32 %v1946, %v2086
  %v2093 = vadd.f32 %v1947, %v2088
  %s2094 = scalar_lea.vmem %s51, 64
  %v2095 = vld [vmem:[%s2094] sm:$0xff]
  %v2096 = vld [vmem:[%s2094 + $0x8] sm:$0xff]
  %v2097 = vld [vmem:[%s2094 + $0x10] sm:$0xff]
  %v2098 = vld [vmem:[%s2094 + $0x18] sm:$0xff]
  %2099 = vmatprep.subr.mxu0 %v127
  %2100 = vmatpush1.msra.mxu0 %v126
  %2101 = vmatprep.subr.mxu0 %v131
  %2102 = vmatpush1.msra.mxu0 %v130
  %2103 = vmatprep.subr.mxu0 %v135
  %2104 = vmatpush1.msra.mxu0 %v134
  %2105 = vmatprep.subr.mxu0 %v139
  %2106 = vmatpush1.msra.mxu0 %v138
  %2107 = vmatprep.subr.mxu0 %v143
  %2108 = vmatpush1.msra.mxu0 %v142
  %2109 = vmatprep.subr.mxu0 %v147
  %2110 = vmatpush1.msra.mxu0 %v146
  %2111 = vmatprep.subr.mxu0 %v151
  %2112 = vmatpush1.msra.mxu0 %v150
  %2113 = vmatprep.subr.mxu0 %v155
  %2114 = vmatpush1.msra.mxu0 %v154
  %2115 = vmatprep.subr.mxu0 %v159
  %2116 = vmatpush1.msra.mxu0 %v158
  %2117 = vmatprep.subr.mxu0 %v163
  %2118 = vmatpush1.msra.mxu0 %v162
  %2119 = vmatprep.subr.mxu0 %v167
  %2120 = vmatpush1.msra.mxu0 %v166
  %2121 = vmatprep.subr.mxu0 %v171
  %2122 = vmatpush1.msra.mxu0 %v170
  %2123 = vmatprep.subr.mxu0 %v175
  %2124 = vmatpush1.msra.mxu0 %v174
  %2125 = vmatprep.subr.mxu0 %v179
  %2126 = vmatpush1.msra.mxu0 %v178
  %2127 = vmatprep.subr.mxu0 %v183
  %2128 = vmatpush1.msra.mxu0 %v182
  %2129 = vmatprep.subr.mxu0 %v187
  %2130 = vmatpush1.msra.mxu0 %v186
  %2131 = vmatprep.subr.mxu0 0.0
  %2132 = vmatpush1.msra.mxu0 0.0
  %2133 = vmatprep.subr.mxu0 0.0
  %2134 = vmatpush1.msra.mxu0 0.0
  %2135 = vmatprep.subr.mxu0 0.0
  %2136 = vmatpush1.msra.mxu0 0.0
  %2137 = vmatprep.subr.mxu0 0.0
  %2138 = vmatpush1.msra.mxu0 0.0
  %2139 = vmatprep.subr.mxu0 0.0
  %2140 = vmatpush1.msra.mxu0 0.0
  %2141 = vmatprep.subr.mxu0 0.0
  %2142 = vmatpush1.msra.mxu0 0.0
  %2143 = vmatprep.subr.mxu0 0.0
  %2144 = vmatpush1.msra.mxu0 0.0
  %2145 = vmatprep.subr.mxu0 0.0
  %2146 = vmatpush1.msra.mxu0 0.0
  %2147 = vmatprep.subr.mxu0 0.0
  %2148 = vmatpush1.msra.mxu0 0.0
  %2149 = vmatprep.subr.mxu0 0.0
  %2150 = vmatpush1.msra.mxu0 0.0
  %2151 = vmatprep.subr.mxu0 0.0
  %2152 = vmatpush1.msra.mxu0 0.0
  %2153 = vmatprep.subr.mxu0 0.0
  %2154 = vmatpush1.msra.mxu0 0.0
  %2155 = vmatprep.subr.mxu0 0.0
  %2156 = vmatpush1.msra.mxu0 0.0
  %2157 = vmatprep.subr.mxu0 0.0
  %2158 = vmatpush1.msra.mxu0 0.0
  %2159 = vmatprep.subr.mxu0 0.0
  %2160 = vmatpush1.msra.mxu0 0.0
  %2161 = vmatprep.subr.mxu0 0.0
  %2162 = vmatpush1.msra.mxu0 0.0
  %2163 = vmatprep.mubr.f32.mxu0 0.0
  %2164 = vmatmul.mubr.f32.gmra.mrb[0].mxu0 %v1942
  %v2165 = vpop.f32.mrb[0].mxu0
  %v2166 = vadd.f32 0.0, %v2165
  %v2167 = vpop.f32.mrb[0].mxu0
  %v2168 = vadd.f32 0.0, %v2167
  %2169 = vdwg.mxu0
  %2170 = vmatprep.subr.mxu0 %v129
  %2171 = vmatpush1.msra.mxu0 %v128
  %2172 = vmatprep.subr.mxu0 %v133
  %2173 = vmatpush1.msra.mxu0 %v132
  %2174 = vmatprep.subr.mxu0 %v137
  %2175 = vmatpush1.msra.mxu0 %v136
  %2176 = vmatprep.subr.mxu0 %v141
  %2177 = vmatpush1.msra.mxu0 %v140
  %2178 = vmatprep.subr.mxu0 %v145
  %2179 = vmatpush1.msra.mxu0 %v144
  %2180 = vmatprep.subr.mxu0 %v149
  %2181 = vmatpush1.msra.mxu0 %v148
  %2182 = vmatprep.subr.mxu0 %v153
  %2183 = vmatpush1.msra.mxu0 %v152
  %2184 = vmatprep.subr.mxu0 %v157
  %2185 = vmatpush1.msra.mxu0 %v156
  %2186 = vmatprep.subr.mxu0 %v161
  %2187 = vmatpush1.msra.mxu0 %v160
  %2188 = vmatprep.subr.mxu0 %v165
  %2189 = vmatpush1.msra.mxu0 %v164
  %2190 = vmatprep.subr.mxu0 %v169
  %2191 = vmatpush1.msra.mxu0 %v168
  %2192 = vmatprep.subr.mxu0 %v173
  %2193 = vmatpush1.msra.mxu0 %v172
  %2194 = vmatprep.subr.mxu0 %v177
  %2195 = vmatpush1.msra.mxu0 %v176
  %2196 = vmatprep.subr.mxu0 %v181
  %2197 = vmatpush1.msra.mxu0 %v180
  %2198 = vmatprep.subr.mxu0 %v185
  %2199 = vmatpush1.msra.mxu0 %v184
  %2200 = vmatprep.subr.mxu0 %v189
  %2201 = vmatpush1.msra.mxu0 %v188
  %2202 = vmatprep.subr.mxu0 0.0
  %2203 = vmatpush1.msra.mxu0 0.0
  %2204 = vmatprep.subr.mxu0 0.0
  %2205 = vmatpush1.msra.mxu0 0.0
  %2206 = vmatprep.subr.mxu0 0.0
  %2207 = vmatpush1.msra.mxu0 0.0
  %2208 = vmatprep.subr.mxu0 0.0
  %2209 = vmatpush1.msra.mxu0 0.0
  %2210 = vmatprep.subr.mxu0 0.0
  %2211 = vmatpush1.msra.mxu0 0.0
  %2212 = vmatprep.subr.mxu0 0.0
  %2213 = vmatpush1.msra.mxu0 0.0
  %2214 = vmatprep.subr.mxu0 0.0
  %2215 = vmatpush1.msra.mxu0 0.0
  %2216 = vmatprep.subr.mxu0 0.0
  %2217 = vmatpush1.msra.mxu0 0.0
  %2218 = vmatprep.subr.mxu0 0.0
  %2219 = vmatpush1.msra.mxu0 0.0
  %2220 = vmatprep.subr.mxu0 0.0
  %2221 = vmatpush1.msra.mxu0 0.0
  %2222 = vmatprep.subr.mxu0 0.0
  %2223 = vmatpush1.msra.mxu0 0.0
  %2224 = vmatprep.subr.mxu0 0.0
  %2225 = vmatpush1.msra.mxu0 0.0
  %2226 = vmatprep.subr.mxu0 0.0
  %2227 = vmatpush1.msra.mxu0 0.0
  %2228 = vmatprep.subr.mxu0 0.0
  %2229 = vmatpush1.msra.mxu0 0.0
  %2230 = vmatprep.subr.mxu0 0.0
  %2231 = vmatpush1.msra.mxu0 0.0
  %2232 = vmatprep.subr.mxu0 0.0
  %2233 = vmatpush1.msra.mxu0 0.0
  %2234 = vmatprep.mubr.f32.mxu0 0.0
  %2235 = vmatmul.mubr.f32.gmra.mrb[0].mxu0 %v1942
  %v2236 = vpop.f32.mrb[0].mxu0
  %v2237 = vadd.f32 0.0, %v2236
  %v2238 = vpop.f32.mrb[0].mxu0
  %v2239 = vadd.f32 0.0, %v2238
  %2240 = vdwg.mxu0
  %v2241 = vadd.f32 %v2095, %v2166
  %v2242 = vadd.f32 %v2096, %v2168
  %v2243 = vadd.f32 %v2097, %v2237
  %v2244 = vadd.f32 %v2098, %v2239
  %v2245 = vxor.u32 %v2090, 2147483648
  %v2246 = vmul.f32 %v2245, 1.442695
  %v2247 = vpow.pop %v2246
  %v2248 = vadd.f32 %v2247, 1.0
  %v2249 = vrcp.pop %v2248
  %v2250 = vmul.f32 1.0, %v2249
  %v2251 = vxor.u32 %v2091, 2147483648
  %v2252 = vmul.f32 %v2251, 1.442695
  %v2253 = vpow.pop %v2252
  %v2254 = vadd.f32 %v2253, 1.0
  %v2255 = vrcp.pop %v2254
  %v2256 = vmul.f32 1.0, %v2255
  %v2257 = vtanh.pop %v2092
  %v2258 = vxor.u32 %v2093, 2147483648
  %v2259 = vmul.f32 %v2258, 1.442695
  %v2260 = vpow.pop %v2259
  %v2261 = vadd.f32 %v2260, 1.0
  %v2262 = vrcp.pop %v2261
  %v2263 = vmul.f32 1.0, %v2262
  %v2264 = vmul.f32 %v2256, %v1916
  %v2265 = vmul.f32 %v2250, %v2257
  %v2266 = vadd.f32 %v2264, %v2265
  %v2267 = vtanh.pop %v2266
  %v2268 = vmul.f32 %v2263, %v2267
  %v2269 = vxor.u32 %v2241, 2147483648
  %v2270 = vmul.f32 %v2269, 1.442695
  %v2271 = vpow.pop %v2270
  %v2272 = vadd.f32 %v2271, 1.0
  %v2273 = vrcp.pop %v2272
  %v2274 = vmul.f32 1.0, %v2273
  %v2275 = vxor.u32 %v2242, 2147483648
  %v2276 = vmul.f32 %v2275, 1.442695
  %v2277 = vpow.pop %v2276
  %v2278 = vadd.f32 %v2277, 1.0
  %v2279 = vrcp.pop %v2278
  %v2280 = vmul.f32 1.0, %v2279
  %v2281 = vtanh.pop %v2243
  %v2282 = vxor.u32 %v2244, 2147483648
  %v2283 = vmul.f32 %v2282, 1.442695
  %v2284 = vpow.pop %v2283
  %v2285 = vadd.f32 %v2284, 1.0
  %v2286 = vrcp.pop %v2285
  %v2287 = vmul.f32 1.0, %v2286
  %v2288 = vmul.f32 %v2280, %v1940
  %v2289 = vmul.f32 %v2274, %v2281
  %v2290 = vadd.f32 %v2288, %v2289
  %v2291 = vtanh.pop %v2290
  %v2292 = vmul.f32 %v2287, %v2291
  %s2293 = scalar_lea.vmem %s0, 192
  %v2294 = vld [vmem:[%s2293] sm:$0xff]
  %v2295 = vld [vmem:[%s2293 + $0x8] sm:$0xff]
  %v2296 = vld [vmem:[%s2293 + $0x10] sm:$0xff]
  %v2297 = vld [vmem:[%s2293 + $0x18] sm:$0xff]
  %2298 = vmatprep.subr.mxu0 %v63
  %2299 = vmatpush1.msra.mxu0 %v62
  %2300 = vmatprep.subr.mxu0 %v67
  %2301 = vmatpush1.msra.mxu0 %v66
  %2302 = vmatprep.subr.mxu0 %v71
  %2303 = vmatpush1.msra.mxu0 %v70
  %2304 = vmatprep.subr.mxu0 %v75
  %2305 = vmatpush1.msra.mxu0 %v74
  %2306 = vmatprep.subr.mxu0 %v79
  %2307 = vmatpush1.msra.mxu0 %v78
  %2308 = vmatprep.subr.mxu0 %v83
  %2309 = vmatpush1.msra.mxu0 %v82
  %2310 = vmatprep.subr.mxu0 %v87
  %2311 = vmatpush1.msra.mxu0 %v86
  %2312 = vmatprep.subr.mxu0 %v91
  %2313 = vmatpush1.msra.mxu0 %v90
  %2314 = vmatprep.subr.mxu0 %v95
  %2315 = vmatpush1.msra.mxu0 %v94
  %2316 = vmatprep.subr.mxu0 %v99
  %2317 = vmatpush1.msra.mxu0 %v98
  %2318 = vmatprep.subr.mxu0 %v103
  %2319 = vmatpush1.msra.mxu0 %v102
  %2320 = vmatprep.subr.mxu0 %v107
  %2321 = vmatpush1.msra.mxu0 %v106
  %2322 = vmatprep.subr.mxu0 %v111
  %2323 = vmatpush1.msra.mxu0 %v110
  %2324 = vmatprep.subr.mxu0 %v115
  %2325 = vmatpush1.msra.mxu0 %v114
  %2326 = vmatprep.subr.mxu0 %v119
  %2327 = vmatpush1.msra.mxu0 %v118
  %2328 = vmatprep.subr.mxu0 %v123
  %2329 = vmatpush1.msra.mxu0 %v122
  %2330 = vmatprep.subr.mxu0 0.0
  %2331 = vmatpush1.msra.mxu0 0.0
  %2332 = vmatprep.subr.mxu0 0.0
  %2333 = vmatpush1.msra.mxu0 0.0
  %2334 = vmatprep.subr.mxu0 0.0
  %2335 = vmatpush1.msra.mxu0 0.0
  %2336 = vmatprep.subr.mxu0 0.0
  %2337 = vmatpush1.msra.mxu0 0.0
  %2338 = vmatprep.subr.mxu0 0.0
  %2339 = vmatpush1.msra.mxu0 0.0
  %2340 = vmatprep.subr.mxu0 0.0
  %2341 = vmatpush1.msra.mxu0 0.0
  %2342 = vmatprep.subr.mxu0 0.0
  %2343 = vmatpush1.msra.mxu0 0.0
  %2344 = vmatprep.subr.mxu0 0.0
  %2345 = vmatpush1.msra.mxu0 0.0
  %2346 = vmatprep.subr.mxu0 0.0
  %2347 = vmatpush1.msra.mxu0 0.0
  %2348 = vmatprep.subr.mxu0 0.0
  %2349 = vmatpush1.msra.mxu0 0.0
  %2350 = vmatprep.subr.mxu0 0.0
  %2351 = vmatpush1.msra.mxu0 0.0
  %2352 = vmatprep.subr.mxu0 0.0
  %2353 = vmatpush1.msra.mxu0 0.0
  %2354 = vmatprep.subr.mxu0 0.0
  %2355 = vmatpush1.msra.mxu0 0.0
  %2356 = vmatprep.subr.mxu0 0.0
  %2357 = vmatpush1.msra.mxu0 0.0
  %2358 = vmatprep.subr.mxu0 0.0
  %2359 = vmatpush1.msra.mxu0 0.0
  %2360 = vmatprep.subr.mxu0 0.0
  %2361 = vmatpush1.msra.mxu0 0.0
  %2362 = vmatprep.mubr.f32.mxu0 0.0
  %2363 = vmatmul.mubr.f32.gmra.mrb[0].mxu0 %v2268
  %v2364 = vpop.f32.mrb[0].mxu0
  %v2365 = vadd.f32 0.0, %v2364
  %v2366 = vpop.f32.mrb[0].mxu0
  %v2367 = vadd.f32 0.0, %v2366
  %2368 = vdwg.mxu0
  %2369 = vmatprep.subr.mxu0 %v65
  %2370 = vmatpush1.msra.mxu0 %v64
  %2371 = vmatprep.subr.mxu0 %v69
  %2372 = vmatpush1.msra.mxu0 %v68
  %2373 = vmatprep.subr.mxu0 %v73
  %2374 = vmatpush1.msra.mxu0 %v72
  %2375 = vmatprep.subr.mxu0 %v77
  %2376 = vmatpush1.msra.mxu0 %v76
  %2377 = vmatprep.subr.mxu0 %v81
  %2378 = vmatpush1.msra.mxu0 %v80
  %2379 = vmatprep.subr.mxu0 %v85
  %2380 = vmatpush1.msra.mxu0 %v84
  %2381 = vmatprep.subr.mxu0 %v89
  %2382 = vmatpush1.msra.mxu0 %v88
  %2383 = vmatprep.subr.mxu0 %v93
  %2384 = vmatpush1.msra.mxu0 %v92
  %2385 = vmatprep.subr.mxu0 %v97
  %2386 = vmatpush1.msra.mxu0 %v96
  %2387 = vmatprep.subr.mxu0 %v101
  %2388 = vmatpush1.msra.mxu0 %v100
  %2389 = vmatprep.subr.mxu0 %v105
  %2390 = vmatpush1.msra.mxu0 %v104
  %2391 = vmatprep.subr.mxu0 %v109
  %2392 = vmatpush1.msra.mxu0 %v108
  %2393 = vmatprep.subr.mxu0 %v113
  %2394 = vmatpush1.msra.mxu0 %v112
  %2395 = vmatprep.subr.mxu0 %v117
  %2396 = vmatpush1.msra.mxu0 %v116
  %2397 = vmatprep.subr.mxu0 %v121
  %2398 = vmatpush1.msra.mxu0 %v120
  %2399 = vmatprep.subr.mxu0 %v125
  %2400 = vmatpush1.msra.mxu0 %v124
  %2401 = vmatprep.subr.mxu0 0.0
  %2402 = vmatpush1.msra.mxu0 0.0
  %2403 = vmatprep.subr.mxu0 0.0
  %2404 = vmatpush1.msra.mxu0 0.0
  %2405 = vmatprep.subr.mxu0 0.0
  %2406 = vmatpush1.msra.mxu0 0.0
  %2407 = vmatprep.subr.mxu0 0.0
  %2408 = vmatpush1.msra.mxu0 0.0
  %2409 = vmatprep.subr.mxu0 0.0
  %2410 = vmatpush1.msra.mxu0 0.0
  %2411 = vmatprep.subr.mxu0 0.0
  %2412 = vmatpush1.msra.mxu0 0.0
  %2413 = vmatprep.subr.mxu0 0.0
  %2414 = vmatpush1.msra.mxu0 0.0
  %2415 = vmatprep.subr.mxu0 0.0
  %2416 = vmatpush1.msra.mxu0 0.0
  %2417 = vmatprep.subr.mxu0 0.0
  %2418 = vmatpush1.msra.mxu0 0.0
  %2419 = vmatprep.subr.mxu0 0.0
  %2420 = vmatpush1.msra.mxu0 0.0
  %2421 = vmatprep.subr.mxu0 0.0
  %2422 = vmatpush1.msra.mxu0 0.0
  %2423 = vmatprep.subr.mxu0 0.0
  %2424 = vmatpush1.msra.mxu0 0.0
  %2425 = vmatprep.subr.mxu0 0.0
  %2426 = vmatpush1.msra.mxu0 0.0
  %2427 = vmatprep.subr.mxu0 0.0
  %2428 = vmatpush1.msra.mxu0 0.0
  %2429 = vmatprep.subr.mxu0 0.0
  %2430 = vmatpush1.msra.mxu0 0.0
  %2431 = vmatprep.subr.mxu0 0.0
  %2432 = vmatpush1.msra.mxu0 0.0
  %2433 = vmatprep.mubr.f32.mxu0 0.0
  %2434 = vmatmul.mubr.f32.gmra.mrb[0].mxu0 %v2268
  %v2435 = vpop.f32.mrb[0].mxu0
  %v2436 = vadd.f32 0.0, %v2435
  %v2437 = vpop.f32.mrb[0].mxu0
  %v2438 = vadd.f32 0.0, %v2437
  %2439 = vdwg.mxu0
  %v2440 = vadd.f32 %v2294, %v2365
  %v2441 = vadd.f32 %v2295, %v2367
  %v2442 = vadd.f32 %v2296, %v2436
  %v2443 = vadd.f32 %v2297, %v2438
  %s2444 = scalar_lea.vmem %s51, 32
  %v2445 = vld [vmem:[%s2444] sm:$0xff]
  %v2446 = vld [vmem:[%s2444 + $0x8] sm:$0xff]
  %v2447 = vld [vmem:[%s2444 + $0x10] sm:$0xff]
  %v2448 = vld [vmem:[%s2444 + $0x18] sm:$0xff]
  %2449 = vmatprep.subr.mxu0 %v127
  %2450 = vmatpush1.msra.mxu0 %v126
  %2451 = vmatprep.subr.mxu0 %v131
  %2452 = vmatpush1.msra.mxu0 %v130
  %2453 = vmatprep.subr.mxu0 %v135
  %2454 = vmatpush1.msra.mxu0 %v134
  %2455 = vmatprep.subr.mxu0 %v139
  %2456 = vmatpush1.msra.mxu0 %v138
  %2457 = vmatprep.subr.mxu0 %v143
  %2458 = vmatpush1.msra.mxu0 %v142
  %2459 = vmatprep.subr.mxu0 %v147
  %2460 = vmatpush1.msra.mxu0 %v146
  %2461 = vmatprep.subr.mxu0 %v151
  %2462 = vmatpush1.msra.mxu0 %v150
  %2463 = vmatprep.subr.mxu0 %v155
  %2464 = vmatpush1.msra.mxu0 %v154
  %2465 = vmatprep.subr.mxu0 %v159
  %2466 = vmatpush1.msra.mxu0 %v158
  %2467 = vmatprep.subr.mxu0 %v163
  %2468 = vmatpush1.msra.mxu0 %v162
  %2469 = vmatprep.subr.mxu0 %v167
  %2470 = vmatpush1.msra.mxu0 %v166
  %2471 = vmatprep.subr.mxu0 %v171
  %2472 = vmatpush1.msra.mxu0 %v170
  %2473 = vmatprep.subr.mxu0 %v175
  %2474 = vmatpush1.msra.mxu0 %v174
  %2475 = vmatprep.subr.mxu0 %v179
  %2476 = vmatpush1.msra.mxu0 %v178
  %2477 = vmatprep.subr.mxu0 %v183
  %2478 = vmatpush1.msra.mxu0 %v182
  %2479 = vmatprep.subr.mxu0 %v187
  %2480 = vmatpush1.msra.mxu0 %v186
  %2481 = vmatprep.subr.mxu0 0.0
  %2482 = vmatpush1.msra.mxu0 0.0
  %2483 = vmatprep.subr.mxu0 0.0
  %2484 = vmatpush1.msra.mxu0 0.0
  %2485 = vmatprep.subr.mxu0 0.0
  %2486 = vmatpush1.msra.mxu0 0.0
  %2487 = vmatprep.subr.mxu0 0.0
  %2488 = vmatpush1.msra.mxu0 0.0
  %2489 = vmatprep.subr.mxu0 0.0
  %2490 = vmatpush1.msra.mxu0 0.0
  %2491 = vmatprep.subr.mxu0 0.0
  %2492 = vmatpush1.msra.mxu0 0.0
  %2493 = vmatprep.subr.mxu0 0.0
  %2494 = vmatpush1.msra.mxu0 0.0
  %2495 = vmatprep.subr.mxu0 0.0
  %2496 = vmatpush1.msra.mxu0 0.0
  %2497 = vmatprep.subr.mxu0 0.0
  %2498 = vmatpush1.msra.mxu0 0.0
  %2499 = vmatprep.subr.mxu0 0.0
  %2500 = vmatpush1.msra.mxu0 0.0
  %2501 = vmatprep.subr.mxu0 0.0
  %2502 = vmatpush1.msra.mxu0 0.0
  %2503 = vmatprep.subr.mxu0 0.0
  %2504 = vmatpush1.msra.mxu0 0.0
  %2505 = vmatprep.subr.mxu0 0.0
  %2506 = vmatpush1.msra.mxu0 0.0
  %2507 = vmatprep.subr.mxu0 0.0
  %2508 = vmatpush1.msra.mxu0 0.0
  %2509 = vmatprep.subr.mxu0 0.0
  %2510 = vmatpush1.msra.mxu0 0.0
  %2511 = vmatprep.subr.mxu0 0.0
  %2512 = vmatpush1.msra.mxu0 0.0
  %2513 = vmatprep.mubr.f32.mxu0 0.0
  %2514 = vmatmul.mubr.f32.gmra.mrb[0].mxu0 %v2292
  %v2515 = vpop.f32.mrb[0].mxu0
  %v2516 = vadd.f32 0.0, %v2515
  %v2517 = vpop.f32.mrb[0].mxu0
  %v2518 = vadd.f32 0.0, %v2517
  %2519 = vdwg.mxu0
  %2520 = vmatprep.subr.mxu0 %v129
  %2521 = vmatpush1.msra.mxu0 %v128
  %2522 = vmatprep.subr.mxu0 %v133
  %2523 = vmatpush1.msra.mxu0 %v132
  %2524 = vmatprep.subr.mxu0 %v137
  %2525 = vmatpush1.msra.mxu0 %v136
  %2526 = vmatprep.subr.mxu0 %v141
  %2527 = vmatpush1.msra.mxu0 %v140
  %2528 = vmatprep.subr.mxu0 %v145
  %2529 = vmatpush1.msra.mxu0 %v144
  %2530 = vmatprep.subr.mxu0 %v149
  %2531 = vmatpush1.msra.mxu0 %v148
  %2532 = vmatprep.subr.mxu0 %v153
  %2533 = vmatpush1.msra.mxu0 %v152
  %2534 = vmatprep.subr.mxu0 %v157
  %2535 = vmatpush1.msra.mxu0 %v156
  %2536 = vmatprep.subr.mxu0 %v161
  %2537 = vmatpush1.msra.mxu0 %v160
  %2538 = vmatprep.subr.mxu0 %v165
  %2539 = vmatpush1.msra.mxu0 %v164
  %2540 = vmatprep.subr.mxu0 %v169
  %2541 = vmatpush1.msra.mxu0 %v168
  %2542 = vmatprep.subr.mxu0 %v173
  %2543 = vmatpush1.msra.mxu0 %v172
  %2544 = vmatprep.subr.mxu0 %v177
  %2545 = vmatpush1.msra.mxu0 %v176
  %2546 = vmatprep.subr.mxu0 %v181
  %2547 = vmatpush1.msra.mxu0 %v180
  %2548 = vmatprep.subr.mxu0 %v185
  %2549 = vmatpush1.msra.mxu0 %v184
  %2550 = vmatprep.subr.mxu0 %v189
  %2551 = vmatpush1.msra.mxu0 %v188
  %2552 = vmatprep.subr.mxu0 0.0
  %2553 = vmatpush1.msra.mxu0 0.0
  %2554 = vmatprep.subr.mxu0 0.0
  %2555 = vmatpush1.msra.mxu0 0.0
  %2556 = vmatprep.subr.mxu0 0.0
  %2557 = vmatpush1.msra.mxu0 0.0
  %2558 = vmatprep.subr.mxu0 0.0
  %2559 = vmatpush1.msra.mxu0 0.0
  %2560 = vmatprep.subr.mxu0 0.0
  %2561 = vmatpush1.msra.mxu0 0.0
  %2562 = vmatprep.subr.mxu0 0.0
  %2563 = vmatpush1.msra.mxu0 0.0
  %2564 = vmatprep.subr.mxu0 0.0
  %2565 = vmatpush1.msra.mxu0 0.0
  %2566 = vmatprep.subr.mxu0 0.0
  %2567 = vmatpush1.msra.mxu0 0.0
  %2568 = vmatprep.subr.mxu0 0.0
  %2569 = vmatpush1.msra.mxu0 0.0
  %2570 = vmatprep.subr.mxu0 0.0
  %2571 = vmatpush1.msra.mxu0 0.0
  %2572 = vmatprep.subr.mxu0 0.0
  %2573 = vmatpush1.msra.mxu0 0.0
  %2574 = vmatprep.subr.mxu0 0.0
  %2575 = vmatpush1.msra.mxu0 0.0
  %2576 = vmatprep.subr.mxu0 0.0
  %2577 = vmatpush1.msra.mxu0 0.0
  %2578 = vmatprep.subr.mxu0 0.0
  %2579 = vmatpush1.msra.mxu0 0.0
  %2580 = vmatprep.subr.mxu0 0.0
  %2581 = vmatpush1.msra.mxu0 0.0
  %2582 = vmatprep.subr.mxu0 0.0
  %2583 = vmatpush1.msra.mxu0 0.0
  %2584 = vmatprep.mubr.f32.mxu0 0.0
  %2585 = vmatmul.mubr.f32.gmra.mrb[0].mxu0 %v2292
  %v2586 = vpop.f32.mrb[0].mxu0
  %v2587 = vadd.f32 0.0, %v2586
  %v2588 = vpop.f32.mrb[0].mxu0
  %v2589 = vadd.f32 0.0, %v2588
  %2590 = vdwg.mxu0
  %v2591 = vadd.f32 %v2445, %v2516
  %v2592 = vadd.f32 %v2446, %v2518
  %v2593 = vadd.f32 %v2447, %v2587
  %v2594 = vadd.f32 %v2448, %v2589
  %v2595 = vxor.u32 %v2440, 2147483648
  %v2596 = vmul.f32 %v2595, 1.442695
  %v2597 = vpow.pop %v2596
  %v2598 = vadd.f32 %v2597, 1.0
  %v2599 = vrcp.pop %v2598
  %v2600 = vmul.f32 1.0, %v2599
  %v2601 = vxor.u32 %v2441, 2147483648
  %v2602 = vmul.f32 %v2601, 1.442695
  %v2603 = vpow.pop %v2602
  %v2604 = vadd.f32 %v2603, 1.0
  %v2605 = vrcp.pop %v2604
  %v2606 = vmul.f32 1.0, %v2605
  %v2607 = vtanh.pop %v2442
  %v2608 = vxor.u32 %v2443, 2147483648
  %v2609 = vmul.f32 %v2608, 1.442695
  %v2610 = vpow.pop %v2609
  %v2611 = vadd.f32 %v2610, 1.0
  %v2612 = vrcp.pop %v2611
  %v2613 = vmul.f32 1.0, %v2612
  %v2614 = vmul.f32 %v2606, %v2266
  %v2615 = vmul.f32 %v2600, %v2607
  %v2616 = vadd.f32 %v2614, %v2615
  %v2617 = vtanh.pop %v2616
  %v2618 = vmul.f32 %v2613, %v2617
  %v2619 = vxor.u32 %v2591, 2147483648
  %v2620 = vmul.f32 %v2619, 1.442695
  %v2621 = vpow.pop %v2620
  %v2622 = vadd.f32 %v2621, 1.0
  %v2623 = vrcp.pop %v2622
  %v2624 = vmul.f32 1.0, %v2623
  %v2625 = vxor.u32 %v2592, 2147483648
  %v2626 = vmul.f32 %v2625, 1.442695
  %v2627 = vpow.pop %v2626
  %v2628 = vadd.f32 %v2627, 1.0
  %v2629 = vrcp.pop %v2628
  %v2630 = vmul.f32 1.0, %v2629
  %v2631 = vtanh.pop %v2593
  %v2632 = vxor.u32 %v2594, 2147483648
  %v2633 = vmul.f32 %v2632, 1.442695
  %v2634 = vpow.pop %v2633
  %v2635 = vadd.f32 %v2634, 1.0
  %v2636 = vrcp.pop %v2635
  %v2637 = vmul.f32 1.0, %v2636
  %v2638 = vmul.f32 %v2630, %v2290
  %v2639 = vmul.f32 %v2624, %v2631
  %v2640 = vadd.f32 %v2638, %v2639
  %v2641 = vtanh.pop %v2640
  %v2642 = vmul.f32 %v2637, %v2641
  %s2643 = scalar_lea.vmem %s0, 224
  %v2644 = vld [vmem:[%s2643] sm:$0xff]
  %v2645 = vld [vmem:[%s2643 + $0x8] sm:$0xff]
  %v2646 = vld [vmem:[%s2643 + $0x10] sm:$0xff]
  %v2647 = vld [vmem:[%s2643 + $0x18] sm:$0xff]
  %2648 = vmatprep.subr.mxu0 %v63
  %2649 = vmatpush1.msra.mxu0 %v62
  %2650 = vmatprep.subr.mxu0 %v67
  %2651 = vmatpush1.msra.mxu0 %v66
  %2652 = vmatprep.subr.mxu0 %v71
  %2653 = vmatpush1.msra.mxu0 %v70
  %2654 = vmatprep.subr.mxu0 %v75
  %2655 = vmatpush1.msra.mxu0 %v74
  %2656 = vmatprep.subr.mxu0 %v79
  %2657 = vmatpush1.msra.mxu0 %v78
  %2658 = vmatprep.subr.mxu0 %v83
  %2659 = vmatpush1.msra.mxu0 %v82
  %2660 = vmatprep.subr.mxu0 %v87
  %2661 = vmatpush1.msra.mxu0 %v86
  %2662 = vmatprep.subr.mxu0 %v91
  %2663 = vmatpush1.msra.mxu0 %v90
  %2664 = vmatprep.subr.mxu0 %v95
  %2665 = vmatpush1.msra.mxu0 %v94
  %2666 = vmatprep.subr.mxu0 %v99
  %2667 = vmatpush1.msra.mxu0 %v98
  %2668 = vmatprep.subr.mxu0 %v103
  %2669 = vmatpush1.msra.mxu0 %v102
  %2670 = vmatprep.subr.mxu0 %v107
  %2671 = vmatpush1.msra.mxu0 %v106
  %2672 = vmatprep.subr.mxu0 %v111
  %2673 = vmatpush1.msra.mxu0 %v110
  %2674 = vmatprep.subr.mxu0 %v115
  %2675 = vmatpush1.msra.mxu0 %v114
  %2676 = vmatprep.subr.mxu0 %v119
  %2677 = vmatpush1.msra.mxu0 %v118
  %2678 = vmatprep.subr.mxu0 %v123
  %2679 = vmatpush1.msra.mxu0 %v122
  %2680 = vmatprep.subr.mxu0 0.0
  %2681 = vmatpush1.msra.mxu0 0.0
  %2682 = vmatprep.subr.mxu0 0.0
  %2683 = vmatpush1.msra.mxu0 0.0
  %2684 = vmatprep.subr.mxu0 0.0
  %2685 = vmatpush1.msra.mxu0 0.0
  %2686 = vmatprep.subr.mxu0 0.0
  %2687 = vmatpush1.msra.mxu0 0.0
  %2688 = vmatprep.subr.mxu0 0.0
  %2689 = vmatpush1.msra.mxu0 0.0
  %2690 = vmatprep.subr.mxu0 0.0
  %2691 = vmatpush1.msra.mxu0 0.0
  %2692 = vmatprep.subr.mxu0 0.0
  %2693 = vmatpush1.msra.mxu0 0.0
  %2694 = vmatprep.subr.mxu0 0.0
  %2695 = vmatpush1.msra.mxu0 0.0
  %2696 = vmatprep.subr.mxu0 0.0
  %2697 = vmatpush1.msra.mxu0 0.0
  %2698 = vmatprep.subr.mxu0 0.0
  %2699 = vmatpush1.msra.mxu0 0.0
  %2700 = vmatprep.subr.mxu0 0.0
  %2701 = vmatpush1.msra.mxu0 0.0
  %2702 = vmatprep.subr.mxu0 0.0
  %2703 = vmatpush1.msra.mxu0 0.0
  %2704 = vmatprep.subr.mxu0 0.0
  %2705 = vmatpush1.msra.mxu0 0.0
  %2706 = vmatprep.subr.mxu0 0.0
  %2707 = vmatpush1.msra.mxu0 0.0
  %2708 = vmatprep.subr.mxu0 0.0
  %2709 = vmatpush1.msra.mxu0 0.0
  %2710 = vmatprep.subr.mxu0 0.0
  %2711 = vmatpush1.msra.mxu0 0.0
  %2712 = vmatprep.mubr.f32.mxu0 0.0
  %2713 = vmatmul.mubr.f32.gmra.mrb[0].mxu0 %v2618
  %v2714 = vpop.f32.mrb[0].mxu0
  %v2715 = vadd.f32 0.0, %v2714
  %v2716 = vpop.f32.mrb[0].mxu0
  %v2717 = vadd.f32 0.0, %v2716
  %2718 = vdwg.mxu0
  %2719 = vmatprep.subr.mxu0 %v65
  %2720 = vmatpush1.msra.mxu0 %v64
  %2721 = vmatprep.subr.mxu0 %v69
  %2722 = vmatpush1.msra.mxu0 %v68
  %2723 = vmatprep.subr.mxu0 %v73
  %2724 = vmatpush1.msra.mxu0 %v72
  %2725 = vmatprep.subr.mxu0 %v77
  %2726 = vmatpush1.msra.mxu0 %v76
  %2727 = vmatprep.subr.mxu0 %v81
  %2728 = vmatpush1.msra.mxu0 %v80
  %2729 = vmatprep.subr.mxu0 %v85
  %2730 = vmatpush1.msra.mxu0 %v84
  %2731 = vmatprep.subr.mxu0 %v89
  %2732 = vmatpush1.msra.mxu0 %v88
  %2733 = vmatprep.subr.mxu0 %v93
  %2734 = vmatpush1.msra.mxu0 %v92
  %2735 = vmatprep.subr.mxu0 %v97
  %2736 = vmatpush1.msra.mxu0 %v96
  %2737 = vmatprep.subr.mxu0 %v101
  %2738 = vmatpush1.msra.mxu0 %v100
  %2739 = vmatprep.subr.mxu0 %v105
  %2740 = vmatpush1.msra.mxu0 %v104
  %2741 = vmatprep.subr.mxu0 %v109
  %2742 = vmatpush1.msra.mxu0 %v108
  %2743 = vmatprep.subr.mxu0 %v113
  %2744 = vmatpush1.msra.mxu0 %v112
  %2745 = vmatprep.subr.mxu0 %v117
  %2746 = vmatpush1.msra.mxu0 %v116
  %2747 = vmatprep.subr.mxu0 %v121
  %2748 = vmatpush1.msra.mxu0 %v120
  %2749 = vmatprep.subr.mxu0 %v125
  %2750 = vmatpush1.msra.mxu0 %v124
  %2751 = vmatprep.subr.mxu0 0.0
  %2752 = vmatpush1.msra.mxu0 0.0
  %2753 = vmatprep.subr.mxu0 0.0
  %2754 = vmatpush1.msra.mxu0 0.0
  %2755 = vmatprep.subr.mxu0 0.0
  %2756 = vmatpush1.msra.mxu0 0.0
  %2757 = vmatprep.subr.mxu0 0.0
  %2758 = vmatpush1.msra.mxu0 0.0
  %2759 = vmatprep.subr.mxu0 0.0
  %2760 = vmatpush1.msra.mxu0 0.0
  %2761 = vmatprep.subr.mxu0 0.0
  %2762 = vmatpush1.msra.mxu0 0.0
  %2763 = vmatprep.subr.mxu0 0.0
  %2764 = vmatpush1.msra.mxu0 0.0
  %2765 = vmatprep.subr.mxu0 0.0
  %2766 = vmatpush1.msra.mxu0 0.0
  %2767 = vmatprep.subr.mxu0 0.0
  %2768 = vmatpush1.msra.mxu0 0.0
  %2769 = vmatprep.subr.mxu0 0.0
  %2770 = vmatpush1.msra.mxu0 0.0
  %2771 = vmatprep.subr.mxu0 0.0
  %2772 = vmatpush1.msra.mxu0 0.0
  %2773 = vmatprep.subr.mxu0 0.0
  %2774 = vmatpush1.msra.mxu0 0.0
  %2775 = vmatprep.subr.mxu0 0.0
  %2776 = vmatpush1.msra.mxu0 0.0
  %2777 = vmatprep.subr.mxu0 0.0
  %2778 = vmatpush1.msra.mxu0 0.0
  %2779 = vmatprep.subr.mxu0 0.0
  %2780 = vmatpush1.msra.mxu0 0.0
  %2781 = vmatprep.subr.mxu0 0.0
  %2782 = vmatpush1.msra.mxu0 0.0
  %2783 = vmatprep.mubr.f32.mxu0 0.0
  %2784 = vmatmul.mubr.f32.gmra.mrb[0].mxu0 %v2618
  %v2785 = vpop.f32.mrb[0].mxu0
  %v2786 = vadd.f32 0.0, %v2785
  %v2787 = vpop.f32.mrb[0].mxu0
  %v2788 = vadd.f32 0.0, %v2787
  %2789 = vdwg.mxu0
  %v2790 = vadd.f32 %v2644, %v2715
  %v2791 = vadd.f32 %v2645, %v2717
  %v2792 = vadd.f32 %v2646, %v2786
  %v2793 = vadd.f32 %v2647, %v2788
  %v2794 = vld [vmem:[%s51] sm:$0xff]
  %v2795 = vld [vmem:[%s51 + $0x8] sm:$0xff]
  %v2796 = vld [vmem:[%s51 + $0x10] sm:$0xff]
  %v2797 = vld [vmem:[%s51 + $0x18] sm:$0xff]
  %2798 = vmatprep.subr.mxu0 %v127
  %2799 = vmatpush1.msra.mxu0 %v126
  %2800 = vmatprep.subr.mxu0 %v131
  %2801 = vmatpush1.msra.mxu0 %v130
  %2802 = vmatprep.subr.mxu0 %v135
  %2803 = vmatpush1.msra.mxu0 %v134
  %2804 = vmatprep.subr.mxu0 %v139
  %2805 = vmatpush1.msra.mxu0 %v138
  %2806 = vmatprep.subr.mxu0 %v143
  %2807 = vmatpush1.msra.mxu0 %v142
  %2808 = vmatprep.subr.mxu0 %v147
  %2809 = vmatpush1.msra.mxu0 %v146
  %2810 = vmatprep.subr.mxu0 %v151
  %2811 = vmatpush1.msra.mxu0 %v150
  %2812 = vmatprep.subr.mxu0 %v155
  %2813 = vmatpush1.msra.mxu0 %v154
  %2814 = vmatprep.subr.mxu0 %v159
  %2815 = vmatpush1.msra.mxu0 %v158
  %2816 = vmatprep.subr.mxu0 %v163
  %2817 = vmatpush1.msra.mxu0 %v162
  %2818 = vmatprep.subr.mxu0 %v167
  %2819 = vmatpush1.msra.mxu0 %v166
  %2820 = vmatprep.subr.mxu0 %v171
  %2821 = vmatpush1.msra.mxu0 %v170
  %2822 = vmatprep.subr.mxu0 %v175
  %2823 = vmatpush1.msra.mxu0 %v174
  %2824 = vmatprep.subr.mxu0 %v179
  %2825 = vmatpush1.msra.mxu0 %v178
  %2826 = vmatprep.subr.mxu0 %v183
  %2827 = vmatpush1.msra.mxu0 %v182
  %2828 = vmatprep.subr.mxu0 %v187
  %2829 = vmatpush1.msra.mxu0 %v186
  %2830 = vmatprep.subr.mxu0 0.0
  %2831 = vmatpush1.msra.mxu0 0.0
  %2832 = vmatprep.subr.mxu0 0.0
  %2833 = vmatpush1.msra.mxu0 0.0
  %2834 = vmatprep.subr.mxu0 0.0
  %2835 = vmatpush1.msra.mxu0 0.0
  %2836 = vmatprep.subr.mxu0 0.0
  %2837 = vmatpush1.msra.mxu0 0.0
  %2838 = vmatprep.subr.mxu0 0.0
  %2839 = vmatpush1.msra.mxu0 0.0
  %2840 = vmatprep.subr.mxu0 0.0
  %2841 = vmatpush1.msra.mxu0 0.0
  %2842 = vmatprep.subr.mxu0 0.0
  %2843 = vmatpush1.msra.mxu0 0.0
  %2844 = vmatprep.subr.mxu0 0.0
  %2845 = vmatpush1.msra.mxu0 0.0
  %2846 = vmatprep.subr.mxu0 0.0
  %2847 = vmatpush1.msra.mxu0 0.0
  %2848 = vmatprep.subr.mxu0 0.0
  %2849 = vmatpush1.msra.mxu0 0.0
  %2850 = vmatprep.subr.mxu0 0.0
  %2851 = vmatpush1.msra.mxu0 0.0
  %2852 = vmatprep.subr.mxu0 0.0
  %2853 = vmatpush1.msra.mxu0 0.0
  %2854 = vmatprep.subr.mxu0 0.0
  %2855 = vmatpush1.msra.mxu0 0.0
  %2856 = vmatprep.subr.mxu0 0.0
  %2857 = vmatpush1.msra.mxu0 0.0
  %2858 = vmatprep.subr.mxu0 0.0
  %2859 = vmatpush1.msra.mxu0 0.0
  %2860 = vmatprep.subr.mxu0 0.0
  %2861 = vmatpush1.msra.mxu0 0.0
  %2862 = vmatprep.mubr.f32.mxu0 0.0
  %2863 = vmatmul.mubr.f32.gmra.mrb[0].mxu0 %v2642
  %v2864 = vpop.f32.mrb[0].mxu0
  %v2865 = vadd.f32 0.0, %v2864
  %v2866 = vpop.f32.mrb[0].mxu0
  %v2867 = vadd.f32 0.0, %v2866
  %2868 = vdwg.mxu0
  %2869 = vmatprep.subr.mxu0 %v129
  %2870 = vmatpush1.msra.mxu0 %v128
  %2871 = vmatprep.subr.mxu0 %v133
  %2872 = vmatpush1.msra.mxu0 %v132
  %2873 = vmatprep.subr.mxu0 %v137
  %2874 = vmatpush1.msra.mxu0 %v136
  %2875 = vmatprep.subr.mxu0 %v141
  %2876 = vmatpush1.msra.mxu0 %v140
  %2877 = vmatprep.subr.mxu0 %v145
  %2878 = vmatpush1.msra.mxu0 %v144
  %2879 = vmatprep.subr.mxu0 %v149
  %2880 = vmatpush1.msra.mxu0 %v148
  %2881 = vmatprep.subr.mxu0 %v153
  %2882 = vmatpush1.msra.mxu0 %v152
  %2883 = vmatprep.subr.mxu0 %v157
  %2884 = vmatpush1.msra.mxu0 %v156
  %2885 = vmatprep.subr.mxu0 %v161
  %2886 = vmatpush1.msra.mxu0 %v160
  %2887 = vmatprep.subr.mxu0 %v165
  %2888 = vmatpush1.msra.mxu0 %v164
  %2889 = vmatprep.subr.mxu0 %v169
  %2890 = vmatpush1.msra.mxu0 %v168
  %2891 = vmatprep.subr.mxu0 %v173
  %2892 = vmatpush1.msra.mxu0 %v172
  %2893 = vmatprep.subr.mxu0 %v177
  %2894 = vmatpush1.msra.mxu0 %v176
  %2895 = vmatprep.subr.mxu0 %v181
  %2896 = vmatpush1.msra.mxu0 %v180
  %2897 = vmatprep.subr.mxu0 %v185
  %2898 = vmatpush1.msra.mxu0 %v184
  %2899 = vmatprep.subr.mxu0 %v189
  %2900 = vmatpush1.msra.mxu0 %v188
  %2901 = vmatprep.subr.mxu0 0.0
  %2902 = vmatpush1.msra.mxu0 0.0
  %2903 = vmatprep.subr.mxu0 0.0
  %2904 = vmatpush1.msra.mxu0 0.0
  %2905 = vmatprep.subr.mxu0 0.0
  %2906 = vmatpush1.msra.mxu0 0.0
  %2907 = vmatprep.subr.mxu0 0.0
  %2908 = vmatpush1.msra.mxu0 0.0
  %2909 = vmatprep.subr.mxu0 0.0
  %2910 = vmatpush1.msra.mxu0 0.0
  %2911 = vmatprep.subr.mxu0 0.0
  %2912 = vmatpush1.msra.mxu0 0.0
  %2913 = vmatprep.subr.mxu0 0.0
  %2914 = vmatpush1.msra.mxu0 0.0
  %2915 = vmatprep.subr.mxu0 0.0
  %2916 = vmatpush1.msra.mxu0 0.0
  %2917 = vmatprep.subr.mxu0 0.0
  %2918 = vmatpush1.msra.mxu0 0.0
  %2919 = vmatprep.subr.mxu0 0.0
  %2920 = vmatpush1.msra.mxu0 0.0
  %2921 = vmatprep.subr.mxu0 0.0
  %2922 = vmatpush1.msra.mxu0 0.0
  %2923 = vmatprep.subr.mxu0 0.0
  %2924 = vmatpush1.msra.mxu0 0.0
  %2925 = vmatprep.subr.mxu0 0.0
  %2926 = vmatpush1.msra.mxu0 0.0
  %2927 = vmatprep.subr.mxu0 0.0
  %2928 = vmatpush1.msra.mxu0 0.0
  %2929 = vmatprep.subr.mxu0 0.0
  %2930 = vmatpush1.msra.mxu0 0.0
  %2931 = vmatprep.subr.mxu0 0.0
  %2932 = vmatpush1.msra.mxu0 0.0
  %2933 = vmatprep.mubr.f32.mxu0 0.0
  %2934 = vmatmul.mubr.f32.gmra.mrb[0].mxu0 %v2642
  %v2935 = vpop.f32.mrb[0].mxu0
  %v2936 = vadd.f32 0.0, %v2935
  %v2937 = vpop.f32.mrb[0].mxu0
  %v2938 = vadd.f32 0.0, %v2937
  %2939 = vdwg.mxu0
  %v2940 = vadd.f32 %v2794, %v2865
  %v2941 = vadd.f32 %v2795, %v2867
  %v2942 = vadd.f32 %v2796, %v2936
  %v2943 = vadd.f32 %v2797, %v2938
  %v2944 = vxor.u32 %v2790, 2147483648
  %v2945 = vmul.f32 %v2944, 1.442695
  %v2946 = vpow.pop %v2945
  %v2947 = vadd.f32 %v2946, 1.0
  %v2948 = vrcp.pop %v2947
  %v2949 = vmul.f32 1.0, %v2948
  %v2950 = vxor.u32 %v2791, 2147483648
  %v2951 = vmul.f32 %v2950, 1.442695
  %v2952 = vpow.pop %v2951
  %v2953 = vadd.f32 %v2952, 1.0
  %v2954 = vrcp.pop %v2953
  %v2955 = vmul.f32 1.0, %v2954
  %v2956 = vtanh.pop %v2792
  %v2957 = vxor.u32 %v2793, 2147483648
  %v2958 = vmul.f32 %v2957, 1.442695
  %v2959 = vpow.pop %v2958
  %v2960 = vadd.f32 %v2959, 1.0
  %v2961 = vrcp.pop %v2960
  %v2962 = vmul.f32 1.0, %v2961
  %v2963 = vmul.f32 %v2955, %v2616
  %v2964 = vmul.f32 %v2949, %v2956
  %v2965 = vadd.f32 %v2963, %v2964
  %v2966 = vtanh.pop %v2965
  %v2967 = vmul.f32 %v2962, %v2966
  %v2968 = vxor.u32 %v2940, 2147483648
  %v2969 = vmul.f32 %v2968, 1.442695
  %v2970 = vpow.pop %v2969
  %v2971 = vadd.f32 %v2970, 1.0
  %v2972 = vrcp.pop %v2971
  %v2973 = vmul.f32 1.0, %v2972
  %v2974 = vxor.u32 %v2941, 2147483648
  %v2975 = vmul.f32 %v2974, 1.442695
  %v2976 = vpow.pop %v2975
  %v2977 = vadd.f32 %v2976, 1.0
  %v2978 = vrcp.pop %v2977
  %v2979 = vmul.f32 1.0, %v2978
  %v2980 = vtanh.pop %v2942
  %v2981 = vxor.u32 %v2943, 2147483648
  %v2982 = vmul.f32 %v2981, 1.442695
  %v2983 = vpow.pop %v2982
  %v2984 = vadd.f32 %v2983, 1.0
  %v2985 = vrcp.pop %v2984
  %v2986 = vmul.f32 1.0, %v2985
  %v2987 = vmul.f32 %v2979, %v2640
  %v2988 = vmul.f32 %v2973, %v2980
  %v2989 = vadd.f32 %v2987, %v2988
  %v2990 = vtanh.pop %v2989
  %v2991 = vmul.f32 %v2986, %v2990
  %2992 = vst [vmem:[#allocation2] sm:$0xff] %v2967
  %2993 = vst [vmem:[#allocation3] sm:$0xff] %v2965
  %2994 = vst [vmem:[#allocation4] sm:$0xff] %v2991
  %2995 = vst [vmem:[#allocation5] sm:$0xff] %v2989
  // Predicated region
  $region38: #{rnn_lstm_forward.3} parent=0 // pred_check
    %p2996 = pneg %p54
  $region39: #{rnn_lstm_forward.3} parent=0 // pred_check_branch
    %2998 = sbr.rel (%p2996) target = $region41
  $region40: #{rnn_lstm_forward.3} parent=0 // pred_region
    %v2999 = vld [vmem:[%s4] sm:$0xff]
    %v3000 = vld [vmem:[%s4 + $0x8] sm:$0xff]
    %v3001 = vld [vmem:[%s4 + $0x10] sm:$0xff]
    %v3002 = vld [vmem:[%s4 + $0x18] sm:$0xff]
    %v3003 = vld [vmem:[%s4 + $0x20] sm:$0xff]
    %v3004 = vld [vmem:[%s4 + $0x28] sm:$0xff]
    %v3005 = vld [vmem:[%s4 + $0x30] sm:$0xff]
    %v3006 = vld [vmem:[%s4 + $0x38] sm:$0xff]
    %v3007 = vld [vmem:[%s4 + $0x40] sm:$0xff]
    %v3008 = vld [vmem:[%s4 + $0x48] sm:$0xff]
    %v3009 = vld [vmem:[%s4 + $0x50] sm:$0xff]
    %v3010 = vld [vmem:[%s4 + $0x58] sm:$0xff]
    %v3011 = vld [vmem:[%s4 + $0x60] sm:$0xff]
    %v3012 = vld [vmem:[%s4 + $0x68] sm:$0xff]
    %v3013 = vld [vmem:[%s4 + $0x70] sm:$0xff]
    %v3014 = vld [vmem:[%s4 + $0x78] sm:$0xff]
    %v3015 = vld [vmem:[%s4 + $0x80] sm:$0xff]
    %v3016 = vld [vmem:[%s4 + $0x88] sm:$0xff]
    %v3017 = vld [vmem:[%s4 + $0x90] sm:$0xff]
    %v3018 = vld [vmem:[%s4 + $0x98] sm:$0xff]
    %v3019 = vld [vmem:[%s4 + $0xa0] sm:$0xff]
    %v3020 = vld [vmem:[%s4 + $0xa8] sm:$0xff]
    %v3021 = vld [vmem:[%s4 + $0xb0] sm:$0xff]
    %v3022 = vld [vmem:[%s4 + $0xb8] sm:$0xff]
    %v3023 = vld [vmem:[%s4 + $0xc0] sm:$0xff]
    %v3024 = vld [vmem:[%s4 + $0xc8] sm:$0xff]
    %v3025 = vld [vmem:[%s4 + $0xd0] sm:$0xff]
    %v3026 = vld [vmem:[%s4 + $0xd8] sm:$0xff]
    %v3027 = vld [vmem:[%s4 + $0xe0] sm:$0xff]
    %v3028 = vld [vmem:[%s4 + $0xe8] sm:$0xff]
    %v3029 = vld [vmem:[%s4 + $0xf0] sm:$0xff]
    %v3030 = vld [vmem:[%s4 + $0xf8] sm:$0xff]
    %v3031 = vld [vmem:[%s5] sm:$0x1]
    %v3033 = vlaneseq
    %v3034 = vshrl.u32 %v3033, 7
    %v3035 = vsub.s32 0, %v3034
    %v3036 = vrot.slane %v3031, %v3035
    %3038 = vmatprep.subr.mxu0 0.0
    %3039 = vmatpush1.msra.mxu0 %v2999
    %3040 = vmatprep.subr.mxu0 0.0
    %3041 = vmatpush1.msra.mxu0 %v3000
    %3042 = vmatprep.subr.mxu0 0.0
    %3043 = vmatpush1.msra.mxu0 %v3001
    %3044 = vmatprep.subr.mxu0 0.0
    %3045 = vmatpush1.msra.mxu0 %v3002
    %3046 = vmatprep.subr.mxu0 0.0
    %3047 = vmatpush1.msra.mxu0 %v3003
    %3048 = vmatprep.subr.mxu0 0.0
    %3049 = vmatpush1.msra.mxu0 %v3004
    %3050 = vmatprep.subr.mxu0 0.0
    %3051 = vmatpush1.msra.mxu0 %v3005
    %3052 = vmatprep.subr.mxu0 0.0
    %3053 = vmatpush1.msra.mxu0 %v3006
    %3054 = vmatprep.subr.mxu0 0.0
    %3055 = vmatpush1.msra.mxu0 %v3007
    %3056 = vmatprep.subr.mxu0 0.0
    %3057 = vmatpush1.msra.mxu0 %v3008
    %3058 = vmatprep.subr.mxu0 0.0
    %3059 = vmatpush1.msra.mxu0 %v3009
    %3060 = vmatprep.subr.mxu0 0.0
    %3061 = vmatpush1.msra.mxu0 %v3010
    %3062 = vmatprep.subr.mxu0 0.0
    %3063 = vmatpush1.msra.mxu0 %v3011
    %3064 = vmatprep.subr.mxu0 0.0
    %3065 = vmatpush1.msra.mxu0 %v3012
    %3066 = vmatprep.subr.mxu0 0.0
    %3067 = vmatpush1.msra.mxu0 %v3013
    %3068 = vmatprep.subr.mxu0 0.0
    %3069 = vmatpush1.msra.mxu0 %v3014
    %3070 = vmatprep.subr.mxu0 0.0
    %3071 = vmatpush1.msra.mxu0 %v3015
    %3072 = vmatprep.subr.mxu0 0.0
    %3073 = vmatpush1.msra.mxu0 %v3016
    %3074 = vmatprep.subr.mxu0 0.0
    %3075 = vmatpush1.msra.mxu0 %v3017
    %3076 = vmatprep.subr.mxu0 0.0
    %3077 = vmatpush1.msra.mxu0 %v3018
    %3078 = vmatprep.subr.mxu0 0.0
    %3079 = vmatpush1.msra.mxu0 %v3019
    %3080 = vmatprep.subr.mxu0 0.0
    %3081 = vmatpush1.msra.mxu0 %v3020
    %3082 = vmatprep.subr.mxu0 0.0
    %3083 = vmatpush1.msra.mxu0 %v3021
    %3084 = vmatprep.subr.mxu0 0.0
    %3085 = vmatpush1.msra.mxu0 %v3022
    %3086 = vmatprep.subr.mxu0 0.0
    %3087 = vmatpush1.msra.mxu0 %v3023
    %3088 = vmatprep.subr.mxu0 0.0
    %3089 = vmatpush1.msra.mxu0 %v3024
    %3090 = vmatprep.subr.mxu0 0.0
    %3091 = vmatpush1.msra.mxu0 %v3025
    %3092 = vmatprep.subr.mxu0 0.0
    %3093 = vmatpush1.msra.mxu0 %v3026
    %3094 = vmatprep.subr.mxu0 0.0
    %3095 = vmatpush1.msra.mxu0 %v3027
    %3096 = vmatprep.subr.mxu0 0.0
    %3097 = vmatpush1.msra.mxu0 %v3028
    %3098 = vmatprep.subr.mxu0 0.0
    %3099 = vmatpush1.msra.mxu0 %v3029
    %3100 = vmatprep.subr.mxu0 0.0
    %3101 = vmatpush1.msra.mxu0 %v3030
    %3102 = vmatprep.mubr.f32.mxu0 %v2991
    %3103 = vmatmul.mubr.f32.gmra.mrb[0].mxu0 %v2967
    %v3104 = vpop.f32.mrb[0].mxu0
    %v3105 = vadd.f32 %v3036, %v3104
    %v3106 = vpop.f32.mrb[0].mxu0
    %3107 = vdwg.mxu0
    %v3108 = vld [vmem:[%s6] sm:$0xff]
    %v3109 = vld [vmem:[%s6 + $0x8] sm:$0xff]
    %v3110 = vld [vmem:[%s6 + $0x10] sm:$0xff]
    %v3111 = vld [vmem:[%s6 + $0x18] sm:$0xff]
    %v3112 = vld [vmem:[%s6 + $0x20] sm:$0xff]
    %v3113 = vld [vmem:[%s6 + $0x28] sm:$0xff]
    %v3114 = vld [vmem:[%s6 + $0x30] sm:$0xff]
    %v3115 = vld [vmem:[%s6 + $0x38] sm:$0xff]
    %v3116 = vld [vmem:[%s7] sm:$0x1]
    %v3118 = vlaneseq
    %v3119 = vshrl.u32 %v3118, 7
    %v3120 = vsub.s32 0, %v3119
    %v3121 = vrot.slane %v3116, %v3120
    %vm3123 = vcmask 523264
    %v3125 = vsel %vm3123, %v3105, 0
    %3127 = vmatprep.subr.mxu0 0.0
    %3128 = vmatpush1.msra.mxu0 %v3108
    %3129 = vmatprep.subr.mxu0 0.0
    %3130 = vmatpush1.msra.mxu0 %v3109
    %3131 = vmatprep.subr.mxu0 0.0
    %3132 = vmatpush1.msra.mxu0 %v3110
    %3133 = vmatprep.subr.mxu0 0.0
    %3134 = vmatpush1.msra.mxu0 %v3111
    %3135 = vmatprep.subr.mxu0 0.0
    %3136 = vmatpush1.msra.mxu0 %v3112
    %3137 = vmatprep.subr.mxu0 0.0
    %3138 = vmatpush1.msra.mxu0 %v3113
    %3139 = vmatprep.subr.mxu0 0.0
    %3140 = vmatpush1.msra.mxu0 %v3114
    %3141 = vmatprep.subr.mxu0 0.0
    %3142 = vmatpush1.msra.mxu0 %v3115
    %3143 = vmatprep.subr.mxu0 0.0
    %3144 = vmatpush1.msra.mxu0 0.0
    %3145 = vmatprep.subr.mxu0 0.0
    %3146 = vmatpush1.msra.mxu0 0.0
    %3147 = vmatprep.subr.mxu0 0.0
    %3148 = vmatpush1.msra.mxu0 0.0
    %3149 = vmatprep.subr.mxu0 0.0
    %3150 = vmatpush1.msra.mxu0 0.0
    %3151 = vmatprep.subr.mxu0 0.0
    %3152 = vmatpush1.msra.mxu0 0.0
    %3153 = vmatprep.subr.mxu0 0.0
    %3154 = vmatpush1.msra.mxu0 0.0
    %3155 = vmatprep.subr.mxu0 0.0
    %3156 = vmatpush1.msra.mxu0 0.0
    %3157 = vmatprep.subr.mxu0 0.0
    %3158 = vmatpush1.msra.mxu0 0.0
    %3159 = vmatprep.subr.mxu0 0.0
    %3160 = vmatpush1.msra.mxu0 0.0
    %3161 = vmatprep.subr.mxu0 0.0
    %3162 = vmatpush1.msra.mxu0 0.0
    %3163 = vmatprep.subr.mxu0 0.0
    %3164 = vmatpush1.msra.mxu0 0.0
    %3165 = vmatprep.subr.mxu0 0.0
    %3166 = vmatpush1.msra.mxu0 0.0
    %3167 = vmatprep.subr.mxu0 0.0
    %3168 = vmatpush1.msra.mxu0 0.0
    %3169 = vmatprep.subr.mxu0 0.0
    %3170 = vmatpush1.msra.mxu0 0.0
    %3171 = vmatprep.subr.mxu0 0.0
    %3172 = vmatpush1.msra.mxu0 0.0
    %3173 = vmatprep.subr.mxu0 0.0
    %3174 = vmatpush1.msra.mxu0 0.0
    %3175 = vmatprep.subr.mxu0 0.0
    %3176 = vmatpush1.msra.mxu0 0.0
    %3177 = vmatprep.subr.mxu0 0.0
    %3178 = vmatpush1.msra.mxu0 0.0
    %3179 = vmatprep.subr.mxu0 0.0
    %3180 = vmatpush1.msra.mxu0 0.0
    %3181 = vmatprep.subr.mxu0 0.0
    %3182 = vmatpush1.msra.mxu0 0.0
    %3183 = vmatprep.subr.mxu0 0.0
    %3184 = vmatpush1.msra.mxu0 0.0
    %3185 = vmatprep.subr.mxu0 0.0
    %3186 = vmatpush1.msra.mxu0 0.0
    %3187 = vmatprep.subr.mxu0 0.0
    %3188 = vmatpush1.msra.mxu0 0.0
    %3189 = vmatprep.subr.mxu0 0.0
    %3190 = vmatpush1.msra.mxu0 0.0
    %3191 = vmatprep.mubr.f32.mxu0 0.0
    %3192 = vmatmul.mubr.f32.gmra.mrb[0].mxu0 %v3125
    %v3193 = vpop.f32.mrb[0].mxu0
    %v3194 = vadd.f32 %v3121, %v3193
    %v3195 = vpop.f32.mrb[0].mxu0
    %3196 = vdwg.mxu0
    %3197 = vst [vmem:[%s8] sm:$0xff] %v3194
  $region41: #{rnn_lstm_forward.3} parent=0 // pred_fallthru
    _
  // Predicated region
  $region42: #{rnn_lstm_forward.3} parent=0 // pred_check
    _
  $region43: #{rnn_lstm_forward.3} parent=0 // pred_check_branch
    %3199 = sbr.rel (0) target = $region45
  $region44: #{rnn_lstm_forward.3} parent=0 // pred_region
    _
  $region45: #{rnn_lstm_forward.3} parent=0 // pred_fallthru
    _
  // Predicated region
  $region46: #{rnn_lstm_forward.3} parent=0 // pred_check
    _
  $region47: #{rnn_lstm_forward.3} parent=0 // pred_check_branch
    %3201 = sbr.rel (0) target = $region49
  $region48: #{rnn_lstm_forward.3} parent=0 // pred_region
    _
  $region49: #{rnn_lstm_forward.3} parent=0 // pred_fallthru
    _

</llo_original>
